<compile_context>
chip_gen: v6e
topology: v6e:2x2x1
jax: 0.10.0
libtpu: 0.0.40
codegen_flags: <defaults>
</compile_context>

<pallas_src>
import numpy as np
import jax
import jax.numpy as jnp
from jax import lax
from jax.experimental import pallas as pl
from jax.experimental.pallas import tpu as pltpu

H1 = 256     # lstm1 hidden size
H2 = 64      # lstm2 hidden size
H2P = 128    # lstm2 gate width padded to one full 128-lane tile
F_IN = 80    # lstm1 input features
F_PAD = 128  # input features zero-padded to a full lane tile
D_ATT = 100  # fc_ha output


# --------------------------------------------------------------------------
# Kernel
# --------------------------------------------------------------------------
def make_kernel(T, B_real, BP):
    """Build the kernel with static seq length T, real batch B_real, padded batch BP."""
    G1 = 4 * H1
    G2 = 4 * H2P

    def kernel(x_ref, w_in1, b_in1, whh1f, whh1b,
               w2_top, w2_bot, b_in2, whh2f, whh2b,
               w_ha, b_ha, w_1, b_1,
               out_ref,
               pre1f, pre1b, x1f, x1b, pre2f):

        # ---- hoisted layer-1 input projection (both directions, one matmul) ----
        xf = x_ref[...].reshape(T * BP, F_PAD)
        pre1 = jnp.dot(xf, w_in1[...], preferred_element_type=jnp.float32) + b_in1[...]
        pre1f[...] = pre1[:, :G1].reshape(T, BP, G1)
        pre1b[...] = pre1[:, G1:].reshape(T, BP, G1)

        def lstm1_cell(pre_t, h, c, whh):
            gates = pre_t + jnp.dot(h.astype(jnp.bfloat16), whh,
                                    preferred_element_type=jnp.float32)
            i = jax.nn.sigmoid(gates[:, 0 * H1:1 * H1])
            f = jax.nn.sigmoid(gates[:, 1 * H1:2 * H1])
            g = jnp.tanh(gates[:, 2 * H1:3 * H1])
            o = jax.nn.sigmoid(gates[:, 3 * H1:4 * H1])
            c = f * c + i * g
            h = o * jnp.tanh(c)
            return h, c

        # ---- layer 1 forward direction (fully unrolled serial recurrence) ----
        whh = whh1f[...]
        h = jnp.zeros((BP, H1), jnp.float32)
        c = jnp.zeros((BP, H1), jnp.float32)
        for t in range(T):
            h, c = lstm1_cell(pre1f[t], h, c, whh)
            x1f[t] = h

        # ---- layer 1 backward direction ----
        whh = whh1b[...]
        h = jnp.zeros((BP, H1), jnp.float32)
        c = jnp.zeros((BP, H1), jnp.float32)
        for t in range(T - 1, -1, -1):
            h, c = lstm1_cell(pre1b[t], h, c, whh)
            x1b[t] = h

        # ---- hoisted layer-2 input projection (split weights: no concat) ----
        x1f_flat = x1f[...].reshape(T * BP, H1)
        x1b_flat = x1b[...].reshape(T * BP, H1)
        pre2 = (jnp.dot(x1f_flat, w2_top[...], preferred_element_type=jnp.float32)
                + jnp.dot(x1b_flat, w2_bot[...], preferred_element_type=jnp.float32)
                + b_in2[...])                                  # (T*BP, 2*G2)
        pre2f[...] = pre2[:, :G2].reshape(T, BP, G2)
        pre2b_last = pre2[(T - 1) * BP:, G2:]                  # only step used by bwd dir

        def lstm2_cell(pre_t, h, c, whh):
            # Each gate occupies a zero-padded 128-lane slot -> aligned slices.
            gates = pre_t + jnp.dot(h.astype(jnp.bfloat16), whh,
                                    preferred_element_type=jnp.float32)
            i = jax.nn.sigmoid(gates[:, 0 * H2P:1 * H2P])
            f = jax.nn.sigmoid(gates[:, 1 * H2P:2 * H2P])
            g = jnp.tanh(gates[:, 2 * H2P:3 * H2P])
            o = jax.nn.sigmoid(gates[:, 3 * H2P:4 * H2P])
            c = f * c + i * g
            h = o * jnp.tanh(c)
            return h, c

        # ---- layer 2 forward direction: only the final hidden state matters ----
        whh = whh2f[...]
        h2 = jnp.zeros((BP, H2P), jnp.float32)
        c2 = jnp.zeros((BP, H2P), jnp.float32)
        for t in range(T):
            h2, c2 = lstm2_cell(pre2f[t], h2, c2, whh)
        h2f = h2

        # ---- layer 2 backward direction: its hidden at t = T-1 is its FIRST
        #      step (processing the reversed sequence from a zero state).
        h2b, _ = lstm2_cell(pre2b_last,
                            jnp.zeros((BP, H2P), jnp.float32),
                            jnp.zeros((BP, H2P), jnp.float32),
                            whh2b[...])

        # ht = x2[-1] -> (BP, 128); drop the zero-padded gate lanes (done once).
        ht = jnp.concatenate([h2f[:, :H2], h2b[:, :H2]], axis=1)

        # ha = tanh(fc_ha(ht)); alp = fc_1(ha)
        ha = jnp.tanh(jnp.dot(ht, w_ha[...], preferred_element_type=jnp.float32)
                      + b_ha[...])                             # (BP, 100)
        alp = (jnp.dot(ha, w_1[...], preferred_element_type=jnp.float32)
               + b_1[...])                                     # (BP, 1)

        # torch softmax(dim=1) over the batch; mask the padded batch rows.
        row = lax.broadcasted_iota(jnp.int32, (BP, 1), 0)
        alp = jnp.where(row < B_real, alp, -jnp.inf)
        m = jnp.max(alp, axis=0, keepdims=True)
        e = jnp.exp(alp - m)
        al = e / jnp.sum(e, axis=0, keepdims=True)             # (BP, 1), padded rows = 0

        # c = bmm(al.view(1,1,B), ht.view(1,B,128)).squeeze(0) -> (1, 128)
        out_ref[...] = jnp.sum(al * ht, axis=0, keepdims=True)

    return kernel


# --------------------------------------------------------------------------
# Wrapper-side parameter packing (transpose / fuse / pad / bf16-cast once)
# --------------------------------------------------------------------------
def _pad_gate_cols(w_t, H, HP):
    """(in, 4H) -> (in, 4HP): each gate's H columns placed at the start of an HP slot."""
    cols = []
    for g in range(4):
        blk = w_t[:, g * H:(g + 1) * H]
        cols.append(jnp.pad(blk, ((0, 0), (0, HP - H))))
    return jnp.concatenate(cols, axis=1)


def _pad_gate_vec(b, H, HP):
    segs = []
    for g in range(4):
        segs.append(jnp.pad(b[g * H:(g + 1) * H], (0, HP - H)))
    return jnp.concatenate(segs)


def pack_kernel_params(params):
    (w_ih1f, w_hh1f, b_ih1f, b_hh1f,
     w_ih1b, w_hh1b, b_ih1b, b_hh1b,
     w_ih2f, w_hh2f, b_ih2f, b_hh2f,
     w_ih2b, w_hh2b, b_ih2b, b_hh2b,
     w_ha, b_ha, w_1, b_1) = params

    # Layer 1: fuse both directions into one (F_PAD, 2048) input matrix, fold biases.
    w_in1 = jnp.concatenate([w_ih1f.T, w_ih1b.T], axis=1)                 # (80, 2048)
    w_in1 = jnp.pad(w_in1, ((0, F_PAD - F_IN), (0, 0)))                   # (128, 2048)
    b_in1 = jnp.concatenate([b_ih1f + b_hh1f, b_ih1b + b_hh1b])[None, :]  # (1, 2048)
    whh1f = w_hh1f.T.astype(jnp.bfloat16)                                 # (256, 1024)
    whh1b = w_hh1b.T.astype(jnp.bfloat16)

    # Layer 2: pad each 64-wide gate to 128 lanes, split input rows into the
    # layer-1 fwd/bwd halves (avoids in-kernel concat), fuse both directions.
    w2f = _pad_gate_cols(w_ih2f.T, H2, H2P)                               # (512, 512)
    w2b = _pad_gate_cols(w_ih2b.T, H2, H2P)                               # (512, 512)
    w2_top = jnp.concatenate([w2f[:H1], w2b[:H1]], axis=1)                # (256, 1024)
    w2_bot = jnp.concatenate([w2f[H1:], w2b[H1:]], axis=1)                # (256, 1024)
    b_in2 = jnp.concatenate([_pad_gate_vec(b_ih2f + b_hh2f, H2, H2P),
                             _pad_gate_vec(b_ih2b + b_hh2b, H2, H2P)])[None, :]
    whh2f = jnp.pad(_pad_gate_cols(w_hh2f.T, H2, H2P),
                    ((0, H2P - H2), (0, 0))).astype(jnp.bfloat16)         # (128, 512)
    whh2b = jnp.pad(_pad_gate_cols(w_hh2b.T, H2, H2P),
                    ((0, H2P - H2), (0, 0))).astype(jnp.bfloat16)         # (128, 512)

    return [w_in1, b_in1, whh1f, whh1b,
            w2_top, w2_bot, b_in2, whh2f, whh2b,
            w_ha.T, b_ha[None, :], w_1.T, b_1[None, :]]


def lstmnet_forward(x, params):
    T, B, F = x.shape
    assert F == F_IN
    BP = ((B + 7) // 8) * 8                       # pad batch to sublane quantum
    x_p = jnp.pad(x, ((0, 0), (0, BP - B), (0, F_PAD - F_IN)))
    kparams = pack_kernel_params(params)          # in production, pre-pack once
    kernel = make_kernel(T, B, BP)
    n_in = 1 + len(kparams)
    return pl.pallas_call(
        kernel,
        out_shape=jax.ShapeDtypeStruct((1, 2 * H2), jnp.float32),
        in_specs=[pl.BlockSpec(memory_space=pltpu.MemorySpace.VMEM)] * n_in,
        out_specs=pl.BlockSpec(memory_space=pltpu.MemorySpace.VMEM),
        scratch_shapes=[
            pltpu.VMEM((T, BP, 4 * H1), jnp.float32),    # layer-1 fwd pre-gates
            pltpu.VMEM((T, BP, 4 * H1), jnp.float32),    # layer-1 bwd pre-gates
            pltpu.VMEM((T, BP, H1), jnp.float32),        # layer-1 fwd hidden seq
            pltpu.VMEM((T, BP, H1), jnp.float32),        # layer-1 bwd hidden seq
            pltpu.VMEM((T, BP, 4 * H2P), jnp.float32),   # layer-2 fwd pre-gates
        ],
        compiler_params=pltpu.CompilerParams(vmem_limit_bytes=32 * 1024 * 1024),
    )(x_p, *kparams)


# --------------------------------------------------------------------------
# Params (PyTorch layout) + pure-JAX f32 reference
# --------------------------------------------------------------------------
def init_params(key):
    """PyTorch-layout params with LSTM/Linear-style uniform(-1/sqrt(fan), 1/sqrt(fan))."""
    def uniform(k, shape, bound):
        return jax.random.uniform(k, shape, jnp.float32, -bound, bound)

    ks = iter(jax.random.split(key, 20))
    params = []
    k1 = 1.0 / np.sqrt(H1)
    for _ in range(2):                       # lstm1 fwd / bwd
        params += [uniform(next(ks), (4 * H1, F_IN), k1),
                   uniform(next(ks), (4 * H1, H1), k1),
                   uniform(next(ks), (4 * H1,), k1),
                   uniform(next(ks), (4 * H1,), k1)]
    k2 = 1.0 / np.sqrt(H2)
    for _ in range(2):                       # lstm2 fwd / bwd
        params += [uniform(next(ks), (4 * H2, 2 * H1), k2),
                   uniform(next(ks), (4 * H2, H2), k2),
                   uniform(next(ks), (4 * H2,), k2),
                   uniform(next(ks), (4 * H2,), k2)]
    kha = 1.0 / np.sqrt(2 * H2)
    params += [uniform(next(ks), (D_ATT, 2 * H2), kha), uniform(next(ks), (D_ATT,), kha)]
    k_1 = 1.0 / np.sqrt(D_ATT)
    params += [uniform(next(ks), (1, D_ATT), k_1), uniform(next(ks), (1,), k_1)]
    return params


def lstmnet_ref(x, params):
    """Pure-JAX f32 reference mirroring the PyTorch forward exactly."""
    (w_ih1f, w_hh1f, b_ih1f, b_hh1f,
     w_ih1b, w_hh1b, b_ih1b, b_hh1b,
     w_ih2f, w_hh2f, b_ih2f, b_hh2f,
     w_ih2b, w_hh2b, b_ih2b, b_hh2b,
     w_ha, b_ha, w_1, b_1) = params
    T, B, _ = x.shape

    def run_dir(xs, w_ih, w_hh, b_ih, b_hh, H, reverse):
        seq = xs[::-1] if reverse else xs
        w_ih_t, w_hh_t, b = w_ih.T, w_hh.T, (b_ih + b_hh)[None, :]

        def step(carry, x_t):
            h, c = carry
            gates = x_t @ w_ih_t + h @ w_hh_t + b
            i = jax.nn.sigmoid(gates[:, :H])
            f = jax.nn.sigmoid(gates[:, H:2 * H])
            g = jnp.tanh(gates[:, 2 * H:3 * H])
            o = jax.nn.sigmoid(gates[:, 3 * H:])
            c = f * c + i * g
            h = o * jnp.tanh(c)
            return (h, c), h

        _, hs = lax.scan(step, (jnp.zeros((B, H), jnp.float32),
                                jnp.zeros((B, H), jnp.float32)), seq)
        return hs[::-1] if reverse else hs

    x1 = jnp.concatenate([run_dir(x, w_ih1f, w_hh1f, b_ih1f, b_hh1f, H1, False),
                          run_dir(x, w_ih1b, w_hh1b, b_ih1b, b_hh1b, H1, True)], axis=-1)
    x2 = jnp.concatenate([run_dir(x1, w_ih2f, w_hh2f, b_ih2f, b_hh2f, H2, False),
                          run_dir(x1, w_ih2b, w_hh2b, b_ih2b, b_hh2b, H2, True)], axis=-1)
    ht = x2[-1]                                  # (B, 128)
    ha = jnp.tanh(ht @ w_ha.T + b_ha[None, :])   # (B, 100)
    alp = ha @ w_1.T + b_1[None, :]              # (B, 1)
    al = jax.nn.softmax(alp, axis=0)             # torch softmax(dim=1) over batch
    return al.T @ ht                             # (1, 128)


if __name__ == "__main__":
    key = jax.random.PRNGKey(0)
    k_x, k_p = jax.random.split(key)
    T, B = 8, 4                                  # small seq / batch; F=80 fixed by module
    x = jax.random.normal(k_x, (T, B, F_IN), jnp.float32)
    params = init_params(k_p)

    out = lstmnet_forward(x, params)
    out = jax.block_until_ready(out)

    ref = lstmnet_ref(x, params)
    assert out.shape == (1, 2 * H2)
    # Recurrent matmuls run with bf16 operands (f32 accumulation); 2e-3 absorbs it.
    np.testing.assert_allclose(np.asarray(out), np.asarray(ref), rtol=2e-3, atol=2e-3)
    print("KERNEL_OK")
</pallas_src>

<mosaic_0001>
module attributes {stable_mosaic.version = 11 : i64} {
  func.func @kernel(%arg0: memref<8x8x128xf32, #tpu.memory_space<vmem>>, %arg1: memref<128x2048xf32, #tpu.memory_space<vmem>>, %arg2: memref<1x2048xf32, #tpu.memory_space<vmem>>, %arg3: memref<256x1024xbf16, #tpu.memory_space<vmem>>, %arg4: memref<256x1024xbf16, #tpu.memory_space<vmem>>, %arg5: memref<256x1024xf32, #tpu.memory_space<vmem>>, %arg6: memref<256x1024xf32, #tpu.memory_space<vmem>>, %arg7: memref<1x1024xf32, #tpu.memory_space<vmem>>, %arg8: memref<128x512xbf16, #tpu.memory_space<vmem>>, %arg9: memref<128x512xbf16, #tpu.memory_space<vmem>>, %arg10: memref<128x100xf32, #tpu.memory_space<vmem>>, %arg11: memref<1x100xf32, #tpu.memory_space<vmem>>, %arg12: memref<100x1xf32, #tpu.memory_space<vmem>>, %arg13: memref<1x1xf32, #tpu.memory_space<vmem>>, %arg14: memref<1x128xf32, #tpu.memory_space<vmem>>, %arg15: memref<8x8x1024xf32, #tpu.memory_space<vmem>>, %arg16: memref<8x8x1024xf32, #tpu.memory_space<vmem>>, %arg17: memref<8x8x256xf32, #tpu.memory_space<vmem>>, %arg18: memref<8x8x256xf32, #tpu.memory_space<vmem>>, %arg19: memref<8x8x512xf32, #tpu.memory_space<vmem>>) attributes {dimension_semantics = [], scalar_prefetch = 0 : i64, scratch_operands = 5 : i64, tpu.core_type = #tpu.core_type<tc>} {
    %c0 = arith.constant 0 : index
    %c0_0 = arith.constant 0 : index
    %c0_1 = arith.constant 0 : index
    %0 = vector.load %arg0[%c0, %c0_0, %c0_1] : memref<8x8x128xf32, #tpu.memory_space<vmem>>, vector<8x8x128xf32>
    %1 = vector.shape_cast %0 : vector<8x8x128xf32> to vector<64x128xf32>
    %c0_2 = arith.constant 0 : index
    %c0_3 = arith.constant 0 : index
    %2 = vector.load %arg1[%c0_2, %c0_3] : memref<128x2048xf32, #tpu.memory_space<vmem>>, vector<128x2048xf32>
    %cst = arith.constant dense<0.000000e+00> : vector<64x2048xf32>
    %3 = tpu.matmul %1, %2, %cst {dimension_numbers = #tpu.dot_dimension_numbers<[1], [0], [0], [1], [0, 0, 1, 1], [], []>} : vector<64x128xf32>, vector<128x2048xf32>, vector<64x2048xf32> -> vector<64x2048xf32>
    %c0_4 = arith.constant 0 : index
    %c0_5 = arith.constant 0 : index
    %4 = vector.load %arg2[%c0_4, %c0_5] : memref<1x2048xf32, #tpu.memory_space<vmem>>, vector<1x2048xf32>
    %5 = vector.broadcast %4 : vector<1x2048xf32> to vector<64x2048xf32>
    %6 = arith.addf %3, %5 : vector<64x2048xf32>
    %7 = vector.extract_strided_slice %6 {offsets = [0, 0], sizes = [64, 1024], strides = [1, 1]} : vector<64x2048xf32> to vector<64x1024xf32>
    %8 = vector.shape_cast %7 : vector<64x1024xf32> to vector<8x8x1024xf32>
    %c0_6 = arith.constant 0 : index
    %c0_7 = arith.constant 0 : index
    %c0_8 = arith.constant 0 : index
    %9 = vector.load %arg15[%c0_6, %c0_7, %c0_8] : memref<8x8x1024xf32, #tpu.memory_space<vmem>>, vector<8x8x1024xf32>
    tpu.vector_store %arg15[%c0_6, %c0_7, %c0_8], %8 {strides = array<i32>} : memref<8x8x1024xf32, #tpu.memory_space<vmem>>, vector<8x8x1024xf32>,
    %10 = vector.extract_strided_slice %6 {offsets = [0, 1024], sizes = [64, 1024], strides = [1, 1]} : vector<64x2048xf32> to vector<64x1024xf32>
    %11 = vector.shape_cast %10 : vector<64x1024xf32> to vector<8x8x1024xf32>
    %c0_9 = arith.constant 0 : index
    %c0_10 = arith.constant 0 : index
    %c0_11 = arith.constant 0 : index
    %12 = vector.load %arg16[%c0_9, %c0_10, %c0_11] : memref<8x8x1024xf32, #tpu.memory_space<vmem>>, vector<8x8x1024xf32>
    tpu.vector_store %arg16[%c0_9, %c0_10, %c0_11], %11 {strides = array<i32>} : memref<8x8x1024xf32, #tpu.memory_space<vmem>>, vector<8x8x1024xf32>,
    %c0_12 = arith.constant 0 : index
    %c0_13 = arith.constant 0 : index
    %13 = vector.load %arg3[%c0_12, %c0_13] : memref<256x1024xbf16, #tpu.memory_space<vmem>>, vector<256x1024xbf16>
    %cst_14 = arith.constant 0.000000e+00 : f32
    %14 = vector.broadcast %cst_14 : f32 to vector<8x256xf32>
    %cst_15 = arith.constant 0.000000e+00 : f32
    %15 = vector.broadcast %cst_15 : f32 to vector<8x256xf32>
    %c0_16 = arith.constant 0 : index
    %c0_17 = arith.constant 0 : index
    %c0_18 = arith.constant 0 : index
    %16 = vector.load %arg15[%c0_16, %c0_17, %c0_18] : memref<8x8x1024xf32, #tpu.memory_space<vmem>>, vector<1x8x1024xf32>
    %17 = vector.shape_cast %16 : vector<1x8x1024xf32> to vector<8x1024xf32>
    %18 = arith.truncf %14 : vector<8x256xf32> to vector<8x256xbf16>
    %cst_19 = arith.constant dense<0.000000e+00> : vector<8x1024xf32>
    %19 = tpu.matmul %18, %13, %cst_19 {dimension_numbers = #tpu.dot_dimension_numbers<[1], [0], [0], [1], [0, 0, 1, 1], [], []>} : vector<8x256xbf16>, vector<256x1024xbf16>, vector<8x1024xf32> -> vector<8x1024xf32>
    %20 = arith.addf %17, %19 : vector<8x1024xf32>
    %21 = vector.extract_strided_slice %20 {offsets = [0, 0], sizes = [8, 256], strides = [1, 1]} : vector<8x1024xf32> to vector<8x256xf32>
    %22 = arith.negf %21 : vector<8x256xf32>
    %23 = math.exp %22 : vector<8x256xf32>
    %cst_20 = arith.constant 1.000000e+00 : f32
    %24 = vector.broadcast %cst_20 : f32 to vector<8x256xf32>
    %25 = arith.addf %24, %23 : vector<8x256xf32>
    %26 = arith.divf %24, %25 : vector<8x256xf32>
    %27 = vector.extract_strided_slice %20 {offsets = [0, 256], sizes = [8, 256], strides = [1, 1]} : vector<8x1024xf32> to vector<8x256xf32>
    %28 = arith.negf %27 : vector<8x256xf32>
    %29 = math.exp %28 : vector<8x256xf32>
    %cst_21 = arith.constant 1.000000e+00 : f32
    %30 = vector.broadcast %cst_21 : f32 to vector<8x256xf32>
    %31 = arith.addf %30, %29 : vector<8x256xf32>
    %32 = arith.divf %30, %31 : vector<8x256xf32>
    %33 = vector.extract_strided_slice %20 {offsets = [0, 512], sizes = [8, 256], strides = [1, 1]} : vector<8x1024xf32> to vector<8x256xf32>
    %34 = math.tanh %33 : vector<8x256xf32>
    %35 = vector.extract_strided_slice %20 {offsets = [0, 768], sizes = [8, 256], strides = [1, 1]} : vector<8x1024xf32> to vector<8x256xf32>
    %36 = arith.negf %35 : vector<8x256xf32>
    %37 = math.exp %36 : vector<8x256xf32>
    %cst_22 = arith.constant 1.000000e+00 : f32
    %38 = vector.broadcast %cst_22 : f32 to vector<8x256xf32>
    %39 = arith.addf %38, %37 : vector<8x256xf32>
    %40 = arith.divf %38, %39 : vector<8x256xf32>
    %41 = arith.mulf %32, %15 : vector<8x256xf32>
    %42 = arith.mulf %26, %34 : vector<8x256xf32>
    %43 = arith.addf %41, %42 : vector<8x256xf32>
    %44 = math.tanh %43 : vector<8x256xf32>
    %45 = arith.mulf %40, %44 : vector<8x256xf32>
    %c0_23 = arith.constant 0 : index
    %c0_24 = arith.constant 0 : index
    %c0_25 = arith.constant 0 : index
    %46 = vector.load %arg17[%c0_23, %c0_24, %c0_25] : memref<8x8x256xf32, #tpu.memory_space<vmem>>, vector<1x8x256xf32>
    %47 = vector.shape_cast %46 : vector<1x8x256xf32> to vector<8x256xf32>
    %48 = vector.shape_cast %45 : vector<8x256xf32> to vector<1x8x256xf32>
    tpu.vector_store %arg17[%c0_23, %c0_24, %c0_25], %48 {strides = array<i32>} : memref<8x8x256xf32, #tpu.memory_space<vmem>>, vector<1x8x256xf32>,
    %c1 = arith.constant 1 : index
    %c0_26 = arith.constant 0 : index
    %c0_27 = arith.constant 0 : index
    %49 = vector.load %arg15[%c1, %c0_26, %c0_27] : memref<8x8x1024xf32, #tpu.memory_space<vmem>>, vector<1x8x1024xf32>
    %50 = vector.shape_cast %49 : vector<1x8x1024xf32> to vector<8x1024xf32>
    %51 = arith.truncf %45 : vector<8x256xf32> to vector<8x256xbf16>
    %cst_28 = arith.constant dense<0.000000e+00> : vector<8x1024xf32>
    %52 = tpu.matmul %51, %13, %cst_28 {dimension_numbers = #tpu.dot_dimension_numbers<[1], [0], [0], [1], [0, 0, 1, 1], [], []>} : vector<8x256xbf16>, vector<256x1024xbf16>, vector<8x1024xf32> -> vector<8x1024xf32>
    %53 = arith.addf %50, %52 : vector<8x1024xf32>
    %54 = vector.extract_strided_slice %53 {offsets = [0, 0], sizes = [8, 256], strides = [1, 1]} : vector<8x1024xf32> to vector<8x256xf32>
    %55 = arith.negf %54 : vector<8x256xf32>
    %56 = math.exp %55 : vector<8x256xf32>
    %cst_29 = arith.constant 1.000000e+00 : f32
    %57 = vector.broadcast %cst_29 : f32 to vector<8x256xf32>
    %58 = arith.addf %57, %56 : vector<8x256xf32>
    %59 = arith.divf %57, %58 : vector<8x256xf32>
    %60 = vector.extract_strided_slice %53 {offsets = [0, 256], sizes = [8, 256], strides = [1, 1]} : vector<8x1024xf32> to vector<8x256xf32>
    %61 = arith.negf %60 : vector<8x256xf32>
    %62 = math.exp %61 : vector<8x256xf32>
    %cst_30 = arith.constant 1.000000e+00 : f32
    %63 = vector.broadcast %cst_30 : f32 to vector<8x256xf32>
    %64 = arith.addf %63, %62 : vector<8x256xf32>
    %65 = arith.divf %63, %64 : vector<8x256xf32>
    %66 = vector.extract_strided_slice %53 {offsets = [0, 512], sizes = [8, 256], strides = [1, 1]} : vector<8x1024xf32> to vector<8x256xf32>
    %67 = math.tanh %66 : vector<8x256xf32>
    %68 = vector.extract_strided_slice %53 {offsets = [0, 768], sizes = [8, 256], strides = [1, 1]} : vector<8x1024xf32> to vector<8x256xf32>
    %69 = arith.negf %68 : vector<8x256xf32>
    %70 = math.exp %69 : vector<8x256xf32>
    %cst_31 = arith.constant 1.000000e+00 : f32
    %71 = vector.broadcast %cst_31 : f32 to vector<8x256xf32>
    %72 = arith.addf %71, %70 : vector<8x256xf32>
    %73 = arith.divf %71, %72 : vector<8x256xf32>
    %74 = arith.mulf %65, %43 : vector<8x256xf32>
    %75 = arith.mulf %59, %67 : vector<8x256xf32>
    %76 = arith.addf %74, %75 : vector<8x256xf32>
    %77 = math.tanh %76 : vector<8x256xf32>
    %78 = arith.mulf %73, %77 : vector<8x256xf32>
    %c1_32 = arith.constant 1 : index
    %c0_33 = arith.constant 0 : index
    %c0_34 = arith.constant 0 : index
    %79 = vector.load %arg17[%c1_32, %c0_33, %c0_34] : memref<8x8x256xf32, #tpu.memory_space<vmem>>, vector<1x8x256xf32>
    %80 = vector.shape_cast %79 : vector<1x8x256xf32> to vector<8x256xf32>
    %81 = vector.shape_cast %78 : vector<8x256xf32> to vector<1x8x256xf32>
    tpu.vector_store %arg17[%c1_32, %c0_33, %c0_34], %81 {strides = array<i32>} : memref<8x8x256xf32, #tpu.memory_space<vmem>>, vector<1x8x256xf32>,
    %c2 = arith.constant 2 : index
    %c0_35 = arith.constant 0 : index
    %c0_36 = arith.constant 0 : index
    %82 = vector.load %arg15[%c2, %c0_35, %c0_36] : memref<8x8x1024xf32, #tpu.memory_space<vmem>>, vector<1x8x1024xf32>
    %83 = vector.shape_cast %82 : vector<1x8x1024xf32> to vector<8x1024xf32>
    %84 = arith.truncf %78 : vector<8x256xf32> to vector<8x256xbf16>
    %cst_37 = arith.constant dense<0.000000e+00> : vector<8x1024xf32>
    %85 = tpu.matmul %84, %13, %cst_37 {dimension_numbers = #tpu.dot_dimension_numbers<[1], [0], [0], [1], [0, 0, 1, 1], [], []>} : vector<8x256xbf16>, vector<256x1024xbf16>, vector<8x1024xf32> -> vector<8x1024xf32>
    %86 = arith.addf %83, %85 : vector<8x1024xf32>
    %87 = vector.extract_strided_slice %86 {offsets = [0, 0], sizes = [8, 256], strides = [1, 1]} : vector<8x1024xf32> to vector<8x256xf32>
    %88 = arith.negf %87 : vector<8x256xf32>
    %89 = math.exp %88 : vector<8x256xf32>
    %cst_38 = arith.constant 1.000000e+00 : f32
    %90 = vector.broadcast %cst_38 : f32 to vector<8x256xf32>
    %91 = arith.addf %90, %89 : vector<8x256xf32>
    %92 = arith.divf %90, %91 : vector<8x256xf32>
    %93 = vector.extract_strided_slice %86 {offsets = [0, 256], sizes = [8, 256], strides = [1, 1]} : vector<8x1024xf32> to vector<8x256xf32>
    %94 = arith.negf %93 : vector<8x256xf32>
    %95 = math.exp %94 : vector<8x256xf32>
    %cst_39 = arith.constant 1.000000e+00 : f32
    %96 = vector.broadcast %cst_39 : f32 to vector<8x256xf32>
    %97 = arith.addf %96, %95 : vector<8x256xf32>
    %98 = arith.divf %96, %97 : vector<8x256xf32>
    %99 = vector.extract_strided_slice %86 {offsets = [0, 512], sizes = [8, 256], strides = [1, 1]} : vector<8x1024xf32> to vector<8x256xf32>
    %100 = math.tanh %99 : vector<8x256xf32>
    %101 = vector.extract_strided_slice %86 {offsets = [0, 768], sizes = [8, 256], strides = [1, 1]} : vector<8x1024xf32> to vector<8x256xf32>
    %102 = arith.negf %101 : vector<8x256xf32>
    %103 = math.exp %102 : vector<8x256xf32>
    %cst_40 = arith.constant 1.000000e+00 : f32
    %104 = vector.broadcast %cst_40 : f32 to vector<8x256xf32>
    %105 = arith.addf %104, %103 : vector<8x256xf32>
    %106 = arith.divf %104, %105 : vector<8x256xf32>
    %107 = arith.mulf %98, %76 : vector<8x256xf32>
    %108 = arith.mulf %92, %100 : vector<8x256xf32>
    %109 = arith.addf %107, %108 : vector<8x256xf32>
    %110 = math.tanh %109 : vector<8x256xf32>
    %111 = arith.mulf %106, %110 : vector<8x256xf32>
    %c2_41 = arith.constant 2 : index
    %c0_42 = arith.constant 0 : index
    %c0_43 = arith.constant 0 : index
    %112 = vector.load %arg17[%c2_41, %c0_42, %c0_43] : memref<8x8x256xf32, #tpu.memory_space<vmem>>, vector<1x8x256xf32>
    %113 = vector.shape_cast %112 : vector<1x8x256xf32> to vector<8x256xf32>
    %114 = vector.shape_cast %111 : vector<8x256xf32> to vector<1x8x256xf32>
    tpu.vector_store %arg17[%c2_41, %c0_42, %c0_43], %114 {strides = array<i32>} : memref<8x8x256xf32, #tpu.memory_space<vmem>>, vector<1x8x256xf32>,
    %c3 = arith.constant 3 : index
    %c0_44 = arith.constant 0 : index
    %c0_45 = arith.constant 0 : index
    %115 = vector.load %arg15[%c3, %c0_44, %c0_45] : memref<8x8x1024xf32, #tpu.memory_space<vmem>>, vector<1x8x1024xf32>
    %116 = vector.shape_cast %115 : vector<1x8x1024xf32> to vector<8x1024xf32>
    %117 = arith.truncf %111 : vector<8x256xf32> to vector<8x256xbf16>
    %cst_46 = arith.constant dense<0.000000e+00> : vector<8x1024xf32>
    %118 = tpu.matmul %117, %13, %cst_46 {dimension_numbers = #tpu.dot_dimension_numbers<[1], [0], [0], [1], [0, 0, 1, 1], [], []>} : vector<8x256xbf16>, vector<256x1024xbf16>, vector<8x1024xf32> -> vector<8x1024xf32>
    %119 = arith.addf %116, %118 : vector<8x1024xf32>
    %120 = vector.extract_strided_slice %119 {offsets = [0, 0], sizes = [8, 256], strides = [1, 1]} : vector<8x1024xf32> to vector<8x256xf32>
    %121 = arith.negf %120 : vector<8x256xf32>
    %122 = math.exp %121 : vector<8x256xf32>
    %cst_47 = arith.constant 1.000000e+00 : f32
    %123 = vector.broadcast %cst_47 : f32 to vector<8x256xf32>
    %124 = arith.addf %123, %122 : vector<8x256xf32>
    %125 = arith.divf %123, %124 : vector<8x256xf32>
    %126 = vector.extract_strided_slice %119 {offsets = [0, 256], sizes = [8, 256], strides = [1, 1]} : vector<8x1024xf32> to vector<8x256xf32>
    %127 = arith.negf %126 : vector<8x256xf32>
    %128 = math.exp %127 : vector<8x256xf32>
    %cst_48 = arith.constant 1.000000e+00 : f32
    %129 = vector.broadcast %cst_48 : f32 to vector<8x256xf32>
    %130 = arith.addf %129, %128 : vector<8x256xf32>
    %131 = arith.divf %129, %130 : vector<8x256xf32>
    %132 = vector.extract_strided_slice %119 {offsets = [0, 512], sizes = [8, 256], strides = [1, 1]} : vector<8x1024xf32> to vector<8x256xf32>
    %133 = math.tanh %132 : vector<8x256xf32>
    %134 = vector.extract_strided_slice %119 {offsets = [0, 768], sizes = [8, 256], strides = [1, 1]} : vector<8x1024xf32> to vector<8x256xf32>
    %135 = arith.negf %134 : vector<8x256xf32>
    %136 = math.exp %135 : vector<8x256xf32>
    %cst_49 = arith.constant 1.000000e+00 : f32
    %137 = vector.broadcast %cst_49 : f32 to vector<8x256xf32>
    %138 = arith.addf %137, %136 : vector<8x256xf32>
    %139 = arith.divf %137, %138 : vector<8x256xf32>
    %140 = arith.mulf %131, %109 : vector<8x256xf32>
    %141 = arith.mulf %125, %133 : vector<8x256xf32>
    %142 = arith.addf %140, %141 : vector<8x256xf32>
    %143 = math.tanh %142 : vector<8x256xf32>
    %144 = arith.mulf %139, %143 : vector<8x256xf32>
    %c3_50 = arith.constant 3 : index
    %c0_51 = arith.constant 0 : index
    %c0_52 = arith.constant 0 : index
    %145 = vector.load %arg17[%c3_50, %c0_51, %c0_52] : memref<8x8x256xf32, #tpu.memory_space<vmem>>, vector<1x8x256xf32>
    %146 = vector.shape_cast %145 : vector<1x8x256xf32> to vector<8x256xf32>
    %147 = vector.shape_cast %144 : vector<8x256xf32> to vector<1x8x256xf32>
    tpu.vector_store %arg17[%c3_50, %c0_51, %c0_52], %147 {strides = array<i32>} : memref<8x8x256xf32, #tpu.memory_space<vmem>>, vector<1x8x256xf32>,
    %c4 = arith.constant 4 : index
    %c0_53 = arith.constant 0 : index
    %c0_54 = arith.constant 0 : index
    %148 = vector.load %arg15[%c4, %c0_53, %c0_54] : memref<8x8x1024xf32, #tpu.memory_space<vmem>>, vector<1x8x1024xf32>
    %149 = vector.shape_cast %148 : vector<1x8x1024xf32> to vector<8x1024xf32>
    %150 = arith.truncf %144 : vector<8x256xf32> to vector<8x256xbf16>
    %cst_55 = arith.constant dense<0.000000e+00> : vector<8x1024xf32>
    %151 = tpu.matmul %150, %13, %cst_55 {dimension_numbers = #tpu.dot_dimension_numbers<[1], [0], [0], [1], [0, 0, 1, 1], [], []>} : vector<8x256xbf16>, vector<256x1024xbf16>, vector<8x1024xf32> -> vector<8x1024xf32>
    %152 = arith.addf %149, %151 : vector<8x1024xf32>
    %153 = vector.extract_strided_slice %152 {offsets = [0, 0], sizes = [8, 256], strides = [1, 1]} : vector<8x1024xf32> to vector<8x256xf32>
    %154 = arith.negf %153 : vector<8x256xf32>
    %155 = math.exp %154 : vector<8x256xf32>
    %cst_56 = arith.constant 1.000000e+00 : f32
    %156 = vector.broadcast %cst_56 : f32 to vector<8x256xf32>
    %157 = arith.addf %156, %155 : vector<8x256xf32>
    %158 = arith.divf %156, %157 : vector<8x256xf32>
    %159 = vector.extract_strided_slice %152 {offsets = [0, 256], sizes = [8, 256], strides = [1, 1]} : vector<8x1024xf32> to vector<8x256xf32>
    %160 = arith.negf %159 : vector<8x256xf32>
    %161 = math.exp %160 : vector<8x256xf32>
    %cst_57 = arith.constant 1.000000e+00 : f32
    %162 = vector.broadcast %cst_57 : f32 to vector<8x256xf32>
    %163 = arith.addf %162, %161 : vector<8x256xf32>
    %164 = arith.divf %162, %163 : vector<8x256xf32>
    %165 = vector.extract_strided_slice %152 {offsets = [0, 512], sizes = [8, 256], strides = [1, 1]} : vector<8x1024xf32> to vector<8x256xf32>
    %166 = math.tanh %165 : vector<8x256xf32>
    %167 = vector.extract_strided_slice %152 {offsets = [0, 768], sizes = [8, 256], strides = [1, 1]} : vector<8x1024xf32> to vector<8x256xf32>
    %168 = arith.negf %167 : vector<8x256xf32>
    %169 = math.exp %168 : vector<8x256xf32>
    %cst_58 = arith.constant 1.000000e+00 : f32
    %170 = vector.broadcast %cst_58 : f32 to vector<8x256xf32>
    %171 = arith.addf %170, %169 : vector<8x256xf32>
    %172 = arith.divf %170, %171 : vector<8x256xf32>
    %173 = arith.mulf %164, %142 : vector<8x256xf32>
    %174 = arith.mulf %158, %166 : vector<8x256xf32>
    %175 = arith.addf %173, %174 : vector<8x256xf32>
    %176 = math.tanh %175 : vector<8x256xf32>
    %177 = arith.mulf %172, %176 : vector<8x256xf32>
    %c4_59 = arith.constant 4 : index
    %c0_60 = arith.constant 0 : index
    %c0_61 = arith.constant 0 : index
    %178 = vector.load %arg17[%c4_59, %c0_60, %c0_61] : memref<8x8x256xf32, #tpu.memory_space<vmem>>, vector<1x8x256xf32>
    %179 = vector.shape_cast %178 : vector<1x8x256xf32> to vector<8x256xf32>
    %180 = vector.shape_cast %177 : vector<8x256xf32> to vector<1x8x256xf32>
    tpu.vector_store %arg17[%c4_59, %c0_60, %c0_61], %180 {strides = array<i32>} : memref<8x8x256xf32, #tpu.memory_space<vmem>>, vector<1x8x256xf32>,
    %c5 = arith.constant 5 : index
    %c0_62 = arith.constant 0 : index
    %c0_63 = arith.constant 0 : index
    %181 = vector.load %arg15[%c5, %c0_62, %c0_63] : memref<8x8x1024xf32, #tpu.memory_space<vmem>>, vector<1x8x1024xf32>
    %182 = vector.shape_cast %181 : vector<1x8x1024xf32> to vector<8x1024xf32>
    %183 = arith.truncf %177 : vector<8x256xf32> to vector<8x256xbf16>
    %cst_64 = arith.constant dense<0.000000e+00> : vector<8x1024xf32>
    %184 = tpu.matmul %183, %13, %cst_64 {dimension_numbers = #tpu.dot_dimension_numbers<[1], [0], [0], [1], [0, 0, 1, 1], [], []>} : vector<8x256xbf16>, vector<256x1024xbf16>, vector<8x1024xf32> -> vector<8x1024xf32>
    %185 = arith.addf %182, %184 : vector<8x1024xf32>
    %186 = vector.extract_strided_slice %185 {offsets = [0, 0], sizes = [8, 256], strides = [1, 1]} : vector<8x1024xf32> to vector<8x256xf32>
    %187 = arith.negf %186 : vector<8x256xf32>
    %188 = math.exp %187 : vector<8x256xf32>
    %cst_65 = arith.constant 1.000000e+00 : f32
    %189 = vector.broadcast %cst_65 : f32 to vector<8x256xf32>
    %190 = arith.addf %189, %188 : vector<8x256xf32>
    %191 = arith.divf %189, %190 : vector<8x256xf32>
    %192 = vector.extract_strided_slice %185 {offsets = [0, 256], sizes = [8, 256], strides = [1, 1]} : vector<8x1024xf32> to vector<8x256xf32>
    %193 = arith.negf %192 : vector<8x256xf32>
    %194 = math.exp %193 : vector<8x256xf32>
    %cst_66 = arith.constant 1.000000e+00 : f32
    %195 = vector.broadcast %cst_66 : f32 to vector<8x256xf32>
    %196 = arith.addf %195, %194 : vector<8x256xf32>
    %197 = arith.divf %195, %196 : vector<8x256xf32>
    %198 = vector.extract_strided_slice %185 {offsets = [0, 512], sizes = [8, 256], strides = [1, 1]} : vector<8x1024xf32> to vector<8x256xf32>
    %199 = math.tanh %198 : vector<8x256xf32>
    %200 = vector.extract_strided_slice %185 {offsets = [0, 768], sizes = [8, 256], strides = [1, 1]} : vector<8x1024xf32> to vector<8x256xf32>
    %201 = arith.negf %200 : vector<8x256xf32>
    %202 = math.exp %201 : vector<8x256xf32>
    %cst_67 = arith.constant 1.000000e+00 : f32
    %203 = vector.broadcast %cst_67 : f32 to vector<8x256xf32>
    %204 = arith.addf %203, %202 : vector<8x256xf32>
    %205 = arith.divf %203, %204 : vector<8x256xf32>
    %206 = arith.mulf %197, %175 : vector<8x256xf32>
    %207 = arith.mulf %191, %199 : vector<8x256xf32>
    %208 = arith.addf %206, %207 : vector<8x256xf32>
    %209 = math.tanh %208 : vector<8x256xf32>
    %210 = arith.mulf %205, %209 : vector<8x256xf32>
    %c5_68 = arith.constant 5 : index
    %c0_69 = arith.constant 0 : index
    %c0_70 = arith.constant 0 : index
    %211 = vector.load %arg17[%c5_68, %c0_69, %c0_70] : memref<8x8x256xf32, #tpu.memory_space<vmem>>, vector<1x8x256xf32>
    %212 = vector.shape_cast %211 : vector<1x8x256xf32> to vector<8x256xf32>
    %213 = vector.shape_cast %210 : vector<8x256xf32> to vector<1x8x256xf32>
    tpu.vector_store %arg17[%c5_68, %c0_69, %c0_70], %213 {strides = array<i32>} : memref<8x8x256xf32, #tpu.memory_space<vmem>>, vector<1x8x256xf32>,
    %c6 = arith.constant 6 : index
    %c0_71 = arith.constant 0 : index
    %c0_72 = arith.constant 0 : index
    %214 = vector.load %arg15[%c6, %c0_71, %c0_72] : memref<8x8x1024xf32, #tpu.memory_space<vmem>>, vector<1x8x1024xf32>
    %215 = vector.shape_cast %214 : vector<1x8x1024xf32> to vector<8x1024xf32>
    %216 = arith.truncf %210 : vector<8x256xf32> to vector<8x256xbf16>
    %cst_73 = arith.constant dense<0.000000e+00> : vector<8x1024xf32>
    %217 = tpu.matmul %216, %13, %cst_73 {dimension_numbers = #tpu.dot_dimension_numbers<[1], [0], [0], [1], [0, 0, 1, 1], [], []>} : vector<8x256xbf16>, vector<256x1024xbf16>, vector<8x1024xf32> -> vector<8x1024xf32>
    %218 = arith.addf %215, %217 : vector<8x1024xf32>
    %219 = vector.extract_strided_slice %218 {offsets = [0, 0], sizes = [8, 256], strides = [1, 1]} : vector<8x1024xf32> to vector<8x256xf32>
    %220 = arith.negf %219 : vector<8x256xf32>
    %221 = math.exp %220 : vector<8x256xf32>
    %cst_74 = arith.constant 1.000000e+00 : f32
    %222 = vector.broadcast %cst_74 : f32 to vector<8x256xf32>
    %223 = arith.addf %222, %221 : vector<8x256xf32>
    %224 = arith.divf %222, %223 : vector<8x256xf32>
    %225 = vector.extract_strided_slice %218 {offsets = [0, 256], sizes = [8, 256], strides = [1, 1]} : vector<8x1024xf32> to vector<8x256xf32>
    %226 = arith.negf %225 : vector<8x256xf32>
    %227 = math.exp %226 : vector<8x256xf32>
    %cst_75 = arith.constant 1.000000e+00 : f32
    %228 = vector.broadcast %cst_75 : f32 to vector<8x256xf32>
    %229 = arith.addf %228, %227 : vector<8x256xf32>
    %230 = arith.divf %228, %229 : vector<8x256xf32>
    %231 = vector.extract_strided_slice %218 {offsets = [0, 512], sizes = [8, 256], strides = [1, 1]} : vector<8x1024xf32> to vector<8x256xf32>
    %232 = math.tanh %231 : vector<8x256xf32>
    %233 = vector.extract_strided_slice %218 {offsets = [0, 768], sizes = [8, 256], strides = [1, 1]} : vector<8x1024xf32> to vector<8x256xf32>
    %234 = arith.negf %233 : vector<8x256xf32>
    %235 = math.exp %234 : vector<8x256xf32>
    %cst_76 = arith.constant 1.000000e+00 : f32
    %236 = vector.broadcast %cst_76 : f32 to vector<8x256xf32>
    %237 = arith.addf %236, %235 : vector<8x256xf32>
    %238 = arith.divf %236, %237 : vector<8x256xf32>
    %239 = arith.mulf %230, %208 : vector<8x256xf32>
    %240 = arith.mulf %224, %232 : vector<8x256xf32>
    %241 = arith.addf %239, %240 : vector<8x256xf32>
    %242 = math.tanh %241 : vector<8x256xf32>
    %243 = arith.mulf %238, %242 : vector<8x256xf32>
    %c6_77 = arith.constant 6 : index
    %c0_78 = arith.constant 0 : index
    %c0_79 = arith.constant 0 : index
    %244 = vector.load %arg17[%c6_77, %c0_78, %c0_79] : memref<8x8x256xf32, #tpu.memory_space<vmem>>, vector<1x8x256xf32>
    %245 = vector.shape_cast %244 : vector<1x8x256xf32> to vector<8x256xf32>
    %246 = vector.shape_cast %243 : vector<8x256xf32> to vector<1x8x256xf32>
    tpu.vector_store %arg17[%c6_77, %c0_78, %c0_79], %246 {strides = array<i32>} : memref<8x8x256xf32, #tpu.memory_space<vmem>>, vector<1x8x256xf32>,
    %c7 = arith.constant 7 : index
    %c0_80 = arith.constant 0 : index
    %c0_81 = arith.constant 0 : index
    %247 = vector.load %arg15[%c7, %c0_80, %c0_81] : memref<8x8x1024xf32, #tpu.memory_space<vmem>>, vector<1x8x1024xf32>
    %248 = vector.shape_cast %247 : vector<1x8x1024xf32> to vector<8x1024xf32>
    %249 = arith.truncf %243 : vector<8x256xf32> to vector<8x256xbf16>
    %cst_82 = arith.constant dense<0.000000e+00> : vector<8x1024xf32>
    %250 = tpu.matmul %249, %13, %cst_82 {dimension_numbers = #tpu.dot_dimension_numbers<[1], [0], [0], [1], [0, 0, 1, 1], [], []>} : vector<8x256xbf16>, vector<256x1024xbf16>, vector<8x1024xf32> -> vector<8x1024xf32>
    %251 = arith.addf %248, %250 : vector<8x1024xf32>
    %252 = vector.extract_strided_slice %251 {offsets = [0, 0], sizes = [8, 256], strides = [1, 1]} : vector<8x1024xf32> to vector<8x256xf32>
    %253 = arith.negf %252 : vector<8x256xf32>
    %254 = math.exp %253 : vector<8x256xf32>
    %cst_83 = arith.constant 1.000000e+00 : f32
    %255 = vector.broadcast %cst_83 : f32 to vector<8x256xf32>
    %256 = arith.addf %255, %254 : vector<8x256xf32>
    %257 = arith.divf %255, %256 : vector<8x256xf32>
    %258 = vector.extract_strided_slice %251 {offsets = [0, 256], sizes = [8, 256], strides = [1, 1]} : vector<8x1024xf32> to vector<8x256xf32>
    %259 = arith.negf %258 : vector<8x256xf32>
    %260 = math.exp %259 : vector<8x256xf32>
    %cst_84 = arith.constant 1.000000e+00 : f32
    %261 = vector.broadcast %cst_84 : f32 to vector<8x256xf32>
    %262 = arith.addf %261, %260 : vector<8x256xf32>
    %263 = arith.divf %261, %262 : vector<8x256xf32>
    %264 = vector.extract_strided_slice %251 {offsets = [0, 512], sizes = [8, 256], strides = [1, 1]} : vector<8x1024xf32> to vector<8x256xf32>
    %265 = math.tanh %264 : vector<8x256xf32>
    %266 = vector.extract_strided_slice %251 {offsets = [0, 768], sizes = [8, 256], strides = [1, 1]} : vector<8x1024xf32> to vector<8x256xf32>
    %267 = arith.negf %266 : vector<8x256xf32>
    %268 = math.exp %267 : vector<8x256xf32>
    %cst_85 = arith.constant 1.000000e+00 : f32
    %269 = vector.broadcast %cst_85 : f32 to vector<8x256xf32>
    %270 = arith.addf %269, %268 : vector<8x256xf32>
    %271 = arith.divf %269, %270 : vector<8x256xf32>
    %272 = arith.mulf %263, %241 : vector<8x256xf32>
    %273 = arith.mulf %257, %265 : vector<8x256xf32>
    %274 = arith.addf %272, %273 : vector<8x256xf32>
    %275 = math.tanh %274 : vector<8x256xf32>
    %276 = arith.mulf %271, %275 : vector<8x256xf32>
    %c7_86 = arith.constant 7 : index
    %c0_87 = arith.constant 0 : index
    %c0_88 = arith.constant 0 : index
    %277 = vector.load %arg17[%c7_86, %c0_87, %c0_88] : memref<8x8x256xf32, #tpu.memory_space<vmem>>, vector<1x8x256xf32>
    %278 = vector.shape_cast %277 : vector<1x8x256xf32> to vector<8x256xf32>
    %279 = vector.shape_cast %276 : vector<8x256xf32> to vector<1x8x256xf32>
    tpu.vector_store %arg17[%c7_86, %c0_87, %c0_88], %279 {strides = array<i32>} : memref<8x8x256xf32, #tpu.memory_space<vmem>>, vector<1x8x256xf32>,
    %c0_89 = arith.constant 0 : index
    %c0_90 = arith.constant 0 : index
    %280 = vector.load %arg4[%c0_89, %c0_90] : memref<256x1024xbf16, #tpu.memory_space<vmem>>, vector<256x1024xbf16>
    %cst_91 = arith.constant 0.000000e+00 : f32
    %281 = vector.broadcast %cst_91 : f32 to vector<8x256xf32>
    %cst_92 = arith.constant 0.000000e+00 : f32
    %282 = vector.broadcast %cst_92 : f32 to vector<8x256xf32>
    %c7_93 = arith.constant 7 : index
    %c0_94 = arith.constant 0 : index
    %c0_95 = arith.constant 0 : index
    %283 = vector.load %arg16[%c7_93, %c0_94, %c0_95] : memref<8x8x1024xf32, #tpu.memory_space<vmem>>, vector<1x8x1024xf32>
    %284 = vector.shape_cast %283 : vector<1x8x1024xf32> to vector<8x1024xf32>
    %285 = arith.truncf %281 : vector<8x256xf32> to vector<8x256xbf16>
    %cst_96 = arith.constant dense<0.000000e+00> : vector<8x1024xf32>
    %286 = tpu.matmul %285, %280, %cst_96 {dimension_numbers = #tpu.dot_dimension_numbers<[1], [0], [0], [1], [0, 0, 1, 1], [], []>} : vector<8x256xbf16>, vector<256x1024xbf16>, vector<8x1024xf32> -> vector<8x1024xf32>
    %287 = arith.addf %284, %286 : vector<8x1024xf32>
    %288 = vector.extract_strided_slice %287 {offsets = [0, 0], sizes = [8, 256], strides = [1, 1]} : vector<8x1024xf32> to vector<8x256xf32>
    %289 = arith.negf %288 : vector<8x256xf32>
    %290 = math.exp %289 : vector<8x256xf32>
    %cst_97 = arith.constant 1.000000e+00 : f32
    %291 = vector.broadcast %cst_97 : f32 to vector<8x256xf32>
    %292 = arith.addf %291, %290 : vector<8x256xf32>
    %293 = arith.divf %291, %292 : vector<8x256xf32>
    %294 = vector.extract_strided_slice %287 {offsets = [0, 256], sizes = [8, 256], strides = [1, 1]} : vector<8x1024xf32> to vector<8x256xf32>
    %295 = arith.negf %294 : vector<8x256xf32>
    %296 = math.exp %295 : vector<8x256xf32>
    %cst_98 = arith.constant 1.000000e+00 : f32
    %297 = vector.broadcast %cst_98 : f32 to vector<8x256xf32>
    %298 = arith.addf %297, %296 : vector<8x256xf32>
    %299 = arith.divf %297, %298 : vector<8x256xf32>
    %300 = vector.extract_strided_slice %287 {offsets = [0, 512], sizes = [8, 256], strides = [1, 1]} : vector<8x1024xf32> to vector<8x256xf32>
    %301 = math.tanh %300 : vector<8x256xf32>
    %302 = vector.extract_strided_slice %287 {offsets = [0, 768], sizes = [8, 256], strides = [1, 1]} : vector<8x1024xf32> to vector<8x256xf32>
    %303 = arith.negf %302 : vector<8x256xf32>
    %304 = math.exp %303 : vector<8x256xf32>
    %cst_99 = arith.constant 1.000000e+00 : f32
    %305 = vector.broadcast %cst_99 : f32 to vector<8x256xf32>
    %306 = arith.addf %305, %304 : vector<8x256xf32>
    %307 = arith.divf %305, %306 : vector<8x256xf32>
    %308 = arith.mulf %299, %282 : vector<8x256xf32>
    %309 = arith.mulf %293, %301 : vector<8x256xf32>
    %310 = arith.addf %308, %309 : vector<8x256xf32>
    %311 = math.tanh %310 : vector<8x256xf32>
    %312 = arith.mulf %307, %311 : vector<8x256xf32>
    %c7_100 = arith.constant 7 : index
    %c0_101 = arith.constant 0 : index
    %c0_102 = arith.constant 0 : index
    %313 = vector.load %arg18[%c7_100, %c0_101, %c0_102] : memref<8x8x256xf32, #tpu.memory_space<vmem>>, vector<1x8x256xf32>
    %314 = vector.shape_cast %313 : vector<1x8x256xf32> to vector<8x256xf32>
    %315 = vector.shape_cast %312 : vector<8x256xf32> to vector<1x8x256xf32>
    tpu.vector_store %arg18[%c7_100, %c0_101, %c0_102], %315 {strides = array<i32>} : memref<8x8x256xf32, #tpu.memory_space<vmem>>, vector<1x8x256xf32>,
    %c6_103 = arith.constant 6 : index
    %c0_104 = arith.constant 0 : index
    %c0_105 = arith.constant 0 : index
    %316 = vector.load %arg16[%c6_103, %c0_104, %c0_105] : memref<8x8x1024xf32, #tpu.memory_space<vmem>>, vector<1x8x1024xf32>
    %317 = vector.shape_cast %316 : vector<1x8x1024xf32> to vector<8x1024xf32>
    %318 = arith.truncf %312 : vector<8x256xf32> to vector<8x256xbf16>
    %cst_106 = arith.constant dense<0.000000e+00> : vector<8x1024xf32>
    %319 = tpu.matmul %318, %280, %cst_106 {dimension_numbers = #tpu.dot_dimension_numbers<[1], [0], [0], [1], [0, 0, 1, 1], [], []>} : vector<8x256xbf16>, vector<256x1024xbf16>, vector<8x1024xf32> -> vector<8x1024xf32>
    %320 = arith.addf %317, %319 : vector<8x1024xf32>
    %321 = vector.extract_strided_slice %320 {offsets = [0, 0], sizes = [8, 256], strides = [1, 1]} : vector<8x1024xf32> to vector<8x256xf32>
    %322 = arith.negf %321 : vector<8x256xf32>
    %323 = math.exp %322 : vector<8x256xf32>
    %cst_107 = arith.constant 1.000000e+00 : f32
    %324 = vector.broadcast %cst_107 : f32 to vector<8x256xf32>
    %325 = arith.addf %324, %323 : vector<8x256xf32>
    %326 = arith.divf %324, %325 : vector<8x256xf32>
    %327 = vector.extract_strided_slice %320 {offsets = [0, 256], sizes = [8, 256], strides = [1, 1]} : vector<8x1024xf32> to vector<8x256xf32>
    %328 = arith.negf %327 : vector<8x256xf32>
    %329 = math.exp %328 : vector<8x256xf32>
    %cst_108 = arith.constant 1.000000e+00 : f32
    %330 = vector.broadcast %cst_108 : f32 to vector<8x256xf32>
    %331 = arith.addf %330, %329 : vector<8x256xf32>
    %332 = arith.divf %330, %331 : vector<8x256xf32>
    %333 = vector.extract_strided_slice %320 {offsets = [0, 512], sizes = [8, 256], strides = [1, 1]} : vector<8x1024xf32> to vector<8x256xf32>
    %334 = math.tanh %333 : vector<8x256xf32>
    %335 = vector.extract_strided_slice %320 {offsets = [0, 768], sizes = [8, 256], strides = [1, 1]} : vector<8x1024xf32> to vector<8x256xf32>
    %336 = arith.negf %335 : vector<8x256xf32>
    %337 = math.exp %336 : vector<8x256xf32>
    %cst_109 = arith.constant 1.000000e+00 : f32
    %338 = vector.broadcast %cst_109 : f32 to vector<8x256xf32>
    %339 = arith.addf %338, %337 : vector<8x256xf32>
    %340 = arith.divf %338, %339 : vector<8x256xf32>
    %341 = arith.mulf %332, %310 : vector<8x256xf32>
    %342 = arith.mulf %326, %334 : vector<8x256xf32>
    %343 = arith.addf %341, %342 : vector<8x256xf32>
    %344 = math.tanh %343 : vector<8x256xf32>
    %345 = arith.mulf %340, %344 : vector<8x256xf32>
    %c6_110 = arith.constant 6 : index
    %c0_111 = arith.constant 0 : index
    %c0_112 = arith.constant 0 : index
    %346 = vector.load %arg18[%c6_110, %c0_111, %c0_112] : memref<8x8x256xf32, #tpu.memory_space<vmem>>, vector<1x8x256xf32>
    %347 = vector.shape_cast %346 : vector<1x8x256xf32> to vector<8x256xf32>
    %348 = vector.shape_cast %345 : vector<8x256xf32> to vector<1x8x256xf32>
    tpu.vector_store %arg18[%c6_110, %c0_111, %c0_112], %348 {strides = array<i32>} : memref<8x8x256xf32, #tpu.memory_space<vmem>>, vector<1x8x256xf32>,
    %c5_113 = arith.constant 5 : index
    %c0_114 = arith.constant 0 : index
    %c0_115 = arith.constant 0 : index
    %349 = vector.load %arg16[%c5_113, %c0_114, %c0_115] : memref<8x8x1024xf32, #tpu.memory_space<vmem>>, vector<1x8x1024xf32>
    %350 = vector.shape_cast %349 : vector<1x8x1024xf32> to vector<8x1024xf32>
    %351 = arith.truncf %345 : vector<8x256xf32> to vector<8x256xbf16>
    %cst_116 = arith.constant dense<0.000000e+00> : vector<8x1024xf32>
    %352 = tpu.matmul %351, %280, %cst_116 {dimension_numbers = #tpu.dot_dimension_numbers<[1], [0], [0], [1], [0, 0, 1, 1], [], []>} : vector<8x256xbf16>, vector<256x1024xbf16>, vector<8x1024xf32> -> vector<8x1024xf32>
    %353 = arith.addf %350, %352 : vector<8x1024xf32>
    %354 = vector.extract_strided_slice %353 {offsets = [0, 0], sizes = [8, 256], strides = [1, 1]} : vector<8x1024xf32> to vector<8x256xf32>
    %355 = arith.negf %354 : vector<8x256xf32>
    %356 = math.exp %355 : vector<8x256xf32>
    %cst_117 = arith.constant 1.000000e+00 : f32
    %357 = vector.broadcast %cst_117 : f32 to vector<8x256xf32>
    %358 = arith.addf %357, %356 : vector<8x256xf32>
    %359 = arith.divf %357, %358 : vector<8x256xf32>
    %360 = vector.extract_strided_slice %353 {offsets = [0, 256], sizes = [8, 256], strides = [1, 1]} : vector<8x1024xf32> to vector<8x256xf32>
    %361 = arith.negf %360 : vector<8x256xf32>
    %362 = math.exp %361 : vector<8x256xf32>
    %cst_118 = arith.constant 1.000000e+00 : f32
    %363 = vector.broadcast %cst_118 : f32 to vector<8x256xf32>
    %364 = arith.addf %363, %362 : vector<8x256xf32>
    %365 = arith.divf %363, %364 : vector<8x256xf32>
    %366 = vector.extract_strided_slice %353 {offsets = [0, 512], sizes = [8, 256], strides = [1, 1]} : vector<8x1024xf32> to vector<8x256xf32>
    %367 = math.tanh %366 : vector<8x256xf32>
    %368 = vector.extract_strided_slice %353 {offsets = [0, 768], sizes = [8, 256], strides = [1, 1]} : vector<8x1024xf32> to vector<8x256xf32>
    %369 = arith.negf %368 : vector<8x256xf32>
    %370 = math.exp %369 : vector<8x256xf32>
    %cst_119 = arith.constant 1.000000e+00 : f32
    %371 = vector.broadcast %cst_119 : f32 to vector<8x256xf32>
    %372 = arith.addf %371, %370 : vector<8x256xf32>
    %373 = arith.divf %371, %372 : vector<8x256xf32>
    %374 = arith.mulf %365, %343 : vector<8x256xf32>
    %375 = arith.mulf %359, %367 : vector<8x256xf32>
    %376 = arith.addf %374, %375 : vector<8x256xf32>
    %377 = math.tanh %376 : vector<8x256xf32>
    %378 = arith.mulf %373, %377 : vector<8x256xf32>
    %c5_120 = arith.constant 5 : index
    %c0_121 = arith.constant 0 : index
    %c0_122 = arith.constant 0 : index
    %379 = vector.load %arg18[%c5_120, %c0_121, %c0_122] : memref<8x8x256xf32, #tpu.memory_space<vmem>>, vector<1x8x256xf32>
    %380 = vector.shape_cast %379 : vector<1x8x256xf32> to vector<8x256xf32>
    %381 = vector.shape_cast %378 : vector<8x256xf32> to vector<1x8x256xf32>
    tpu.vector_store %arg18[%c5_120, %c0_121, %c0_122], %381 {strides = array<i32>} : memref<8x8x256xf32, #tpu.memory_space<vmem>>, vector<1x8x256xf32>,
    %c4_123 = arith.constant 4 : index
    %c0_124 = arith.constant 0 : index
    %c0_125 = arith.constant 0 : index
    %382 = vector.load %arg16[%c4_123, %c0_124, %c0_125] : memref<8x8x1024xf32, #tpu.memory_space<vmem>>, vector<1x8x1024xf32>
    %383 = vector.shape_cast %382 : vector<1x8x1024xf32> to vector<8x1024xf32>
    %384 = arith.truncf %378 : vector<8x256xf32> to vector<8x256xbf16>
    %cst_126 = arith.constant dense<0.000000e+00> : vector<8x1024xf32>
    %385 = tpu.matmul %384, %280, %cst_126 {dimension_numbers = #tpu.dot_dimension_numbers<[1], [0], [0], [1], [0, 0, 1, 1], [], []>} : vector<8x256xbf16>, vector<256x1024xbf16>, vector<8x1024xf32> -> vector<8x1024xf32>
    %386 = arith.addf %383, %385 : vector<8x1024xf32>
    %387 = vector.extract_strided_slice %386 {offsets = [0, 0], sizes = [8, 256], strides = [1, 1]} : vector<8x1024xf32> to vector<8x256xf32>
    %388 = arith.negf %387 : vector<8x256xf32>
    %389 = math.exp %388 : vector<8x256xf32>
    %cst_127 = arith.constant 1.000000e+00 : f32
    %390 = vector.broadcast %cst_127 : f32 to vector<8x256xf32>
    %391 = arith.addf %390, %389 : vector<8x256xf32>
    %392 = arith.divf %390, %391 : vector<8x256xf32>
    %393 = vector.extract_strided_slice %386 {offsets = [0, 256], sizes = [8, 256], strides = [1, 1]} : vector<8x1024xf32> to vector<8x256xf32>
    %394 = arith.negf %393 : vector<8x256xf32>
    %395 = math.exp %394 : vector<8x256xf32>
    %cst_128 = arith.constant 1.000000e+00 : f32
    %396 = vector.broadcast %cst_128 : f32 to vector<8x256xf32>
    %397 = arith.addf %396, %395 : vector<8x256xf32>
    %398 = arith.divf %396, %397 : vector<8x256xf32>
    %399 = vector.extract_strided_slice %386 {offsets = [0, 512], sizes = [8, 256], strides = [1, 1]} : vector<8x1024xf32> to vector<8x256xf32>
    %400 = math.tanh %399 : vector<8x256xf32>
    %401 = vector.extract_strided_slice %386 {offsets = [0, 768], sizes = [8, 256], strides = [1, 1]} : vector<8x1024xf32> to vector<8x256xf32>
    %402 = arith.negf %401 : vector<8x256xf32>
    %403 = math.exp %402 : vector<8x256xf32>
    %cst_129 = arith.constant 1.000000e+00 : f32
    %404 = vector.broadcast %cst_129 : f32 to vector<8x256xf32>
    %405 = arith.addf %404, %403 : vector<8x256xf32>
    %406 = arith.divf %404, %405 : vector<8x256xf32>
    %407 = arith.mulf %398, %376 : vector<8x256xf32>
    %408 = arith.mulf %392, %400 : vector<8x256xf32>
    %409 = arith.addf %407, %408 : vector<8x256xf32>
    %410 = math.tanh %409 : vector<8x256xf32>
    %411 = arith.mulf %406, %410 : vector<8x256xf32>
    %c4_130 = arith.constant 4 : index
    %c0_131 = arith.constant 0 : index
    %c0_132 = arith.constant 0 : index
    %412 = vector.load %arg18[%c4_130, %c0_131, %c0_132] : memref<8x8x256xf32, #tpu.memory_space<vmem>>, vector<1x8x256xf32>
    %413 = vector.shape_cast %412 : vector<1x8x256xf32> to vector<8x256xf32>
    %414 = vector.shape_cast %411 : vector<8x256xf32> to vector<1x8x256xf32>
    tpu.vector_store %arg18[%c4_130, %c0_131, %c0_132], %414 {strides = array<i32>} : memref<8x8x256xf32, #tpu.memory_space<vmem>>, vector<1x8x256xf32>,
    %c3_133 = arith.constant 3 : index
    %c0_134 = arith.constant 0 : index
    %c0_135 = arith.constant 0 : index
    %415 = vector.load %arg16[%c3_133, %c0_134, %c0_135] : memref<8x8x1024xf32, #tpu.memory_space<vmem>>, vector<1x8x1024xf32>
    %416 = vector.shape_cast %415 : vector<1x8x1024xf32> to vector<8x1024xf32>
    %417 = arith.truncf %411 : vector<8x256xf32> to vector<8x256xbf16>
    %cst_136 = arith.constant dense<0.000000e+00> : vector<8x1024xf32>
    %418 = tpu.matmul %417, %280, %cst_136 {dimension_numbers = #tpu.dot_dimension_numbers<[1], [0], [0], [1], [0, 0, 1, 1], [], []>} : vector<8x256xbf16>, vector<256x1024xbf16>, vector<8x1024xf32> -> vector<8x1024xf32>
    %419 = arith.addf %416, %418 : vector<8x1024xf32>
    %420 = vector.extract_strided_slice %419 {offsets = [0, 0], sizes = [8, 256], strides = [1, 1]} : vector<8x1024xf32> to vector<8x256xf32>
    %421 = arith.negf %420 : vector<8x256xf32>
    %422 = math.exp %421 : vector<8x256xf32>
    %cst_137 = arith.constant 1.000000e+00 : f32
    %423 = vector.broadcast %cst_137 : f32 to vector<8x256xf32>
    %424 = arith.addf %423, %422 : vector<8x256xf32>
    %425 = arith.divf %423, %424 : vector<8x256xf32>
    %426 = vector.extract_strided_slice %419 {offsets = [0, 256], sizes = [8, 256], strides = [1, 1]} : vector<8x1024xf32> to vector<8x256xf32>
    %427 = arith.negf %426 : vector<8x256xf32>
    %428 = math.exp %427 : vector<8x256xf32>
    %cst_138 = arith.constant 1.000000e+00 : f32
    %429 = vector.broadcast %cst_138 : f32 to vector<8x256xf32>
    %430 = arith.addf %429, %428 : vector<8x256xf32>
    %431 = arith.divf %429, %430 : vector<8x256xf32>
    %432 = vector.extract_strided_slice %419 {offsets = [0, 512], sizes = [8, 256], strides = [1, 1]} : vector<8x1024xf32> to vector<8x256xf32>
    %433 = math.tanh %432 : vector<8x256xf32>
    %434 = vector.extract_strided_slice %419 {offsets = [0, 768], sizes = [8, 256], strides = [1, 1]} : vector<8x1024xf32> to vector<8x256xf32>
    %435 = arith.negf %434 : vector<8x256xf32>
    %436 = math.exp %435 : vector<8x256xf32>
    %cst_139 = arith.constant 1.000000e+00 : f32
    %437 = vector.broadcast %cst_139 : f32 to vector<8x256xf32>
    %438 = arith.addf %437, %436 : vector<8x256xf32>
    %439 = arith.divf %437, %438 : vector<8x256xf32>
    %440 = arith.mulf %431, %409 : vector<8x256xf32>
    %441 = arith.mulf %425, %433 : vector<8x256xf32>
    %442 = arith.addf %440, %441 : vector<8x256xf32>
    %443 = math.tanh %442 : vector<8x256xf32>
    %444 = arith.mulf %439, %443 : vector<8x256xf32>
    %c3_140 = arith.constant 3 : index
    %c0_141 = arith.constant 0 : index
    %c0_142 = arith.constant 0 : index
    %445 = vector.load %arg18[%c3_140, %c0_141, %c0_142] : memref<8x8x256xf32, #tpu.memory_space<vmem>>, vector<1x8x256xf32>
    %446 = vector.shape_cast %445 : vector<1x8x256xf32> to vector<8x256xf32>
    %447 = vector.shape_cast %444 : vector<8x256xf32> to vector<1x8x256xf32>
    tpu.vector_store %arg18[%c3_140, %c0_141, %c0_142], %447 {strides = array<i32>} : memref<8x8x256xf32, #tpu.memory_space<vmem>>, vector<1x8x256xf32>,
    %c2_143 = arith.constant 2 : index
    %c0_144 = arith.constant 0 : index
    %c0_145 = arith.constant 0 : index
    %448 = vector.load %arg16[%c2_143, %c0_144, %c0_145] : memref<8x8x1024xf32, #tpu.memory_space<vmem>>, vector<1x8x1024xf32>
    %449 = vector.shape_cast %448 : vector<1x8x1024xf32> to vector<8x1024xf32>
    %450 = arith.truncf %444 : vector<8x256xf32> to vector<8x256xbf16>
    %cst_146 = arith.constant dense<0.000000e+00> : vector<8x1024xf32>
    %451 = tpu.matmul %450, %280, %cst_146 {dimension_numbers = #tpu.dot_dimension_numbers<[1], [0], [0], [1], [0, 0, 1, 1], [], []>} : vector<8x256xbf16>, vector<256x1024xbf16>, vector<8x1024xf32> -> vector<8x1024xf32>
    %452 = arith.addf %449, %451 : vector<8x1024xf32>
    %453 = vector.extract_strided_slice %452 {offsets = [0, 0], sizes = [8, 256], strides = [1, 1]} : vector<8x1024xf32> to vector<8x256xf32>
    %454 = arith.negf %453 : vector<8x256xf32>
    %455 = math.exp %454 : vector<8x256xf32>
    %cst_147 = arith.constant 1.000000e+00 : f32
    %456 = vector.broadcast %cst_147 : f32 to vector<8x256xf32>
    %457 = arith.addf %456, %455 : vector<8x256xf32>
    %458 = arith.divf %456, %457 : vector<8x256xf32>
    %459 = vector.extract_strided_slice %452 {offsets = [0, 256], sizes = [8, 256], strides = [1, 1]} : vector<8x1024xf32> to vector<8x256xf32>
    %460 = arith.negf %459 : vector<8x256xf32>
    %461 = math.exp %460 : vector<8x256xf32>
    %cst_148 = arith.constant 1.000000e+00 : f32
    %462 = vector.broadcast %cst_148 : f32 to vector<8x256xf32>
    %463 = arith.addf %462, %461 : vector<8x256xf32>
    %464 = arith.divf %462, %463 : vector<8x256xf32>
    %465 = vector.extract_strided_slice %452 {offsets = [0, 512], sizes = [8, 256], strides = [1, 1]} : vector<8x1024xf32> to vector<8x256xf32>
    %466 = math.tanh %465 : vector<8x256xf32>
    %467 = vector.extract_strided_slice %452 {offsets = [0, 768], sizes = [8, 256], strides = [1, 1]} : vector<8x1024xf32> to vector<8x256xf32>
    %468 = arith.negf %467 : vector<8x256xf32>
    %469 = math.exp %468 : vector<8x256xf32>
    %cst_149 = arith.constant 1.000000e+00 : f32
    %470 = vector.broadcast %cst_149 : f32 to vector<8x256xf32>
    %471 = arith.addf %470, %469 : vector<8x256xf32>
    %472 = arith.divf %470, %471 : vector<8x256xf32>
    %473 = arith.mulf %464, %442 : vector<8x256xf32>
    %474 = arith.mulf %458, %466 : vector<8x256xf32>
    %475 = arith.addf %473, %474 : vector<8x256xf32>
    %476 = math.tanh %475 : vector<8x256xf32>
    %477 = arith.mulf %472, %476 : vector<8x256xf32>
    %c2_150 = arith.constant 2 : index
    %c0_151 = arith.constant 0 : index
    %c0_152 = arith.constant 0 : index
    %478 = vector.load %arg18[%c2_150, %c0_151, %c0_152] : memref<8x8x256xf32, #tpu.memory_space<vmem>>, vector<1x8x256xf32>
    %479 = vector.shape_cast %478 : vector<1x8x256xf32> to vector<8x256xf32>
    %480 = vector.shape_cast %477 : vector<8x256xf32> to vector<1x8x256xf32>
    tpu.vector_store %arg18[%c2_150, %c0_151, %c0_152], %480 {strides = array<i32>} : memref<8x8x256xf32, #tpu.memory_space<vmem>>, vector<1x8x256xf32>,
    %c1_153 = arith.constant 1 : index
    %c0_154 = arith.constant 0 : index
    %c0_155 = arith.constant 0 : index
    %481 = vector.load %arg16[%c1_153, %c0_154, %c0_155] : memref<8x8x1024xf32, #tpu.memory_space<vmem>>, vector<1x8x1024xf32>
    %482 = vector.shape_cast %481 : vector<1x8x1024xf32> to vector<8x1024xf32>
    %483 = arith.truncf %477 : vector<8x256xf32> to vector<8x256xbf16>
    %cst_156 = arith.constant dense<0.000000e+00> : vector<8x1024xf32>
    %484 = tpu.matmul %483, %280, %cst_156 {dimension_numbers = #tpu.dot_dimension_numbers<[1], [0], [0], [1], [0, 0, 1, 1], [], []>} : vector<8x256xbf16>, vector<256x1024xbf16>, vector<8x1024xf32> -> vector<8x1024xf32>
    %485 = arith.addf %482, %484 : vector<8x1024xf32>
    %486 = vector.extract_strided_slice %485 {offsets = [0, 0], sizes = [8, 256], strides = [1, 1]} : vector<8x1024xf32> to vector<8x256xf32>
    %487 = arith.negf %486 : vector<8x256xf32>
    %488 = math.exp %487 : vector<8x256xf32>
    %cst_157 = arith.constant 1.000000e+00 : f32
    %489 = vector.broadcast %cst_157 : f32 to vector<8x256xf32>
    %490 = arith.addf %489, %488 : vector<8x256xf32>
    %491 = arith.divf %489, %490 : vector<8x256xf32>
    %492 = vector.extract_strided_slice %485 {offsets = [0, 256], sizes = [8, 256], strides = [1, 1]} : vector<8x1024xf32> to vector<8x256xf32>
    %493 = arith.negf %492 : vector<8x256xf32>
    %494 = math.exp %493 : vector<8x256xf32>
    %cst_158 = arith.constant 1.000000e+00 : f32
    %495 = vector.broadcast %cst_158 : f32 to vector<8x256xf32>
    %496 = arith.addf %495, %494 : vector<8x256xf32>
    %497 = arith.divf %495, %496 : vector<8x256xf32>
    %498 = vector.extract_strided_slice %485 {offsets = [0, 512], sizes = [8, 256], strides = [1, 1]} : vector<8x1024xf32> to vector<8x256xf32>
    %499 = math.tanh %498 : vector<8x256xf32>
    %500 = vector.extract_strided_slice %485 {offsets = [0, 768], sizes = [8, 256], strides = [1, 1]} : vector<8x1024xf32> to vector<8x256xf32>
    %501 = arith.negf %500 : vector<8x256xf32>
    %502 = math.exp %501 : vector<8x256xf32>
    %cst_159 = arith.constant 1.000000e+00 : f32
    %503 = vector.broadcast %cst_159 : f32 to vector<8x256xf32>
    %504 = arith.addf %503, %502 : vector<8x256xf32>
    %505 = arith.divf %503, %504 : vector<8x256xf32>
    %506 = arith.mulf %497, %475 : vector<8x256xf32>
    %507 = arith.mulf %491, %499 : vector<8x256xf32>
    %508 = arith.addf %506, %507 : vector<8x256xf32>
    %509 = math.tanh %508 : vector<8x256xf32>
    %510 = arith.mulf %505, %509 : vector<8x256xf32>
    %c1_160 = arith.constant 1 : index
    %c0_161 = arith.constant 0 : index
    %c0_162 = arith.constant 0 : index
    %511 = vector.load %arg18[%c1_160, %c0_161, %c0_162] : memref<8x8x256xf32, #tpu.memory_space<vmem>>, vector<1x8x256xf32>
    %512 = vector.shape_cast %511 : vector<1x8x256xf32> to vector<8x256xf32>
    %513 = vector.shape_cast %510 : vector<8x256xf32> to vector<1x8x256xf32>
    tpu.vector_store %arg18[%c1_160, %c0_161, %c0_162], %513 {strides = array<i32>} : memref<8x8x256xf32, #tpu.memory_space<vmem>>, vector<1x8x256xf32>,
    %c0_163 = arith.constant 0 : index
    %c0_164 = arith.constant 0 : index
    %c0_165 = arith.constant 0 : index
    %514 = vector.load %arg16[%c0_163, %c0_164, %c0_165] : memref<8x8x1024xf32, #tpu.memory_space<vmem>>, vector<1x8x1024xf32>
    %515 = vector.shape_cast %514 : vector<1x8x1024xf32> to vector<8x1024xf32>
    %516 = arith.truncf %510 : vector<8x256xf32> to vector<8x256xbf16>
    %cst_166 = arith.constant dense<0.000000e+00> : vector<8x1024xf32>
    %517 = tpu.matmul %516, %280, %cst_166 {dimension_numbers = #tpu.dot_dimension_numbers<[1], [0], [0], [1], [0, 0, 1, 1], [], []>} : vector<8x256xbf16>, vector<256x1024xbf16>, vector<8x1024xf32> -> vector<8x1024xf32>
    %518 = arith.addf %515, %517 : vector<8x1024xf32>
    %519 = vector.extract_strided_slice %518 {offsets = [0, 0], sizes = [8, 256], strides = [1, 1]} : vector<8x1024xf32> to vector<8x256xf32>
    %520 = arith.negf %519 : vector<8x256xf32>
    %521 = math.exp %520 : vector<8x256xf32>
    %cst_167 = arith.constant 1.000000e+00 : f32
    %522 = vector.broadcast %cst_167 : f32 to vector<8x256xf32>
    %523 = arith.addf %522, %521 : vector<8x256xf32>
    %524 = arith.divf %522, %523 : vector<8x256xf32>
    %525 = vector.extract_strided_slice %518 {offsets = [0, 256], sizes = [8, 256], strides = [1, 1]} : vector<8x1024xf32> to vector<8x256xf32>
    %526 = arith.negf %525 : vector<8x256xf32>
    %527 = math.exp %526 : vector<8x256xf32>
    %cst_168 = arith.constant 1.000000e+00 : f32
    %528 = vector.broadcast %cst_168 : f32 to vector<8x256xf32>
    %529 = arith.addf %528, %527 : vector<8x256xf32>
    %530 = arith.divf %528, %529 : vector<8x256xf32>
    %531 = vector.extract_strided_slice %518 {offsets = [0, 512], sizes = [8, 256], strides = [1, 1]} : vector<8x1024xf32> to vector<8x256xf32>
    %532 = math.tanh %531 : vector<8x256xf32>
    %533 = vector.extract_strided_slice %518 {offsets = [0, 768], sizes = [8, 256], strides = [1, 1]} : vector<8x1024xf32> to vector<8x256xf32>
    %534 = arith.negf %533 : vector<8x256xf32>
    %535 = math.exp %534 : vector<8x256xf32>
    %cst_169 = arith.constant 1.000000e+00 : f32
    %536 = vector.broadcast %cst_169 : f32 to vector<8x256xf32>
    %537 = arith.addf %536, %535 : vector<8x256xf32>
    %538 = arith.divf %536, %537 : vector<8x256xf32>
    %539 = arith.mulf %530, %508 : vector<8x256xf32>
    %540 = arith.mulf %524, %532 : vector<8x256xf32>
    %541 = arith.addf %539, %540 : vector<8x256xf32>
    %542 = math.tanh %541 : vector<8x256xf32>
    %543 = arith.mulf %538, %542 : vector<8x256xf32>
    %c0_170 = arith.constant 0 : index
    %c0_171 = arith.constant 0 : index
    %c0_172 = arith.constant 0 : index
    %544 = vector.load %arg18[%c0_170, %c0_171, %c0_172] : memref<8x8x256xf32, #tpu.memory_space<vmem>>, vector<1x8x256xf32>
    %545 = vector.shape_cast %544 : vector<1x8x256xf32> to vector<8x256xf32>
    %546 = vector.shape_cast %543 : vector<8x256xf32> to vector<1x8x256xf32>
    tpu.vector_store %arg18[%c0_170, %c0_171, %c0_172], %546 {strides = array<i32>} : memref<8x8x256xf32, #tpu.memory_space<vmem>>, vector<1x8x256xf32>,
    %c0_173 = arith.constant 0 : index
    %c0_174 = arith.constant 0 : index
    %c0_175 = arith.constant 0 : index
    %547 = vector.load %arg17[%c0_173, %c0_174, %c0_175] : memref<8x8x256xf32, #tpu.memory_space<vmem>>, vector<8x8x256xf32>
    %548 = vector.shape_cast %547 : vector<8x8x256xf32> to vector<64x256xf32>
    %c0_176 = arith.constant 0 : index
    %c0_177 = arith.constant 0 : index
    %c0_178 = arith.constant 0 : index
    %549 = vector.load %arg18[%c0_176, %c0_177, %c0_178] : memref<8x8x256xf32, #tpu.memory_space<vmem>>, vector<8x8x256xf32>
    %550 = vector.shape_cast %549 : vector<8x8x256xf32> to vector<64x256xf32>
    %c0_179 = arith.constant 0 : index
    %c0_180 = arith.constant 0 : index
    %551 = vector.load %arg5[%c0_179, %c0_180] : memref<256x1024xf32, #tpu.memory_space<vmem>>, vector<256x1024xf32>
    %cst_181 = arith.constant dense<0.000000e+00> : vector<64x1024xf32>
    %552 = tpu.matmul %548, %551, %cst_181 {dimension_numbers = #tpu.dot_dimension_numbers<[1], [0], [0], [1], [0, 0, 1, 1], [], []>} : vector<64x256xf32>, vector<256x1024xf32>, vector<64x1024xf32> -> vector<64x1024xf32>
    %c0_182 = arith.constant 0 : index
    %c0_183 = arith.constant 0 : index
    %553 = vector.load %arg6[%c0_182, %c0_183] : memref<256x1024xf32, #tpu.memory_space<vmem>>, vector<256x1024xf32>
    %cst_184 = arith.constant dense<0.000000e+00> : vector<64x1024xf32>
    %554 = tpu.matmul %550, %553, %cst_184 {dimension_numbers = #tpu.dot_dimension_numbers<[1], [0], [0], [1], [0, 0, 1, 1], [], []>} : vector<64x256xf32>, vector<256x1024xf32>, vector<64x1024xf32> -> vector<64x1024xf32>
    %555 = arith.addf %552, %554 : vector<64x1024xf32>
    %c0_185 = arith.constant 0 : index
    %c0_186 = arith.constant 0 : index
    %556 = vector.load %arg7[%c0_185, %c0_186] : memref<1x1024xf32, #tpu.memory_space<vmem>>, vector<1x1024xf32>
    %557 = vector.broadcast %556 : vector<1x1024xf32> to vector<64x1024xf32>
    %558 = arith.addf %555, %557 : vector<64x1024xf32>
    %559 = vector.extract_strided_slice %558 {offsets = [0, 0], sizes = [64, 512], strides = [1, 1]} : vector<64x1024xf32> to vector<64x512xf32>
    %560 = vector.shape_cast %559 : vector<64x512xf32> to vector<8x8x512xf32>
    %c0_187 = arith.constant 0 : index
    %c0_188 = arith.constant 0 : index
    %c0_189 = arith.constant 0 : index
    %561 = vector.load %arg19[%c0_187, %c0_188, %c0_189] : memref<8x8x512xf32, #tpu.memory_space<vmem>>, vector<8x8x512xf32>
    tpu.vector_store %arg19[%c0_187, %c0_188, %c0_189], %560 {strides = array<i32>} : memref<8x8x512xf32, #tpu.memory_space<vmem>>, vector<8x8x512xf32>,
    %562 = vector.extract_strided_slice %558 {offsets = [56, 512], sizes = [8, 512], strides = [1, 1]} : vector<64x1024xf32> to vector<8x512xf32>
    %c0_190 = arith.constant 0 : index
    %c0_191 = arith.constant 0 : index
    %563 = vector.load %arg8[%c0_190, %c0_191] : memref<128x512xbf16, #tpu.memory_space<vmem>>, vector<128x512xbf16>
    %cst_192 = arith.constant 0.000000e+00 : f32
    %564 = vector.broadcast %cst_192 : f32 to vector<8x128xf32>
    %cst_193 = arith.constant 0.000000e+00 : f32
    %565 = vector.broadcast %cst_193 : f32 to vector<8x128xf32>
    %c0_194 = arith.constant 0 : index
    %c0_195 = arith.constant 0 : index
    %c0_196 = arith.constant 0 : index
    %566 = vector.load %arg19[%c0_194, %c0_195, %c0_196] : memref<8x8x512xf32, #tpu.memory_space<vmem>>, vector<1x8x512xf32>
    %567 = vector.shape_cast %566 : vector<1x8x512xf32> to vector<8x512xf32>
    %568 = arith.truncf %564 : vector<8x128xf32> to vector<8x128xbf16>
    %cst_197 = arith.constant dense<0.000000e+00> : vector<8x512xf32>
    %569 = tpu.matmul %568, %563, %cst_197 {dimension_numbers = #tpu.dot_dimension_numbers<[1], [0], [0], [1], [0, 0, 1, 1], [], []>} : vector<8x128xbf16>, vector<128x512xbf16>, vector<8x512xf32> -> vector<8x512xf32>
    %570 = arith.addf %567, %569 : vector<8x512xf32>
    %571 = vector.extract_strided_slice %570 {offsets = [0, 0], sizes = [8, 128], strides = [1, 1]} : vector<8x512xf32> to vector<8x128xf32>
    %572 = arith.negf %571 : vector<8x128xf32>
    %573 = math.exp %572 : vector<8x128xf32>
    %cst_198 = arith.constant 1.000000e+00 : f32
    %574 = vector.broadcast %cst_198 : f32 to vector<8x128xf32>
    %575 = arith.addf %574, %573 : vector<8x128xf32>
    %576 = arith.divf %574, %575 : vector<8x128xf32>
    %577 = vector.extract_strided_slice %570 {offsets = [0, 128], sizes = [8, 128], strides = [1, 1]} : vector<8x512xf32> to vector<8x128xf32>
    %578 = arith.negf %577 : vector<8x128xf32>
    %579 = math.exp %578 : vector<8x128xf32>
    %cst_199 = arith.constant 1.000000e+00 : f32
    %580 = vector.broadcast %cst_199 : f32 to vector<8x128xf32>
    %581 = arith.addf %580, %579 : vector<8x128xf32>
    %582 = arith.divf %580, %581 : vector<8x128xf32>
    %583 = vector.extract_strided_slice %570 {offsets = [0, 256], sizes = [8, 128], strides = [1, 1]} : vector<8x512xf32> to vector<8x128xf32>
    %584 = math.tanh %583 : vector<8x128xf32>
    %585 = vector.extract_strided_slice %570 {offsets = [0, 384], sizes = [8, 128], strides = [1, 1]} : vector<8x512xf32> to vector<8x128xf32>
    %586 = arith.negf %585 : vector<8x128xf32>
    %587 = math.exp %586 : vector<8x128xf32>
    %cst_200 = arith.constant 1.000000e+00 : f32
    %588 = vector.broadcast %cst_200 : f32 to vector<8x128xf32>
    %589 = arith.addf %588, %587 : vector<8x128xf32>
    %590 = arith.divf %588, %589 : vector<8x128xf32>
    %591 = arith.mulf %582, %565 : vector<8x128xf32>
    %592 = arith.mulf %576, %584 : vector<8x128xf32>
    %593 = arith.addf %591, %592 : vector<8x128xf32>
    %594 = math.tanh %593 : vector<8x128xf32>
    %595 = arith.mulf %590, %594 : vector<8x128xf32>
    %c1_201 = arith.constant 1 : index
    %c0_202 = arith.constant 0 : index
    %c0_203 = arith.constant 0 : index
    %596 = vector.load %arg19[%c1_201, %c0_202, %c0_203] : memref<8x8x512xf32, #tpu.memory_space<vmem>>, vector<1x8x512xf32>
    %597 = vector.shape_cast %596 : vector<1x8x512xf32> to vector<8x512xf32>
    %598 = arith.truncf %595 : vector<8x128xf32> to vector<8x128xbf16>
    %cst_204 = arith.constant dense<0.000000e+00> : vector<8x512xf32>
    %599 = tpu.matmul %598, %563, %cst_204 {dimension_numbers = #tpu.dot_dimension_numbers<[1], [0], [0], [1], [0, 0, 1, 1], [], []>} : vector<8x128xbf16>, vector<128x512xbf16>, vector<8x512xf32> -> vector<8x512xf32>
    %600 = arith.addf %597, %599 : vector<8x512xf32>
    %601 = vector.extract_strided_slice %600 {offsets = [0, 0], sizes = [8, 128], strides = [1, 1]} : vector<8x512xf32> to vector<8x128xf32>
    %602 = arith.negf %601 : vector<8x128xf32>
    %603 = math.exp %602 : vector<8x128xf32>
    %cst_205 = arith.constant 1.000000e+00 : f32
    %604 = vector.broadcast %cst_205 : f32 to vector<8x128xf32>
    %605 = arith.addf %604, %603 : vector<8x128xf32>
    %606 = arith.divf %604, %605 : vector<8x128xf32>
    %607 = vector.extract_strided_slice %600 {offsets = [0, 128], sizes = [8, 128], strides = [1, 1]} : vector<8x512xf32> to vector<8x128xf32>
    %608 = arith.negf %607 : vector<8x128xf32>
    %609 = math.exp %608 : vector<8x128xf32>
    %cst_206 = arith.constant 1.000000e+00 : f32
    %610 = vector.broadcast %cst_206 : f32 to vector<8x128xf32>
    %611 = arith.addf %610, %609 : vector<8x128xf32>
    %612 = arith.divf %610, %611 : vector<8x128xf32>
    %613 = vector.extract_strided_slice %600 {offsets = [0, 256], sizes = [8, 128], strides = [1, 1]} : vector<8x512xf32> to vector<8x128xf32>
    %614 = math.tanh %613 : vector<8x128xf32>
    %615 = vector.extract_strided_slice %600 {offsets = [0, 384], sizes = [8, 128], strides = [1, 1]} : vector<8x512xf32> to vector<8x128xf32>
    %616 = arith.negf %615 : vector<8x128xf32>
    %617 = math.exp %616 : vector<8x128xf32>
    %cst_207 = arith.constant 1.000000e+00 : f32
    %618 = vector.broadcast %cst_207 : f32 to vector<8x128xf32>
    %619 = arith.addf %618, %617 : vector<8x128xf32>
    %620 = arith.divf %618, %619 : vector<8x128xf32>
    %621 = arith.mulf %612, %593 : vector<8x128xf32>
    %622 = arith.mulf %606, %614 : vector<8x128xf32>
    %623 = arith.addf %621, %622 : vector<8x128xf32>
    %624 = math.tanh %623 : vector<8x128xf32>
    %625 = arith.mulf %620, %624 : vector<8x128xf32>
    %c2_208 = arith.constant 2 : index
    %c0_209 = arith.constant 0 : index
    %c0_210 = arith.constant 0 : index
    %626 = vector.load %arg19[%c2_208, %c0_209, %c0_210] : memref<8x8x512xf32, #tpu.memory_space<vmem>>, vector<1x8x512xf32>
    %627 = vector.shape_cast %626 : vector<1x8x512xf32> to vector<8x512xf32>
    %628 = arith.truncf %625 : vector<8x128xf32> to vector<8x128xbf16>
    %cst_211 = arith.constant dense<0.000000e+00> : vector<8x512xf32>
    %629 = tpu.matmul %628, %563, %cst_211 {dimension_numbers = #tpu.dot_dimension_numbers<[1], [0], [0], [1], [0, 0, 1, 1], [], []>} : vector<8x128xbf16>, vector<128x512xbf16>, vector<8x512xf32> -> vector<8x512xf32>
    %630 = arith.addf %627, %629 : vector<8x512xf32>
    %631 = vector.extract_strided_slice %630 {offsets = [0, 0], sizes = [8, 128], strides = [1, 1]} : vector<8x512xf32> to vector<8x128xf32>
    %632 = arith.negf %631 : vector<8x128xf32>
    %633 = math.exp %632 : vector<8x128xf32>
    %cst_212 = arith.constant 1.000000e+00 : f32
    %634 = vector.broadcast %cst_212 : f32 to vector<8x128xf32>
    %635 = arith.addf %634, %633 : vector<8x128xf32>
    %636 = arith.divf %634, %635 : vector<8x128xf32>
    %637 = vector.extract_strided_slice %630 {offsets = [0, 128], sizes = [8, 128], strides = [1, 1]} : vector<8x512xf32> to vector<8x128xf32>
    %638 = arith.negf %637 : vector<8x128xf32>
    %639 = math.exp %638 : vector<8x128xf32>
    %cst_213 = arith.constant 1.000000e+00 : f32
    %640 = vector.broadcast %cst_213 : f32 to vector<8x128xf32>
    %641 = arith.addf %640, %639 : vector<8x128xf32>
    %642 = arith.divf %640, %641 : vector<8x128xf32>
    %643 = vector.extract_strided_slice %630 {offsets = [0, 256], sizes = [8, 128], strides = [1, 1]} : vector<8x512xf32> to vector<8x128xf32>
    %644 = math.tanh %643 : vector<8x128xf32>
    %645 = vector.extract_strided_slice %630 {offsets = [0, 384], sizes = [8, 128], strides = [1, 1]} : vector<8x512xf32> to vector<8x128xf32>
    %646 = arith.negf %645 : vector<8x128xf32>
    %647 = math.exp %646 : vector<8x128xf32>
    %cst_214 = arith.constant 1.000000e+00 : f32
    %648 = vector.broadcast %cst_214 : f32 to vector<8x128xf32>
    %649 = arith.addf %648, %647 : vector<8x128xf32>
    %650 = arith.divf %648, %649 : vector<8x128xf32>
    %651 = arith.mulf %642, %623 : vector<8x128xf32>
    %652 = arith.mulf %636, %644 : vector<8x128xf32>
    %653 = arith.addf %651, %652 : vector<8x128xf32>
    %654 = math.tanh %653 : vector<8x128xf32>
    %655 = arith.mulf %650, %654 : vector<8x128xf32>
    %c3_215 = arith.constant 3 : index
    %c0_216 = arith.constant 0 : index
    %c0_217 = arith.constant 0 : index
    %656 = vector.load %arg19[%c3_215, %c0_216, %c0_217] : memref<8x8x512xf32, #tpu.memory_space<vmem>>, vector<1x8x512xf32>
    %657 = vector.shape_cast %656 : vector<1x8x512xf32> to vector<8x512xf32>
    %658 = arith.truncf %655 : vector<8x128xf32> to vector<8x128xbf16>
    %cst_218 = arith.constant dense<0.000000e+00> : vector<8x512xf32>
    %659 = tpu.matmul %658, %563, %cst_218 {dimension_numbers = #tpu.dot_dimension_numbers<[1], [0], [0], [1], [0, 0, 1, 1], [], []>} : vector<8x128xbf16>, vector<128x512xbf16>, vector<8x512xf32> -> vector<8x512xf32>
    %660 = arith.addf %657, %659 : vector<8x512xf32>
    %661 = vector.extract_strided_slice %660 {offsets = [0, 0], sizes = [8, 128], strides = [1, 1]} : vector<8x512xf32> to vector<8x128xf32>
    %662 = arith.negf %661 : vector<8x128xf32>
    %663 = math.exp %662 : vector<8x128xf32>
    %cst_219 = arith.constant 1.000000e+00 : f32
    %664 = vector.broadcast %cst_219 : f32 to vector<8x128xf32>
    %665 = arith.addf %664, %663 : vector<8x128xf32>
    %666 = arith.divf %664, %665 : vector<8x128xf32>
    %667 = vector.extract_strided_slice %660 {offsets = [0, 128], sizes = [8, 128], strides = [1, 1]} : vector<8x512xf32> to vector<8x128xf32>
    %668 = arith.negf %667 : vector<8x128xf32>
    %669 = math.exp %668 : vector<8x128xf32>
    %cst_220 = arith.constant 1.000000e+00 : f32
    %670 = vector.broadcast %cst_220 : f32 to vector<8x128xf32>
    %671 = arith.addf %670, %669 : vector<8x128xf32>
    %672 = arith.divf %670, %671 : vector<8x128xf32>
    %673 = vector.extract_strided_slice %660 {offsets = [0, 256], sizes = [8, 128], strides = [1, 1]} : vector<8x512xf32> to vector<8x128xf32>
    %674 = math.tanh %673 : vector<8x128xf32>
    %675 = vector.extract_strided_slice %660 {offsets = [0, 384], sizes = [8, 128], strides = [1, 1]} : vector<8x512xf32> to vector<8x128xf32>
    %676 = arith.negf %675 : vector<8x128xf32>
    %677 = math.exp %676 : vector<8x128xf32>
    %cst_221 = arith.constant 1.000000e+00 : f32
    %678 = vector.broadcast %cst_221 : f32 to vector<8x128xf32>
    %679 = arith.addf %678, %677 : vector<8x128xf32>
    %680 = arith.divf %678, %679 : vector<8x128xf32>
    %681 = arith.mulf %672, %653 : vector<8x128xf32>
    %682 = arith.mulf %666, %674 : vector<8x128xf32>
    %683 = arith.addf %681, %682 : vector<8x128xf32>
    %684 = math.tanh %683 : vector<8x128xf32>
    %685 = arith.mulf %680, %684 : vector<8x128xf32>
    %c4_222 = arith.constant 4 : index
    %c0_223 = arith.constant 0 : index
    %c0_224 = arith.constant 0 : index
    %686 = vector.load %arg19[%c4_222, %c0_223, %c0_224] : memref<8x8x512xf32, #tpu.memory_space<vmem>>, vector<1x8x512xf32>
    %687 = vector.shape_cast %686 : vector<1x8x512xf32> to vector<8x512xf32>
    %688 = arith.truncf %685 : vector<8x128xf32> to vector<8x128xbf16>
    %cst_225 = arith.constant dense<0.000000e+00> : vector<8x512xf32>
    %689 = tpu.matmul %688, %563, %cst_225 {dimension_numbers = #tpu.dot_dimension_numbers<[1], [0], [0], [1], [0, 0, 1, 1], [], []>} : vector<8x128xbf16>, vector<128x512xbf16>, vector<8x512xf32> -> vector<8x512xf32>
    %690 = arith.addf %687, %689 : vector<8x512xf32>
    %691 = vector.extract_strided_slice %690 {offsets = [0, 0], sizes = [8, 128], strides = [1, 1]} : vector<8x512xf32> to vector<8x128xf32>
    %692 = arith.negf %691 : vector<8x128xf32>
    %693 = math.exp %692 : vector<8x128xf32>
    %cst_226 = arith.constant 1.000000e+00 : f32
    %694 = vector.broadcast %cst_226 : f32 to vector<8x128xf32>
    %695 = arith.addf %694, %693 : vector<8x128xf32>
    %696 = arith.divf %694, %695 : vector<8x128xf32>
    %697 = vector.extract_strided_slice %690 {offsets = [0, 128], sizes = [8, 128], strides = [1, 1]} : vector<8x512xf32> to vector<8x128xf32>
    %698 = arith.negf %697 : vector<8x128xf32>
    %699 = math.exp %698 : vector<8x128xf32>
    %cst_227 = arith.constant 1.000000e+00 : f32
    %700 = vector.broadcast %cst_227 : f32 to vector<8x128xf32>
    %701 = arith.addf %700, %699 : vector<8x128xf32>
    %702 = arith.divf %700, %701 : vector<8x128xf32>
    %703 = vector.extract_strided_slice %690 {offsets = [0, 256], sizes = [8, 128], strides = [1, 1]} : vector<8x512xf32> to vector<8x128xf32>
    %704 = math.tanh %703 : vector<8x128xf32>
    %705 = vector.extract_strided_slice %690 {offsets = [0, 384], sizes = [8, 128], strides = [1, 1]} : vector<8x512xf32> to vector<8x128xf32>
    %706 = arith.negf %705 : vector<8x128xf32>
    %707 = math.exp %706 : vector<8x128xf32>
    %cst_228 = arith.constant 1.000000e+00 : f32
    %708 = vector.broadcast %cst_228 : f32 to vector<8x128xf32>
    %709 = arith.addf %708, %707 : vector<8x128xf32>
    %710 = arith.divf %708, %709 : vector<8x128xf32>
    %711 = arith.mulf %702, %683 : vector<8x128xf32>
    %712 = arith.mulf %696, %704 : vector<8x128xf32>
    %713 = arith.addf %711, %712 : vector<8x128xf32>
    %714 = math.tanh %713 : vector<8x128xf32>
    %715 = arith.mulf %710, %714 : vector<8x128xf32>
    %c5_229 = arith.constant 5 : index
    %c0_230 = arith.constant 0 : index
    %c0_231 = arith.constant 0 : index
    %716 = vector.load %arg19[%c5_229, %c0_230, %c0_231] : memref<8x8x512xf32, #tpu.memory_space<vmem>>, vector<1x8x512xf32>
    %717 = vector.shape_cast %716 : vector<1x8x512xf32> to vector<8x512xf32>
    %718 = arith.truncf %715 : vector<8x128xf32> to vector<8x128xbf16>
    %cst_232 = arith.constant dense<0.000000e+00> : vector<8x512xf32>
    %719 = tpu.matmul %718, %563, %cst_232 {dimension_numbers = #tpu.dot_dimension_numbers<[1], [0], [0], [1], [0, 0, 1, 1], [], []>} : vector<8x128xbf16>, vector<128x512xbf16>, vector<8x512xf32> -> vector<8x512xf32>
    %720 = arith.addf %717, %719 : vector<8x512xf32>
    %721 = vector.extract_strided_slice %720 {offsets = [0, 0], sizes = [8, 128], strides = [1, 1]} : vector<8x512xf32> to vector<8x128xf32>
    %722 = arith.negf %721 : vector<8x128xf32>
    %723 = math.exp %722 : vector<8x128xf32>
    %cst_233 = arith.constant 1.000000e+00 : f32
    %724 = vector.broadcast %cst_233 : f32 to vector<8x128xf32>
    %725 = arith.addf %724, %723 : vector<8x128xf32>
    %726 = arith.divf %724, %725 : vector<8x128xf32>
    %727 = vector.extract_strided_slice %720 {offsets = [0, 128], sizes = [8, 128], strides = [1, 1]} : vector<8x512xf32> to vector<8x128xf32>
    %728 = arith.negf %727 : vector<8x128xf32>
    %729 = math.exp %728 : vector<8x128xf32>
    %cst_234 = arith.constant 1.000000e+00 : f32
    %730 = vector.broadcast %cst_234 : f32 to vector<8x128xf32>
    %731 = arith.addf %730, %729 : vector<8x128xf32>
    %732 = arith.divf %730, %731 : vector<8x128xf32>
    %733 = vector.extract_strided_slice %720 {offsets = [0, 256], sizes = [8, 128], strides = [1, 1]} : vector<8x512xf32> to vector<8x128xf32>
    %734 = math.tanh %733 : vector<8x128xf32>
    %735 = vector.extract_strided_slice %720 {offsets = [0, 384], sizes = [8, 128], strides = [1, 1]} : vector<8x512xf32> to vector<8x128xf32>
    %736 = arith.negf %735 : vector<8x128xf32>
    %737 = math.exp %736 : vector<8x128xf32>
    %cst_235 = arith.constant 1.000000e+00 : f32
    %738 = vector.broadcast %cst_235 : f32 to vector<8x128xf32>
    %739 = arith.addf %738, %737 : vector<8x128xf32>
    %740 = arith.divf %738, %739 : vector<8x128xf32>
    %741 = arith.mulf %732, %713 : vector<8x128xf32>
    %742 = arith.mulf %726, %734 : vector<8x128xf32>
    %743 = arith.addf %741, %742 : vector<8x128xf32>
    %744 = math.tanh %743 : vector<8x128xf32>
    %745 = arith.mulf %740, %744 : vector<8x128xf32>
    %c6_236 = arith.constant 6 : index
    %c0_237 = arith.constant 0 : index
    %c0_238 = arith.constant 0 : index
    %746 = vector.load %arg19[%c6_236, %c0_237, %c0_238] : memref<8x8x512xf32, #tpu.memory_space<vmem>>, vector<1x8x512xf32>
    %747 = vector.shape_cast %746 : vector<1x8x512xf32> to vector<8x512xf32>
    %748 = arith.truncf %745 : vector<8x128xf32> to vector<8x128xbf16>
    %cst_239 = arith.constant dense<0.000000e+00> : vector<8x512xf32>
    %749 = tpu.matmul %748, %563, %cst_239 {dimension_numbers = #tpu.dot_dimension_numbers<[1], [0], [0], [1], [0, 0, 1, 1], [], []>} : vector<8x128xbf16>, vector<128x512xbf16>, vector<8x512xf32> -> vector<8x512xf32>
    %750 = arith.addf %747, %749 : vector<8x512xf32>
    %751 = vector.extract_strided_slice %750 {offsets = [0, 0], sizes = [8, 128], strides = [1, 1]} : vector<8x512xf32> to vector<8x128xf32>
    %752 = arith.negf %751 : vector<8x128xf32>
    %753 = math.exp %752 : vector<8x128xf32>
    %cst_240 = arith.constant 1.000000e+00 : f32
    %754 = vector.broadcast %cst_240 : f32 to vector<8x128xf32>
    %755 = arith.addf %754, %753 : vector<8x128xf32>
    %756 = arith.divf %754, %755 : vector<8x128xf32>
    %757 = vector.extract_strided_slice %750 {offsets = [0, 128], sizes = [8, 128], strides = [1, 1]} : vector<8x512xf32> to vector<8x128xf32>
    %758 = arith.negf %757 : vector<8x128xf32>
    %759 = math.exp %758 : vector<8x128xf32>
    %cst_241 = arith.constant 1.000000e+00 : f32
    %760 = vector.broadcast %cst_241 : f32 to vector<8x128xf32>
    %761 = arith.addf %760, %759 : vector<8x128xf32>
    %762 = arith.divf %760, %761 : vector<8x128xf32>
    %763 = vector.extract_strided_slice %750 {offsets = [0, 256], sizes = [8, 128], strides = [1, 1]} : vector<8x512xf32> to vector<8x128xf32>
    %764 = math.tanh %763 : vector<8x128xf32>
    %765 = vector.extract_strided_slice %750 {offsets = [0, 384], sizes = [8, 128], strides = [1, 1]} : vector<8x512xf32> to vector<8x128xf32>
    %766 = arith.negf %765 : vector<8x128xf32>
    %767 = math.exp %766 : vector<8x128xf32>
    %cst_242 = arith.constant 1.000000e+00 : f32
    %768 = vector.broadcast %cst_242 : f32 to vector<8x128xf32>
    %769 = arith.addf %768, %767 : vector<8x128xf32>
    %770 = arith.divf %768, %769 : vector<8x128xf32>
    %771 = arith.mulf %762, %743 : vector<8x128xf32>
    %772 = arith.mulf %756, %764 : vector<8x128xf32>
    %773 = arith.addf %771, %772 : vector<8x128xf32>
    %774 = math.tanh %773 : vector<8x128xf32>
    %775 = arith.mulf %770, %774 : vector<8x128xf32>
    %c7_243 = arith.constant 7 : index
    %c0_244 = arith.constant 0 : index
    %c0_245 = arith.constant 0 : index
    %776 = vector.load %arg19[%c7_243, %c0_244, %c0_245] : memref<8x8x512xf32, #tpu.memory_space<vmem>>, vector<1x8x512xf32>
    %777 = vector.shape_cast %776 : vector<1x8x512xf32> to vector<8x512xf32>
    %778 = arith.truncf %775 : vector<8x128xf32> to vector<8x128xbf16>
    %cst_246 = arith.constant dense<0.000000e+00> : vector<8x512xf32>
    %779 = tpu.matmul %778, %563, %cst_246 {dimension_numbers = #tpu.dot_dimension_numbers<[1], [0], [0], [1], [0, 0, 1, 1], [], []>} : vector<8x128xbf16>, vector<128x512xbf16>, vector<8x512xf32> -> vector<8x512xf32>
    %780 = arith.addf %777, %779 : vector<8x512xf32>
    %781 = vector.extract_strided_slice %780 {offsets = [0, 0], sizes = [8, 128], strides = [1, 1]} : vector<8x512xf32> to vector<8x128xf32>
    %782 = arith.negf %781 : vector<8x128xf32>
    %783 = math.exp %782 : vector<8x128xf32>
    %cst_247 = arith.constant 1.000000e+00 : f32
    %784 = vector.broadcast %cst_247 : f32 to vector<8x128xf32>
    %785 = arith.addf %784, %783 : vector<8x128xf32>
    %786 = arith.divf %784, %785 : vector<8x128xf32>
    %787 = vector.extract_strided_slice %780 {offsets = [0, 128], sizes = [8, 128], strides = [1, 1]} : vector<8x512xf32> to vector<8x128xf32>
    %788 = arith.negf %787 : vector<8x128xf32>
    %789 = math.exp %788 : vector<8x128xf32>
    %cst_248 = arith.constant 1.000000e+00 : f32
    %790 = vector.broadcast %cst_248 : f32 to vector<8x128xf32>
    %791 = arith.addf %790, %789 : vector<8x128xf32>
    %792 = arith.divf %790, %791 : vector<8x128xf32>
    %793 = vector.extract_strided_slice %780 {offsets = [0, 256], sizes = [8, 128], strides = [1, 1]} : vector<8x512xf32> to vector<8x128xf32>
    %794 = math.tanh %793 : vector<8x128xf32>
    %795 = vector.extract_strided_slice %780 {offsets = [0, 384], sizes = [8, 128], strides = [1, 1]} : vector<8x512xf32> to vector<8x128xf32>
    %796 = arith.negf %795 : vector<8x128xf32>
    %797 = math.exp %796 : vector<8x128xf32>
    %cst_249 = arith.constant 1.000000e+00 : f32
    %798 = vector.broadcast %cst_249 : f32 to vector<8x128xf32>
    %799 = arith.addf %798, %797 : vector<8x128xf32>
    %800 = arith.divf %798, %799 : vector<8x128xf32>
    %801 = arith.mulf %792, %773 : vector<8x128xf32>
    %802 = arith.mulf %786, %794 : vector<8x128xf32>
    %803 = arith.addf %801, %802 : vector<8x128xf32>
    %804 = math.tanh %803 : vector<8x128xf32>
    %805 = arith.mulf %800, %804 : vector<8x128xf32>
    %cst_250 = arith.constant 0.000000e+00 : f32
    %806 = vector.broadcast %cst_250 : f32 to vector<8x128xf32>
    %cst_251 = arith.constant 0.000000e+00 : f32
    %807 = vector.broadcast %cst_251 : f32 to vector<8x128xf32>
    %c0_252 = arith.constant 0 : index
    %c0_253 = arith.constant 0 : index
    %808 = vector.load %arg9[%c0_252, %c0_253] : memref<128x512xbf16, #tpu.memory_space<vmem>>, vector<128x512xbf16>
    %809 = arith.truncf %806 : vector<8x128xf32> to vector<8x128xbf16>
    %cst_254 = arith.constant dense<0.000000e+00> : vector<8x512xf32>
    %810 = tpu.matmul %809, %808, %cst_254 {dimension_numbers = #tpu.dot_dimension_numbers<[1], [0], [0], [1], [0, 0, 1, 1], [], []>} : vector<8x128xbf16>, vector<128x512xbf16>, vector<8x512xf32> -> vector<8x512xf32>
    %811 = arith.addf %562, %810 : vector<8x512xf32>
    %812 = vector.extract_strided_slice %811 {offsets = [0, 0], sizes = [8, 128], strides = [1, 1]} : vector<8x512xf32> to vector<8x128xf32>
    %813 = arith.negf %812 : vector<8x128xf32>
    %814 = math.exp %813 : vector<8x128xf32>
    %cst_255 = arith.constant 1.000000e+00 : f32
    %815 = vector.broadcast %cst_255 : f32 to vector<8x128xf32>
    %816 = arith.addf %815, %814 : vector<8x128xf32>
    %817 = arith.divf %815, %816 : vector<8x128xf32>
    %818 = vector.extract_strided_slice %811 {offsets = [0, 128], sizes = [8, 128], strides = [1, 1]} : vector<8x512xf32> to vector<8x128xf32>
    %819 = arith.negf %818 : vector<8x128xf32>
    %820 = math.exp %819 : vector<8x128xf32>
    %cst_256 = arith.constant 1.000000e+00 : f32
    %821 = vector.broadcast %cst_256 : f32 to vector<8x128xf32>
    %822 = arith.addf %821, %820 : vector<8x128xf32>
    %823 = arith.divf %821, %822 : vector<8x128xf32>
    %824 = vector.extract_strided_slice %811 {offsets = [0, 256], sizes = [8, 128], strides = [1, 1]} : vector<8x512xf32> to vector<8x128xf32>
    %825 = math.tanh %824 : vector<8x128xf32>
    %826 = vector.extract_strided_slice %811 {offsets = [0, 384], sizes = [8, 128], strides = [1, 1]} : vector<8x512xf32> to vector<8x128xf32>
    %827 = arith.negf %826 : vector<8x128xf32>
    %828 = math.exp %827 : vector<8x128xf32>
    %cst_257 = arith.constant 1.000000e+00 : f32
    %829 = vector.broadcast %cst_257 : f32 to vector<8x128xf32>
    %830 = arith.addf %829, %828 : vector<8x128xf32>
    %831 = arith.divf %829, %830 : vector<8x128xf32>
    %832 = arith.mulf %823, %807 : vector<8x128xf32>
    %833 = arith.mulf %817, %825 : vector<8x128xf32>
    %834 = arith.addf %832, %833 : vector<8x128xf32>
    %835 = math.tanh %834 : vector<8x128xf32>
    %836 = arith.mulf %831, %835 : vector<8x128xf32>
    %837 = vector.extract_strided_slice %805 {offsets = [0, 0], sizes = [8, 64], strides = [1, 1]} : vector<8x128xf32> to vector<8x64xf32>
    %838 = vector.extract_strided_slice %836 {offsets = [0, 0], sizes = [8, 64], strides = [1, 1]} : vector<8x128xf32> to vector<8x64xf32>
    %839 = tpu.concatenate %837, %838 in 1 : vector<8x64xf32>, vector<8x64xf32> -> vector<8x128xf32>
    %c0_258 = arith.constant 0 : index
    %c0_259 = arith.constant 0 : index
    %840 = vector.load %arg10[%c0_258, %c0_259] : memref<128x100xf32, #tpu.memory_space<vmem>>, vector<128x100xf32>
    %cst_260 = arith.constant dense<0.000000e+00> : vector<8x100xf32>
    %841 = tpu.matmul %839, %840, %cst_260 {dimension_numbers = #tpu.dot_dimension_numbers<[1], [0], [0], [1], [0, 0, 1, 1], [], []>} : vector<8x128xf32>, vector<128x100xf32>, vector<8x100xf32> -> vector<8x100xf32>
    %c0_261 = arith.constant 0 : index
    %c0_262 = arith.constant 0 : index
    %842 = vector.load %arg11[%c0_261, %c0_262] : memref<1x100xf32, #tpu.memory_space<vmem>>, vector<1x100xf32>
    %843 = vector.broadcast %842 : vector<1x100xf32> to vector<8x100xf32>
    %844 = arith.addf %841, %843 : vector<8x100xf32>
    %845 = math.tanh %844 : vector<8x100xf32>
    %c0_263 = arith.constant 0 : index
    %c0_264 = arith.constant 0 : index
    %846 = vector.load %arg12[%c0_263, %c0_264] : memref<100x1xf32, #tpu.memory_space<vmem>>, vector<100x1xf32>
    %cst_265 = arith.constant dense<0.000000e+00> : vector<8x1xf32>
    %847 = tpu.matmul %845, %846, %cst_265 {dimension_numbers = #tpu.dot_dimension_numbers<[1], [0], [0], [1], [0, 0, 1, 1], [], []>} : vector<8x100xf32>, vector<100x1xf32>, vector<8x1xf32> -> vector<8x1xf32>
    %c0_266 = arith.constant 0 : index
    %c0_267 = arith.constant 0 : index
    %848 = vector.load %arg13[%c0_266, %c0_267] : memref<1x1xf32, #tpu.memory_space<vmem>>, vector<1x1xf32>
    %849 = vector.broadcast %848 : vector<1x1xf32> to vector<8x1xf32>
    %850 = arith.addf %847, %849 : vector<8x1xf32>
    %851 = tpu.iota {dimensions = array<i32: 0>} : vector<8x1xi32>
    %c4_i32 = arith.constant 4 : i32
    %852 = vector.broadcast %c4_i32 : i32 to vector<8x1xi32>
    %853 = arith.cmpi slt, %851, %852 : vector<8x1xi32>
    %cst_268 = arith.constant 0xFF800000 : f32
    %854 = vector.broadcast %cst_268 : f32 to vector<8x1xf32>
    %855 = arith.select %853, %850, %854 : vector<8x1xi1>, vector<8x1xf32>
    %cst_269 = arith.constant dense<0xFF800000> : vector<1xf32>
    %856 = vector.multi_reduction <maximumf>, %855, %cst_269 [0] : vector<8x1xf32> to vector<1xf32>
    %857 = vector.shape_cast %856 : vector<1xf32> to vector<1x1xf32>
    %858 = vector.broadcast %857 : vector<1x1xf32> to vector<8x1xf32>
    %859 = arith.subf %855, %858 : vector<8x1xf32>
    %860 = math.exp %859 : vector<8x1xf32>
    %cst_270 = arith.constant dense<0.000000e+00> : vector<1xf32>
    %861 = vector.multi_reduction <add>, %860, %cst_270 [0] : vector<8x1xf32> to vector<1xf32>
    %862 = vector.shape_cast %861 : vector<1xf32> to vector<1x1xf32>
    %863 = vector.broadcast %862 : vector<1x1xf32> to vector<8x1xf32>
    %864 = arith.divf %860, %863 : vector<8x1xf32>
    %865 = vector.broadcast %864 : vector<8x1xf32> to vector<8x128xf32>
    %866 = arith.mulf %865, %839 : vector<8x128xf32>
    %cst_271 = arith.constant dense<0.000000e+00> : vector<128xf32>
    %867 = vector.multi_reduction <add>, %866, %cst_271 [0] : vector<8x128xf32> to vector<128xf32>
    %868 = vector.shape_cast %867 : vector<128xf32> to vector<1x128xf32>
    %c0_272 = arith.constant 0 : index
    %c0_273 = arith.constant 0 : index
    %869 = vector.load %arg14[%c0_272, %c0_273] : memref<1x128xf32, #tpu.memory_space<vmem>>, vector<1x128xf32>
    tpu.vector_store %arg14[%c0_272, %c0_273], %868 {strides = array<i32>} : memref<1x128xf32, #tpu.memory_space<vmem>>, vector<1x128xf32>,
    return
  }
}

</mosaic_0001>

<llo_original>
// kernel: tpu_custom_call.1
$region0: #{tpu_custom_call.1}
  #allocation0 [shape = 'u32[]', space=smem, size = 0x4, offset = 0x4, fixed_abs, tag = 'smem constant byte address 0x4 - core index']
  #allocation1 [shape = 'u32[144,128]{1,0:T(1,128)}', space=vmem, size = 0x12000, scoped, tag = 'internal scratch']
  #allocation2 [shape = 'f32[8,8,1024]{2,1,0:T(8,128)}', space=vmem, size = 0x40000, scoped, tag = 'scratch operand']
  #allocation3 [shape = 'f32[8,8,1024]{2,1,0:T(8,128)}', space=vmem, size = 0x40000, scoped, tag = 'scratch operand']
  #allocation4 [shape = 'f32[8,8,256]{2,1,0:T(8,128)}', space=vmem, size = 0x10000, scoped, tag = 'scratch operand']
  #allocation5 [shape = 'f32[8,8,256]{2,1,0:T(8,128)}', space=vmem, size = 0x10000, scoped, tag = 'scratch operand']
  #allocation6 [shape = 'f32[8,8,512]{2,1,0:T(8,128)}', space=vmem, size = 0x20000, scoped, tag = 'scratch operand']
  #allocation7 [shape = 'f32[1,1]{1,0:T(1,128)S(1)}', space=vmem, size = 0x200, scoped, tag = 'scoped memory for tpu_custom_call.1']
  %s0 = inlined_call_operand.vmem [shape: f32[8,8,128], index: 0, kind: input, shape index: {}]
  %s1 = inlined_call_operand.hbm [shape: f32[128,2048], index: 1, kind: input, shape index: {}]
  %s2 = inlined_call_operand.vmem [shape: f32[1,2048], index: 2, kind: input, shape index: {}]
  %s3 = inlined_call_operand.hbm [shape: bf16[256,1024], index: 3, kind: input, shape index: {}]
  %s4 = inlined_call_operand.hbm [shape: bf16[256,1024], index: 4, kind: input, shape index: {}]
  %s5 = inlined_call_operand.hbm [shape: f32[256,1024], index: 5, kind: input, shape index: {}]
  %s6 = inlined_call_operand.hbm [shape: f32[256,1024], index: 6, kind: input, shape index: {}]
  %s7 = inlined_call_operand.vmem [shape: f32[1,1024], index: 7, kind: input, shape index: {}]
  %s8 = inlined_call_operand.vmem [shape: bf16[128,512], index: 8, kind: input, shape index: {}]
  %s9 = inlined_call_operand.hbm [shape: bf16[128,512], index: 9, kind: input, shape index: {}]
  %s10 = inlined_call_operand.vmem [shape: f32[128,100], index: 10, kind: input, shape index: {}]
  %s11 = inlined_call_operand.vmem [shape: f32[1,100], index: 11, kind: input, shape index: {}]
  %s12 = inlined_call_operand.vmem [shape: f32[100,1], index: 12, kind: input, shape index: {}]
  %s13 = inlined_call_operand.<no memory space> [shape: f32[1,1], index: 13, kind: input, shape index: {}]
  %s14 = inlined_call_operand.hbm [shape: f32[1,128], index: 14, kind: output, shape index: {}]
  %s15 = sld [smem:[#allocation0]]
  $region90: #{tpu_custom_call.1} parent=0
    _
  %s17 = ssub.s32 1, %s15
  %s18 = scalar_select 0, %s17, %s15
  %v19 = vstv %s13
  %20 = vst [vmem:[#allocation7] sm:$0x1] %v19
  $region1: #{tpu_custom_call.1} parent=0
    #allocation8 [shape = 'u8[1048576]{0}', space=vmem, size = 0x100000, scoped, tag = 'input window, operand 1, single buffered']
    #allocation9 [shape = 's32[1]{0}', space=sflag, size = 0x4, scoped, tag = 'scoped memory for tpu_custom_call.1']
    #allocation10 [shape = 's32[1]{0}', space=sflag, size = 0x4, scoped, tag = 'scoped memory for tpu_custom_call.1']
    #allocation11 [shape = 'u8[524288]{0}', space=vmem, size = 0x80000, scoped, tag = 'input window, operand 3, single buffered']
    #allocation12 [shape = 's32[1]{0}', space=sflag, size = 0x4, scoped, tag = 'scoped memory for tpu_custom_call.1']
    #allocation13 [shape = 'u8[524288]{0}', space=vmem, size = 0x80000, scoped, tag = 'input window, operand 4, single buffered']
    #allocation14 [shape = 'u8[1048576]{0}', space=vmem, size = 0x100000, scoped, tag = 'input window, operand 5, single buffered']
    #allocation15 [shape = 's32[1]{0}', space=sflag, size = 0x4, scoped, tag = 'scoped memory for tpu_custom_call.1']
    #allocation16 [shape = 'u8[1048576]{0}', space=vmem, size = 0x100000, scoped, tag = 'input window, operand 6, single buffered']
    #allocation17 [shape = 'u8[131072]{0}', space=vmem, size = 0x20000, scoped, tag = 'input window, operand 9, single buffered']
    #allocation18 [shape = 's32[1]{0}', space=sflag, size = 0x4, scoped, tag = 'scoped memory for tpu_custom_call.1']
    #allocation19 [shape = 'u8[512]{0}', space=vmem, size = 0x400, scoped, tag = 'output window, operand 0, single buffered']
    %21 = vsyncpa [#allocation9], 0
    %22 = vsyncpa [#allocation12], 0
    %23 = vsyncpa [#allocation15], 0
    %24 = vsyncpa [#allocation18], 0
    %25 = vsyncpa [#allocation10], 0
    // Predicated region
    $region2: #{tpu_custom_call.1} parent=1 // pred_check
      _
    $region3: #{tpu_custom_call.1} parent=1 // pred_check_branch
      %27 = sbr.rel (0) target = $region5
    $region4: #{tpu_custom_call.1} parent=1 // pred_region
      _
    $region5: #{tpu_custom_call.1} parent=1 // pred_fallthru
      _
    // Predicated region
    $region6: #{tpu_custom_call.1} parent=1 // pred_check
      _
    $region7: #{tpu_custom_call.1} parent=1 // pred_check_branch
      %29 = sbr.rel (0) target = $region9
    $region8: #{tpu_custom_call.1} parent=1 // pred_region
      %s31 = ssub.s32 32768, 32768
      %32 = vsyncadd [#allocation9], %s31
      %s33 = sshll.u32 [#allocation8], 4
      %s34 = int_to_ptr.vmem [resolvable:$true] %s33
      %39 = dma.hbm_to_vmem [thread:$0]  %s1, 32768, %s34, [#allocation9], 2048, 2048, 128
    $region9: #{tpu_custom_call.1} parent=1 // pred_fallthru
      _
    // Predicated region
    $region10: #{tpu_custom_call.1} parent=1 // pred_check
      _
    $region11: #{tpu_custom_call.1} parent=1 // pred_check_branch
      %41 = sbr.rel (0) target = $region13
    $region12: #{tpu_custom_call.1} parent=1 // pred_region
      _
    $region13: #{tpu_custom_call.1} parent=1 // pred_fallthru
      _
    // Predicated region
    $region14: #{tpu_custom_call.1} parent=1 // pred_check
      _
    $region15: #{tpu_custom_call.1} parent=1 // pred_check_branch
      %43 = sbr.rel (0) target = $region17
    $region16: #{tpu_custom_call.1} parent=1 // pred_region
      %s45 = ssub.s32 16384, 16384
      %46 = vsyncadd [#allocation12], %s45
      %s47 = sshll.u32 [#allocation11], 4
      %s48 = int_to_ptr.vmem [resolvable:$true] %s47
      %53 = dma.hbm_to_vmem [thread:$0]  %s3, 16384, %s48, [#allocation12], 512, 512, 32
    $region17: #{tpu_custom_call.1} parent=1 // pred_fallthru
      _
    // Predicated region
    $region18: #{tpu_custom_call.1} parent=1 // pred_check
      _
    $region19: #{tpu_custom_call.1} parent=1 // pred_check_branch
      %55 = sbr.rel (0) target = $region21
    $region20: #{tpu_custom_call.1} parent=1 // pred_region
      %s57 = ssub.s32 16384, 16384
      %58 = vsyncadd [#allocation12], %s57
      %s59 = sshll.u32 [#allocation13], 4
      %s60 = int_to_ptr.vmem [resolvable:$true] %s59
      %65 = dma.hbm_to_vmem [thread:$0]  %s4, 16384, %s60, [#allocation12], 512, 512, 32
    $region21: #{tpu_custom_call.1} parent=1 // pred_fallthru
      _
    // Predicated region
    $region22: #{tpu_custom_call.1} parent=1 // pred_check
      _
    $region23: #{tpu_custom_call.1} parent=1 // pred_check_branch
      %67 = sbr.rel (0) target = $region25
    $region24: #{tpu_custom_call.1} parent=1 // pred_region
      %s69 = ssub.s32 32768, 32768
      %70 = vsyncadd [#allocation15], %s69
      %s71 = sshll.u32 [#allocation14], 4
      %s72 = int_to_ptr.vmem [resolvable:$true] %s71
      %77 = dma.hbm_to_vmem [thread:$0]  %s5, 32768, %s72, [#allocation15], 1024, 1024, 64
    $region25: #{tpu_custom_call.1} parent=1 // pred_fallthru
      _
    // Predicated region
    $region26: #{tpu_custom_call.1} parent=1 // pred_check
      _
    $region27: #{tpu_custom_call.1} parent=1 // pred_check_branch
      %79 = sbr.rel (0) target = $region29
    $region28: #{tpu_custom_call.1} parent=1 // pred_region
      %s81 = ssub.s32 32768, 32768
      %82 = vsyncadd [#allocation15], %s81
      %s83 = sshll.u32 [#allocation16], 4
      %s84 = int_to_ptr.vmem [resolvable:$true] %s83
      %89 = dma.hbm_to_vmem [thread:$0]  %s6, 32768, %s84, [#allocation15], 1024, 1024, 64
    $region29: #{tpu_custom_call.1} parent=1 // pred_fallthru
      _
    // Predicated region
    $region30: #{tpu_custom_call.1} parent=1 // pred_check
      _
    $region31: #{tpu_custom_call.1} parent=1 // pred_check_branch
      %91 = sbr.rel (0) target = $region33
    $region32: #{tpu_custom_call.1} parent=1 // pred_region
      _
    $region33: #{tpu_custom_call.1} parent=1 // pred_fallthru
      _
    // Predicated region
    $region34: #{tpu_custom_call.1} parent=1 // pred_check
      _
    $region35: #{tpu_custom_call.1} parent=1 // pred_check_branch
      %93 = sbr.rel (0) target = $region37
    $region36: #{tpu_custom_call.1} parent=1 // pred_region
      _
    $region37: #{tpu_custom_call.1} parent=1 // pred_fallthru
      _
    // Predicated region
    $region38: #{tpu_custom_call.1} parent=1 // pred_check
      _
    $region39: #{tpu_custom_call.1} parent=1 // pred_check_branch
      %95 = sbr.rel (0) target = $region41
    $region40: #{tpu_custom_call.1} parent=1 // pred_region
      %s97 = ssub.s32 4096, 4096
      %98 = vsyncadd [#allocation18], %s97
      %s99 = sshll.u32 [#allocation17], 4
      %s100 = int_to_ptr.vmem [resolvable:$true] %s99
      %105 = dma.hbm_to_vmem [thread:$0]  %s9, 4096, %s100, [#allocation18], 256, 256, 16
    $region41: #{tpu_custom_call.1} parent=1 // pred_fallthru
      _
    // Predicated region
    $region42: #{tpu_custom_call.1} parent=1 // pred_check
      _
    $region43: #{tpu_custom_call.1} parent=1 // pred_check_branch
      %107 = sbr.rel (0) target = $region45
    $region44: #{tpu_custom_call.1} parent=1 // pred_region
      _
    $region45: #{tpu_custom_call.1} parent=1 // pred_fallthru
      _
    // Predicated region
    $region46: #{tpu_custom_call.1} parent=1 // pred_check
      _
    $region47: #{tpu_custom_call.1} parent=1 // pred_check_branch
      %109 = sbr.rel (0) target = $region49
    $region48: #{tpu_custom_call.1} parent=1 // pred_region
      _
    $region49: #{tpu_custom_call.1} parent=1 // pred_fallthru
      _
    // Predicated region
    $region50: #{tpu_custom_call.1} parent=1 // pred_check
      _
    $region51: #{tpu_custom_call.1} parent=1 // pred_check_branch
      %111 = sbr.rel (0) target = $region53
    $region52: #{tpu_custom_call.1} parent=1 // pred_region
      _
    $region53: #{tpu_custom_call.1} parent=1 // pred_fallthru
      _
    // Predicated region
    $region54: #{tpu_custom_call.1} parent=1 // pred_check
      _
    $region55: #{tpu_custom_call.1} parent=1 // pred_check_branch
      %113 = sbr.rel (0) target = $region57
    $region56: #{tpu_custom_call.1} parent=1 // pred_region
      _
    $region57: #{tpu_custom_call.1} parent=1 // pred_fallthru
      _
    // Predicated region
    $region58: #{tpu_custom_call.1} parent=1 // pred_check
      _
    $region59: #{tpu_custom_call.1} parent=1 // pred_check_branch
      %115 = sbr.rel (0) target = $region61
    $region60: #{tpu_custom_call.1} parent=1 // pred_region
      %116 = dma.done [#allocation9], 32768
    $region61: #{tpu_custom_call.1} parent=1 // pred_fallthru
      _
    // Predicated region
    $region62: #{tpu_custom_call.1} parent=1 // pred_check
      _
    $region63: #{tpu_custom_call.1} parent=1 // pred_check_branch
      %118 = sbr.rel (0) target = $region65
    $region64: #{tpu_custom_call.1} parent=1 // pred_region
      %119 = dma.done [#allocation12], 16384
    $region65: #{tpu_custom_call.1} parent=1 // pred_fallthru
      _
    // Predicated region
    $region66: #{tpu_custom_call.1} parent=1 // pred_check
      _
    $region67: #{tpu_custom_call.1} parent=1 // pred_check_branch
      %121 = sbr.rel (0) target = $region69
    $region68: #{tpu_custom_call.1} parent=1 // pred_region
      %122 = dma.done [#allocation12], 16384
    $region69: #{tpu_custom_call.1} parent=1 // pred_fallthru
      _
    // Predicated region
    $region70: #{tpu_custom_call.1} parent=1 // pred_check
      _
    $region71: #{tpu_custom_call.1} parent=1 // pred_check_branch
      %124 = sbr.rel (0) target = $region73
    $region72: #{tpu_custom_call.1} parent=1 // pred_region
      %125 = dma.done [#allocation15], 32768
    $region73: #{tpu_custom_call.1} parent=1 // pred_fallthru
      _
    // Predicated region
    $region74: #{tpu_custom_call.1} parent=1 // pred_check
      _
    $region75: #{tpu_custom_call.1} parent=1 // pred_check_branch
      %127 = sbr.rel (0) target = $region77
    $region76: #{tpu_custom_call.1} parent=1 // pred_region
      %128 = dma.done [#allocation15], 32768
    $region77: #{tpu_custom_call.1} parent=1 // pred_fallthru
      _
    // Predicated region
    $region78: #{tpu_custom_call.1} parent=1 // pred_check
      _
    $region79: #{tpu_custom_call.1} parent=1 // pred_check_branch
      %130 = sbr.rel (0) target = $region81
    $region80: #{tpu_custom_call.1} parent=1 // pred_region
      %131 = dma.done [#allocation18], 4096
    $region81: #{tpu_custom_call.1} parent=1 // pred_fallthru
      _
    %v133 = vld [vmem:[%s0] sm:$0xff]
    %v134 = vld [vmem:[%s0 + $0x8] sm:$0xff]
    %v135 = vld [vmem:[%s0 + $0x10] sm:$0xff]
    %v136 = vld [vmem:[%s0 + $0x18] sm:$0xff]
    %v137 = vld [vmem:[%s0 + $0x20] sm:$0xff]
    %v138 = vld [vmem:[%s0 + $0x28] sm:$0xff]
    %v139 = vld [vmem:[%s0 + $0x30] sm:$0xff]
    %v140 = vld [vmem:[%s0 + $0x38] sm:$0xff]
    %v141 = vld [vmem:[#allocation8] sm:$0xff]
    %v142 = vld [vmem:[#allocation8 + $0x8] sm:$0xff]
    %v143 = vld [vmem:[#allocation8 + $0x10] sm:$0xff]
    %v144 = vld [vmem:[#allocation8 + $0x18] sm:$0xff]
    %v145 = vld [vmem:[#allocation8 + $0x20] sm:$0xff]
    %v146 = vld [vmem:[#allocation8 + $0x28] sm:$0xff]
    %v147 = vld [vmem:[#allocation8 + $0x30] sm:$0xff]
    %v148 = vld [vmem:[#allocation8 + $0x38] sm:$0xff]
    %v149 = vld [vmem:[#allocation8 + $0x40] sm:$0xff]
    %v150 = vld [vmem:[#allocation8 + $0x48] sm:$0xff]
    %v151 = vld [vmem:[#allocation8 + $0x50] sm:$0xff]
    %v152 = vld [vmem:[#allocation8 + $0x58] sm:$0xff]
    %v153 = vld [vmem:[#allocation8 + $0x60] sm:$0xff]
    %v154 = vld [vmem:[#allocation8 + $0x68] sm:$0xff]
    %v155 = vld [vmem:[#allocation8 + $0x70] sm:$0xff]
    %v156 = vld [vmem:[#allocation8 + $0x78] sm:$0xff]
    %v157 = vld [vmem:[#allocation8 + $0x80] sm:$0xff]
    %v158 = vld [vmem:[#allocation8 + $0x88] sm:$0xff]
    %v159 = vld [vmem:[#allocation8 + $0x90] sm:$0xff]
    %v160 = vld [vmem:[#allocation8 + $0x98] sm:$0xff]
    %v161 = vld [vmem:[#allocation8 + $0xa0] sm:$0xff]
    %v162 = vld [vmem:[#allocation8 + $0xa8] sm:$0xff]
    %v163 = vld [vmem:[#allocation8 + $0xb0] sm:$0xff]
    %v164 = vld [vmem:[#allocation8 + $0xb8] sm:$0xff]
    %v165 = vld [vmem:[#allocation8 + $0xc0] sm:$0xff]
    %v166 = vld [vmem:[#allocation8 + $0xc8] sm:$0xff]
    %v167 = vld [vmem:[#allocation8 + $0xd0] sm:$0xff]
    %v168 = vld [vmem:[#allocation8 + $0xd8] sm:$0xff]
    %v169 = vld [vmem:[#allocation8 + $0xe0] sm:$0xff]
    %v170 = vld [vmem:[#allocation8 + $0xe8] sm:$0xff]
    %v171 = vld [vmem:[#allocation8 + $0xf0] sm:$0xff]
    %v172 = vld [vmem:[#allocation8 + $0xf8] sm:$0xff]
    %v173 = vld [vmem:[#allocation8 + $0x100] sm:$0xff]
    %v174 = vld [vmem:[#allocation8 + $0x108] sm:$0xff]
    %v175 = vld [vmem:[#allocation8 + $0x110] sm:$0xff]
    %v176 = vld [vmem:[#allocation8 + $0x118] sm:$0xff]
    %v177 = vld [vmem:[#allocation8 + $0x120] sm:$0xff]
    %v178 = vld [vmem:[#allocation8 + $0x128] sm:$0xff]
    %v179 = vld [vmem:[#allocation8 + $0x130] sm:$0xff]
    %v180 = vld [vmem:[#allocation8 + $0x138] sm:$0xff]
    %v181 = vld [vmem:[#allocation8 + $0x140] sm:$0xff]
    %v182 = vld [vmem:[#allocation8 + $0x148] sm:$0xff]
    %v183 = vld [vmem:[#allocation8 + $0x150] sm:$0xff]
    %v184 = vld [vmem:[#allocation8 + $0x158] sm:$0xff]
    %v185 = vld [vmem:[#allocation8 + $0x160] sm:$0xff]
    %v186 = vld [vmem:[#allocation8 + $0x168] sm:$0xff]
    %v187 = vld [vmem:[#allocation8 + $0x170] sm:$0xff]
    %v188 = vld [vmem:[#allocation8 + $0x178] sm:$0xff]
    %v189 = vld [vmem:[#allocation8 + $0x180] sm:$0xff]
    %v190 = vld [vmem:[#allocation8 + $0x188] sm:$0xff]
    %v191 = vld [vmem:[#allocation8 + $0x190] sm:$0xff]
    %v192 = vld [vmem:[#allocation8 + $0x198] sm:$0xff]
    %v193 = vld [vmem:[#allocation8 + $0x1a0] sm:$0xff]
    %v194 = vld [vmem:[#allocation8 + $0x1a8] sm:$0xff]
    %v195 = vld [vmem:[#allocation8 + $0x1b0] sm:$0xff]
    %v196 = vld [vmem:[#allocation8 + $0x1b8] sm:$0xff]
    %v197 = vld [vmem:[#allocation8 + $0x1c0] sm:$0xff]
    %v198 = vld [vmem:[#allocation8 + $0x1c8] sm:$0xff]
    %v199 = vld [vmem:[#allocation8 + $0x1d0] sm:$0xff]
    %v200 = vld [vmem:[#allocation8 + $0x1d8] sm:$0xff]
    %v201 = vld [vmem:[#allocation8 + $0x1e0] sm:$0xff]
    %v202 = vld [vmem:[#allocation8 + $0x1e8] sm:$0xff]
    %v203 = vld [vmem:[#allocation8 + $0x1f0] sm:$0xff]
    %v204 = vld [vmem:[#allocation8 + $0x1f8] sm:$0xff]
    %v205 = vld [vmem:[#allocation8 + $0x200] sm:$0xff]
    %v206 = vld [vmem:[#allocation8 + $0x208] sm:$0xff]
    %v207 = vld [vmem:[#allocation8 + $0x210] sm:$0xff]
    %v208 = vld [vmem:[#allocation8 + $0x218] sm:$0xff]
    %v209 = vld [vmem:[#allocation8 + $0x220] sm:$0xff]
    %v210 = vld [vmem:[#allocation8 + $0x228] sm:$0xff]
    %v211 = vld [vmem:[#allocation8 + $0x230] sm:$0xff]
    %v212 = vld [vmem:[#allocation8 + $0x238] sm:$0xff]
    %v213 = vld [vmem:[#allocation8 + $0x240] sm:$0xff]
    %v214 = vld [vmem:[#allocation8 + $0x248] sm:$0xff]
    %v215 = vld [vmem:[#allocation8 + $0x250] sm:$0xff]
    %v216 = vld [vmem:[#allocation8 + $0x258] sm:$0xff]
    %v217 = vld [vmem:[#allocation8 + $0x260] sm:$0xff]
    %v218 = vld [vmem:[#allocation8 + $0x268] sm:$0xff]
    %v219 = vld [vmem:[#allocation8 + $0x270] sm:$0xff]
    %v220 = vld [vmem:[#allocation8 + $0x278] sm:$0xff]
    %v221 = vld [vmem:[#allocation8 + $0x280] sm:$0xff]
    %v222 = vld [vmem:[#allocation8 + $0x288] sm:$0xff]
    %v223 = vld [vmem:[#allocation8 + $0x290] sm:$0xff]
    %v224 = vld [vmem:[#allocation8 + $0x298] sm:$0xff]
    %v225 = vld [vmem:[#allocation8 + $0x2a0] sm:$0xff]
    %v226 = vld [vmem:[#allocation8 + $0x2a8] sm:$0xff]
    %v227 = vld [vmem:[#allocation8 + $0x2b0] sm:$0xff]
    %v228 = vld [vmem:[#allocation8 + $0x2b8] sm:$0xff]
    %v229 = vld [vmem:[#allocation8 + $0x2c0] sm:$0xff]
    %v230 = vld [vmem:[#allocation8 + $0x2c8] sm:$0xff]
    %v231 = vld [vmem:[#allocation8 + $0x2d0] sm:$0xff]
    %v232 = vld [vmem:[#allocation8 + $0x2d8] sm:$0xff]
    %v233 = vld [vmem:[#allocation8 + $0x2e0] sm:$0xff]
    %v234 = vld [vmem:[#allocation8 + $0x2e8] sm:$0xff]
    %v235 = vld [vmem:[#allocation8 + $0x2f0] sm:$0xff]
    %v236 = vld [vmem:[#allocation8 + $0x2f8] sm:$0xff]
    %v237 = vld [vmem:[#allocation8 + $0x300] sm:$0xff]
    %v238 = vld [vmem:[#allocation8 + $0x308] sm:$0xff]
    %v239 = vld [vmem:[#allocation8 + $0x310] sm:$0xff]
    %v240 = vld [vmem:[#allocation8 + $0x318] sm:$0xff]
    %v241 = vld [vmem:[#allocation8 + $0x320] sm:$0xff]
    %v242 = vld [vmem:[#allocation8 + $0x328] sm:$0xff]
    %v243 = vld [vmem:[#allocation8 + $0x330] sm:$0xff]
    %v244 = vld [vmem:[#allocation8 + $0x338] sm:$0xff]
    %v245 = vld [vmem:[#allocation8 + $0x340] sm:$0xff]
    %v246 = vld [vmem:[#allocation8 + $0x348] sm:$0xff]
    %v247 = vld [vmem:[#allocation8 + $0x350] sm:$0xff]
    %v248 = vld [vmem:[#allocation8 + $0x358] sm:$0xff]
    %v249 = vld [vmem:[#allocation8 + $0x360] sm:$0xff]
    %v250 = vld [vmem:[#allocation8 + $0x368] sm:$0xff]
    %v251 = vld [vmem:[#allocation8 + $0x370] sm:$0xff]
    %v252 = vld [vmem:[#allocation8 + $0x378] sm:$0xff]
    %v253 = vld [vmem:[#allocation8 + $0x380] sm:$0xff]
    %v254 = vld [vmem:[#allocation8 + $0x388] sm:$0xff]
    %v255 = vld [vmem:[#allocation8 + $0x390] sm:$0xff]
    %v256 = vld [vmem:[#allocation8 + $0x398] sm:$0xff]
    %v257 = vld [vmem:[#allocation8 + $0x3a0] sm:$0xff]
    %v258 = vld [vmem:[#allocation8 + $0x3a8] sm:$0xff]
    %v259 = vld [vmem:[#allocation8 + $0x3b0] sm:$0xff]
    %v260 = vld [vmem:[#allocation8 + $0x3b8] sm:$0xff]
    %v261 = vld [vmem:[#allocation8 + $0x3c0] sm:$0xff]
    %v262 = vld [vmem:[#allocation8 + $0x3c8] sm:$0xff]
    %v263 = vld [vmem:[#allocation8 + $0x3d0] sm:$0xff]
    %v264 = vld [vmem:[#allocation8 + $0x3d8] sm:$0xff]
    %v265 = vld [vmem:[#allocation8 + $0x3e0] sm:$0xff]
    %v266 = vld [vmem:[#allocation8 + $0x3e8] sm:$0xff]
    %v267 = vld [vmem:[#allocation8 + $0x3f0] sm:$0xff]
    %v268 = vld [vmem:[#allocation8 + $0x3f8] sm:$0xff]
    %v269 = vld [vmem:[#allocation8 + $0x400] sm:$0xff]
    %v270 = vld [vmem:[#allocation8 + $0x408] sm:$0xff]
    %v271 = vld [vmem:[#allocation8 + $0x410] sm:$0xff]
    %v272 = vld [vmem:[#allocation8 + $0x418] sm:$0xff]
    %v273 = vld [vmem:[#allocation8 + $0x420] sm:$0xff]
    %v274 = vld [vmem:[#allocation8 + $0x428] sm:$0xff]
    %v275 = vld [vmem:[#allocation8 + $0x430] sm:$0xff]
    %v276 = vld [vmem:[#allocation8 + $0x438] sm:$0xff]
    %v277 = vld [vmem:[#allocation8 + $0x440] sm:$0xff]
    %v278 = vld [vmem:[#allocation8 + $0x448] sm:$0xff]
    %v279 = vld [vmem:[#allocation8 + $0x450] sm:$0xff]
    %v280 = vld [vmem:[#allocation8 + $0x458] sm:$0xff]
    %v281 = vld [vmem:[#allocation8 + $0x460] sm:$0xff]
    %v282 = vld [vmem:[#allocation8 + $0x468] sm:$0xff]
    %v283 = vld [vmem:[#allocation8 + $0x470] sm:$0xff]
    %v284 = vld [vmem:[#allocation8 + $0x478] sm:$0xff]
    %v285 = vld [vmem:[#allocation8 + $0x480] sm:$0xff]
    %v286 = vld [vmem:[#allocation8 + $0x488] sm:$0xff]
    %v287 = vld [vmem:[#allocation8 + $0x490] sm:$0xff]
    %v288 = vld [vmem:[#allocation8 + $0x498] sm:$0xff]
    %v289 = vld [vmem:[#allocation8 + $0x4a0] sm:$0xff]
    %v290 = vld [vmem:[#allocation8 + $0x4a8] sm:$0xff]
    %v291 = vld [vmem:[#allocation8 + $0x4b0] sm:$0xff]
    %v292 = vld [vmem:[#allocation8 + $0x4b8] sm:$0xff]
    %v293 = vld [vmem:[#allocation8 + $0x4c0] sm:$0xff]
    %v294 = vld [vmem:[#allocation8 + $0x4c8] sm:$0xff]
    %v295 = vld [vmem:[#allocation8 + $0x4d0] sm:$0xff]
    %v296 = vld [vmem:[#allocation8 + $0x4d8] sm:$0xff]
    %v297 = vld [vmem:[#allocation8 + $0x4e0] sm:$0xff]
    %v298 = vld [vmem:[#allocation8 + $0x4e8] sm:$0xff]
    %v299 = vld [vmem:[#allocation8 + $0x4f0] sm:$0xff]
    %v300 = vld [vmem:[#allocation8 + $0x4f8] sm:$0xff]
    %v301 = vld [vmem:[#allocation8 + $0x500] sm:$0xff]
    %v302 = vld [vmem:[#allocation8 + $0x508] sm:$0xff]
    %v303 = vld [vmem:[#allocation8 + $0x510] sm:$0xff]
    %v304 = vld [vmem:[#allocation8 + $0x518] sm:$0xff]
    %v305 = vld [vmem:[#allocation8 + $0x520] sm:$0xff]
    %v306 = vld [vmem:[#allocation8 + $0x528] sm:$0xff]
    %v307 = vld [vmem:[#allocation8 + $0x530] sm:$0xff]
    %v308 = vld [vmem:[#allocation8 + $0x538] sm:$0xff]
    %v309 = vld [vmem:[#allocation8 + $0x540] sm:$0xff]
    %v310 = vld [vmem:[#allocation8 + $0x548] sm:$0xff]
    %v311 = vld [vmem:[#allocation8 + $0x550] sm:$0xff]
    %v312 = vld [vmem:[#allocation8 + $0x558] sm:$0xff]
    %v313 = vld [vmem:[#allocation8 + $0x560] sm:$0xff]
    %v314 = vld [vmem:[#allocation8 + $0x568] sm:$0xff]
    %v315 = vld [vmem:[#allocation8 + $0x570] sm:$0xff]
    %v316 = vld [vmem:[#allocation8 + $0x578] sm:$0xff]
    %v317 = vld [vmem:[#allocation8 + $0x580] sm:$0xff]
    %v318 = vld [vmem:[#allocation8 + $0x588] sm:$0xff]
    %v319 = vld [vmem:[#allocation8 + $0x590] sm:$0xff]
    %v320 = vld [vmem:[#allocation8 + $0x598] sm:$0xff]
    %v321 = vld [vmem:[#allocation8 + $0x5a0] sm:$0xff]
    %v322 = vld [vmem:[#allocation8 + $0x5a8] sm:$0xff]
    %v323 = vld [vmem:[#allocation8 + $0x5b0] sm:$0xff]
    %v324 = vld [vmem:[#allocation8 + $0x5b8] sm:$0xff]
    %v325 = vld [vmem:[#allocation8 + $0x5c0] sm:$0xff]
    %v326 = vld [vmem:[#allocation8 + $0x5c8] sm:$0xff]
    %v327 = vld [vmem:[#allocation8 + $0x5d0] sm:$0xff]
    %v328 = vld [vmem:[#allocation8 + $0x5d8] sm:$0xff]
    %v329 = vld [vmem:[#allocation8 + $0x5e0] sm:$0xff]
    %v330 = vld [vmem:[#allocation8 + $0x5e8] sm:$0xff]
    %v331 = vld [vmem:[#allocation8 + $0x5f0] sm:$0xff]
    %v332 = vld [vmem:[#allocation8 + $0x5f8] sm:$0xff]
    %v333 = vld [vmem:[#allocation8 + $0x600] sm:$0xff]
    %v334 = vld [vmem:[#allocation8 + $0x608] sm:$0xff]
    %v335 = vld [vmem:[#allocation8 + $0x610] sm:$0xff]
    %v336 = vld [vmem:[#allocation8 + $0x618] sm:$0xff]
    %v337 = vld [vmem:[#allocation8 + $0x620] sm:$0xff]
    %v338 = vld [vmem:[#allocation8 + $0x628] sm:$0xff]
    %v339 = vld [vmem:[#allocation8 + $0x630] sm:$0xff]
    %v340 = vld [vmem:[#allocation8 + $0x638] sm:$0xff]
    %v341 = vld [vmem:[#allocation8 + $0x640] sm:$0xff]
    %v342 = vld [vmem:[#allocation8 + $0x648] sm:$0xff]
    %v343 = vld [vmem:[#allocation8 + $0x650] sm:$0xff]
    %v344 = vld [vmem:[#allocation8 + $0x658] sm:$0xff]
    %v345 = vld [vmem:[#allocation8 + $0x660] sm:$0xff]
    %v346 = vld [vmem:[#allocation8 + $0x668] sm:$0xff]
    %v347 = vld [vmem:[#allocation8 + $0x670] sm:$0xff]
    %v348 = vld [vmem:[#allocation8 + $0x678] sm:$0xff]
    %v349 = vld [vmem:[#allocation8 + $0x680] sm:$0xff]
    %v350 = vld [vmem:[#allocation8 + $0x688] sm:$0xff]
    %v351 = vld [vmem:[#allocation8 + $0x690] sm:$0xff]
    %v352 = vld [vmem:[#allocation8 + $0x698] sm:$0xff]
    %v353 = vld [vmem:[#allocation8 + $0x6a0] sm:$0xff]
    %v354 = vld [vmem:[#allocation8 + $0x6a8] sm:$0xff]
    %v355 = vld [vmem:[#allocation8 + $0x6b0] sm:$0xff]
    %v356 = vld [vmem:[#allocation8 + $0x6b8] sm:$0xff]
    %v357 = vld [vmem:[#allocation8 + $0x6c0] sm:$0xff]
    %v358 = vld [vmem:[#allocation8 + $0x6c8] sm:$0xff]
    %v359 = vld [vmem:[#allocation8 + $0x6d0] sm:$0xff]
    %v360 = vld [vmem:[#allocation8 + $0x6d8] sm:$0xff]
    %v361 = vld [vmem:[#allocation8 + $0x6e0] sm:$0xff]
    %v362 = vld [vmem:[#allocation8 + $0x6e8] sm:$0xff]
    %v363 = vld [vmem:[#allocation8 + $0x6f0] sm:$0xff]
    %v364 = vld [vmem:[#allocation8 + $0x6f8] sm:$0xff]
    %v365 = vld [vmem:[#allocation8 + $0x700] sm:$0xff]
    %v366 = vld [vmem:[#allocation8 + $0x708] sm:$0xff]
    %v367 = vld [vmem:[#allocation8 + $0x710] sm:$0xff]
    %v368 = vld [vmem:[#allocation8 + $0x718] sm:$0xff]
    %v369 = vld [vmem:[#allocation8 + $0x720] sm:$0xff]
    %v370 = vld [vmem:[#allocation8 + $0x728] sm:$0xff]
    %v371 = vld [vmem:[#allocation8 + $0x730] sm:$0xff]
    %v372 = vld [vmem:[#allocation8 + $0x738] sm:$0xff]
    %v373 = vld [vmem:[#allocation8 + $0x740] sm:$0xff]
    %v374 = vld [vmem:[#allocation8 + $0x748] sm:$0xff]
    %v375 = vld [vmem:[#allocation8 + $0x750] sm:$0xff]
    %v376 = vld [vmem:[#allocation8 + $0x758] sm:$0xff]
    %v377 = vld [vmem:[#allocation8 + $0x760] sm:$0xff]
    %v378 = vld [vmem:[#allocation8 + $0x768] sm:$0xff]
    %v379 = vld [vmem:[#allocation8 + $0x770] sm:$0xff]
    %v380 = vld [vmem:[#allocation8 + $0x778] sm:$0xff]
    %v381 = vld [vmem:[#allocation8 + $0x780] sm:$0xff]
    %v382 = vld [vmem:[#allocation8 + $0x788] sm:$0xff]
    %v383 = vld [vmem:[#allocation8 + $0x790] sm:$0xff]
    %v384 = vld [vmem:[#allocation8 + $0x798] sm:$0xff]
    %v385 = vld [vmem:[#allocation8 + $0x7a0] sm:$0xff]
    %v386 = vld [vmem:[#allocation8 + $0x7a8] sm:$0xff]
    %v387 = vld [vmem:[#allocation8 + $0x7b0] sm:$0xff]
    %v388 = vld [vmem:[#allocation8 + $0x7b8] sm:$0xff]
    %v389 = vld [vmem:[#allocation8 + $0x7c0] sm:$0xff]
    %v390 = vld [vmem:[#allocation8 + $0x7c8] sm:$0xff]
    %v391 = vld [vmem:[#allocation8 + $0x7d0] sm:$0xff]
    %v392 = vld [vmem:[#allocation8 + $0x7d8] sm:$0xff]
    %v393 = vld [vmem:[#allocation8 + $0x7e0] sm:$0xff]
    %v394 = vld [vmem:[#allocation8 + $0x7e8] sm:$0xff]
    %v395 = vld [vmem:[#allocation8 + $0x7f0] sm:$0xff]
    %v396 = vld [vmem:[#allocation8 + $0x7f8] sm:$0xff]
    %v397 = vld [vmem:[%s2] sm:$0xff]
    %v398 = vld [vmem:[%s2 + $0x8] sm:$0xff]
    %v401 = vlaneseq
    %v402 = vshrl.u32 %v401, 7
    %v403 = vsub.s32 0, %v402
    %v404 = vrot.slane %v397, %v403
    %v405 = vlaneseq
    %v406 = vshrl.u32 %v405, 7
    %v407 = vsub.s32 1, %v406
    %v408 = vrot.slane %v397, %v407
    %v409 = vlaneseq
    %v410 = vshrl.u32 %v409, 7
    %v411 = vsub.s32 2, %v410
    %v412 = vrot.slane %v397, %v411
    %v413 = vlaneseq
    %v414 = vshrl.u32 %v413, 7
    %v415 = vsub.s32 3, %v414
    %v416 = vrot.slane %v397, %v415
    %v417 = vlaneseq
    %v418 = vshrl.u32 %v417, 7
    %v419 = vsub.s32 4, %v418
    %v420 = vrot.slane %v397, %v419
    %v421 = vlaneseq
    %v422 = vshrl.u32 %v421, 7
    %v423 = vsub.s32 5, %v422
    %v424 = vrot.slane %v397, %v423
    %v425 = vlaneseq
    %v426 = vshrl.u32 %v425, 7
    %v427 = vsub.s32 6, %v426
    %v428 = vrot.slane %v397, %v427
    %v429 = vlaneseq
    %v430 = vshrl.u32 %v429, 7
    %v431 = vsub.s32 7, %v430
    %v432 = vrot.slane %v397, %v431
    %v433 = vlaneseq
    %v434 = vshrl.u32 %v433, 7
    %v435 = vsub.s32 0, %v434
    %v436 = vrot.slane %v398, %v435
    %v437 = vlaneseq
    %v438 = vshrl.u32 %v437, 7
    %v439 = vsub.s32 1, %v438
    %v440 = vrot.slane %v398, %v439
    %v441 = vlaneseq
    %v442 = vshrl.u32 %v441, 7
    %v443 = vsub.s32 2, %v442
    %v444 = vrot.slane %v398, %v443
    %v445 = vlaneseq
    %v446 = vshrl.u32 %v445, 7
    %v447 = vsub.s32 3, %v446
    %v448 = vrot.slane %v398, %v447
    %v449 = vlaneseq
    %v450 = vshrl.u32 %v449, 7
    %v451 = vsub.s32 4, %v450
    %v452 = vrot.slane %v398, %v451
    %v453 = vlaneseq
    %v454 = vshrl.u32 %v453, 7
    %v455 = vsub.s32 5, %v454
    %v456 = vrot.slane %v398, %v455
    %v457 = vlaneseq
    %v458 = vshrl.u32 %v457, 7
    %v459 = vsub.s32 6, %v458
    %v460 = vrot.slane %v398, %v459
    %v461 = vlaneseq
    %v462 = vshrl.u32 %v461, 7
    %v463 = vsub.s32 7, %v462
    %v464 = vrot.slane %v398, %v463
    %481 = vmatprep.subr.mxu0 %v382
    %482 = vmatpush1.msra.mxu0 %v381
    %483 = vmatprep.subr.mxu0 %v366
    %484 = vmatpush1.msra.mxu0 %v365
    %485 = vmatprep.subr.mxu0 %v350
    %486 = vmatpush1.msra.mxu0 %v349
    %487 = vmatprep.subr.mxu0 %v334
    %488 = vmatpush1.msra.mxu0 %v333
    %489 = vmatprep.subr.mxu0 %v318
    %490 = vmatpush1.msra.mxu0 %v317
    %491 = vmatprep.subr.mxu0 %v302
    %492 = vmatpush1.msra.mxu0 %v301
    %493 = vmatprep.subr.mxu0 %v286
    %494 = vmatpush1.msra.mxu0 %v285
    %495 = vmatprep.subr.mxu0 %v270
    %496 = vmatpush1.msra.mxu0 %v269
    %497 = vmatprep.subr.mxu0 %v254
    %498 = vmatpush1.msra.mxu0 %v253
    %499 = vmatprep.subr.mxu0 %v238
    %500 = vmatpush1.msra.mxu0 %v237
    %501 = vmatprep.subr.mxu0 %v222
    %502 = vmatpush1.msra.mxu0 %v221
    %503 = vmatprep.subr.mxu0 %v206
    %504 = vmatpush1.msra.mxu0 %v205
    %505 = vmatprep.subr.mxu0 %v190
    %506 = vmatpush1.msra.mxu0 %v189
    %507 = vmatprep.subr.mxu0 %v174
    %508 = vmatpush1.msra.mxu0 %v173
    %509 = vmatprep.subr.mxu0 %v158
    %510 = vmatpush1.msra.mxu0 %v157
    %511 = vmatprep.subr.mxu0 %v142
    %512 = vmatpush1.msra.mxu0 %v141
    %513 = vmatprep.subr.mxu0 0.0
    %514 = vmatpush2.msra.mxu0 0.0
    %515 = vmatprep.subr.mxu0 0.0
    %516 = vmatpush2.msra.mxu0 0.0
    %517 = vmatprep.subr.mxu0 0.0
    %518 = vmatpush2.msra.mxu0 0.0
    %519 = vmatprep.subr.mxu0 0.0
    %520 = vmatpush2.msra.mxu0 0.0
    %521 = vmatprep.subr.mxu0 0.0
    %522 = vmatpush2.msra.mxu0 0.0
    %523 = vmatprep.subr.mxu0 0.0
    %524 = vmatpush2.msra.mxu0 0.0
    %525 = vmatprep.subr.mxu0 0.0
    %526 = vmatpush2.msra.mxu0 0.0
    %527 = vmatprep.subr.mxu0 0.0
    %528 = vmatpush2.msra.mxu0 0.0
    %529 = vmatprep.subr.mxu0 0.0
    %530 = vmatpush2.msra.mxu0 0.0
    %531 = vmatprep.subr.mxu0 0.0
    %532 = vmatpush2.msra.mxu0 0.0
    %533 = vmatprep.subr.mxu0 0.0
    %534 = vmatpush2.msra.mxu0 0.0
    %535 = vmatprep.subr.mxu0 0.0
    %536 = vmatpush2.msra.mxu0 0.0
    %537 = vmatprep.subr.mxu0 0.0
    %538 = vmatpush2.msra.mxu0 0.0
    %539 = vmatprep.subr.mxu0 0.0
    %540 = vmatpush2.msra.mxu0 0.0
    %541 = vmatprep.subr.mxu0 0.0
    %542 = vmatpush2.msra.mxu0 0.0
    %543 = vmatprep.subr.mxu0 0.0
    %544 = vmatpush2.msra.mxu0 0.0
    %545 = vmatprep.mubr.f32.mxu0 0.0
    %546 = vmatmul.mubr.f32.gmra.mxu0 %v133
    %v547 = vpop.f32.mrf.mxu0
    %v548 = vadd.f32 %v404, %v547
    %v549 = vpop.f32.mrf.mxu0
    %v550 = vadd.f32 %v408, %v549
    %551 = vmatprep.mubr.f32.mxu0 0.0
    %552 = vmatmul.mubr.f32.gmra.mxu0 %v134
    %v553 = vpop.f32.mrf.mxu0
    %v554 = vadd.f32 %v404, %v553
    %v555 = vpop.f32.mrf.mxu0
    %v556 = vadd.f32 %v408, %v555
    %557 = vmatprep.mubr.f32.mxu0 0.0
    %558 = vmatmul.mubr.f32.gmra.mxu0 %v135
    %v559 = vpop.f32.mrf.mxu0
    %v560 = vadd.f32 %v404, %v559
    %v561 = vpop.f32.mrf.mxu0
    %v562 = vadd.f32 %v408, %v561
    %563 = vmatprep.mubr.f32.mxu0 0.0
    %564 = vmatmul.mubr.f32.gmra.mxu0 %v136
    %v565 = vpop.f32.mrf.mxu0
    %v566 = vadd.f32 %v404, %v565
    %v567 = vpop.f32.mrf.mxu0
    %v568 = vadd.f32 %v408, %v567
    %569 = vmatprep.mubr.f32.mxu0 0.0
    %570 = vmatmul.mubr.f32.gmra.mxu0 %v137
    %v571 = vpop.f32.mrf.mxu0
    %v572 = vadd.f32 %v404, %v571
    %v573 = vpop.f32.mrf.mxu0
    %v574 = vadd.f32 %v408, %v573
    %575 = vmatprep.mubr.f32.mxu0 0.0
    %576 = vmatmul.mubr.f32.gmra.mxu0 %v138
    %v577 = vpop.f32.mrf.mxu0
    %v578 = vadd.f32 %v404, %v577
    %v579 = vpop.f32.mrf.mxu0
    %v580 = vadd.f32 %v408, %v579
    %581 = vmatprep.mubr.f32.mxu0 0.0
    %582 = vmatmul.mubr.f32.gmra.mxu0 %v139
    %v583 = vpop.f32.mrf.mxu0
    %v584 = vadd.f32 %v404, %v583
    %v585 = vpop.f32.mrf.mxu0
    %v586 = vadd.f32 %v408, %v585
    %587 = vmatprep.mubr.f32.mxu0 0.0
    %588 = vmatmul.mubr.f32.gmra.mxu0 %v140
    %v589 = vpop.f32.mrf.mxu0
    %v590 = vadd.f32 %v404, %v589
    %v591 = vpop.f32.mrf.mxu0
    %v592 = vadd.f32 %v408, %v591
    %593 = vdwg.mxu0
    %594 = vmatprep.subr.mxu0 %v384
    %595 = vmatpush1.msra.mxu0 %v383
    %596 = vmatprep.subr.mxu0 %v368
    %597 = vmatpush1.msra.mxu0 %v367
    %598 = vmatprep.subr.mxu0 %v352
    %599 = vmatpush1.msra.mxu0 %v351
    %600 = vmatprep.subr.mxu0 %v336
    %601 = vmatpush1.msra.mxu0 %v335
    %602 = vmatprep.subr.mxu0 %v320
    %603 = vmatpush1.msra.mxu0 %v319
    %604 = vmatprep.subr.mxu0 %v304
    %605 = vmatpush1.msra.mxu0 %v303
    %606 = vmatprep.subr.mxu0 %v288
    %607 = vmatpush1.msra.mxu0 %v287
    %608 = vmatprep.subr.mxu0 %v272
    %609 = vmatpush1.msra.mxu0 %v271
    %610 = vmatprep.subr.mxu0 %v256
    %611 = vmatpush1.msra.mxu0 %v255
    %612 = vmatprep.subr.mxu0 %v240
    %613 = vmatpush1.msra.mxu0 %v239
    %614 = vmatprep.subr.mxu0 %v224
    %615 = vmatpush1.msra.mxu0 %v223
    %616 = vmatprep.subr.mxu0 %v208
    %617 = vmatpush1.msra.mxu0 %v207
    %618 = vmatprep.subr.mxu0 %v192
    %619 = vmatpush1.msra.mxu0 %v191
    %620 = vmatprep.subr.mxu0 %v176
    %621 = vmatpush1.msra.mxu0 %v175
    %622 = vmatprep.subr.mxu0 %v160
    %623 = vmatpush1.msra.mxu0 %v159
    %624 = vmatprep.subr.mxu0 %v144
    %625 = vmatpush1.msra.mxu0 %v143
    %626 = vmatprep.subr.mxu0 0.0
    %627 = vmatpush2.msra.mxu0 0.0
    %628 = vmatprep.subr.mxu0 0.0
    %629 = vmatpush2.msra.mxu0 0.0
    %630 = vmatprep.subr.mxu0 0.0
    %631 = vmatpush2.msra.mxu0 0.0
    %632 = vmatprep.subr.mxu0 0.0
    %633 = vmatpush2.msra.mxu0 0.0
    %634 = vmatprep.subr.mxu0 0.0
    %635 = vmatpush2.msra.mxu0 0.0
    %636 = vmatprep.subr.mxu0 0.0
    %637 = vmatpush2.msra.mxu0 0.0
    %638 = vmatprep.subr.mxu0 0.0
    %639 = vmatpush2.msra.mxu0 0.0
    %640 = vmatprep.subr.mxu0 0.0
    %641 = vmatpush2.msra.mxu0 0.0
    %642 = vmatprep.subr.mxu0 0.0
    %643 = vmatpush2.msra.mxu0 0.0
    %644 = vmatprep.subr.mxu0 0.0
    %645 = vmatpush2.msra.mxu0 0.0
    %646 = vmatprep.subr.mxu0 0.0
    %647 = vmatpush2.msra.mxu0 0.0
    %648 = vmatprep.subr.mxu0 0.0
    %649 = vmatpush2.msra.mxu0 0.0
    %650 = vmatprep.subr.mxu0 0.0
    %651 = vmatpush2.msra.mxu0 0.0
    %652 = vmatprep.subr.mxu0 0.0
    %653 = vmatpush2.msra.mxu0 0.0
    %654 = vmatprep.subr.mxu0 0.0
    %655 = vmatpush2.msra.mxu0 0.0
    %656 = vmatprep.subr.mxu0 0.0
    %657 = vmatpush2.msra.mxu0 0.0
    %658 = vmatprep.mubr.f32.mxu0 0.0
    %659 = vmatmul.mubr.f32.gmra.mxu0 %v133
    %v660 = vpop.f32.mrf.mxu0
    %v661 = vadd.f32 %v412, %v660
    %v662 = vpop.f32.mrf.mxu0
    %v663 = vadd.f32 %v416, %v662
    %664 = vmatprep.mubr.f32.mxu0 0.0
    %665 = vmatmul.mubr.f32.gmra.mxu0 %v134
    %v666 = vpop.f32.mrf.mxu0
    %v667 = vadd.f32 %v412, %v666
    %v668 = vpop.f32.mrf.mxu0
    %v669 = vadd.f32 %v416, %v668
    %670 = vmatprep.mubr.f32.mxu0 0.0
    %671 = vmatmul.mubr.f32.gmra.mxu0 %v135
    %v672 = vpop.f32.mrf.mxu0
    %v673 = vadd.f32 %v412, %v672
    %v674 = vpop.f32.mrf.mxu0
    %v675 = vadd.f32 %v416, %v674
    %676 = vmatprep.mubr.f32.mxu0 0.0
    %677 = vmatmul.mubr.f32.gmra.mxu0 %v136
    %v678 = vpop.f32.mrf.mxu0
    %v679 = vadd.f32 %v412, %v678
    %v680 = vpop.f32.mrf.mxu0
    %v681 = vadd.f32 %v416, %v680
    %682 = vmatprep.mubr.f32.mxu0 0.0
    %683 = vmatmul.mubr.f32.gmra.mxu0 %v137
    %v684 = vpop.f32.mrf.mxu0
    %v685 = vadd.f32 %v412, %v684
    %v686 = vpop.f32.mrf.mxu0
    %v687 = vadd.f32 %v416, %v686
    %688 = vmatprep.mubr.f32.mxu0 0.0
    %689 = vmatmul.mubr.f32.gmra.mxu0 %v138
    %v690 = vpop.f32.mrf.mxu0
    %v691 = vadd.f32 %v412, %v690
    %v692 = vpop.f32.mrf.mxu0
    %v693 = vadd.f32 %v416, %v692
    %694 = vmatprep.mubr.f32.mxu0 0.0
    %695 = vmatmul.mubr.f32.gmra.mxu0 %v139
    %v696 = vpop.f32.mrf.mxu0
    %v697 = vadd.f32 %v412, %v696
    %v698 = vpop.f32.mrf.mxu0
    %v699 = vadd.f32 %v416, %v698
    %700 = vmatprep.mubr.f32.mxu0 0.0
    %701 = vmatmul.mubr.f32.gmra.mxu0 %v140
    %v702 = vpop.f32.mrf.mxu0
    %v703 = vadd.f32 %v412, %v702
    %v704 = vpop.f32.mrf.mxu0
    %v705 = vadd.f32 %v416, %v704
    %706 = vdwg.mxu0
    %707 = vmatprep.subr.mxu0 %v386
    %708 = vmatpush1.msra.mxu0 %v385
    %709 = vmatprep.subr.mxu0 %v370
    %710 = vmatpush1.msra.mxu0 %v369
    %711 = vmatprep.subr.mxu0 %v354
    %712 = vmatpush1.msra.mxu0 %v353
    %713 = vmatprep.subr.mxu0 %v338
    %714 = vmatpush1.msra.mxu0 %v337
    %715 = vmatprep.subr.mxu0 %v322
    %716 = vmatpush1.msra.mxu0 %v321
    %717 = vmatprep.subr.mxu0 %v306
    %718 = vmatpush1.msra.mxu0 %v305
    %719 = vmatprep.subr.mxu0 %v290
    %720 = vmatpush1.msra.mxu0 %v289
    %721 = vmatprep.subr.mxu0 %v274
    %722 = vmatpush1.msra.mxu0 %v273
    %723 = vmatprep.subr.mxu0 %v258
    %724 = vmatpush1.msra.mxu0 %v257
    %725 = vmatprep.subr.mxu0 %v242
    %726 = vmatpush1.msra.mxu0 %v241
    %727 = vmatprep.subr.mxu0 %v226
    %728 = vmatpush1.msra.mxu0 %v225
    %729 = vmatprep.subr.mxu0 %v210
    %730 = vmatpush1.msra.mxu0 %v209
    %731 = vmatprep.subr.mxu0 %v194
    %732 = vmatpush1.msra.mxu0 %v193
    %733 = vmatprep.subr.mxu0 %v178
    %734 = vmatpush1.msra.mxu0 %v177
    %735 = vmatprep.subr.mxu0 %v162
    %736 = vmatpush1.msra.mxu0 %v161
    %737 = vmatprep.subr.mxu0 %v146
    %738 = vmatpush1.msra.mxu0 %v145
    %739 = vmatprep.subr.mxu0 0.0
    %740 = vmatpush2.msra.mxu0 0.0
    %741 = vmatprep.subr.mxu0 0.0
    %742 = vmatpush2.msra.mxu0 0.0
    %743 = vmatprep.subr.mxu0 0.0
    %744 = vmatpush2.msra.mxu0 0.0
    %745 = vmatprep.subr.mxu0 0.0
    %746 = vmatpush2.msra.mxu0 0.0
    %747 = vmatprep.subr.mxu0 0.0
    %748 = vmatpush2.msra.mxu0 0.0
    %749 = vmatprep.subr.mxu0 0.0
    %750 = vmatpush2.msra.mxu0 0.0
    %751 = vmatprep.subr.mxu0 0.0
    %752 = vmatpush2.msra.mxu0 0.0
    %753 = vmatprep.subr.mxu0 0.0
    %754 = vmatpush2.msra.mxu0 0.0
    %755 = vmatprep.subr.mxu0 0.0
    %756 = vmatpush2.msra.mxu0 0.0
    %757 = vmatprep.subr.mxu0 0.0
    %758 = vmatpush2.msra.mxu0 0.0
    %759 = vmatprep.subr.mxu0 0.0
    %760 = vmatpush2.msra.mxu0 0.0
    %761 = vmatprep.subr.mxu0 0.0
    %762 = vmatpush2.msra.mxu0 0.0
    %763 = vmatprep.subr.mxu0 0.0
    %764 = vmatpush2.msra.mxu0 0.0
    %765 = vmatprep.subr.mxu0 0.0
    %766 = vmatpush2.msra.mxu0 0.0
    %767 = vmatprep.subr.mxu0 0.0
    %768 = vmatpush2.msra.mxu0 0.0
    %769 = vmatprep.subr.mxu0 0.0
    %770 = vmatpush2.msra.mxu0 0.0
    %771 = vmatprep.mubr.f32.mxu0 0.0
    %772 = vmatmul.mubr.f32.gmra.mxu0 %v133
    %v773 = vpop.f32.mrf.mxu0
    %v774 = vadd.f32 %v420, %v773
    %v775 = vpop.f32.mrf.mxu0
    %v776 = vadd.f32 %v424, %v775
    %777 = vmatprep.mubr.f32.mxu0 0.0
    %778 = vmatmul.mubr.f32.gmra.mxu0 %v134
    %v779 = vpop.f32.mrf.mxu0
    %v780 = vadd.f32 %v420, %v779
    %v781 = vpop.f32.mrf.mxu0
    %v782 = vadd.f32 %v424, %v781
    %783 = vmatprep.mubr.f32.mxu0 0.0
    %784 = vmatmul.mubr.f32.gmra.mxu0 %v135
    %v785 = vpop.f32.mrf.mxu0
    %v786 = vadd.f32 %v420, %v785
    %v787 = vpop.f32.mrf.mxu0
    %v788 = vadd.f32 %v424, %v787
    %789 = vmatprep.mubr.f32.mxu0 0.0
    %790 = vmatmul.mubr.f32.gmra.mxu0 %v136
    %v791 = vpop.f32.mrf.mxu0
    %v792 = vadd.f32 %v420, %v791
    %v793 = vpop.f32.mrf.mxu0
    %v794 = vadd.f32 %v424, %v793
    %795 = vmatprep.mubr.f32.mxu0 0.0
    %796 = vmatmul.mubr.f32.gmra.mxu0 %v137
    %v797 = vpop.f32.mrf.mxu0
    %v798 = vadd.f32 %v420, %v797
    %v799 = vpop.f32.mrf.mxu0
    %v800 = vadd.f32 %v424, %v799
    %801 = vmatprep.mubr.f32.mxu0 0.0
    %802 = vmatmul.mubr.f32.gmra.mxu0 %v138
    %v803 = vpop.f32.mrf.mxu0
    %v804 = vadd.f32 %v420, %v803
    %v805 = vpop.f32.mrf.mxu0
    %v806 = vadd.f32 %v424, %v805
    %807 = vmatprep.mubr.f32.mxu0 0.0
    %808 = vmatmul.mubr.f32.gmra.mxu0 %v139
    %v809 = vpop.f32.mrf.mxu0
    %v810 = vadd.f32 %v420, %v809
    %v811 = vpop.f32.mrf.mxu0
    %v812 = vadd.f32 %v424, %v811
    %813 = vmatprep.mubr.f32.mxu0 0.0
    %814 = vmatmul.mubr.f32.gmra.mxu0 %v140
    %v815 = vpop.f32.mrf.mxu0
    %v816 = vadd.f32 %v420, %v815
    %v817 = vpop.f32.mrf.mxu0
    %v818 = vadd.f32 %v424, %v817
    %819 = vdwg.mxu0
    %820 = vmatprep.subr.mxu0 %v388
    %821 = vmatpush1.msra.mxu0 %v387
    %822 = vmatprep.subr.mxu0 %v372
    %823 = vmatpush1.msra.mxu0 %v371
    %824 = vmatprep.subr.mxu0 %v356
    %825 = vmatpush1.msra.mxu0 %v355
    %826 = vmatprep.subr.mxu0 %v340
    %827 = vmatpush1.msra.mxu0 %v339
    %828 = vmatprep.subr.mxu0 %v324
    %829 = vmatpush1.msra.mxu0 %v323
    %830 = vmatprep.subr.mxu0 %v308
    %831 = vmatpush1.msra.mxu0 %v307
    %832 = vmatprep.subr.mxu0 %v292
    %833 = vmatpush1.msra.mxu0 %v291
    %834 = vmatprep.subr.mxu0 %v276
    %835 = vmatpush1.msra.mxu0 %v275
    %836 = vmatprep.subr.mxu0 %v260
    %837 = vmatpush1.msra.mxu0 %v259
    %838 = vmatprep.subr.mxu0 %v244
    %839 = vmatpush1.msra.mxu0 %v243
    %840 = vmatprep.subr.mxu0 %v228
    %841 = vmatpush1.msra.mxu0 %v227
    %842 = vmatprep.subr.mxu0 %v212
    %843 = vmatpush1.msra.mxu0 %v211
    %844 = vmatprep.subr.mxu0 %v196
    %845 = vmatpush1.msra.mxu0 %v195
    %846 = vmatprep.subr.mxu0 %v180
    %847 = vmatpush1.msra.mxu0 %v179
    %848 = vmatprep.subr.mxu0 %v164
    %849 = vmatpush1.msra.mxu0 %v163
    %850 = vmatprep.subr.mxu0 %v148
    %851 = vmatpush1.msra.mxu0 %v147
    %852 = vmatprep.subr.mxu0 0.0
    %853 = vmatpush2.msra.mxu0 0.0
    %854 = vmatprep.subr.mxu0 0.0
    %855 = vmatpush2.msra.mxu0 0.0
    %856 = vmatprep.subr.mxu0 0.0
    %857 = vmatpush2.msra.mxu0 0.0
    %858 = vmatprep.subr.mxu0 0.0
    %859 = vmatpush2.msra.mxu0 0.0
    %860 = vmatprep.subr.mxu0 0.0
    %861 = vmatpush2.msra.mxu0 0.0
    %862 = vmatprep.subr.mxu0 0.0
    %863 = vmatpush2.msra.mxu0 0.0
    %864 = vmatprep.subr.mxu0 0.0
    %865 = vmatpush2.msra.mxu0 0.0
    %866 = vmatprep.subr.mxu0 0.0
    %867 = vmatpush2.msra.mxu0 0.0
    %868 = vmatprep.subr.mxu0 0.0
    %869 = vmatpush2.msra.mxu0 0.0
    %870 = vmatprep.subr.mxu0 0.0
    %871 = vmatpush2.msra.mxu0 0.0
    %872 = vmatprep.subr.mxu0 0.0
    %873 = vmatpush2.msra.mxu0 0.0
    %874 = vmatprep.subr.mxu0 0.0
    %875 = vmatpush2.msra.mxu0 0.0
    %876 = vmatprep.subr.mxu0 0.0
    %877 = vmatpush2.msra.mxu0 0.0
    %878 = vmatprep.subr.mxu0 0.0
    %879 = vmatpush2.msra.mxu0 0.0
    %880 = vmatprep.subr.mxu0 0.0
    %881 = vmatpush2.msra.mxu0 0.0
    %882 = vmatprep.subr.mxu0 0.0
    %883 = vmatpush2.msra.mxu0 0.0
    %884 = vmatprep.mubr.f32.mxu0 0.0
    %885 = vmatmul.mubr.f32.gmra.mxu0 %v133
    %v886 = vpop.f32.mrf.mxu0
    %v887 = vadd.f32 %v428, %v886
    %v888 = vpop.f32.mrf.mxu0
    %v889 = vadd.f32 %v432, %v888
    %890 = vmatprep.mubr.f32.mxu0 0.0
    %891 = vmatmul.mubr.f32.gmra.mxu0 %v134
    %v892 = vpop.f32.mrf.mxu0
    %v893 = vadd.f32 %v428, %v892
    %v894 = vpop.f32.mrf.mxu0
    %v895 = vadd.f32 %v432, %v894
    %896 = vmatprep.mubr.f32.mxu0 0.0
    %897 = vmatmul.mubr.f32.gmra.mxu0 %v135
    %v898 = vpop.f32.mrf.mxu0
    %v899 = vadd.f32 %v428, %v898
    %v900 = vpop.f32.mrf.mxu0
    %v901 = vadd.f32 %v432, %v900
    %902 = vmatprep.mubr.f32.mxu0 0.0
    %903 = vmatmul.mubr.f32.gmra.mxu0 %v136
    %v904 = vpop.f32.mrf.mxu0
    %v905 = vadd.f32 %v428, %v904
    %v906 = vpop.f32.mrf.mxu0
    %v907 = vadd.f32 %v432, %v906
    %908 = vmatprep.mubr.f32.mxu0 0.0
    %909 = vmatmul.mubr.f32.gmra.mxu0 %v137
    %v910 = vpop.f32.mrf.mxu0
    %v911 = vadd.f32 %v428, %v910
    %v912 = vpop.f32.mrf.mxu0
    %v913 = vadd.f32 %v432, %v912
    %914 = vmatprep.mubr.f32.mxu0 0.0
    %915 = vmatmul.mubr.f32.gmra.mxu0 %v138
    %v916 = vpop.f32.mrf.mxu0
    %v917 = vadd.f32 %v428, %v916
    %v918 = vpop.f32.mrf.mxu0
    %v919 = vadd.f32 %v432, %v918
    %920 = vmatprep.mubr.f32.mxu0 0.0
    %921 = vmatmul.mubr.f32.gmra.mxu0 %v139
    %v922 = vpop.f32.mrf.mxu0
    %v923 = vadd.f32 %v428, %v922
    %v924 = vpop.f32.mrf.mxu0
    %v925 = vadd.f32 %v432, %v924
    %926 = vmatprep.mubr.f32.mxu0 0.0
    %927 = vmatmul.mubr.f32.gmra.mxu0 %v140
    %v928 = vpop.f32.mrf.mxu0
    %v929 = vadd.f32 %v428, %v928
    %v930 = vpop.f32.mrf.mxu0
    %v931 = vadd.f32 %v432, %v930
    %932 = vdwg.mxu0
    %933 = vmatprep.subr.mxu0 %v390
    %934 = vmatpush1.msra.mxu0 %v389
    %935 = vmatprep.subr.mxu0 %v374
    %936 = vmatpush1.msra.mxu0 %v373
    %937 = vmatprep.subr.mxu0 %v358
    %938 = vmatpush1.msra.mxu0 %v357
    %939 = vmatprep.subr.mxu0 %v342
    %940 = vmatpush1.msra.mxu0 %v341
    %941 = vmatprep.subr.mxu0 %v326
    %942 = vmatpush1.msra.mxu0 %v325
    %943 = vmatprep.subr.mxu0 %v310
    %944 = vmatpush1.msra.mxu0 %v309
    %945 = vmatprep.subr.mxu0 %v294
    %946 = vmatpush1.msra.mxu0 %v293
    %947 = vmatprep.subr.mxu0 %v278
    %948 = vmatpush1.msra.mxu0 %v277
    %949 = vmatprep.subr.mxu0 %v262
    %950 = vmatpush1.msra.mxu0 %v261
    %951 = vmatprep.subr.mxu0 %v246
    %952 = vmatpush1.msra.mxu0 %v245
    %953 = vmatprep.subr.mxu0 %v230
    %954 = vmatpush1.msra.mxu0 %v229
    %955 = vmatprep.subr.mxu0 %v214
    %956 = vmatpush1.msra.mxu0 %v213
    %957 = vmatprep.subr.mxu0 %v198
    %958 = vmatpush1.msra.mxu0 %v197
    %959 = vmatprep.subr.mxu0 %v182
    %960 = vmatpush1.msra.mxu0 %v181
    %961 = vmatprep.subr.mxu0 %v166
    %962 = vmatpush1.msra.mxu0 %v165
    %963 = vmatprep.subr.mxu0 %v150
    %964 = vmatpush1.msra.mxu0 %v149
    %965 = vmatprep.subr.mxu0 0.0
    %966 = vmatpush2.msra.mxu0 0.0
    %967 = vmatprep.subr.mxu0 0.0
    %968 = vmatpush2.msra.mxu0 0.0
    %969 = vmatprep.subr.mxu0 0.0
    %970 = vmatpush2.msra.mxu0 0.0
    %971 = vmatprep.subr.mxu0 0.0
    %972 = vmatpush2.msra.mxu0 0.0
    %973 = vmatprep.subr.mxu0 0.0
    %974 = vmatpush2.msra.mxu0 0.0
    %975 = vmatprep.subr.mxu0 0.0
    %976 = vmatpush2.msra.mxu0 0.0
    %977 = vmatprep.subr.mxu0 0.0
    %978 = vmatpush2.msra.mxu0 0.0
    %979 = vmatprep.subr.mxu0 0.0
    %980 = vmatpush2.msra.mxu0 0.0
    %981 = vmatprep.subr.mxu0 0.0
    %982 = vmatpush2.msra.mxu0 0.0
    %983 = vmatprep.subr.mxu0 0.0
    %984 = vmatpush2.msra.mxu0 0.0
    %985 = vmatprep.subr.mxu0 0.0
    %986 = vmatpush2.msra.mxu0 0.0
    %987 = vmatprep.subr.mxu0 0.0
    %988 = vmatpush2.msra.mxu0 0.0
    %989 = vmatprep.subr.mxu0 0.0
    %990 = vmatpush2.msra.mxu0 0.0
    %991 = vmatprep.subr.mxu0 0.0
    %992 = vmatpush2.msra.mxu0 0.0
    %993 = vmatprep.subr.mxu0 0.0
    %994 = vmatpush2.msra.mxu0 0.0
    %995 = vmatprep.subr.mxu0 0.0
    %996 = vmatpush2.msra.mxu0 0.0
    %997 = vmatprep.mubr.f32.mxu0 0.0
    %998 = vmatmul.mubr.f32.gmra.mxu0 %v133
    %v999 = vpop.f32.mrf.mxu0
    %v1000 = vadd.f32 %v436, %v999
    %v1001 = vpop.f32.mrf.mxu0
    %v1002 = vadd.f32 %v440, %v1001
    %1003 = vmatprep.mubr.f32.mxu0 0.0
    %1004 = vmatmul.mubr.f32.gmra.mxu0 %v134
    %v1005 = vpop.f32.mrf.mxu0
    %v1006 = vadd.f32 %v436, %v1005
    %v1007 = vpop.f32.mrf.mxu0
    %v1008 = vadd.f32 %v440, %v1007
    %1009 = vmatprep.mubr.f32.mxu0 0.0
    %1010 = vmatmul.mubr.f32.gmra.mxu0 %v135
    %v1011 = vpop.f32.mrf.mxu0
    %v1012 = vadd.f32 %v436, %v1011
    %v1013 = vpop.f32.mrf.mxu0
    %v1014 = vadd.f32 %v440, %v1013
    %1015 = vmatprep.mubr.f32.mxu0 0.0
    %1016 = vmatmul.mubr.f32.gmra.mxu0 %v136
    %v1017 = vpop.f32.mrf.mxu0
    %v1018 = vadd.f32 %v436, %v1017
    %v1019 = vpop.f32.mrf.mxu0
    %v1020 = vadd.f32 %v440, %v1019
    %1021 = vmatprep.mubr.f32.mxu0 0.0
    %1022 = vmatmul.mubr.f32.gmra.mxu0 %v137
    %v1023 = vpop.f32.mrf.mxu0
    %v1024 = vadd.f32 %v436, %v1023
    %v1025 = vpop.f32.mrf.mxu0
    %v1026 = vadd.f32 %v440, %v1025
    %1027 = vmatprep.mubr.f32.mxu0 0.0
    %1028 = vmatmul.mubr.f32.gmra.mxu0 %v138
    %v1029 = vpop.f32.mrf.mxu0
    %v1030 = vadd.f32 %v436, %v1029
    %v1031 = vpop.f32.mrf.mxu0
    %v1032 = vadd.f32 %v440, %v1031
    %1033 = vmatprep.mubr.f32.mxu0 0.0
    %1034 = vmatmul.mubr.f32.gmra.mxu0 %v139
    %v1035 = vpop.f32.mrf.mxu0
    %v1036 = vadd.f32 %v436, %v1035
    %v1037 = vpop.f32.mrf.mxu0
    %v1038 = vadd.f32 %v440, %v1037
    %1039 = vmatprep.mubr.f32.mxu0 0.0
    %1040 = vmatmul.mubr.f32.gmra.mxu0 %v140
    %v1041 = vpop.f32.mrf.mxu0
    %v1042 = vadd.f32 %v436, %v1041
    %v1043 = vpop.f32.mrf.mxu0
    %v1044 = vadd.f32 %v440, %v1043
    %1045 = vdwg.mxu0
    %1046 = vmatprep.subr.mxu0 %v392
    %1047 = vmatpush1.msra.mxu0 %v391
    %1048 = vmatprep.subr.mxu0 %v376
    %1049 = vmatpush1.msra.mxu0 %v375
    %1050 = vmatprep.subr.mxu0 %v360
    %1051 = vmatpush1.msra.mxu0 %v359
    %1052 = vmatprep.subr.mxu0 %v344
    %1053 = vmatpush1.msra.mxu0 %v343
    %1054 = vmatprep.subr.mxu0 %v328
    %1055 = vmatpush1.msra.mxu0 %v327
    %1056 = vmatprep.subr.mxu0 %v312
    %1057 = vmatpush1.msra.mxu0 %v311
    %1058 = vmatprep.subr.mxu0 %v296
    %1059 = vmatpush1.msra.mxu0 %v295
    %1060 = vmatprep.subr.mxu0 %v280
    %1061 = vmatpush1.msra.mxu0 %v279
    %1062 = vmatprep.subr.mxu0 %v264
    %1063 = vmatpush1.msra.mxu0 %v263
    %1064 = vmatprep.subr.mxu0 %v248
    %1065 = vmatpush1.msra.mxu0 %v247
    %1066 = vmatprep.subr.mxu0 %v232
    %1067 = vmatpush1.msra.mxu0 %v231
    %1068 = vmatprep.subr.mxu0 %v216
    %1069 = vmatpush1.msra.mxu0 %v215
    %1070 = vmatprep.subr.mxu0 %v200
    %1071 = vmatpush1.msra.mxu0 %v199
    %1072 = vmatprep.subr.mxu0 %v184
    %1073 = vmatpush1.msra.mxu0 %v183
    %1074 = vmatprep.subr.mxu0 %v168
    %1075 = vmatpush1.msra.mxu0 %v167
    %1076 = vmatprep.subr.mxu0 %v152
    %1077 = vmatpush1.msra.mxu0 %v151
    %1078 = vmatprep.subr.mxu0 0.0
    %1079 = vmatpush2.msra.mxu0 0.0
    %1080 = vmatprep.subr.mxu0 0.0
    %1081 = vmatpush2.msra.mxu0 0.0
    %1082 = vmatprep.subr.mxu0 0.0
    %1083 = vmatpush2.msra.mxu0 0.0
    %1084 = vmatprep.subr.mxu0 0.0
    %1085 = vmatpush2.msra.mxu0 0.0
    %1086 = vmatprep.subr.mxu0 0.0
    %1087 = vmatpush2.msra.mxu0 0.0
    %1088 = vmatprep.subr.mxu0 0.0
    %1089 = vmatpush2.msra.mxu0 0.0
    %1090 = vmatprep.subr.mxu0 0.0
    %1091 = vmatpush2.msra.mxu0 0.0
    %1092 = vmatprep.subr.mxu0 0.0
    %1093 = vmatpush2.msra.mxu0 0.0
    %1094 = vmatprep.subr.mxu0 0.0
    %1095 = vmatpush2.msra.mxu0 0.0
    %1096 = vmatprep.subr.mxu0 0.0
    %1097 = vmatpush2.msra.mxu0 0.0
    %1098 = vmatprep.subr.mxu0 0.0
    %1099 = vmatpush2.msra.mxu0 0.0
    %1100 = vmatprep.subr.mxu0 0.0
    %1101 = vmatpush2.msra.mxu0 0.0
    %1102 = vmatprep.subr.mxu0 0.0
    %1103 = vmatpush2.msra.mxu0 0.0
    %1104 = vmatprep.subr.mxu0 0.0
    %1105 = vmatpush2.msra.mxu0 0.0
    %1106 = vmatprep.subr.mxu0 0.0
    %1107 = vmatpush2.msra.mxu0 0.0
    %1108 = vmatprep.subr.mxu0 0.0
    %1109 = vmatpush2.msra.mxu0 0.0
    %1110 = vmatprep.mubr.f32.mxu0 0.0
    %1111 = vmatmul.mubr.f32.gmra.mxu0 %v133
    %v1112 = vpop.f32.mrf.mxu0
    %v1113 = vadd.f32 %v444, %v1112
    %v1114 = vpop.f32.mrf.mxu0
    %v1115 = vadd.f32 %v448, %v1114
    %1116 = vmatprep.mubr.f32.mxu0 0.0
    %1117 = vmatmul.mubr.f32.gmra.mxu0 %v134
    %v1118 = vpop.f32.mrf.mxu0
    %v1119 = vadd.f32 %v444, %v1118
    %v1120 = vpop.f32.mrf.mxu0
    %v1121 = vadd.f32 %v448, %v1120
    %1122 = vmatprep.mubr.f32.mxu0 0.0
    %1123 = vmatmul.mubr.f32.gmra.mxu0 %v135
    %v1124 = vpop.f32.mrf.mxu0
    %v1125 = vadd.f32 %v444, %v1124
    %v1126 = vpop.f32.mrf.mxu0
    %v1127 = vadd.f32 %v448, %v1126
    %1128 = vmatprep.mubr.f32.mxu0 0.0
    %1129 = vmatmul.mubr.f32.gmra.mxu0 %v136
    %v1130 = vpop.f32.mrf.mxu0
    %v1131 = vadd.f32 %v444, %v1130
    %v1132 = vpop.f32.mrf.mxu0
    %v1133 = vadd.f32 %v448, %v1132
    %1134 = vmatprep.mubr.f32.mxu0 0.0
    %1135 = vmatmul.mubr.f32.gmra.mxu0 %v137
    %v1136 = vpop.f32.mrf.mxu0
    %v1137 = vadd.f32 %v444, %v1136
    %v1138 = vpop.f32.mrf.mxu0
    %v1139 = vadd.f32 %v448, %v1138
    %1140 = vmatprep.mubr.f32.mxu0 0.0
    %1141 = vmatmul.mubr.f32.gmra.mxu0 %v138
    %v1142 = vpop.f32.mrf.mxu0
    %v1143 = vadd.f32 %v444, %v1142
    %v1144 = vpop.f32.mrf.mxu0
    %v1145 = vadd.f32 %v448, %v1144
    %1146 = vmatprep.mubr.f32.mxu0 0.0
    %1147 = vmatmul.mubr.f32.gmra.mxu0 %v139
    %v1148 = vpop.f32.mrf.mxu0
    %v1149 = vadd.f32 %v444, %v1148
    %v1150 = vpop.f32.mrf.mxu0
    %v1151 = vadd.f32 %v448, %v1150
    %1152 = vmatprep.mubr.f32.mxu0 0.0
    %1153 = vmatmul.mubr.f32.gmra.mxu0 %v140
    %v1154 = vpop.f32.mrf.mxu0
    %v1155 = vadd.f32 %v444, %v1154
    %v1156 = vpop.f32.mrf.mxu0
    %v1157 = vadd.f32 %v448, %v1156
    %1158 = vdwg.mxu0
    %1159 = vmatprep.subr.mxu0 %v394
    %1160 = vmatpush1.msra.mxu0 %v393
    %1161 = vmatprep.subr.mxu0 %v378
    %1162 = vmatpush1.msra.mxu0 %v377
    %1163 = vmatprep.subr.mxu0 %v362
    %1164 = vmatpush1.msra.mxu0 %v361
    %1165 = vmatprep.subr.mxu0 %v346
    %1166 = vmatpush1.msra.mxu0 %v345
    %1167 = vmatprep.subr.mxu0 %v330
    %1168 = vmatpush1.msra.mxu0 %v329
    %1169 = vmatprep.subr.mxu0 %v314
    %1170 = vmatpush1.msra.mxu0 %v313
    %1171 = vmatprep.subr.mxu0 %v298
    %1172 = vmatpush1.msra.mxu0 %v297
    %1173 = vmatprep.subr.mxu0 %v282
    %1174 = vmatpush1.msra.mxu0 %v281
    %1175 = vmatprep.subr.mxu0 %v266
    %1176 = vmatpush1.msra.mxu0 %v265
    %1177 = vmatprep.subr.mxu0 %v250
    %1178 = vmatpush1.msra.mxu0 %v249
    %1179 = vmatprep.subr.mxu0 %v234
    %1180 = vmatpush1.msra.mxu0 %v233
    %1181 = vmatprep.subr.mxu0 %v218
    %1182 = vmatpush1.msra.mxu0 %v217
    %1183 = vmatprep.subr.mxu0 %v202
    %1184 = vmatpush1.msra.mxu0 %v201
    %1185 = vmatprep.subr.mxu0 %v186
    %1186 = vmatpush1.msra.mxu0 %v185
    %1187 = vmatprep.subr.mxu0 %v170
    %1188 = vmatpush1.msra.mxu0 %v169
    %1189 = vmatprep.subr.mxu0 %v154
    %1190 = vmatpush1.msra.mxu0 %v153
    %1191 = vmatprep.subr.mxu0 0.0
    %1192 = vmatpush2.msra.mxu0 0.0
    %1193 = vmatprep.subr.mxu0 0.0
    %1194 = vmatpush2.msra.mxu0 0.0
    %1195 = vmatprep.subr.mxu0 0.0
    %1196 = vmatpush2.msra.mxu0 0.0
    %1197 = vmatprep.subr.mxu0 0.0
    %1198 = vmatpush2.msra.mxu0 0.0
    %1199 = vmatprep.subr.mxu0 0.0
    %1200 = vmatpush2.msra.mxu0 0.0
    %1201 = vmatprep.subr.mxu0 0.0
    %1202 = vmatpush2.msra.mxu0 0.0
    %1203 = vmatprep.subr.mxu0 0.0
    %1204 = vmatpush2.msra.mxu0 0.0
    %1205 = vmatprep.subr.mxu0 0.0
    %1206 = vmatpush2.msra.mxu0 0.0
    %1207 = vmatprep.subr.mxu0 0.0
    %1208 = vmatpush2.msra.mxu0 0.0
    %1209 = vmatprep.subr.mxu0 0.0
    %1210 = vmatpush2.msra.mxu0 0.0
    %1211 = vmatprep.subr.mxu0 0.0
    %1212 = vmatpush2.msra.mxu0 0.0
    %1213 = vmatprep.subr.mxu0 0.0
    %1214 = vmatpush2.msra.mxu0 0.0
    %1215 = vmatprep.subr.mxu0 0.0
    %1216 = vmatpush2.msra.mxu0 0.0
    %1217 = vmatprep.subr.mxu0 0.0
    %1218 = vmatpush2.msra.mxu0 0.0
    %1219 = vmatprep.subr.mxu0 0.0
    %1220 = vmatpush2.msra.mxu0 0.0
    %1221 = vmatprep.subr.mxu0 0.0
    %1222 = vmatpush2.msra.mxu0 0.0
    %1223 = vmatprep.mubr.f32.mxu0 0.0
    %1224 = vmatmul.mubr.f32.gmra.mxu0 %v133
    %v1225 = vpop.f32.mrf.mxu0
    %v1226 = vadd.f32 %v452, %v1225
    %v1227 = vpop.f32.mrf.mxu0
    %v1228 = vadd.f32 %v456, %v1227
    %1229 = vmatprep.mubr.f32.mxu0 0.0
    %1230 = vmatmul.mubr.f32.gmra.mxu0 %v134
    %v1231 = vpop.f32.mrf.mxu0
    %v1232 = vadd.f32 %v452, %v1231
    %v1233 = vpop.f32.mrf.mxu0
    %v1234 = vadd.f32 %v456, %v1233
    %1235 = vmatprep.mubr.f32.mxu0 0.0
    %1236 = vmatmul.mubr.f32.gmra.mxu0 %v135
    %v1237 = vpop.f32.mrf.mxu0
    %v1238 = vadd.f32 %v452, %v1237
    %v1239 = vpop.f32.mrf.mxu0
    %v1240 = vadd.f32 %v456, %v1239
    %1241 = vmatprep.mubr.f32.mxu0 0.0
    %1242 = vmatmul.mubr.f32.gmra.mxu0 %v136
    %v1243 = vpop.f32.mrf.mxu0
    %v1244 = vadd.f32 %v452, %v1243
    %v1245 = vpop.f32.mrf.mxu0
    %v1246 = vadd.f32 %v456, %v1245
    %1247 = vmatprep.mubr.f32.mxu0 0.0
    %1248 = vmatmul.mubr.f32.gmra.mxu0 %v137
    %v1249 = vpop.f32.mrf.mxu0
    %v1250 = vadd.f32 %v452, %v1249
    %v1251 = vpop.f32.mrf.mxu0
    %v1252 = vadd.f32 %v456, %v1251
    %1253 = vmatprep.mubr.f32.mxu0 0.0
    %1254 = vmatmul.mubr.f32.gmra.mxu0 %v138
    %v1255 = vpop.f32.mrf.mxu0
    %v1256 = vadd.f32 %v452, %v1255
    %v1257 = vpop.f32.mrf.mxu0
    %v1258 = vadd.f32 %v456, %v1257
    %1259 = vmatprep.mubr.f32.mxu0 0.0
    %1260 = vmatmul.mubr.f32.gmra.mxu0 %v139
    %v1261 = vpop.f32.mrf.mxu0
    %v1262 = vadd.f32 %v452, %v1261
    %v1263 = vpop.f32.mrf.mxu0
    %v1264 = vadd.f32 %v456, %v1263
    %1265 = vmatprep.mubr.f32.mxu0 0.0
    %1266 = vmatmul.mubr.f32.gmra.mxu0 %v140
    %v1267 = vpop.f32.mrf.mxu0
    %v1268 = vadd.f32 %v452, %v1267
    %v1269 = vpop.f32.mrf.mxu0
    %v1270 = vadd.f32 %v456, %v1269
    %1271 = vdwg.mxu0
    %1272 = vmatprep.subr.mxu0 %v396
    %1273 = vmatpush1.msra.mxu0 %v395
    %1274 = vmatprep.subr.mxu0 %v380
    %1275 = vmatpush1.msra.mxu0 %v379
    %1276 = vmatprep.subr.mxu0 %v364
    %1277 = vmatpush1.msra.mxu0 %v363
    %1278 = vmatprep.subr.mxu0 %v348
    %1279 = vmatpush1.msra.mxu0 %v347
    %1280 = vmatprep.subr.mxu0 %v332
    %1281 = vmatpush1.msra.mxu0 %v331
    %1282 = vmatprep.subr.mxu0 %v316
    %1283 = vmatpush1.msra.mxu0 %v315
    %1284 = vmatprep.subr.mxu0 %v300
    %1285 = vmatpush1.msra.mxu0 %v299
    %1286 = vmatprep.subr.mxu0 %v284
    %1287 = vmatpush1.msra.mxu0 %v283
    %1288 = vmatprep.subr.mxu0 %v268
    %1289 = vmatpush1.msra.mxu0 %v267
    %1290 = vmatprep.subr.mxu0 %v252
    %1291 = vmatpush1.msra.mxu0 %v251
    %1292 = vmatprep.subr.mxu0 %v236
    %1293 = vmatpush1.msra.mxu0 %v235
    %1294 = vmatprep.subr.mxu0 %v220
    %1295 = vmatpush1.msra.mxu0 %v219
    %1296 = vmatprep.subr.mxu0 %v204
    %1297 = vmatpush1.msra.mxu0 %v203
    %1298 = vmatprep.subr.mxu0 %v188
    %1299 = vmatpush1.msra.mxu0 %v187
    %1300 = vmatprep.subr.mxu0 %v172
    %1301 = vmatpush1.msra.mxu0 %v171
    %1302 = vmatprep.subr.mxu0 %v156
    %1303 = vmatpush1.msra.mxu0 %v155
    %1304 = vmatprep.subr.mxu0 0.0
    %1305 = vmatpush2.msra.mxu0 0.0
    %1306 = vmatprep.subr.mxu0 0.0
    %1307 = vmatpush2.msra.mxu0 0.0
    %1308 = vmatprep.subr.mxu0 0.0
    %1309 = vmatpush2.msra.mxu0 0.0
    %1310 = vmatprep.subr.mxu0 0.0
    %1311 = vmatpush2.msra.mxu0 0.0
    %1312 = vmatprep.subr.mxu0 0.0
    %1313 = vmatpush2.msra.mxu0 0.0
    %1314 = vmatprep.subr.mxu0 0.0
    %1315 = vmatpush2.msra.mxu0 0.0
    %1316 = vmatprep.subr.mxu0 0.0
    %1317 = vmatpush2.msra.mxu0 0.0
    %1318 = vmatprep.subr.mxu0 0.0
    %1319 = vmatpush2.msra.mxu0 0.0
    %1320 = vmatprep.subr.mxu0 0.0
    %1321 = vmatpush2.msra.mxu0 0.0
    %1322 = vmatprep.subr.mxu0 0.0
    %1323 = vmatpush2.msra.mxu0 0.0
    %1324 = vmatprep.subr.mxu0 0.0
    %1325 = vmatpush2.msra.mxu0 0.0
    %1326 = vmatprep.subr.mxu0 0.0
    %1327 = vmatpush2.msra.mxu0 0.0
    %1328 = vmatprep.subr.mxu0 0.0
    %1329 = vmatpush2.msra.mxu0 0.0
    %1330 = vmatprep.subr.mxu0 0.0
    %1331 = vmatpush2.msra.mxu0 0.0
    %1332 = vmatprep.subr.mxu0 0.0
    %1333 = vmatpush2.msra.mxu0 0.0
    %1334 = vmatprep.subr.mxu0 0.0
    %1335 = vmatpush2.msra.mxu0 0.0
    %1336 = vmatprep.mubr.f32.mxu0 0.0
    %1337 = vmatmul.mubr.f32.gmra.mxu0 %v133
    %v1338 = vpop.f32.mrf.mxu0
    %v1339 = vadd.f32 %v460, %v1338
    %v1340 = vpop.f32.mrf.mxu0
    %v1341 = vadd.f32 %v464, %v1340
    %1342 = vmatprep.mubr.f32.mxu0 0.0
    %1343 = vmatmul.mubr.f32.gmra.mxu0 %v134
    %v1344 = vpop.f32.mrf.mxu0
    %v1345 = vadd.f32 %v460, %v1344
    %v1346 = vpop.f32.mrf.mxu0
    %v1347 = vadd.f32 %v464, %v1346
    %1348 = vmatprep.mubr.f32.mxu0 0.0
    %1349 = vmatmul.mubr.f32.gmra.mxu0 %v135
    %v1350 = vpop.f32.mrf.mxu0
    %v1351 = vadd.f32 %v460, %v1350
    %v1352 = vpop.f32.mrf.mxu0
    %v1353 = vadd.f32 %v464, %v1352
    %1354 = vmatprep.mubr.f32.mxu0 0.0
    %1355 = vmatmul.mubr.f32.gmra.mxu0 %v136
    %v1356 = vpop.f32.mrf.mxu0
    %v1357 = vadd.f32 %v460, %v1356
    %v1358 = vpop.f32.mrf.mxu0
    %v1359 = vadd.f32 %v464, %v1358
    %1360 = vmatprep.mubr.f32.mxu0 0.0
    %1361 = vmatmul.mubr.f32.gmra.mxu0 %v137
    %v1362 = vpop.f32.mrf.mxu0
    %v1363 = vadd.f32 %v460, %v1362
    %v1364 = vpop.f32.mrf.mxu0
    %v1365 = vadd.f32 %v464, %v1364
    %1366 = vmatprep.mubr.f32.mxu0 0.0
    %1367 = vmatmul.mubr.f32.gmra.mxu0 %v138
    %v1368 = vpop.f32.mrf.mxu0
    %v1369 = vadd.f32 %v460, %v1368
    %v1370 = vpop.f32.mrf.mxu0
    %v1371 = vadd.f32 %v464, %v1370
    %1372 = vmatprep.mubr.f32.mxu0 0.0
    %1373 = vmatmul.mubr.f32.gmra.mxu0 %v139
    %v1374 = vpop.f32.mrf.mxu0
    %v1375 = vadd.f32 %v460, %v1374
    %v1376 = vpop.f32.mrf.mxu0
    %v1377 = vadd.f32 %v464, %v1376
    %1378 = vmatprep.mubr.f32.mxu0 0.0
    %1379 = vmatmul.mubr.f32.gmra.mxu0 %v140
    %v1380 = vpop.f32.mrf.mxu0
    %v1381 = vadd.f32 %v460, %v1380
    %v1382 = vpop.f32.mrf.mxu0
    %v1383 = vadd.f32 %v464, %v1382
    %1384 = vdwg.mxu0
    %1385 = vst [vmem:[#allocation2] sm:$0xff] %v548
    %1386 = vst [vmem:[#allocation2 + $0x8] sm:$0xff] %v550
    %1387 = vst [vmem:[#allocation2 + $0x10] sm:$0xff] %v661
    %1388 = vst [vmem:[#allocation2 + $0x18] sm:$0xff] %v663
    %1389 = vst [vmem:[#allocation2 + $0x20] sm:$0xff] %v774
    %1390 = vst [vmem:[#allocation2 + $0x28] sm:$0xff] %v776
    %1391 = vst [vmem:[#allocation2 + $0x30] sm:$0xff] %v887
    %1392 = vst [vmem:[#allocation2 + $0x38] sm:$0xff] %v889
    %1393 = vst [vmem:[#allocation2 + $0x40] sm:$0xff] %v554
    %1394 = vst [vmem:[#allocation2 + $0x48] sm:$0xff] %v556
    %1395 = vst [vmem:[#allocation2 + $0x50] sm:$0xff] %v667
    %1396 = vst [vmem:[#allocation2 + $0x58] sm:$0xff] %v669
    %1397 = vst [vmem:[#allocation2 + $0x60] sm:$0xff] %v780
    %1398 = vst [vmem:[#allocation2 + $0x68] sm:$0xff] %v782
    %1399 = vst [vmem:[#allocation2 + $0x70] sm:$0xff] %v893
    %1400 = vst [vmem:[#allocation2 + $0x78] sm:$0xff] %v895
    %1401 = vst [vmem:[#allocation2 + $0x80] sm:$0xff] %v560
    %1402 = vst [vmem:[#allocation2 + $0x88] sm:$0xff] %v562
    %1403 = vst [vmem:[#allocation2 + $0x90] sm:$0xff] %v673
    %1404 = vst [vmem:[#allocation2 + $0x98] sm:$0xff] %v675
    %1405 = vst [vmem:[#allocation2 + $0xa0] sm:$0xff] %v786
    %1406 = vst [vmem:[#allocation2 + $0xa8] sm:$0xff] %v788
    %1407 = vst [vmem:[#allocation2 + $0xb0] sm:$0xff] %v899
    %1408 = vst [vmem:[#allocation2 + $0xb8] sm:$0xff] %v901
    %1409 = vst [vmem:[#allocation2 + $0xc0] sm:$0xff] %v566
    %1410 = vst [vmem:[#allocation2 + $0xc8] sm:$0xff] %v568
    %1411 = vst [vmem:[#allocation2 + $0xd0] sm:$0xff] %v679
    %1412 = vst [vmem:[#allocation2 + $0xd8] sm:$0xff] %v681
    %1413 = vst [vmem:[#allocation2 + $0xe0] sm:$0xff] %v792
    %1414 = vst [vmem:[#allocation2 + $0xe8] sm:$0xff] %v794
    %1415 = vst [vmem:[#allocation2 + $0xf0] sm:$0xff] %v905
    %1416 = vst [vmem:[#allocation2 + $0xf8] sm:$0xff] %v907
    %1417 = vst [vmem:[#allocation2 + $0x100] sm:$0xff] %v572
    %1418 = vst [vmem:[#allocation2 + $0x108] sm:$0xff] %v574
    %1419 = vst [vmem:[#allocation2 + $0x110] sm:$0xff] %v685
    %1420 = vst [vmem:[#allocation2 + $0x118] sm:$0xff] %v687
    %1421 = vst [vmem:[#allocation2 + $0x120] sm:$0xff] %v798
    %1422 = vst [vmem:[#allocation2 + $0x128] sm:$0xff] %v800
    %1423 = vst [vmem:[#allocation2 + $0x130] sm:$0xff] %v911
    %1424 = vst [vmem:[#allocation2 + $0x138] sm:$0xff] %v913
    %1425 = vst [vmem:[#allocation2 + $0x140] sm:$0xff] %v578
    %1426 = vst [vmem:[#allocation2 + $0x148] sm:$0xff] %v580
    %1427 = vst [vmem:[#allocation2 + $0x150] sm:$0xff] %v691
    %1428 = vst [vmem:[#allocation2 + $0x158] sm:$0xff] %v693
    %1429 = vst [vmem:[#allocation2 + $0x160] sm:$0xff] %v804
    %1430 = vst [vmem:[#allocation2 + $0x168] sm:$0xff] %v806
    %1431 = vst [vmem:[#allocation2 + $0x170] sm:$0xff] %v917
    %1432 = vst [vmem:[#allocation2 + $0x178] sm:$0xff] %v919
    %1433 = vst [vmem:[#allocation2 + $0x180] sm:$0xff] %v584
    %1434 = vst [vmem:[#allocation2 + $0x188] sm:$0xff] %v586
    %1435 = vst [vmem:[#allocation2 + $0x190] sm:$0xff] %v697
    %1436 = vst [vmem:[#allocation2 + $0x198] sm:$0xff] %v699
    %1437 = vst [vmem:[#allocation2 + $0x1a0] sm:$0xff] %v810
    %1438 = vst [vmem:[#allocation2 + $0x1a8] sm:$0xff] %v812
    %1439 = vst [vmem:[#allocation2 + $0x1b0] sm:$0xff] %v923
    %1440 = vst [vmem:[#allocation2 + $0x1b8] sm:$0xff] %v925
    %1441 = vst [vmem:[#allocation2 + $0x1c0] sm:$0xff] %v590
    %1442 = vst [vmem:[#allocation2 + $0x1c8] sm:$0xff] %v592
    %1443 = vst [vmem:[#allocation2 + $0x1d0] sm:$0xff] %v703
    %1444 = vst [vmem:[#allocation2 + $0x1d8] sm:$0xff] %v705
    %1445 = vst [vmem:[#allocation2 + $0x1e0] sm:$0xff] %v816
    %1446 = vst [vmem:[#allocation2 + $0x1e8] sm:$0xff] %v818
    %1447 = vst [vmem:[#allocation2 + $0x1f0] sm:$0xff] %v929
    %1448 = vst [vmem:[#allocation2 + $0x1f8] sm:$0xff] %v931
    %1449 = vst [vmem:[#allocation3] sm:$0xff] %v1000
    %1450 = vst [vmem:[#allocation3 + $0x8] sm:$0xff] %v1002
    %1451 = vst [vmem:[#allocation3 + $0x10] sm:$0xff] %v1113
    %1452 = vst [vmem:[#allocation3 + $0x18] sm:$0xff] %v1115
    %1453 = vst [vmem:[#allocation3 + $0x20] sm:$0xff] %v1226
    %1454 = vst [vmem:[#allocation3 + $0x28] sm:$0xff] %v1228
    %1455 = vst [vmem:[#allocation3 + $0x30] sm:$0xff] %v1339
    %1456 = vst [vmem:[#allocation3 + $0x38] sm:$0xff] %v1341
    %1457 = vst [vmem:[#allocation3 + $0x40] sm:$0xff] %v1006
    %1458 = vst [vmem:[#allocation3 + $0x48] sm:$0xff] %v1008
    %1459 = vst [vmem:[#allocation3 + $0x50] sm:$0xff] %v1119
    %1460 = vst [vmem:[#allocation3 + $0x58] sm:$0xff] %v1121
    %1461 = vst [vmem:[#allocation3 + $0x60] sm:$0xff] %v1232
    %1462 = vst [vmem:[#allocation3 + $0x68] sm:$0xff] %v1234
    %1463 = vst [vmem:[#allocation3 + $0x70] sm:$0xff] %v1345
    %1464 = vst [vmem:[#allocation3 + $0x78] sm:$0xff] %v1347
    %1465 = vst [vmem:[#allocation3 + $0x80] sm:$0xff] %v1012
    %1466 = vst [vmem:[#allocation3 + $0x88] sm:$0xff] %v1014
    %1467 = vst [vmem:[#allocation3 + $0x90] sm:$0xff] %v1125
    %1468 = vst [vmem:[#allocation3 + $0x98] sm:$0xff] %v1127
    %1469 = vst [vmem:[#allocation3 + $0xa0] sm:$0xff] %v1238
    %1470 = vst [vmem:[#allocation3 + $0xa8] sm:$0xff] %v1240
    %1471 = vst [vmem:[#allocation3 + $0xb0] sm:$0xff] %v1351
    %1472 = vst [vmem:[#allocation3 + $0xb8] sm:$0xff] %v1353
    %1473 = vst [vmem:[#allocation3 + $0xc0] sm:$0xff] %v1018
    %1474 = vst [vmem:[#allocation3 + $0xc8] sm:$0xff] %v1020
    %1475 = vst [vmem:[#allocation3 + $0xd0] sm:$0xff] %v1131
    %1476 = vst [vmem:[#allocation3 + $0xd8] sm:$0xff] %v1133
    %1477 = vst [vmem:[#allocation3 + $0xe0] sm:$0xff] %v1244
    %1478 = vst [vmem:[#allocation3 + $0xe8] sm:$0xff] %v1246
    %1479 = vst [vmem:[#allocation3 + $0xf0] sm:$0xff] %v1357
    %1480 = vst [vmem:[#allocation3 + $0xf8] sm:$0xff] %v1359
    %1481 = vst [vmem:[#allocation3 + $0x100] sm:$0xff] %v1024
    %1482 = vst [vmem:[#allocation3 + $0x108] sm:$0xff] %v1026
    %1483 = vst [vmem:[#allocation3 + $0x110] sm:$0xff] %v1137
    %1484 = vst [vmem:[#allocation3 + $0x118] sm:$0xff] %v1139
    %1485 = vst [vmem:[#allocation3 + $0x120] sm:$0xff] %v1250
    %1486 = vst [vmem:[#allocation3 + $0x128] sm:$0xff] %v1252
    %1487 = vst [vmem:[#allocation3 + $0x130] sm:$0xff] %v1363
    %1488 = vst [vmem:[#allocation3 + $0x138] sm:$0xff] %v1365
    %1489 = vst [vmem:[#allocation3 + $0x140] sm:$0xff] %v1030
    %1490 = vst [vmem:[#allocation3 + $0x148] sm:$0xff] %v1032
    %1491 = vst [vmem:[#allocation3 + $0x150] sm:$0xff] %v1143
    %1492 = vst [vmem:[#allocation3 + $0x158] sm:$0xff] %v1145
    %1493 = vst [vmem:[#allocation3 + $0x160] sm:$0xff] %v1256
    %1494 = vst [vmem:[#allocation3 + $0x168] sm:$0xff] %v1258
    %1495 = vst [vmem:[#allocation3 + $0x170] sm:$0xff] %v1369
    %1496 = vst [vmem:[#allocation3 + $0x178] sm:$0xff] %v1371
    %1497 = vst [vmem:[#allocation3 + $0x180] sm:$0xff] %v1036
    %1498 = vst [vmem:[#allocation3 + $0x188] sm:$0xff] %v1038
    %1499 = vst [vmem:[#allocation3 + $0x190] sm:$0xff] %v1149
    %1500 = vst [vmem:[#allocation3 + $0x198] sm:$0xff] %v1151
    %1501 = vst [vmem:[#allocation3 + $0x1a0] sm:$0xff] %v1262
    %1502 = vst [vmem:[#allocation3 + $0x1a8] sm:$0xff] %v1264
    %1503 = vst [vmem:[#allocation3 + $0x1b0] sm:$0xff] %v1375
    %1504 = vst [vmem:[#allocation3 + $0x1b8] sm:$0xff] %v1377
    %1505 = vst [vmem:[#allocation3 + $0x1c0] sm:$0xff] %v1042
    %1506 = vst [vmem:[#allocation3 + $0x1c8] sm:$0xff] %v1044
    %1507 = vst [vmem:[#allocation3 + $0x1d0] sm:$0xff] %v1155
    %1508 = vst [vmem:[#allocation3 + $0x1d8] sm:$0xff] %v1157
    %1509 = vst [vmem:[#allocation3 + $0x1e0] sm:$0xff] %v1268
    %1510 = vst [vmem:[#allocation3 + $0x1e8] sm:$0xff] %v1270
    %1511 = vst [vmem:[#allocation3 + $0x1f0] sm:$0xff] %v1381
    %1512 = vst [vmem:[#allocation3 + $0x1f8] sm:$0xff] %v1383
    %v1513 = vld [vmem:[#allocation11] sm:$0xff]
    %v1514 = vld [vmem:[#allocation11 + $0x8] sm:$0xff]
    %v1515 = vld [vmem:[#allocation11 + $0x10] sm:$0xff]
    %v1516 = vld [vmem:[#allocation11 + $0x18] sm:$0xff]
    %v1517 = vld [vmem:[#allocation11 + $0x20] sm:$0xff]
    %v1518 = vld [vmem:[#allocation11 + $0x28] sm:$0xff]
    %v1519 = vld [vmem:[#allocation11 + $0x30] sm:$0xff]
    %v1520 = vld [vmem:[#allocation11 + $0x38] sm:$0xff]
    %v1521 = vld [vmem:[#allocation11 + $0x40] sm:$0xff]
    %v1522 = vld [vmem:[#allocation11 + $0x48] sm:$0xff]
    %v1523 = vld [vmem:[#allocation11 + $0x50] sm:$0xff]
    %v1524 = vld [vmem:[#allocation11 + $0x58] sm:$0xff]
    %v1525 = vld [vmem:[#allocation11 + $0x60] sm:$0xff]
    %v1526 = vld [vmem:[#allocation11 + $0x68] sm:$0xff]
    %v1527 = vld [vmem:[#allocation11 + $0x70] sm:$0xff]
    %v1528 = vld [vmem:[#allocation11 + $0x78] sm:$0xff]
    %v1529 = vld [vmem:[#allocation11 + $0x80] sm:$0xff]
    %v1530 = vld [vmem:[#allocation11 + $0x88] sm:$0xff]
    %v1531 = vld [vmem:[#allocation11 + $0x90] sm:$0xff]
    %v1532 = vld [vmem:[#allocation11 + $0x98] sm:$0xff]
    %v1533 = vld [vmem:[#allocation11 + $0xa0] sm:$0xff]
    %v1534 = vld [vmem:[#allocation11 + $0xa8] sm:$0xff]
    %v1535 = vld [vmem:[#allocation11 + $0xb0] sm:$0xff]
    %v1536 = vld [vmem:[#allocation11 + $0xb8] sm:$0xff]
    %v1537 = vld [vmem:[#allocation11 + $0xc0] sm:$0xff]
    %v1538 = vld [vmem:[#allocation11 + $0xc8] sm:$0xff]
    %v1539 = vld [vmem:[#allocation11 + $0xd0] sm:$0xff]
    %v1540 = vld [vmem:[#allocation11 + $0xd8] sm:$0xff]
    %v1541 = vld [vmem:[#allocation11 + $0xe0] sm:$0xff]
    %v1542 = vld [vmem:[#allocation11 + $0xe8] sm:$0xff]
    %v1543 = vld [vmem:[#allocation11 + $0xf0] sm:$0xff]
    %v1544 = vld [vmem:[#allocation11 + $0xf8] sm:$0xff]
    %v1545 = vld [vmem:[#allocation11 + $0x100] sm:$0xff]
    %v1546 = vld [vmem:[#allocation11 + $0x108] sm:$0xff]
    %v1547 = vld [vmem:[#allocation11 + $0x110] sm:$0xff]
    %v1548 = vld [vmem:[#allocation11 + $0x118] sm:$0xff]
    %v1549 = vld [vmem:[#allocation11 + $0x120] sm:$0xff]
    %v1550 = vld [vmem:[#allocation11 + $0x128] sm:$0xff]
    %v1551 = vld [vmem:[#allocation11 + $0x130] sm:$0xff]
    %v1552 = vld [vmem:[#allocation11 + $0x138] sm:$0xff]
    %v1553 = vld [vmem:[#allocation11 + $0x140] sm:$0xff]
    %v1554 = vld [vmem:[#allocation11 + $0x148] sm:$0xff]
    %v1555 = vld [vmem:[#allocation11 + $0x150] sm:$0xff]
    %v1556 = vld [vmem:[#allocation11 + $0x158] sm:$0xff]
    %v1557 = vld [vmem:[#allocation11 + $0x160] sm:$0xff]
    %v1558 = vld [vmem:[#allocation11 + $0x168] sm:$0xff]
    %v1559 = vld [vmem:[#allocation11 + $0x170] sm:$0xff]
    %v1560 = vld [vmem:[#allocation11 + $0x178] sm:$0xff]
    %v1561 = vld [vmem:[#allocation11 + $0x180] sm:$0xff]
    %v1562 = vld [vmem:[#allocation11 + $0x188] sm:$0xff]
    %v1563 = vld [vmem:[#allocation11 + $0x190] sm:$0xff]
    %v1564 = vld [vmem:[#allocation11 + $0x198] sm:$0xff]
    %v1565 = vld [vmem:[#allocation11 + $0x1a0] sm:$0xff]
    %v1566 = vld [vmem:[#allocation11 + $0x1a8] sm:$0xff]
    %v1567 = vld [vmem:[#allocation11 + $0x1b0] sm:$0xff]
    %v1568 = vld [vmem:[#allocation11 + $0x1b8] sm:$0xff]
    %v1569 = vld [vmem:[#allocation11 + $0x1c0] sm:$0xff]
    %v1570 = vld [vmem:[#allocation11 + $0x1c8] sm:$0xff]
    %v1571 = vld [vmem:[#allocation11 + $0x1d0] sm:$0xff]
    %v1572 = vld [vmem:[#allocation11 + $0x1d8] sm:$0xff]
    %v1573 = vld [vmem:[#allocation11 + $0x1e0] sm:$0xff]
    %v1574 = vld [vmem:[#allocation11 + $0x1e8] sm:$0xff]
    %v1575 = vld [vmem:[#allocation11 + $0x1f0] sm:$0xff]
    %v1576 = vld [vmem:[#allocation11 + $0x1f8] sm:$0xff]
    %v1577 = vld [vmem:[#allocation11 + $0x200] sm:$0xff]
    %v1578 = vld [vmem:[#allocation11 + $0x208] sm:$0xff]
    %v1579 = vld [vmem:[#allocation11 + $0x210] sm:$0xff]
    %v1580 = vld [vmem:[#allocation11 + $0x218] sm:$0xff]
    %v1581 = vld [vmem:[#allocation11 + $0x220] sm:$0xff]
    %v1582 = vld [vmem:[#allocation11 + $0x228] sm:$0xff]
    %v1583 = vld [vmem:[#allocation11 + $0x230] sm:$0xff]
    %v1584 = vld [vmem:[#allocation11 + $0x238] sm:$0xff]
    %v1585 = vld [vmem:[#allocation11 + $0x240] sm:$0xff]
    %v1586 = vld [vmem:[#allocation11 + $0x248] sm:$0xff]
    %v1587 = vld [vmem:[#allocation11 + $0x250] sm:$0xff]
    %v1588 = vld [vmem:[#allocation11 + $0x258] sm:$0xff]
    %v1589 = vld [vmem:[#allocation11 + $0x260] sm:$0xff]
    %v1590 = vld [vmem:[#allocation11 + $0x268] sm:$0xff]
    %v1591 = vld [vmem:[#allocation11 + $0x270] sm:$0xff]
    %v1592 = vld [vmem:[#allocation11 + $0x278] sm:$0xff]
    %v1593 = vld [vmem:[#allocation11 + $0x280] sm:$0xff]
    %v1594 = vld [vmem:[#allocation11 + $0x288] sm:$0xff]
    %v1595 = vld [vmem:[#allocation11 + $0x290] sm:$0xff]
    %v1596 = vld [vmem:[#allocation11 + $0x298] sm:$0xff]
    %v1597 = vld [vmem:[#allocation11 + $0x2a0] sm:$0xff]
    %v1598 = vld [vmem:[#allocation11 + $0x2a8] sm:$0xff]
    %v1599 = vld [vmem:[#allocation11 + $0x2b0] sm:$0xff]
    %v1600 = vld [vmem:[#allocation11 + $0x2b8] sm:$0xff]
    %v1601 = vld [vmem:[#allocation11 + $0x2c0] sm:$0xff]
    %v1602 = vld [vmem:[#allocation11 + $0x2c8] sm:$0xff]
    %v1603 = vld [vmem:[#allocation11 + $0x2d0] sm:$0xff]
    %v1604 = vld [vmem:[#allocation11 + $0x2d8] sm:$0xff]
    %v1605 = vld [vmem:[#allocation11 + $0x2e0] sm:$0xff]
    %v1606 = vld [vmem:[#allocation11 + $0x2e8] sm:$0xff]
    %v1607 = vld [vmem:[#allocation11 + $0x2f0] sm:$0xff]
    %v1608 = vld [vmem:[#allocation11 + $0x2f8] sm:$0xff]
    %v1609 = vld [vmem:[#allocation11 + $0x300] sm:$0xff]
    %v1610 = vld [vmem:[#allocation11 + $0x308] sm:$0xff]
    %v1611 = vld [vmem:[#allocation11 + $0x310] sm:$0xff]
    %v1612 = vld [vmem:[#allocation11 + $0x318] sm:$0xff]
    %v1613 = vld [vmem:[#allocation11 + $0x320] sm:$0xff]
    %v1614 = vld [vmem:[#allocation11 + $0x328] sm:$0xff]
    %v1615 = vld [vmem:[#allocation11 + $0x330] sm:$0xff]
    %v1616 = vld [vmem:[#allocation11 + $0x338] sm:$0xff]
    %v1617 = vld [vmem:[#allocation11 + $0x340] sm:$0xff]
    %v1618 = vld [vmem:[#allocation11 + $0x348] sm:$0xff]
    %v1619 = vld [vmem:[#allocation11 + $0x350] sm:$0xff]
    %v1620 = vld [vmem:[#allocation11 + $0x358] sm:$0xff]
    %v1621 = vld [vmem:[#allocation11 + $0x360] sm:$0xff]
    %v1622 = vld [vmem:[#allocation11 + $0x368] sm:$0xff]
    %v1623 = vld [vmem:[#allocation11 + $0x370] sm:$0xff]
    %v1624 = vld [vmem:[#allocation11 + $0x378] sm:$0xff]
    %v1625 = vld [vmem:[#allocation11 + $0x380] sm:$0xff]
    %v1626 = vld [vmem:[#allocation11 + $0x388] sm:$0xff]
    %v1627 = vld [vmem:[#allocation11 + $0x390] sm:$0xff]
    %v1628 = vld [vmem:[#allocation11 + $0x398] sm:$0xff]
    %v1629 = vld [vmem:[#allocation11 + $0x3a0] sm:$0xff]
    %v1630 = vld [vmem:[#allocation11 + $0x3a8] sm:$0xff]
    %v1631 = vld [vmem:[#allocation11 + $0x3b0] sm:$0xff]
    %v1632 = vld [vmem:[#allocation11 + $0x3b8] sm:$0xff]
    %v1633 = vld [vmem:[#allocation11 + $0x3c0] sm:$0xff]
    %v1634 = vld [vmem:[#allocation11 + $0x3c8] sm:$0xff]
    %v1635 = vld [vmem:[#allocation11 + $0x3d0] sm:$0xff]
    %v1636 = vld [vmem:[#allocation11 + $0x3d8] sm:$0xff]
    %v1637 = vld [vmem:[#allocation11 + $0x3e0] sm:$0xff]
    %v1638 = vld [vmem:[#allocation11 + $0x3e8] sm:$0xff]
    %v1639 = vld [vmem:[#allocation11 + $0x3f0] sm:$0xff]
    %v1640 = vld [vmem:[#allocation11 + $0x3f8] sm:$0xff]
    %v1641 = vld [vmem:[#allocation2] sm:$0xff]
    %v1642 = vld [vmem:[#allocation2 + $0x8] sm:$0xff]
    %v1643 = vld [vmem:[#allocation2 + $0x10] sm:$0xff]
    %v1644 = vld [vmem:[#allocation2 + $0x18] sm:$0xff]
    %v1645 = vld [vmem:[#allocation2 + $0x20] sm:$0xff]
    %v1646 = vld [vmem:[#allocation2 + $0x28] sm:$0xff]
    %v1647 = vld [vmem:[#allocation2 + $0x30] sm:$0xff]
    %v1648 = vld [vmem:[#allocation2 + $0x38] sm:$0xff]
    %v1777 = vunpack.c.l.b16 %v1513
    %v1778 = vunpack.c.h.b16 %v1513
    %v1779 = vunpack.c.l.b16 %v1514
    %v1780 = vunpack.c.h.b16 %v1514
    %v1781 = vunpack.c.l.b16 %v1515
    %v1782 = vunpack.c.h.b16 %v1515
    %v1783 = vunpack.c.l.b16 %v1516
    %v1784 = vunpack.c.h.b16 %v1516
    %v1785 = vunpack.c.l.b16 %v1517
    %v1786 = vunpack.c.h.b16 %v1517
    %v1787 = vunpack.c.l.b16 %v1518
    %v1788 = vunpack.c.h.b16 %v1518
    %v1789 = vunpack.c.l.b16 %v1519
    %v1790 = vunpack.c.h.b16 %v1519
    %v1791 = vunpack.c.l.b16 %v1520
    %v1792 = vunpack.c.h.b16 %v1520
    %v1793 = vunpack.c.l.b16 %v1521
    %v1794 = vunpack.c.h.b16 %v1521
    %v1795 = vunpack.c.l.b16 %v1522
    %v1796 = vunpack.c.h.b16 %v1522
    %v1797 = vunpack.c.l.b16 %v1523
    %v1798 = vunpack.c.h.b16 %v1523
    %v1799 = vunpack.c.l.b16 %v1524
    %v1800 = vunpack.c.h.b16 %v1524
    %v1801 = vunpack.c.l.b16 %v1525
    %v1802 = vunpack.c.h.b16 %v1525
    %v1803 = vunpack.c.l.b16 %v1526
    %v1804 = vunpack.c.h.b16 %v1526
    %v1805 = vunpack.c.l.b16 %v1527
    %v1806 = vunpack.c.h.b16 %v1527
    %v1807 = vunpack.c.l.b16 %v1528
    %v1808 = vunpack.c.h.b16 %v1528
    %v1809 = vunpack.c.l.b16 %v1529
    %v1810 = vunpack.c.h.b16 %v1529
    %v1811 = vunpack.c.l.b16 %v1530
    %v1812 = vunpack.c.h.b16 %v1530
    %v1813 = vunpack.c.l.b16 %v1531
    %v1814 = vunpack.c.h.b16 %v1531
    %v1815 = vunpack.c.l.b16 %v1532
    %v1816 = vunpack.c.h.b16 %v1532
    %v1817 = vunpack.c.l.b16 %v1533
    %v1818 = vunpack.c.h.b16 %v1533
    %v1819 = vunpack.c.l.b16 %v1534
    %v1820 = vunpack.c.h.b16 %v1534
    %v1821 = vunpack.c.l.b16 %v1535
    %v1822 = vunpack.c.h.b16 %v1535
    %v1823 = vunpack.c.l.b16 %v1536
    %v1824 = vunpack.c.h.b16 %v1536
    %v1825 = vunpack.c.l.b16 %v1537
    %v1826 = vunpack.c.h.b16 %v1537
    %v1827 = vunpack.c.l.b16 %v1538
    %v1828 = vunpack.c.h.b16 %v1538
    %v1829 = vunpack.c.l.b16 %v1539
    %v1830 = vunpack.c.h.b16 %v1539
    %v1831 = vunpack.c.l.b16 %v1540
    %v1832 = vunpack.c.h.b16 %v1540
    %v1833 = vunpack.c.l.b16 %v1541
    %v1834 = vunpack.c.h.b16 %v1541
    %v1835 = vunpack.c.l.b16 %v1542
    %v1836 = vunpack.c.h.b16 %v1542
    %v1837 = vunpack.c.l.b16 %v1543
    %v1838 = vunpack.c.h.b16 %v1543
    %v1839 = vunpack.c.l.b16 %v1544
    %v1840 = vunpack.c.h.b16 %v1544
    %v1841 = vunpack.c.l.b16 %v1545
    %v1842 = vunpack.c.h.b16 %v1545
    %v1843 = vunpack.c.l.b16 %v1546
    %v1844 = vunpack.c.h.b16 %v1546
    %v1845 = vunpack.c.l.b16 %v1547
    %v1846 = vunpack.c.h.b16 %v1547
    %v1847 = vunpack.c.l.b16 %v1548
    %v1848 = vunpack.c.h.b16 %v1548
    %v1849 = vunpack.c.l.b16 %v1549
    %v1850 = vunpack.c.h.b16 %v1549
    %v1851 = vunpack.c.l.b16 %v1550
    %v1852 = vunpack.c.h.b16 %v1550
    %v1853 = vunpack.c.l.b16 %v1551
    %v1854 = vunpack.c.h.b16 %v1551
    %v1855 = vunpack.c.l.b16 %v1552
    %v1856 = vunpack.c.h.b16 %v1552
    %v1857 = vunpack.c.l.b16 %v1553
    %v1858 = vunpack.c.h.b16 %v1553
    %v1859 = vunpack.c.l.b16 %v1554
    %v1860 = vunpack.c.h.b16 %v1554
    %v1861 = vunpack.c.l.b16 %v1555
    %v1862 = vunpack.c.h.b16 %v1555
    %v1863 = vunpack.c.l.b16 %v1556
    %v1864 = vunpack.c.h.b16 %v1556
    %v1865 = vunpack.c.l.b16 %v1557
    %v1866 = vunpack.c.h.b16 %v1557
    %v1867 = vunpack.c.l.b16 %v1558
    %v1868 = vunpack.c.h.b16 %v1558
    %v1869 = vunpack.c.l.b16 %v1559
    %v1870 = vunpack.c.h.b16 %v1559
    %v1871 = vunpack.c.l.b16 %v1560
    %v1872 = vunpack.c.h.b16 %v1560
    %v1873 = vunpack.c.l.b16 %v1561
    %v1874 = vunpack.c.h.b16 %v1561
    %v1875 = vunpack.c.l.b16 %v1562
    %v1876 = vunpack.c.h.b16 %v1562
    %v1877 = vunpack.c.l.b16 %v1563
    %v1878 = vunpack.c.h.b16 %v1563
    %v1879 = vunpack.c.l.b16 %v1564
    %v1880 = vunpack.c.h.b16 %v1564
    %v1881 = vunpack.c.l.b16 %v1565
    %v1882 = vunpack.c.h.b16 %v1565
    %v1883 = vunpack.c.l.b16 %v1566
    %v1884 = vunpack.c.h.b16 %v1566
    %v1885 = vunpack.c.l.b16 %v1567
    %v1886 = vunpack.c.h.b16 %v1567
    %v1887 = vunpack.c.l.b16 %v1568
    %v1888 = vunpack.c.h.b16 %v1568
    %v1889 = vunpack.c.l.b16 %v1569
    %v1890 = vunpack.c.h.b16 %v1569
    %v1891 = vunpack.c.l.b16 %v1570
    %v1892 = vunpack.c.h.b16 %v1570
    %v1893 = vunpack.c.l.b16 %v1571
    %v1894 = vunpack.c.h.b16 %v1571
    %v1895 = vunpack.c.l.b16 %v1572
    %v1896 = vunpack.c.h.b16 %v1572
    %v1897 = vunpack.c.l.b16 %v1573
    %v1898 = vunpack.c.h.b16 %v1573
    %v1899 = vunpack.c.l.b16 %v1574
    %v1900 = vunpack.c.h.b16 %v1574
    %v1901 = vunpack.c.l.b16 %v1575
    %v1902 = vunpack.c.h.b16 %v1575
    %v1903 = vunpack.c.l.b16 %v1576
    %v1904 = vunpack.c.h.b16 %v1576
    %v1905 = vunpack.c.l.b16 %v1577
    %v1906 = vunpack.c.h.b16 %v1577
    %v1907 = vunpack.c.l.b16 %v1578
    %v1908 = vunpack.c.h.b16 %v1578
    %v1909 = vunpack.c.l.b16 %v1579
    %v1910 = vunpack.c.h.b16 %v1579
    %v1911 = vunpack.c.l.b16 %v1580
    %v1912 = vunpack.c.h.b16 %v1580
    %v1913 = vunpack.c.l.b16 %v1581
    %v1914 = vunpack.c.h.b16 %v1581
    %v1915 = vunpack.c.l.b16 %v1582
    %v1916 = vunpack.c.h.b16 %v1582
    %v1917 = vunpack.c.l.b16 %v1583
    %v1918 = vunpack.c.h.b16 %v1583
    %v1919 = vunpack.c.l.b16 %v1584
    %v1920 = vunpack.c.h.b16 %v1584
    %v1921 = vunpack.c.l.b16 %v1585
    %v1922 = vunpack.c.h.b16 %v1585
    %v1923 = vunpack.c.l.b16 %v1586
    %v1924 = vunpack.c.h.b16 %v1586
    %v1925 = vunpack.c.l.b16 %v1587
    %v1926 = vunpack.c.h.b16 %v1587
    %v1927 = vunpack.c.l.b16 %v1588
    %v1928 = vunpack.c.h.b16 %v1588
    %v1929 = vunpack.c.l.b16 %v1589
    %v1930 = vunpack.c.h.b16 %v1589
    %v1931 = vunpack.c.l.b16 %v1590
    %v1932 = vunpack.c.h.b16 %v1590
    %v1933 = vunpack.c.l.b16 %v1591
    %v1934 = vunpack.c.h.b16 %v1591
    %v1935 = vunpack.c.l.b16 %v1592
    %v1936 = vunpack.c.h.b16 %v1592
    %v1937 = vunpack.c.l.b16 %v1593
    %v1938 = vunpack.c.h.b16 %v1593
    %v1939 = vunpack.c.l.b16 %v1594
    %v1940 = vunpack.c.h.b16 %v1594
    %v1941 = vunpack.c.l.b16 %v1595
    %v1942 = vunpack.c.h.b16 %v1595
    %v1943 = vunpack.c.l.b16 %v1596
    %v1944 = vunpack.c.h.b16 %v1596
    %v1945 = vunpack.c.l.b16 %v1597
    %v1946 = vunpack.c.h.b16 %v1597
    %v1947 = vunpack.c.l.b16 %v1598
    %v1948 = vunpack.c.h.b16 %v1598
    %v1949 = vunpack.c.l.b16 %v1599
    %v1950 = vunpack.c.h.b16 %v1599
    %v1951 = vunpack.c.l.b16 %v1600
    %v1952 = vunpack.c.h.b16 %v1600
    %v1953 = vunpack.c.l.b16 %v1601
    %v1954 = vunpack.c.h.b16 %v1601
    %v1955 = vunpack.c.l.b16 %v1602
    %v1956 = vunpack.c.h.b16 %v1602
    %v1957 = vunpack.c.l.b16 %v1603
    %v1958 = vunpack.c.h.b16 %v1603
    %v1959 = vunpack.c.l.b16 %v1604
    %v1960 = vunpack.c.h.b16 %v1604
    %v1961 = vunpack.c.l.b16 %v1605
    %v1962 = vunpack.c.h.b16 %v1605
    %v1963 = vunpack.c.l.b16 %v1606
    %v1964 = vunpack.c.h.b16 %v1606
    %v1965 = vunpack.c.l.b16 %v1607
    %v1966 = vunpack.c.h.b16 %v1607
    %v1967 = vunpack.c.l.b16 %v1608
    %v1968 = vunpack.c.h.b16 %v1608
    %v1969 = vunpack.c.l.b16 %v1609
    %v1970 = vunpack.c.h.b16 %v1609
    %v1971 = vunpack.c.l.b16 %v1610
    %v1972 = vunpack.c.h.b16 %v1610
    %v1973 = vunpack.c.l.b16 %v1611
    %v1974 = vunpack.c.h.b16 %v1611
    %v1975 = vunpack.c.l.b16 %v1612
    %v1976 = vunpack.c.h.b16 %v1612
    %v1977 = vunpack.c.l.b16 %v1613
    %v1978 = vunpack.c.h.b16 %v1613
    %v1979 = vunpack.c.l.b16 %v1614
    %v1980 = vunpack.c.h.b16 %v1614
    %v1981 = vunpack.c.l.b16 %v1615
    %v1982 = vunpack.c.h.b16 %v1615
    %v1983 = vunpack.c.l.b16 %v1616
    %v1984 = vunpack.c.h.b16 %v1616
    %v1985 = vunpack.c.l.b16 %v1617
    %v1986 = vunpack.c.h.b16 %v1617
    %v1987 = vunpack.c.l.b16 %v1618
    %v1988 = vunpack.c.h.b16 %v1618
    %v1989 = vunpack.c.l.b16 %v1619
    %v1990 = vunpack.c.h.b16 %v1619
    %v1991 = vunpack.c.l.b16 %v1620
    %v1992 = vunpack.c.h.b16 %v1620
    %v1993 = vunpack.c.l.b16 %v1621
    %v1994 = vunpack.c.h.b16 %v1621
    %v1995 = vunpack.c.l.b16 %v1622
    %v1996 = vunpack.c.h.b16 %v1622
    %v1997 = vunpack.c.l.b16 %v1623
    %v1998 = vunpack.c.h.b16 %v1623
    %v1999 = vunpack.c.l.b16 %v1624
    %v2000 = vunpack.c.h.b16 %v1624
    %v2001 = vunpack.c.l.b16 %v1625
    %v2002 = vunpack.c.h.b16 %v1625
    %v2003 = vunpack.c.l.b16 %v1626
    %v2004 = vunpack.c.h.b16 %v1626
    %v2005 = vunpack.c.l.b16 %v1627
    %v2006 = vunpack.c.h.b16 %v1627
    %v2007 = vunpack.c.l.b16 %v1628
    %v2008 = vunpack.c.h.b16 %v1628
    %v2009 = vunpack.c.l.b16 %v1629
    %v2010 = vunpack.c.h.b16 %v1629
    %v2011 = vunpack.c.l.b16 %v1630
    %v2012 = vunpack.c.h.b16 %v1630
    %v2013 = vunpack.c.l.b16 %v1631
    %v2014 = vunpack.c.h.b16 %v1631
    %v2015 = vunpack.c.l.b16 %v1632
    %v2016 = vunpack.c.h.b16 %v1632
    %v2017 = vunpack.c.l.b16 %v1633
    %v2018 = vunpack.c.h.b16 %v1633
    %v2019 = vunpack.c.l.b16 %v1634
    %v2020 = vunpack.c.h.b16 %v1634
    %v2021 = vunpack.c.l.b16 %v1635
    %v2022 = vunpack.c.h.b16 %v1635
    %v2023 = vunpack.c.l.b16 %v1636
    %v2024 = vunpack.c.h.b16 %v1636
    %v2025 = vunpack.c.l.b16 %v1637
    %v2026 = vunpack.c.h.b16 %v1637
    %v2027 = vunpack.c.l.b16 %v1638
    %v2028 = vunpack.c.h.b16 %v1638
    %v2029 = vunpack.c.l.b16 %v1639
    %v2030 = vunpack.c.h.b16 %v1639
    %v2031 = vunpack.c.l.b16 %v1640
    %v2032 = vunpack.c.h.b16 %v1640
    %v2033 = vpack.c.b16 %v1785, %v1777
    %v2034 = vpack.c.b16 %v1786, %v1778
    %v2035 = vpack.c.b16 %v1787, %v1779
    %v2036 = vpack.c.b16 %v1788, %v1780
    %v2037 = vpack.c.b16 %v1789, %v1781
    %v2038 = vpack.c.b16 %v1790, %v1782
    %v2039 = vpack.c.b16 %v1791, %v1783
    %v2040 = vpack.c.b16 %v1792, %v1784
    %v2041 = vpack.c.b16 %v1801, %v1793
    %v2042 = vpack.c.b16 %v1802, %v1794
    %v2043 = vpack.c.b16 %v1803, %v1795
    %v2044 = vpack.c.b16 %v1804, %v1796
    %v2045 = vpack.c.b16 %v1805, %v1797
    %v2046 = vpack.c.b16 %v1806, %v1798
    %v2047 = vpack.c.b16 %v1807, %v1799
    %v2048 = vpack.c.b16 %v1808, %v1800
    %v2049 = vpack.c.b16 %v1817, %v1809
    %v2050 = vpack.c.b16 %v1818, %v1810
    %v2051 = vpack.c.b16 %v1819, %v1811
    %v2052 = vpack.c.b16 %v1820, %v1812
    %v2053 = vpack.c.b16 %v1821, %v1813
    %v2054 = vpack.c.b16 %v1822, %v1814
    %v2055 = vpack.c.b16 %v1823, %v1815
    %v2056 = vpack.c.b16 %v1824, %v1816
    %v2057 = vpack.c.b16 %v1833, %v1825
    %v2058 = vpack.c.b16 %v1834, %v1826
    %v2059 = vpack.c.b16 %v1835, %v1827
    %v2060 = vpack.c.b16 %v1836, %v1828
    %v2061 = vpack.c.b16 %v1837, %v1829
    %v2062 = vpack.c.b16 %v1838, %v1830
    %v2063 = vpack.c.b16 %v1839, %v1831
    %v2064 = vpack.c.b16 %v1840, %v1832
    %v2065 = vpack.c.b16 %v1849, %v1841
    %v2066 = vpack.c.b16 %v1850, %v1842
    %v2067 = vpack.c.b16 %v1851, %v1843
    %v2068 = vpack.c.b16 %v1852, %v1844
    %v2069 = vpack.c.b16 %v1853, %v1845
    %v2070 = vpack.c.b16 %v1854, %v1846
    %v2071 = vpack.c.b16 %v1855, %v1847
    %v2072 = vpack.c.b16 %v1856, %v1848
    %v2073 = vpack.c.b16 %v1865, %v1857
    %v2074 = vpack.c.b16 %v1866, %v1858
    %v2075 = vpack.c.b16 %v1867, %v1859
    %v2076 = vpack.c.b16 %v1868, %v1860
    %v2077 = vpack.c.b16 %v1869, %v1861
    %v2078 = vpack.c.b16 %v1870, %v1862
    %v2079 = vpack.c.b16 %v1871, %v1863
    %v2080 = vpack.c.b16 %v1872, %v1864
    %v2081 = vpack.c.b16 %v1881, %v1873
    %v2082 = vpack.c.b16 %v1882, %v1874
    %v2083 = vpack.c.b16 %v1883, %v1875
    %v2084 = vpack.c.b16 %v1884, %v1876
    %v2085 = vpack.c.b16 %v1885, %v1877
    %v2086 = vpack.c.b16 %v1886, %v1878
    %v2087 = vpack.c.b16 %v1887, %v1879
    %v2088 = vpack.c.b16 %v1888, %v1880
    %v2089 = vpack.c.b16 %v1897, %v1889
    %v2090 = vpack.c.b16 %v1898, %v1890
    %v2091 = vpack.c.b16 %v1899, %v1891
    %v2092 = vpack.c.b16 %v1900, %v1892
    %v2093 = vpack.c.b16 %v1901, %v1893
    %v2094 = vpack.c.b16 %v1902, %v1894
    %v2095 = vpack.c.b16 %v1903, %v1895
    %v2096 = vpack.c.b16 %v1904, %v1896
    %v2097 = vpack.c.b16 %v1913, %v1905
    %v2098 = vpack.c.b16 %v1914, %v1906
    %v2099 = vpack.c.b16 %v1915, %v1907
    %v2100 = vpack.c.b16 %v1916, %v1908
    %v2101 = vpack.c.b16 %v1917, %v1909
    %v2102 = vpack.c.b16 %v1918, %v1910
    %v2103 = vpack.c.b16 %v1919, %v1911
    %v2104 = vpack.c.b16 %v1920, %v1912
    %v2105 = vpack.c.b16 %v1929, %v1921
    %v2106 = vpack.c.b16 %v1930, %v1922
    %v2107 = vpack.c.b16 %v1931, %v1923
    %v2108 = vpack.c.b16 %v1932, %v1924
    %v2109 = vpack.c.b16 %v1933, %v1925
    %v2110 = vpack.c.b16 %v1934, %v1926
    %v2111 = vpack.c.b16 %v1935, %v1927
    %v2112 = vpack.c.b16 %v1936, %v1928
    %v2113 = vpack.c.b16 %v1945, %v1937
    %v2114 = vpack.c.b16 %v1946, %v1938
    %v2115 = vpack.c.b16 %v1947, %v1939
    %v2116 = vpack.c.b16 %v1948, %v1940
    %v2117 = vpack.c.b16 %v1949, %v1941
    %v2118 = vpack.c.b16 %v1950, %v1942
    %v2119 = vpack.c.b16 %v1951, %v1943
    %v2120 = vpack.c.b16 %v1952, %v1944
    %v2121 = vpack.c.b16 %v1961, %v1953
    %v2122 = vpack.c.b16 %v1962, %v1954
    %v2123 = vpack.c.b16 %v1963, %v1955
    %v2124 = vpack.c.b16 %v1964, %v1956
    %v2125 = vpack.c.b16 %v1965, %v1957
    %v2126 = vpack.c.b16 %v1966, %v1958
    %v2127 = vpack.c.b16 %v1967, %v1959
    %v2128 = vpack.c.b16 %v1968, %v1960
    %v2129 = vpack.c.b16 %v1977, %v1969
    %v2130 = vpack.c.b16 %v1978, %v1970
    %v2131 = vpack.c.b16 %v1979, %v1971
    %v2132 = vpack.c.b16 %v1980, %v1972
    %v2133 = vpack.c.b16 %v1981, %v1973
    %v2134 = vpack.c.b16 %v1982, %v1974
    %v2135 = vpack.c.b16 %v1983, %v1975
    %v2136 = vpack.c.b16 %v1984, %v1976
    %v2137 = vpack.c.b16 %v1993, %v1985
    %v2138 = vpack.c.b16 %v1994, %v1986
    %v2139 = vpack.c.b16 %v1995, %v1987
    %v2140 = vpack.c.b16 %v1996, %v1988
    %v2141 = vpack.c.b16 %v1997, %v1989
    %v2142 = vpack.c.b16 %v1998, %v1990
    %v2143 = vpack.c.b16 %v1999, %v1991
    %v2144 = vpack.c.b16 %v2000, %v1992
    %v2145 = vpack.c.b16 %v2009, %v2001
    %v2146 = vpack.c.b16 %v2010, %v2002
    %v2147 = vpack.c.b16 %v2011, %v2003
    %v2148 = vpack.c.b16 %v2012, %v2004
    %v2149 = vpack.c.b16 %v2013, %v2005
    %v2150 = vpack.c.b16 %v2014, %v2006
    %v2151 = vpack.c.b16 %v2015, %v2007
    %v2152 = vpack.c.b16 %v2016, %v2008
    %v2153 = vpack.c.b16 %v2025, %v2017
    %v2154 = vpack.c.b16 %v2026, %v2018
    %v2155 = vpack.c.b16 %v2027, %v2019
    %v2156 = vpack.c.b16 %v2028, %v2020
    %v2157 = vpack.c.b16 %v2029, %v2021
    %v2158 = vpack.c.b16 %v2030, %v2022
    %v2159 = vpack.c.b16 %v2031, %v2023
    %v2160 = vpack.c.b16 %v2032, %v2024
    %2289 = vmatprep.subr.bf16.mxu0 %v2090
    %2290 = vmatpush1.bf16.msra.mxu0 %v2089
    %2291 = vmatprep.subr.bf16.mxu0 %v2082
    %2292 = vmatpush1.bf16.msra.mxu0 %v2081
    %2293 = vmatprep.subr.bf16.mxu0 %v2074
    %2294 = vmatpush1.bf16.msra.mxu0 %v2073
    %2295 = vmatprep.subr.bf16.mxu0 %v2066
    %2296 = vmatpush1.bf16.msra.mxu0 %v2065
    %2297 = vmatprep.subr.bf16.mxu0 %v2058
    %2298 = vmatpush1.bf16.msra.mxu0 %v2057
    %2299 = vmatprep.subr.bf16.mxu0 %v2050
    %2300 = vmatpush1.bf16.msra.mxu0 %v2049
    %2301 = vmatprep.subr.bf16.mxu0 %v2042
    %2302 = vmatpush1.bf16.msra.mxu0 %v2041
    %2303 = vmatprep.subr.bf16.mxu0 %v2034
    %2304 = vmatpush1.bf16.msra.mxu0 %v2033
    %2305 = vmatprep.subr.bf16.mxu0 %v2154
    %2306 = vmatpush2.bf16.msra.mxu0 %v2153
    %2307 = vmatprep.subr.bf16.mxu0 %v2146
    %2308 = vmatpush2.bf16.msra.mxu0 %v2145
    %2309 = vmatprep.subr.bf16.mxu0 %v2138
    %2310 = vmatpush2.bf16.msra.mxu0 %v2137
    %2311 = vmatprep.subr.bf16.mxu0 %v2130
    %2312 = vmatpush2.bf16.msra.mxu0 %v2129
    %2313 = vmatprep.subr.bf16.mxu0 %v2122
    %2314 = vmatpush2.bf16.msra.mxu0 %v2121
    %2315 = vmatprep.subr.bf16.mxu0 %v2114
    %2316 = vmatpush2.bf16.msra.mxu0 %v2113
    %2317 = vmatprep.subr.bf16.mxu0 %v2106
    %2318 = vmatpush2.bf16.msra.mxu0 %v2105
    %2319 = vmatprep.subr.bf16.mxu0 %v2098
    %2320 = vmatpush2.bf16.msra.mxu0 %v2097
    %2321 = vmatprep.mubr.bf16.mxu0 0
    %2322 = vmatmul.mubr.bf16.gmra.mxu0 0
    %v2323 = vpop.f32.mrf.mxu0
    %v2324 = vadd.f32 0.0, %v2323
    %v2325 = vpop.f32.mrf.mxu0
    %v2326 = vadd.f32 0.0, %v2325
    %v2327 = vpop.f32.mrf.mxu0
    %v2328 = vpop.f32.mrf.mxu0
    %2329 = vdwg.mxu0
    %2330 = vmatprep.subr.bf16.mxu0 %v2092
    %2331 = vmatpush1.bf16.msra.mxu0 %v2091
    %2332 = vmatprep.subr.bf16.mxu0 %v2084
    %2333 = vmatpush1.bf16.msra.mxu0 %v2083
    %2334 = vmatprep.subr.bf16.mxu0 %v2076
    %2335 = vmatpush1.bf16.msra.mxu0 %v2075
    %2336 = vmatprep.subr.bf16.mxu0 %v2068
    %2337 = vmatpush1.bf16.msra.mxu0 %v2067
    %2338 = vmatprep.subr.bf16.mxu0 %v2060
    %2339 = vmatpush1.bf16.msra.mxu0 %v2059
    %2340 = vmatprep.subr.bf16.mxu0 %v2052
    %2341 = vmatpush1.bf16.msra.mxu0 %v2051
    %2342 = vmatprep.subr.bf16.mxu0 %v2044
    %2343 = vmatpush1.bf16.msra.mxu0 %v2043
    %2344 = vmatprep.subr.bf16.mxu0 %v2036
    %2345 = vmatpush1.bf16.msra.mxu0 %v2035
    %2346 = vmatprep.subr.bf16.mxu0 %v2156
    %2347 = vmatpush2.bf16.msra.mxu0 %v2155
    %2348 = vmatprep.subr.bf16.mxu0 %v2148
    %2349 = vmatpush2.bf16.msra.mxu0 %v2147
    %2350 = vmatprep.subr.bf16.mxu0 %v2140
    %2351 = vmatpush2.bf16.msra.mxu0 %v2139
    %2352 = vmatprep.subr.bf16.mxu0 %v2132
    %2353 = vmatpush2.bf16.msra.mxu0 %v2131
    %2354 = vmatprep.subr.bf16.mxu0 %v2124
    %2355 = vmatpush2.bf16.msra.mxu0 %v2123
    %2356 = vmatprep.subr.bf16.mxu0 %v2116
    %2357 = vmatpush2.bf16.msra.mxu0 %v2115
    %2358 = vmatprep.subr.bf16.mxu0 %v2108
    %2359 = vmatpush2.bf16.msra.mxu0 %v2107
    %2360 = vmatprep.subr.bf16.mxu0 %v2100
    %2361 = vmatpush2.bf16.msra.mxu0 %v2099
    %2362 = vmatprep.mubr.bf16.mxu0 0
    %2363 = vmatmul.mubr.bf16.gmra.mxu0 0
    %v2364 = vpop.f32.mrf.mxu0
    %v2365 = vadd.f32 0.0, %v2364
    %v2366 = vpop.f32.mrf.mxu0
    %v2367 = vadd.f32 0.0, %v2366
    %v2368 = vpop.f32.mrf.mxu0
    %v2369 = vpop.f32.mrf.mxu0
    %2370 = vdwg.mxu0
    %2371 = vmatprep.subr.bf16.mxu0 %v2094
    %2372 = vmatpush1.bf16.msra.mxu0 %v2093
    %2373 = vmatprep.subr.bf16.mxu0 %v2086
    %2374 = vmatpush1.bf16.msra.mxu0 %v2085
    %2375 = vmatprep.subr.bf16.mxu0 %v2078
    %2376 = vmatpush1.bf16.msra.mxu0 %v2077
    %2377 = vmatprep.subr.bf16.mxu0 %v2070
    %2378 = vmatpush1.bf16.msra.mxu0 %v2069
    %2379 = vmatprep.subr.bf16.mxu0 %v2062
    %2380 = vmatpush1.bf16.msra.mxu0 %v2061
    %2381 = vmatprep.subr.bf16.mxu0 %v2054
    %2382 = vmatpush1.bf16.msra.mxu0 %v2053
    %2383 = vmatprep.subr.bf16.mxu0 %v2046
    %2384 = vmatpush1.bf16.msra.mxu0 %v2045
    %2385 = vmatprep.subr.bf16.mxu0 %v2038
    %2386 = vmatpush1.bf16.msra.mxu0 %v2037
    %2387 = vmatprep.subr.bf16.mxu0 %v2158
    %2388 = vmatpush2.bf16.msra.mxu0 %v2157
    %2389 = vmatprep.subr.bf16.mxu0 %v2150
    %2390 = vmatpush2.bf16.msra.mxu0 %v2149
    %2391 = vmatprep.subr.bf16.mxu0 %v2142
    %2392 = vmatpush2.bf16.msra.mxu0 %v2141
    %2393 = vmatprep.subr.bf16.mxu0 %v2134
    %2394 = vmatpush2.bf16.msra.mxu0 %v2133
    %2395 = vmatprep.subr.bf16.mxu0 %v2126
    %2396 = vmatpush2.bf16.msra.mxu0 %v2125
    %2397 = vmatprep.subr.bf16.mxu0 %v2118
    %2398 = vmatpush2.bf16.msra.mxu0 %v2117
    %2399 = vmatprep.subr.bf16.mxu0 %v2110
    %2400 = vmatpush2.bf16.msra.mxu0 %v2109
    %2401 = vmatprep.subr.bf16.mxu0 %v2102
    %2402 = vmatpush2.bf16.msra.mxu0 %v2101
    %2403 = vmatprep.mubr.bf16.mxu0 0
    %2404 = vmatmul.mubr.bf16.gmra.mxu0 0
    %v2405 = vpop.f32.mrf.mxu0
    %v2406 = vadd.f32 0.0, %v2405
    %v2407 = vpop.f32.mrf.mxu0
    %v2408 = vadd.f32 0.0, %v2407
    %v2409 = vpop.f32.mrf.mxu0
    %v2410 = vpop.f32.mrf.mxu0
    %2411 = vdwg.mxu0
    %2412 = vmatprep.subr.bf16.mxu0 %v2096
    %2413 = vmatpush1.bf16.msra.mxu0 %v2095
    %2414 = vmatprep.subr.bf16.mxu0 %v2088
    %2415 = vmatpush1.bf16.msra.mxu0 %v2087
    %2416 = vmatprep.subr.bf16.mxu0 %v2080
    %2417 = vmatpush1.bf16.msra.mxu0 %v2079
    %2418 = vmatprep.subr.bf16.mxu0 %v2072
    %2419 = vmatpush1.bf16.msra.mxu0 %v2071
    %2420 = vmatprep.subr.bf16.mxu0 %v2064
    %2421 = vmatpush1.bf16.msra.mxu0 %v2063
    %2422 = vmatprep.subr.bf16.mxu0 %v2056
    %2423 = vmatpush1.bf16.msra.mxu0 %v2055
    %2424 = vmatprep.subr.bf16.mxu0 %v2048
    %2425 = vmatpush1.bf16.msra.mxu0 %v2047
    %2426 = vmatprep.subr.bf16.mxu0 %v2040
    %2427 = vmatpush1.bf16.msra.mxu0 %v2039
    %2428 = vmatprep.subr.bf16.mxu0 %v2160
    %2429 = vmatpush2.bf16.msra.mxu0 %v2159
    %2430 = vmatprep.subr.bf16.mxu0 %v2152
    %2431 = vmatpush2.bf16.msra.mxu0 %v2151
    %2432 = vmatprep.subr.bf16.mxu0 %v2144
    %2433 = vmatpush2.bf16.msra.mxu0 %v2143
    %2434 = vmatprep.subr.bf16.mxu0 %v2136
    %2435 = vmatpush2.bf16.msra.mxu0 %v2135
    %2436 = vmatprep.subr.bf16.mxu0 %v2128
    %2437 = vmatpush2.bf16.msra.mxu0 %v2127
    %2438 = vmatprep.subr.bf16.mxu0 %v2120
    %2439 = vmatpush2.bf16.msra.mxu0 %v2119
    %2440 = vmatprep.subr.bf16.mxu0 %v2112
    %2441 = vmatpush2.bf16.msra.mxu0 %v2111
    %2442 = vmatprep.subr.bf16.mxu0 %v2104
    %2443 = vmatpush2.bf16.msra.mxu0 %v2103
    %2444 = vmatprep.mubr.bf16.mxu0 0
    %2445 = vmatmul.mubr.bf16.gmra.mxu0 0
    %v2446 = vpop.f32.mrf.mxu0
    %v2447 = vadd.f32 0.0, %v2446
    %v2448 = vpop.f32.mrf.mxu0
    %v2449 = vadd.f32 0.0, %v2448
    %v2450 = vpop.f32.mrf.mxu0
    %v2451 = vpop.f32.mrf.mxu0
    %2452 = vdwg.mxu0
    %v2453 = vadd.f32 %v1641, %v2324
    %v2454 = vadd.f32 %v1642, %v2326
    %v2455 = vadd.f32 %v1643, %v2365
    %v2456 = vadd.f32 %v1644, %v2367
    %v2457 = vadd.f32 %v1645, %v2406
    %v2458 = vadd.f32 %v1646, %v2408
    %v2459 = vadd.f32 %v1647, %v2447
    %v2460 = vadd.f32 %v1648, %v2449
    %v2461 = vxor.u32 %v2453, 2147483648
    %v2462 = vxor.u32 %v2454, 2147483648
    %v2463 = vmul.f32 %v2461, 1.442695
    %v2464 = vpow.pop %v2463
    %v2465 = vmul.f32 %v2462, 1.442695
    %v2466 = vpow.pop %v2465
    %v2467 = vadd.f32 %v2464, 1.0
    %v2468 = vadd.f32 %v2466, 1.0
    %v2469 = vrcp.pop %v2467
    %v2470 = vmul.f32 1.0, %v2469
    %v2471 = vrcp.pop %v2468
    %v2472 = vmul.f32 1.0, %v2471
    %v2473 = vxor.u32 %v2455, 2147483648
    %v2474 = vxor.u32 %v2456, 2147483648
    %v2475 = vmul.f32 %v2473, 1.442695
    %v2476 = vpow.pop %v2475
    %v2477 = vmul.f32 %v2474, 1.442695
    %v2478 = vpow.pop %v2477
    %v2479 = vadd.f32 %v2476, 1.0
    %v2480 = vadd.f32 %v2478, 1.0
    %v2481 = vrcp.pop %v2479
    %v2482 = vmul.f32 1.0, %v2481
    %v2483 = vrcp.pop %v2480
    %v2484 = vmul.f32 1.0, %v2483
    %v2485 = vtanh.pop %v2457
    %v2486 = vtanh.pop %v2458
    %v2487 = vxor.u32 %v2459, 2147483648
    %v2488 = vxor.u32 %v2460, 2147483648
    %v2489 = vmul.f32 %v2487, 1.442695
    %v2490 = vpow.pop %v2489
    %v2491 = vmul.f32 %v2488, 1.442695
    %v2492 = vpow.pop %v2491
    %v2493 = vadd.f32 %v2490, 1.0
    %v2494 = vadd.f32 %v2492, 1.0
    %v2495 = vrcp.pop %v2493
    %v2496 = vmul.f32 1.0, %v2495
    %v2497 = vrcp.pop %v2494
    %v2498 = vmul.f32 1.0, %v2497
    %v2499 = vmul.f32 %v2482, 0.0
    %v2500 = vmul.f32 %v2484, 0.0
    %v2501 = vmul.f32 %v2470, %v2485
    %v2502 = vmul.f32 %v2472, %v2486
    %v2503 = vadd.f32 %v2499, %v2501
    %v2504 = vadd.f32 %v2500, %v2502
    %v2505 = vtanh.pop %v2503
    %v2506 = vtanh.pop %v2504
    %v2507 = vmul.f32 %v2496, %v2505
    %v2508 = vmul.f32 %v2498, %v2506
    %2509 = vst [vmem:[#allocation4] sm:$0xff] %v2507
    %2510 = vst [vmem:[#allocation4 + $0x8] sm:$0xff] %v2508
    %s2511 = scalar_lea.vmem [#allocation2], 64
    %v2512 = vld [vmem:[%s2511] sm:$0xff]
    %v2513 = vld [vmem:[%s2511 + $0x8] sm:$0xff]
    %v2514 = vld [vmem:[%s2511 + $0x10] sm:$0xff]
    %v2515 = vld [vmem:[%s2511 + $0x18] sm:$0xff]
    %v2516 = vld [vmem:[%s2511 + $0x20] sm:$0xff]
    %v2517 = vld [vmem:[%s2511 + $0x28] sm:$0xff]
    %v2518 = vld [vmem:[%s2511 + $0x30] sm:$0xff]
    %v2519 = vld [vmem:[%s2511 + $0x38] sm:$0xff]
    %v2520 = vpack.c.bf16 %v2507, %v2507
    %v2521 = vpack.c.bf16 %v2508, %v2508
    %2522 = vmatprep.subr.bf16.mxu0 %v2090
    %2523 = vmatpush1.bf16.msra.mxu0 %v2089
    %2524 = vmatprep.subr.bf16.mxu0 %v2082
    %2525 = vmatpush1.bf16.msra.mxu0 %v2081
    %2526 = vmatprep.subr.bf16.mxu0 %v2074
    %2527 = vmatpush1.bf16.msra.mxu0 %v2073
    %2528 = vmatprep.subr.bf16.mxu0 %v2066
    %2529 = vmatpush1.bf16.msra.mxu0 %v2065
    %2530 = vmatprep.subr.bf16.mxu0 %v2058
    %2531 = vmatpush1.bf16.msra.mxu0 %v2057
    %2532 = vmatprep.subr.bf16.mxu0 %v2050
    %2533 = vmatpush1.bf16.msra.mxu0 %v2049
    %2534 = vmatprep.subr.bf16.mxu0 %v2042
    %2535 = vmatpush1.bf16.msra.mxu0 %v2041
    %2536 = vmatprep.subr.bf16.mxu0 %v2034
    %2537 = vmatpush1.bf16.msra.mxu0 %v2033
    %2538 = vmatprep.subr.bf16.mxu0 %v2154
    %2539 = vmatpush2.bf16.msra.mxu0 %v2153
    %2540 = vmatprep.subr.bf16.mxu0 %v2146
    %2541 = vmatpush2.bf16.msra.mxu0 %v2145
    %2542 = vmatprep.subr.bf16.mxu0 %v2138
    %2543 = vmatpush2.bf16.msra.mxu0 %v2137
    %2544 = vmatprep.subr.bf16.mxu0 %v2130
    %2545 = vmatpush2.bf16.msra.mxu0 %v2129
    %2546 = vmatprep.subr.bf16.mxu0 %v2122
    %2547 = vmatpush2.bf16.msra.mxu0 %v2121
    %2548 = vmatprep.subr.bf16.mxu0 %v2114
    %2549 = vmatpush2.bf16.msra.mxu0 %v2113
    %2550 = vmatprep.subr.bf16.mxu0 %v2106
    %2551 = vmatpush2.bf16.msra.mxu0 %v2105
    %2552 = vmatprep.subr.bf16.mxu0 %v2098
    %2553 = vmatpush2.bf16.msra.mxu0 %v2097
    %2554 = vmatprep.mubr.bf16.mxu0 %v2521
    %2555 = vmatmul.mubr.bf16.gmra.mxu0 %v2520
    %v2556 = vpop.f32.mrf.mxu0
    %v2557 = vadd.f32 0.0, %v2556
    %v2558 = vpop.f32.mrf.mxu0
    %v2559 = vadd.f32 0.0, %v2558
    %v2560 = vpop.f32.mrf.mxu0
    %v2561 = vpop.f32.mrf.mxu0
    %2562 = vdwg.mxu0
    %2563 = vmatprep.subr.bf16.mxu0 %v2092
    %2564 = vmatpush1.bf16.msra.mxu0 %v2091
    %2565 = vmatprep.subr.bf16.mxu0 %v2084
    %2566 = vmatpush1.bf16.msra.mxu0 %v2083
    %2567 = vmatprep.subr.bf16.mxu0 %v2076
    %2568 = vmatpush1.bf16.msra.mxu0 %v2075
    %2569 = vmatprep.subr.bf16.mxu0 %v2068
    %2570 = vmatpush1.bf16.msra.mxu0 %v2067
    %2571 = vmatprep.subr.bf16.mxu0 %v2060
    %2572 = vmatpush1.bf16.msra.mxu0 %v2059
    %2573 = vmatprep.subr.bf16.mxu0 %v2052
    %2574 = vmatpush1.bf16.msra.mxu0 %v2051
    %2575 = vmatprep.subr.bf16.mxu0 %v2044
    %2576 = vmatpush1.bf16.msra.mxu0 %v2043
    %2577 = vmatprep.subr.bf16.mxu0 %v2036
    %2578 = vmatpush1.bf16.msra.mxu0 %v2035
    %2579 = vmatprep.subr.bf16.mxu0 %v2156
    %2580 = vmatpush2.bf16.msra.mxu0 %v2155
    %2581 = vmatprep.subr.bf16.mxu0 %v2148
    %2582 = vmatpush2.bf16.msra.mxu0 %v2147
    %2583 = vmatprep.subr.bf16.mxu0 %v2140
    %2584 = vmatpush2.bf16.msra.mxu0 %v2139
    %2585 = vmatprep.subr.bf16.mxu0 %v2132
    %2586 = vmatpush2.bf16.msra.mxu0 %v2131
    %2587 = vmatprep.subr.bf16.mxu0 %v2124
    %2588 = vmatpush2.bf16.msra.mxu0 %v2123
    %2589 = vmatprep.subr.bf16.mxu0 %v2116
    %2590 = vmatpush2.bf16.msra.mxu0 %v2115
    %2591 = vmatprep.subr.bf16.mxu0 %v2108
    %2592 = vmatpush2.bf16.msra.mxu0 %v2107
    %2593 = vmatprep.subr.bf16.mxu0 %v2100
    %2594 = vmatpush2.bf16.msra.mxu0 %v2099
    %2595 = vmatprep.mubr.bf16.mxu0 %v2521
    %2596 = vmatmul.mubr.bf16.gmra.mxu0 %v2520
    %v2597 = vpop.f32.mrf.mxu0
    %v2598 = vadd.f32 0.0, %v2597
    %v2599 = vpop.f32.mrf.mxu0
    %v2600 = vadd.f32 0.0, %v2599
    %v2601 = vpop.f32.mrf.mxu0
    %v2602 = vpop.f32.mrf.mxu0
    %2603 = vdwg.mxu0
    %2604 = vmatprep.subr.bf16.mxu0 %v2094
    %2605 = vmatpush1.bf16.msra.mxu0 %v2093
    %2606 = vmatprep.subr.bf16.mxu0 %v2086
    %2607 = vmatpush1.bf16.msra.mxu0 %v2085
    %2608 = vmatprep.subr.bf16.mxu0 %v2078
    %2609 = vmatpush1.bf16.msra.mxu0 %v2077
    %2610 = vmatprep.subr.bf16.mxu0 %v2070
    %2611 = vmatpush1.bf16.msra.mxu0 %v2069
    %2612 = vmatprep.subr.bf16.mxu0 %v2062
    %2613 = vmatpush1.bf16.msra.mxu0 %v2061
    %2614 = vmatprep.subr.bf16.mxu0 %v2054
    %2615 = vmatpush1.bf16.msra.mxu0 %v2053
    %2616 = vmatprep.subr.bf16.mxu0 %v2046
    %2617 = vmatpush1.bf16.msra.mxu0 %v2045
    %2618 = vmatprep.subr.bf16.mxu0 %v2038
    %2619 = vmatpush1.bf16.msra.mxu0 %v2037
    %2620 = vmatprep.subr.bf16.mxu0 %v2158
    %2621 = vmatpush2.bf16.msra.mxu0 %v2157
    %2622 = vmatprep.subr.bf16.mxu0 %v2150
    %2623 = vmatpush2.bf16.msra.mxu0 %v2149
    %2624 = vmatprep.subr.bf16.mxu0 %v2142
    %2625 = vmatpush2.bf16.msra.mxu0 %v2141
    %2626 = vmatprep.subr.bf16.mxu0 %v2134
    %2627 = vmatpush2.bf16.msra.mxu0 %v2133
    %2628 = vmatprep.subr.bf16.mxu0 %v2126
    %2629 = vmatpush2.bf16.msra.mxu0 %v2125
    %2630 = vmatprep.subr.bf16.mxu0 %v2118
    %2631 = vmatpush2.bf16.msra.mxu0 %v2117
    %2632 = vmatprep.subr.bf16.mxu0 %v2110
    %2633 = vmatpush2.bf16.msra.mxu0 %v2109
    %2634 = vmatprep.subr.bf16.mxu0 %v2102
    %2635 = vmatpush2.bf16.msra.mxu0 %v2101
    %2636 = vmatprep.mubr.bf16.mxu0 %v2521
    %2637 = vmatmul.mubr.bf16.gmra.mxu0 %v2520
    %v2638 = vpop.f32.mrf.mxu0
    %v2639 = vadd.f32 0.0, %v2638
    %v2640 = vpop.f32.mrf.mxu0
    %v2641 = vadd.f32 0.0, %v2640
    %v2642 = vpop.f32.mrf.mxu0
    %v2643 = vpop.f32.mrf.mxu0
    %2644 = vdwg.mxu0
    %2645 = vmatprep.subr.bf16.mxu0 %v2096
    %2646 = vmatpush1.bf16.msra.mxu0 %v2095
    %2647 = vmatprep.subr.bf16.mxu0 %v2088
    %2648 = vmatpush1.bf16.msra.mxu0 %v2087
    %2649 = vmatprep.subr.bf16.mxu0 %v2080
    %2650 = vmatpush1.bf16.msra.mxu0 %v2079
    %2651 = vmatprep.subr.bf16.mxu0 %v2072
    %2652 = vmatpush1.bf16.msra.mxu0 %v2071
    %2653 = vmatprep.subr.bf16.mxu0 %v2064
    %2654 = vmatpush1.bf16.msra.mxu0 %v2063
    %2655 = vmatprep.subr.bf16.mxu0 %v2056
    %2656 = vmatpush1.bf16.msra.mxu0 %v2055
    %2657 = vmatprep.subr.bf16.mxu0 %v2048
    %2658 = vmatpush1.bf16.msra.mxu0 %v2047
    %2659 = vmatprep.subr.bf16.mxu0 %v2040
    %2660 = vmatpush1.bf16.msra.mxu0 %v2039
    %2661 = vmatprep.subr.bf16.mxu0 %v2160
    %2662 = vmatpush2.bf16.msra.mxu0 %v2159
    %2663 = vmatprep.subr.bf16.mxu0 %v2152
    %2664 = vmatpush2.bf16.msra.mxu0 %v2151
    %2665 = vmatprep.subr.bf16.mxu0 %v2144
    %2666 = vmatpush2.bf16.msra.mxu0 %v2143
    %2667 = vmatprep.subr.bf16.mxu0 %v2136
    %2668 = vmatpush2.bf16.msra.mxu0 %v2135
    %2669 = vmatprep.subr.bf16.mxu0 %v2128
    %2670 = vmatpush2.bf16.msra.mxu0 %v2127
    %2671 = vmatprep.subr.bf16.mxu0 %v2120
    %2672 = vmatpush2.bf16.msra.mxu0 %v2119
    %2673 = vmatprep.subr.bf16.mxu0 %v2112
    %2674 = vmatpush2.bf16.msra.mxu0 %v2111
    %2675 = vmatprep.subr.bf16.mxu0 %v2104
    %2676 = vmatpush2.bf16.msra.mxu0 %v2103
    %2677 = vmatprep.mubr.bf16.mxu0 %v2521
    %2678 = vmatmul.mubr.bf16.gmra.mxu0 %v2520
    %v2679 = vpop.f32.mrf.mxu0
    %v2680 = vadd.f32 0.0, %v2679
    %v2681 = vpop.f32.mrf.mxu0
    %v2682 = vadd.f32 0.0, %v2681
    %v2683 = vpop.f32.mrf.mxu0
    %v2684 = vpop.f32.mrf.mxu0
    %2685 = vdwg.mxu0
    %v2686 = vadd.f32 %v2512, %v2557
    %v2687 = vadd.f32 %v2513, %v2559
    %v2688 = vadd.f32 %v2514, %v2598
    %v2689 = vadd.f32 %v2515, %v2600
    %v2690 = vadd.f32 %v2516, %v2639
    %v2691 = vadd.f32 %v2517, %v2641
    %v2692 = vadd.f32 %v2518, %v2680
    %v2693 = vadd.f32 %v2519, %v2682
    %v2694 = vxor.u32 %v2686, 2147483648
    %v2695 = vxor.u32 %v2687, 2147483648
    %v2696 = vmul.f32 %v2694, 1.442695
    %v2697 = vpow.pop %v2696
    %v2698 = vmul.f32 %v2695, 1.442695
    %v2699 = vpow.pop %v2698
    %v2700 = vadd.f32 %v2697, 1.0
    %v2701 = vadd.f32 %v2699, 1.0
    %v2702 = vrcp.pop %v2700
    %v2703 = vmul.f32 1.0, %v2702
    %v2704 = vrcp.pop %v2701
    %v2705 = vmul.f32 1.0, %v2704
    %v2706 = vxor.u32 %v2688, 2147483648
    %v2707 = vxor.u32 %v2689, 2147483648
    %v2708 = vmul.f32 %v2706, 1.442695
    %v2709 = vpow.pop %v2708
    %v2710 = vmul.f32 %v2707, 1.442695
    %v2711 = vpow.pop %v2710
    %v2712 = vadd.f32 %v2709, 1.0
    %v2713 = vadd.f32 %v2711, 1.0
    %v2714 = vrcp.pop %v2712
    %v2715 = vmul.f32 1.0, %v2714
    %v2716 = vrcp.pop %v2713
    %v2717 = vmul.f32 1.0, %v2716
    %v2718 = vtanh.pop %v2690
    %v2719 = vtanh.pop %v2691
    %v2720 = vxor.u32 %v2692, 2147483648
    %v2721 = vxor.u32 %v2693, 2147483648
    %v2722 = vmul.f32 %v2720, 1.442695
    %v2723 = vpow.pop %v2722
    %v2724 = vmul.f32 %v2721, 1.442695
    %v2725 = vpow.pop %v2724
    %v2726 = vadd.f32 %v2723, 1.0
    %v2727 = vadd.f32 %v2725, 1.0
    %v2728 = vrcp.pop %v2726
    %v2729 = vmul.f32 1.0, %v2728
    %v2730 = vrcp.pop %v2727
    %v2731 = vmul.f32 1.0, %v2730
    %v2732 = vmul.f32 %v2715, %v2503
    %v2733 = vmul.f32 %v2717, %v2504
    %v2734 = vmul.f32 %v2703, %v2718
    %v2735 = vmul.f32 %v2705, %v2719
    %v2736 = vadd.f32 %v2732, %v2734
    %v2737 = vadd.f32 %v2733, %v2735
    %v2738 = vtanh.pop %v2736
    %v2739 = vtanh.pop %v2737
    %v2740 = vmul.f32 %v2729, %v2738
    %v2741 = vmul.f32 %v2731, %v2739
    %s2742 = scalar_lea.vmem [#allocation4], 16
    %2743 = vst [vmem:[%s2742] sm:$0xff] %v2740
    %2744 = vst [vmem:[%s2742 + $0x8] sm:$0xff] %v2741
    %s2745 = scalar_lea.vmem [#allocation2], 128
    %v2746 = vld [vmem:[%s2745] sm:$0xff]
    %v2747 = vld [vmem:[%s2745 + $0x8] sm:$0xff]
    %v2748 = vld [vmem:[%s2745 + $0x10] sm:$0xff]
    %v2749 = vld [vmem:[%s2745 + $0x18] sm:$0xff]
    %v2750 = vld [vmem:[%s2745 + $0x20] sm:$0xff]
    %v2751 = vld [vmem:[%s2745 + $0x28] sm:$0xff]
    %v2752 = vld [vmem:[%s2745 + $0x30] sm:$0xff]
    %v2753 = vld [vmem:[%s2745 + $0x38] sm:$0xff]
    %v2754 = vpack.c.bf16 %v2740, %v2740
    %v2755 = vpack.c.bf16 %v2741, %v2741
    %2756 = vmatprep.subr.bf16.mxu0 %v2090
    %2757 = vmatpush1.bf16.msra.mxu0 %v2089
    %2758 = vmatprep.subr.bf16.mxu0 %v2082
    %2759 = vmatpush1.bf16.msra.mxu0 %v2081
    %2760 = vmatprep.subr.bf16.mxu0 %v2074
    %2761 = vmatpush1.bf16.msra.mxu0 %v2073
    %2762 = vmatprep.subr.bf16.mxu0 %v2066
    %2763 = vmatpush1.bf16.msra.mxu0 %v2065
    %2764 = vmatprep.subr.bf16.mxu0 %v2058
    %2765 = vmatpush1.bf16.msra.mxu0 %v2057
    %2766 = vmatprep.subr.bf16.mxu0 %v2050
    %2767 = vmatpush1.bf16.msra.mxu0 %v2049
    %2768 = vmatprep.subr.bf16.mxu0 %v2042
    %2769 = vmatpush1.bf16.msra.mxu0 %v2041
    %2770 = vmatprep.subr.bf16.mxu0 %v2034
    %2771 = vmatpush1.bf16.msra.mxu0 %v2033
    %2772 = vmatprep.subr.bf16.mxu0 %v2154
    %2773 = vmatpush2.bf16.msra.mxu0 %v2153
    %2774 = vmatprep.subr.bf16.mxu0 %v2146
    %2775 = vmatpush2.bf16.msra.mxu0 %v2145
    %2776 = vmatprep.subr.bf16.mxu0 %v2138
    %2777 = vmatpush2.bf16.msra.mxu0 %v2137
    %2778 = vmatprep.subr.bf16.mxu0 %v2130
    %2779 = vmatpush2.bf16.msra.mxu0 %v2129
    %2780 = vmatprep.subr.bf16.mxu0 %v2122
    %2781 = vmatpush2.bf16.msra.mxu0 %v2121
    %2782 = vmatprep.subr.bf16.mxu0 %v2114
    %2783 = vmatpush2.bf16.msra.mxu0 %v2113
    %2784 = vmatprep.subr.bf16.mxu0 %v2106
    %2785 = vmatpush2.bf16.msra.mxu0 %v2105
    %2786 = vmatprep.subr.bf16.mxu0 %v2098
    %2787 = vmatpush2.bf16.msra.mxu0 %v2097
    %2788 = vmatprep.mubr.bf16.mxu0 %v2755
    %2789 = vmatmul.mubr.bf16.gmra.mxu0 %v2754
    %v2790 = vpop.f32.mrf.mxu0
    %v2791 = vadd.f32 0.0, %v2790
    %v2792 = vpop.f32.mrf.mxu0
    %v2793 = vadd.f32 0.0, %v2792
    %v2794 = vpop.f32.mrf.mxu0
    %v2795 = vpop.f32.mrf.mxu0
    %2796 = vdwg.mxu0
    %2797 = vmatprep.subr.bf16.mxu0 %v2092
    %2798 = vmatpush1.bf16.msra.mxu0 %v2091
    %2799 = vmatprep.subr.bf16.mxu0 %v2084
    %2800 = vmatpush1.bf16.msra.mxu0 %v2083
    %2801 = vmatprep.subr.bf16.mxu0 %v2076
    %2802 = vmatpush1.bf16.msra.mxu0 %v2075
    %2803 = vmatprep.subr.bf16.mxu0 %v2068
    %2804 = vmatpush1.bf16.msra.mxu0 %v2067
    %2805 = vmatprep.subr.bf16.mxu0 %v2060
    %2806 = vmatpush1.bf16.msra.mxu0 %v2059
    %2807 = vmatprep.subr.bf16.mxu0 %v2052
    %2808 = vmatpush1.bf16.msra.mxu0 %v2051
    %2809 = vmatprep.subr.bf16.mxu0 %v2044
    %2810 = vmatpush1.bf16.msra.mxu0 %v2043
    %2811 = vmatprep.subr.bf16.mxu0 %v2036
    %2812 = vmatpush1.bf16.msra.mxu0 %v2035
    %2813 = vmatprep.subr.bf16.mxu0 %v2156
    %2814 = vmatpush2.bf16.msra.mxu0 %v2155
    %2815 = vmatprep.subr.bf16.mxu0 %v2148
    %2816 = vmatpush2.bf16.msra.mxu0 %v2147
    %2817 = vmatprep.subr.bf16.mxu0 %v2140
    %2818 = vmatpush2.bf16.msra.mxu0 %v2139
    %2819 = vmatprep.subr.bf16.mxu0 %v2132
    %2820 = vmatpush2.bf16.msra.mxu0 %v2131
    %2821 = vmatprep.subr.bf16.mxu0 %v2124
    %2822 = vmatpush2.bf16.msra.mxu0 %v2123
    %2823 = vmatprep.subr.bf16.mxu0 %v2116
    %2824 = vmatpush2.bf16.msra.mxu0 %v2115
    %2825 = vmatprep.subr.bf16.mxu0 %v2108
    %2826 = vmatpush2.bf16.msra.mxu0 %v2107
    %2827 = vmatprep.subr.bf16.mxu0 %v2100
    %2828 = vmatpush2.bf16.msra.mxu0 %v2099
    %2829 = vmatprep.mubr.bf16.mxu0 %v2755
    %2830 = vmatmul.mubr.bf16.gmra.mxu0 %v2754
    %v2831 = vpop.f32.mrf.mxu0
    %v2832 = vadd.f32 0.0, %v2831
    %v2833 = vpop.f32.mrf.mxu0
    %v2834 = vadd.f32 0.0, %v2833
    %v2835 = vpop.f32.mrf.mxu0
    %v2836 = vpop.f32.mrf.mxu0
    %2837 = vdwg.mxu0
    %2838 = vmatprep.subr.bf16.mxu0 %v2094
    %2839 = vmatpush1.bf16.msra.mxu0 %v2093
    %2840 = vmatprep.subr.bf16.mxu0 %v2086
    %2841 = vmatpush1.bf16.msra.mxu0 %v2085
    %2842 = vmatprep.subr.bf16.mxu0 %v2078
    %2843 = vmatpush1.bf16.msra.mxu0 %v2077
    %2844 = vmatprep.subr.bf16.mxu0 %v2070
    %2845 = vmatpush1.bf16.msra.mxu0 %v2069
    %2846 = vmatprep.subr.bf16.mxu0 %v2062
    %2847 = vmatpush1.bf16.msra.mxu0 %v2061
    %2848 = vmatprep.subr.bf16.mxu0 %v2054
    %2849 = vmatpush1.bf16.msra.mxu0 %v2053
    %2850 = vmatprep.subr.bf16.mxu0 %v2046
    %2851 = vmatpush1.bf16.msra.mxu0 %v2045
    %2852 = vmatprep.subr.bf16.mxu0 %v2038
    %2853 = vmatpush1.bf16.msra.mxu0 %v2037
    %2854 = vmatprep.subr.bf16.mxu0 %v2158
    %2855 = vmatpush2.bf16.msra.mxu0 %v2157
    %2856 = vmatprep.subr.bf16.mxu0 %v2150
    %2857 = vmatpush2.bf16.msra.mxu0 %v2149
    %2858 = vmatprep.subr.bf16.mxu0 %v2142
    %2859 = vmatpush2.bf16.msra.mxu0 %v2141
    %2860 = vmatprep.subr.bf16.mxu0 %v2134
    %2861 = vmatpush2.bf16.msra.mxu0 %v2133
    %2862 = vmatprep.subr.bf16.mxu0 %v2126
    %2863 = vmatpush2.bf16.msra.mxu0 %v2125
    %2864 = vmatprep.subr.bf16.mxu0 %v2118
    %2865 = vmatpush2.bf16.msra.mxu0 %v2117
    %2866 = vmatprep.subr.bf16.mxu0 %v2110
    %2867 = vmatpush2.bf16.msra.mxu0 %v2109
    %2868 = vmatprep.subr.bf16.mxu0 %v2102
    %2869 = vmatpush2.bf16.msra.mxu0 %v2101
    %2870 = vmatprep.mubr.bf16.mxu0 %v2755
    %2871 = vmatmul.mubr.bf16.gmra.mxu0 %v2754
    %v2872 = vpop.f32.mrf.mxu0
    %v2873 = vadd.f32 0.0, %v2872
    %v2874 = vpop.f32.mrf.mxu0
    %v2875 = vadd.f32 0.0, %v2874
    %v2876 = vpop.f32.mrf.mxu0
    %v2877 = vpop.f32.mrf.mxu0
    %2878 = vdwg.mxu0
    %2879 = vmatprep.subr.bf16.mxu0 %v2096
    %2880 = vmatpush1.bf16.msra.mxu0 %v2095
    %2881 = vmatprep.subr.bf16.mxu0 %v2088
    %2882 = vmatpush1.bf16.msra.mxu0 %v2087
    %2883 = vmatprep.subr.bf16.mxu0 %v2080
    %2884 = vmatpush1.bf16.msra.mxu0 %v2079
    %2885 = vmatprep.subr.bf16.mxu0 %v2072
    %2886 = vmatpush1.bf16.msra.mxu0 %v2071
    %2887 = vmatprep.subr.bf16.mxu0 %v2064
    %2888 = vmatpush1.bf16.msra.mxu0 %v2063
    %2889 = vmatprep.subr.bf16.mxu0 %v2056
    %2890 = vmatpush1.bf16.msra.mxu0 %v2055
    %2891 = vmatprep.subr.bf16.mxu0 %v2048
    %2892 = vmatpush1.bf16.msra.mxu0 %v2047
    %2893 = vmatprep.subr.bf16.mxu0 %v2040
    %2894 = vmatpush1.bf16.msra.mxu0 %v2039
    %2895 = vmatprep.subr.bf16.mxu0 %v2160
    %2896 = vmatpush2.bf16.msra.mxu0 %v2159
    %2897 = vmatprep.subr.bf16.mxu0 %v2152
    %2898 = vmatpush2.bf16.msra.mxu0 %v2151
    %2899 = vmatprep.subr.bf16.mxu0 %v2144
    %2900 = vmatpush2.bf16.msra.mxu0 %v2143
    %2901 = vmatprep.subr.bf16.mxu0 %v2136
    %2902 = vmatpush2.bf16.msra.mxu0 %v2135
    %2903 = vmatprep.subr.bf16.mxu0 %v2128
    %2904 = vmatpush2.bf16.msra.mxu0 %v2127
    %2905 = vmatprep.subr.bf16.mxu0 %v2120
    %2906 = vmatpush2.bf16.msra.mxu0 %v2119
    %2907 = vmatprep.subr.bf16.mxu0 %v2112
    %2908 = vmatpush2.bf16.msra.mxu0 %v2111
    %2909 = vmatprep.subr.bf16.mxu0 %v2104
    %2910 = vmatpush2.bf16.msra.mxu0 %v2103
    %2911 = vmatprep.mubr.bf16.mxu0 %v2755
    %2912 = vmatmul.mubr.bf16.gmra.mxu0 %v2754
    %v2913 = vpop.f32.mrf.mxu0
    %v2914 = vadd.f32 0.0, %v2913
    %v2915 = vpop.f32.mrf.mxu0
    %v2916 = vadd.f32 0.0, %v2915
    %v2917 = vpop.f32.mrf.mxu0
    %v2918 = vpop.f32.mrf.mxu0
    %2919 = vdwg.mxu0
    %v2920 = vadd.f32 %v2746, %v2791
    %v2921 = vadd.f32 %v2747, %v2793
    %v2922 = vadd.f32 %v2748, %v2832
    %v2923 = vadd.f32 %v2749, %v2834
    %v2924 = vadd.f32 %v2750, %v2873
    %v2925 = vadd.f32 %v2751, %v2875
    %v2926 = vadd.f32 %v2752, %v2914
    %v2927 = vadd.f32 %v2753, %v2916
    %v2928 = vxor.u32 %v2920, 2147483648
    %v2929 = vxor.u32 %v2921, 2147483648
    %v2930 = vmul.f32 %v2928, 1.442695
    %v2931 = vpow.pop %v2930
    %v2932 = vmul.f32 %v2929, 1.442695
    %v2933 = vpow.pop %v2932
    %v2934 = vadd.f32 %v2931, 1.0
    %v2935 = vadd.f32 %v2933, 1.0
    %v2936 = vrcp.pop %v2934
    %v2937 = vmul.f32 1.0, %v2936
    %v2938 = vrcp.pop %v2935
    %v2939 = vmul.f32 1.0, %v2938
    %v2940 = vxor.u32 %v2922, 2147483648
    %v2941 = vxor.u32 %v2923, 2147483648
    %v2942 = vmul.f32 %v2940, 1.442695
    %v2943 = vpow.pop %v2942
    %v2944 = vmul.f32 %v2941, 1.442695
    %v2945 = vpow.pop %v2944
    %v2946 = vadd.f32 %v2943, 1.0
    %v2947 = vadd.f32 %v2945, 1.0
    %v2948 = vrcp.pop %v2946
    %v2949 = vmul.f32 1.0, %v2948
    %v2950 = vrcp.pop %v2947
    %v2951 = vmul.f32 1.0, %v2950
    %v2952 = vtanh.pop %v2924
    %v2953 = vtanh.pop %v2925
    %v2954 = vxor.u32 %v2926, 2147483648
    %v2955 = vxor.u32 %v2927, 2147483648
    %v2956 = vmul.f32 %v2954, 1.442695
    %v2957 = vpow.pop %v2956
    %v2958 = vmul.f32 %v2955, 1.442695
    %v2959 = vpow.pop %v2958
    %v2960 = vadd.f32 %v2957, 1.0
    %v2961 = vadd.f32 %v2959, 1.0
    %v2962 = vrcp.pop %v2960
    %v2963 = vmul.f32 1.0, %v2962
    %v2964 = vrcp.pop %v2961
    %v2965 = vmul.f32 1.0, %v2964
    %v2966 = vmul.f32 %v2949, %v2736
    %v2967 = vmul.f32 %v2951, %v2737
    %v2968 = vmul.f32 %v2937, %v2952
    %v2969 = vmul.f32 %v2939, %v2953
    %v2970 = vadd.f32 %v2966, %v2968
    %v2971 = vadd.f32 %v2967, %v2969
    %v2972 = vtanh.pop %v2970
    %v2973 = vtanh.pop %v2971
    %v2974 = vmul.f32 %v2963, %v2972
    %v2975 = vmul.f32 %v2965, %v2973
    %s2976 = scalar_lea.vmem [#allocation4], 32
    %2977 = vst [vmem:[%s2976] sm:$0xff] %v2974
    %2978 = vst [vmem:[%s2976 + $0x8] sm:$0xff] %v2975
    %s2979 = scalar_lea.vmem [#allocation2], 192
    %v2980 = vld [vmem:[%s2979] sm:$0xff]
    %v2981 = vld [vmem:[%s2979 + $0x8] sm:$0xff]
    %v2982 = vld [vmem:[%s2979 + $0x10] sm:$0xff]
    %v2983 = vld [vmem:[%s2979 + $0x18] sm:$0xff]
    %v2984 = vld [vmem:[%s2979 + $0x20] sm:$0xff]
    %v2985 = vld [vmem:[%s2979 + $0x28] sm:$0xff]
    %v2986 = vld [vmem:[%s2979 + $0x30] sm:$0xff]
    %v2987 = vld [vmem:[%s2979 + $0x38] sm:$0xff]
    %v2988 = vpack.c.bf16 %v2974, %v2974
    %v2989 = vpack.c.bf16 %v2975, %v2975
    %2990 = vmatprep.subr.bf16.mxu0 %v2090
    %2991 = vmatpush1.bf16.msra.mxu0 %v2089
    %2992 = vmatprep.subr.bf16.mxu0 %v2082
    %2993 = vmatpush1.bf16.msra.mxu0 %v2081
    %2994 = vmatprep.subr.bf16.mxu0 %v2074
    %2995 = vmatpush1.bf16.msra.mxu0 %v2073
    %2996 = vmatprep.subr.bf16.mxu0 %v2066
    %2997 = vmatpush1.bf16.msra.mxu0 %v2065
    %2998 = vmatprep.subr.bf16.mxu0 %v2058
    %2999 = vmatpush1.bf16.msra.mxu0 %v2057
    %3000 = vmatprep.subr.bf16.mxu0 %v2050
    %3001 = vmatpush1.bf16.msra.mxu0 %v2049
    %3002 = vmatprep.subr.bf16.mxu0 %v2042
    %3003 = vmatpush1.bf16.msra.mxu0 %v2041
    %3004 = vmatprep.subr.bf16.mxu0 %v2034
    %3005 = vmatpush1.bf16.msra.mxu0 %v2033
    %3006 = vmatprep.subr.bf16.mxu0 %v2154
    %3007 = vmatpush2.bf16.msra.mxu0 %v2153
    %3008 = vmatprep.subr.bf16.mxu0 %v2146
    %3009 = vmatpush2.bf16.msra.mxu0 %v2145
    %3010 = vmatprep.subr.bf16.mxu0 %v2138
    %3011 = vmatpush2.bf16.msra.mxu0 %v2137
    %3012 = vmatprep.subr.bf16.mxu0 %v2130
    %3013 = vmatpush2.bf16.msra.mxu0 %v2129
    %3014 = vmatprep.subr.bf16.mxu0 %v2122
    %3015 = vmatpush2.bf16.msra.mxu0 %v2121
    %3016 = vmatprep.subr.bf16.mxu0 %v2114
    %3017 = vmatpush2.bf16.msra.mxu0 %v2113
    %3018 = vmatprep.subr.bf16.mxu0 %v2106
    %3019 = vmatpush2.bf16.msra.mxu0 %v2105
    %3020 = vmatprep.subr.bf16.mxu0 %v2098
    %3021 = vmatpush2.bf16.msra.mxu0 %v2097
    %3022 = vmatprep.mubr.bf16.mxu0 %v2989
    %3023 = vmatmul.mubr.bf16.gmra.mxu0 %v2988
    %v3024 = vpop.f32.mrf.mxu0
    %v3025 = vadd.f32 0.0, %v3024
    %v3026 = vpop.f32.mrf.mxu0
    %v3027 = vadd.f32 0.0, %v3026
    %v3028 = vpop.f32.mrf.mxu0
    %v3029 = vpop.f32.mrf.mxu0
    %3030 = vdwg.mxu0
    %3031 = vmatprep.subr.bf16.mxu0 %v2092
    %3032 = vmatpush1.bf16.msra.mxu0 %v2091
    %3033 = vmatprep.subr.bf16.mxu0 %v2084
    %3034 = vmatpush1.bf16.msra.mxu0 %v2083
    %3035 = vmatprep.subr.bf16.mxu0 %v2076
    %3036 = vmatpush1.bf16.msra.mxu0 %v2075
    %3037 = vmatprep.subr.bf16.mxu0 %v2068
    %3038 = vmatpush1.bf16.msra.mxu0 %v2067
    %3039 = vmatprep.subr.bf16.mxu0 %v2060
    %3040 = vmatpush1.bf16.msra.mxu0 %v2059
    %3041 = vmatprep.subr.bf16.mxu0 %v2052
    %3042 = vmatpush1.bf16.msra.mxu0 %v2051
    %3043 = vmatprep.subr.bf16.mxu0 %v2044
    %3044 = vmatpush1.bf16.msra.mxu0 %v2043
    %3045 = vmatprep.subr.bf16.mxu0 %v2036
    %3046 = vmatpush1.bf16.msra.mxu0 %v2035
    %3047 = vmatprep.subr.bf16.mxu0 %v2156
    %3048 = vmatpush2.bf16.msra.mxu0 %v2155
    %3049 = vmatprep.subr.bf16.mxu0 %v2148
    %3050 = vmatpush2.bf16.msra.mxu0 %v2147
    %3051 = vmatprep.subr.bf16.mxu0 %v2140
    %3052 = vmatpush2.bf16.msra.mxu0 %v2139
    %3053 = vmatprep.subr.bf16.mxu0 %v2132
    %3054 = vmatpush2.bf16.msra.mxu0 %v2131
    %3055 = vmatprep.subr.bf16.mxu0 %v2124
    %3056 = vmatpush2.bf16.msra.mxu0 %v2123
    %3057 = vmatprep.subr.bf16.mxu0 %v2116
    %3058 = vmatpush2.bf16.msra.mxu0 %v2115
    %3059 = vmatprep.subr.bf16.mxu0 %v2108
    %3060 = vmatpush2.bf16.msra.mxu0 %v2107
    %3061 = vmatprep.subr.bf16.mxu0 %v2100
    %3062 = vmatpush2.bf16.msra.mxu0 %v2099
    %3063 = vmatprep.mubr.bf16.mxu0 %v2989
    %3064 = vmatmul.mubr.bf16.gmra.mxu0 %v2988
    %v3065 = vpop.f32.mrf.mxu0
    %v3066 = vadd.f32 0.0, %v3065
    %v3067 = vpop.f32.mrf.mxu0
    %v3068 = vadd.f32 0.0, %v3067
    %v3069 = vpop.f32.mrf.mxu0
    %v3070 = vpop.f32.mrf.mxu0
    %3071 = vdwg.mxu0
    %3072 = vmatprep.subr.bf16.mxu0 %v2094
    %3073 = vmatpush1.bf16.msra.mxu0 %v2093
    %3074 = vmatprep.subr.bf16.mxu0 %v2086
    %3075 = vmatpush1.bf16.msra.mxu0 %v2085
    %3076 = vmatprep.subr.bf16.mxu0 %v2078
    %3077 = vmatpush1.bf16.msra.mxu0 %v2077
    %3078 = vmatprep.subr.bf16.mxu0 %v2070
    %3079 = vmatpush1.bf16.msra.mxu0 %v2069
    %3080 = vmatprep.subr.bf16.mxu0 %v2062
    %3081 = vmatpush1.bf16.msra.mxu0 %v2061
    %3082 = vmatprep.subr.bf16.mxu0 %v2054
    %3083 = vmatpush1.bf16.msra.mxu0 %v2053
    %3084 = vmatprep.subr.bf16.mxu0 %v2046
    %3085 = vmatpush1.bf16.msra.mxu0 %v2045
    %3086 = vmatprep.subr.bf16.mxu0 %v2038
    %3087 = vmatpush1.bf16.msra.mxu0 %v2037
    %3088 = vmatprep.subr.bf16.mxu0 %v2158
    %3089 = vmatpush2.bf16.msra.mxu0 %v2157
    %3090 = vmatprep.subr.bf16.mxu0 %v2150
    %3091 = vmatpush2.bf16.msra.mxu0 %v2149
    %3092 = vmatprep.subr.bf16.mxu0 %v2142
    %3093 = vmatpush2.bf16.msra.mxu0 %v2141
    %3094 = vmatprep.subr.bf16.mxu0 %v2134
    %3095 = vmatpush2.bf16.msra.mxu0 %v2133
    %3096 = vmatprep.subr.bf16.mxu0 %v2126
    %3097 = vmatpush2.bf16.msra.mxu0 %v2125
    %3098 = vmatprep.subr.bf16.mxu0 %v2118
    %3099 = vmatpush2.bf16.msra.mxu0 %v2117
    %3100 = vmatprep.subr.bf16.mxu0 %v2110
    %3101 = vmatpush2.bf16.msra.mxu0 %v2109
    %3102 = vmatprep.subr.bf16.mxu0 %v2102
    %3103 = vmatpush2.bf16.msra.mxu0 %v2101
    %3104 = vmatprep.mubr.bf16.mxu0 %v2989
    %3105 = vmatmul.mubr.bf16.gmra.mxu0 %v2988
    %v3106 = vpop.f32.mrf.mxu0
    %v3107 = vadd.f32 0.0, %v3106
    %v3108 = vpop.f32.mrf.mxu0
    %v3109 = vadd.f32 0.0, %v3108
    %v3110 = vpop.f32.mrf.mxu0
    %v3111 = vpop.f32.mrf.mxu0
    %3112 = vdwg.mxu0
    %3113 = vmatprep.subr.bf16.mxu0 %v2096
    %3114 = vmatpush1.bf16.msra.mxu0 %v2095
    %3115 = vmatprep.subr.bf16.mxu0 %v2088
    %3116 = vmatpush1.bf16.msra.mxu0 %v2087
    %3117 = vmatprep.subr.bf16.mxu0 %v2080
    %3118 = vmatpush1.bf16.msra.mxu0 %v2079
    %3119 = vmatprep.subr.bf16.mxu0 %v2072
    %3120 = vmatpush1.bf16.msra.mxu0 %v2071
    %3121 = vmatprep.subr.bf16.mxu0 %v2064
    %3122 = vmatpush1.bf16.msra.mxu0 %v2063
    %3123 = vmatprep.subr.bf16.mxu0 %v2056
    %3124 = vmatpush1.bf16.msra.mxu0 %v2055
    %3125 = vmatprep.subr.bf16.mxu0 %v2048
    %3126 = vmatpush1.bf16.msra.mxu0 %v2047
    %3127 = vmatprep.subr.bf16.mxu0 %v2040
    %3128 = vmatpush1.bf16.msra.mxu0 %v2039
    %3129 = vmatprep.subr.bf16.mxu0 %v2160
    %3130 = vmatpush2.bf16.msra.mxu0 %v2159
    %3131 = vmatprep.subr.bf16.mxu0 %v2152
    %3132 = vmatpush2.bf16.msra.mxu0 %v2151
    %3133 = vmatprep.subr.bf16.mxu0 %v2144
    %3134 = vmatpush2.bf16.msra.mxu0 %v2143
    %3135 = vmatprep.subr.bf16.mxu0 %v2136
    %3136 = vmatpush2.bf16.msra.mxu0 %v2135
    %3137 = vmatprep.subr.bf16.mxu0 %v2128
    %3138 = vmatpush2.bf16.msra.mxu0 %v2127
    %3139 = vmatprep.subr.bf16.mxu0 %v2120
    %3140 = vmatpush2.bf16.msra.mxu0 %v2119
    %3141 = vmatprep.subr.bf16.mxu0 %v2112
    %3142 = vmatpush2.bf16.msra.mxu0 %v2111
    %3143 = vmatprep.subr.bf16.mxu0 %v2104
    %3144 = vmatpush2.bf16.msra.mxu0 %v2103
    %3145 = vmatprep.mubr.bf16.mxu0 %v2989
    %3146 = vmatmul.mubr.bf16.gmra.mxu0 %v2988
    %v3147 = vpop.f32.mrf.mxu0
    %v3148 = vadd.f32 0.0, %v3147
    %v3149 = vpop.f32.mrf.mxu0
    %v3150 = vadd.f32 0.0, %v3149
    %v3151 = vpop.f32.mrf.mxu0
    %v3152 = vpop.f32.mrf.mxu0
    %3153 = vdwg.mxu0
    %v3154 = vadd.f32 %v2980, %v3025
    %v3155 = vadd.f32 %v2981, %v3027
    %v3156 = vadd.f32 %v2982, %v3066
    %v3157 = vadd.f32 %v2983, %v3068
    %v3158 = vadd.f32 %v2984, %v3107
    %v3159 = vadd.f32 %v2985, %v3109
    %v3160 = vadd.f32 %v2986, %v3148
    %v3161 = vadd.f32 %v2987, %v3150
    %v3162 = vxor.u32 %v3154, 2147483648
    %v3163 = vxor.u32 %v3155, 2147483648
    %v3164 = vmul.f32 %v3162, 1.442695
    %v3165 = vpow.pop %v3164
    %v3166 = vmul.f32 %v3163, 1.442695
    %v3167 = vpow.pop %v3166
    %v3168 = vadd.f32 %v3165, 1.0
    %v3169 = vadd.f32 %v3167, 1.0
    %v3170 = vrcp.pop %v3168
    %v3171 = vmul.f32 1.0, %v3170
    %v3172 = vrcp.pop %v3169
    %v3173 = vmul.f32 1.0, %v3172
    %v3174 = vxor.u32 %v3156, 2147483648
    %v3175 = vxor.u32 %v3157, 2147483648
    %v3176 = vmul.f32 %v3174, 1.442695
    %v3177 = vpow.pop %v3176
    %v3178 = vmul.f32 %v3175, 1.442695
    %v3179 = vpow.pop %v3178
    %v3180 = vadd.f32 %v3177, 1.0
    %v3181 = vadd.f32 %v3179, 1.0
    %v3182 = vrcp.pop %v3180
    %v3183 = vmul.f32 1.0, %v3182
    %v3184 = vrcp.pop %v3181
    %v3185 = vmul.f32 1.0, %v3184
    %v3186 = vtanh.pop %v3158
    %v3187 = vtanh.pop %v3159
    %v3188 = vxor.u32 %v3160, 2147483648
    %v3189 = vxor.u32 %v3161, 2147483648
    %v3190 = vmul.f32 %v3188, 1.442695
    %v3191 = vpow.pop %v3190
    %v3192 = vmul.f32 %v3189, 1.442695
    %v3193 = vpow.pop %v3192
    %v3194 = vadd.f32 %v3191, 1.0
    %v3195 = vadd.f32 %v3193, 1.0
    %v3196 = vrcp.pop %v3194
    %v3197 = vmul.f32 1.0, %v3196
    %v3198 = vrcp.pop %v3195
    %v3199 = vmul.f32 1.0, %v3198
    %v3200 = vmul.f32 %v3183, %v2970
    %v3201 = vmul.f32 %v3185, %v2971
    %v3202 = vmul.f32 %v3171, %v3186
    %v3203 = vmul.f32 %v3173, %v3187
    %v3204 = vadd.f32 %v3200, %v3202
    %v3205 = vadd.f32 %v3201, %v3203
    %v3206 = vtanh.pop %v3204
    %v3207 = vtanh.pop %v3205
    %v3208 = vmul.f32 %v3197, %v3206
    %v3209 = vmul.f32 %v3199, %v3207
    %s3210 = scalar_lea.vmem [#allocation4], 48
    %3211 = vst [vmem:[%s3210] sm:$0xff] %v3208
    %3212 = vst [vmem:[%s3210 + $0x8] sm:$0xff] %v3209
    %s3213 = scalar_lea.vmem [#allocation2], 256
    %v3214 = vld [vmem:[%s3213] sm:$0xff]
    %v3215 = vld [vmem:[%s3213 + $0x8] sm:$0xff]
    %v3216 = vld [vmem:[%s3213 + $0x10] sm:$0xff]
    %v3217 = vld [vmem:[%s3213 + $0x18] sm:$0xff]
    %v3218 = vld [vmem:[%s3213 + $0x20] sm:$0xff]
    %v3219 = vld [vmem:[%s3213 + $0x28] sm:$0xff]
    %v3220 = vld [vmem:[%s3213 + $0x30] sm:$0xff]
    %v3221 = vld [vmem:[%s3213 + $0x38] sm:$0xff]
    %v3222 = vpack.c.bf16 %v3208, %v3208
    %v3223 = vpack.c.bf16 %v3209, %v3209
    %3224 = vmatprep.subr.bf16.mxu0 %v2090
    %3225 = vmatpush1.bf16.msra.mxu0 %v2089
    %3226 = vmatprep.subr.bf16.mxu0 %v2082
    %3227 = vmatpush1.bf16.msra.mxu0 %v2081
    %3228 = vmatprep.subr.bf16.mxu0 %v2074
    %3229 = vmatpush1.bf16.msra.mxu0 %v2073
    %3230 = vmatprep.subr.bf16.mxu0 %v2066
    %3231 = vmatpush1.bf16.msra.mxu0 %v2065
    %3232 = vmatprep.subr.bf16.mxu0 %v2058
    %3233 = vmatpush1.bf16.msra.mxu0 %v2057
    %3234 = vmatprep.subr.bf16.mxu0 %v2050
    %3235 = vmatpush1.bf16.msra.mxu0 %v2049
    %3236 = vmatprep.subr.bf16.mxu0 %v2042
    %3237 = vmatpush1.bf16.msra.mxu0 %v2041
    %3238 = vmatprep.subr.bf16.mxu0 %v2034
    %3239 = vmatpush1.bf16.msra.mxu0 %v2033
    %3240 = vmatprep.subr.bf16.mxu0 %v2154
    %3241 = vmatpush2.bf16.msra.mxu0 %v2153
    %3242 = vmatprep.subr.bf16.mxu0 %v2146
    %3243 = vmatpush2.bf16.msra.mxu0 %v2145
    %3244 = vmatprep.subr.bf16.mxu0 %v2138
    %3245 = vmatpush2.bf16.msra.mxu0 %v2137
    %3246 = vmatprep.subr.bf16.mxu0 %v2130
    %3247 = vmatpush2.bf16.msra.mxu0 %v2129
    %3248 = vmatprep.subr.bf16.mxu0 %v2122
    %3249 = vmatpush2.bf16.msra.mxu0 %v2121
    %3250 = vmatprep.subr.bf16.mxu0 %v2114
    %3251 = vmatpush2.bf16.msra.mxu0 %v2113
    %3252 = vmatprep.subr.bf16.mxu0 %v2106
    %3253 = vmatpush2.bf16.msra.mxu0 %v2105
    %3254 = vmatprep.subr.bf16.mxu0 %v2098
    %3255 = vmatpush2.bf16.msra.mxu0 %v2097
    %3256 = vmatprep.mubr.bf16.mxu0 %v3223
    %3257 = vmatmul.mubr.bf16.gmra.mxu0 %v3222
    %v3258 = vpop.f32.mrf.mxu0
    %v3259 = vadd.f32 0.0, %v3258
    %v3260 = vpop.f32.mrf.mxu0
    %v3261 = vadd.f32 0.0, %v3260
    %v3262 = vpop.f32.mrf.mxu0
    %v3263 = vpop.f32.mrf.mxu0
    %3264 = vdwg.mxu0
    %3265 = vmatprep.subr.bf16.mxu0 %v2092
    %3266 = vmatpush1.bf16.msra.mxu0 %v2091
    %3267 = vmatprep.subr.bf16.mxu0 %v2084
    %3268 = vmatpush1.bf16.msra.mxu0 %v2083
    %3269 = vmatprep.subr.bf16.mxu0 %v2076
    %3270 = vmatpush1.bf16.msra.mxu0 %v2075
    %3271 = vmatprep.subr.bf16.mxu0 %v2068
    %3272 = vmatpush1.bf16.msra.mxu0 %v2067
    %3273 = vmatprep.subr.bf16.mxu0 %v2060
    %3274 = vmatpush1.bf16.msra.mxu0 %v2059
    %3275 = vmatprep.subr.bf16.mxu0 %v2052
    %3276 = vmatpush1.bf16.msra.mxu0 %v2051
    %3277 = vmatprep.subr.bf16.mxu0 %v2044
    %3278 = vmatpush1.bf16.msra.mxu0 %v2043
    %3279 = vmatprep.subr.bf16.mxu0 %v2036
    %3280 = vmatpush1.bf16.msra.mxu0 %v2035
    %3281 = vmatprep.subr.bf16.mxu0 %v2156
    %3282 = vmatpush2.bf16.msra.mxu0 %v2155
    %3283 = vmatprep.subr.bf16.mxu0 %v2148
    %3284 = vmatpush2.bf16.msra.mxu0 %v2147
    %3285 = vmatprep.subr.bf16.mxu0 %v2140
    %3286 = vmatpush2.bf16.msra.mxu0 %v2139
    %3287 = vmatprep.subr.bf16.mxu0 %v2132
    %3288 = vmatpush2.bf16.msra.mxu0 %v2131
    %3289 = vmatprep.subr.bf16.mxu0 %v2124
    %3290 = vmatpush2.bf16.msra.mxu0 %v2123
    %3291 = vmatprep.subr.bf16.mxu0 %v2116
    %3292 = vmatpush2.bf16.msra.mxu0 %v2115
    %3293 = vmatprep.subr.bf16.mxu0 %v2108
    %3294 = vmatpush2.bf16.msra.mxu0 %v2107
    %3295 = vmatprep.subr.bf16.mxu0 %v2100
    %3296 = vmatpush2.bf16.msra.mxu0 %v2099
    %3297 = vmatprep.mubr.bf16.mxu0 %v3223
    %3298 = vmatmul.mubr.bf16.gmra.mxu0 %v3222
    %v3299 = vpop.f32.mrf.mxu0
    %v3300 = vadd.f32 0.0, %v3299
    %v3301 = vpop.f32.mrf.mxu0
    %v3302 = vadd.f32 0.0, %v3301
    %v3303 = vpop.f32.mrf.mxu0
    %v3304 = vpop.f32.mrf.mxu0
    %3305 = vdwg.mxu0
    %3306 = vmatprep.subr.bf16.mxu0 %v2094
    %3307 = vmatpush1.bf16.msra.mxu0 %v2093
    %3308 = vmatprep.subr.bf16.mxu0 %v2086
    %3309 = vmatpush1.bf16.msra.mxu0 %v2085
    %3310 = vmatprep.subr.bf16.mxu0 %v2078
    %3311 = vmatpush1.bf16.msra.mxu0 %v2077
    %3312 = vmatprep.subr.bf16.mxu0 %v2070
    %3313 = vmatpush1.bf16.msra.mxu0 %v2069
    %3314 = vmatprep.subr.bf16.mxu0 %v2062
    %3315 = vmatpush1.bf16.msra.mxu0 %v2061
    %3316 = vmatprep.subr.bf16.mxu0 %v2054
    %3317 = vmatpush1.bf16.msra.mxu0 %v2053
    %3318 = vmatprep.subr.bf16.mxu0 %v2046
    %3319 = vmatpush1.bf16.msra.mxu0 %v2045
    %3320 = vmatprep.subr.bf16.mxu0 %v2038
    %3321 = vmatpush1.bf16.msra.mxu0 %v2037
    %3322 = vmatprep.subr.bf16.mxu0 %v2158
    %3323 = vmatpush2.bf16.msra.mxu0 %v2157
    %3324 = vmatprep.subr.bf16.mxu0 %v2150
    %3325 = vmatpush2.bf16.msra.mxu0 %v2149
    %3326 = vmatprep.subr.bf16.mxu0 %v2142
    %3327 = vmatpush2.bf16.msra.mxu0 %v2141
    %3328 = vmatprep.subr.bf16.mxu0 %v2134
    %3329 = vmatpush2.bf16.msra.mxu0 %v2133
    %3330 = vmatprep.subr.bf16.mxu0 %v2126
    %3331 = vmatpush2.bf16.msra.mxu0 %v2125
    %3332 = vmatprep.subr.bf16.mxu0 %v2118
    %3333 = vmatpush2.bf16.msra.mxu0 %v2117
    %3334 = vmatprep.subr.bf16.mxu0 %v2110
    %3335 = vmatpush2.bf16.msra.mxu0 %v2109
    %3336 = vmatprep.subr.bf16.mxu0 %v2102
    %3337 = vmatpush2.bf16.msra.mxu0 %v2101
    %3338 = vmatprep.mubr.bf16.mxu0 %v3223
    %3339 = vmatmul.mubr.bf16.gmra.mxu0 %v3222
    %v3340 = vpop.f32.mrf.mxu0
    %v3341 = vadd.f32 0.0, %v3340
    %v3342 = vpop.f32.mrf.mxu0
    %v3343 = vadd.f32 0.0, %v3342
    %v3344 = vpop.f32.mrf.mxu0
    %v3345 = vpop.f32.mrf.mxu0
    %3346 = vdwg.mxu0
    %3347 = vmatprep.subr.bf16.mxu0 %v2096
    %3348 = vmatpush1.bf16.msra.mxu0 %v2095
    %3349 = vmatprep.subr.bf16.mxu0 %v2088
    %3350 = vmatpush1.bf16.msra.mxu0 %v2087
    %3351 = vmatprep.subr.bf16.mxu0 %v2080
    %3352 = vmatpush1.bf16.msra.mxu0 %v2079
    %3353 = vmatprep.subr.bf16.mxu0 %v2072
    %3354 = vmatpush1.bf16.msra.mxu0 %v2071
    %3355 = vmatprep.subr.bf16.mxu0 %v2064
    %3356 = vmatpush1.bf16.msra.mxu0 %v2063
    %3357 = vmatprep.subr.bf16.mxu0 %v2056
    %3358 = vmatpush1.bf16.msra.mxu0 %v2055
    %3359 = vmatprep.subr.bf16.mxu0 %v2048
    %3360 = vmatpush1.bf16.msra.mxu0 %v2047
    %3361 = vmatprep.subr.bf16.mxu0 %v2040
    %3362 = vmatpush1.bf16.msra.mxu0 %v2039
    %3363 = vmatprep.subr.bf16.mxu0 %v2160
    %3364 = vmatpush2.bf16.msra.mxu0 %v2159
    %3365 = vmatprep.subr.bf16.mxu0 %v2152
    %3366 = vmatpush2.bf16.msra.mxu0 %v2151
    %3367 = vmatprep.subr.bf16.mxu0 %v2144
    %3368 = vmatpush2.bf16.msra.mxu0 %v2143
    %3369 = vmatprep.subr.bf16.mxu0 %v2136
    %3370 = vmatpush2.bf16.msra.mxu0 %v2135
    %3371 = vmatprep.subr.bf16.mxu0 %v2128
    %3372 = vmatpush2.bf16.msra.mxu0 %v2127
    %3373 = vmatprep.subr.bf16.mxu0 %v2120
    %3374 = vmatpush2.bf16.msra.mxu0 %v2119
    %3375 = vmatprep.subr.bf16.mxu0 %v2112
    %3376 = vmatpush2.bf16.msra.mxu0 %v2111
    %3377 = vmatprep.subr.bf16.mxu0 %v2104
    %3378 = vmatpush2.bf16.msra.mxu0 %v2103
    %3379 = vmatprep.mubr.bf16.mxu0 %v3223
    %3380 = vmatmul.mubr.bf16.gmra.mxu0 %v3222
    %v3381 = vpop.f32.mrf.mxu0
    %v3382 = vadd.f32 0.0, %v3381
    %v3383 = vpop.f32.mrf.mxu0
    %v3384 = vadd.f32 0.0, %v3383
    %v3385 = vpop.f32.mrf.mxu0
    %v3386 = vpop.f32.mrf.mxu0
    %3387 = vdwg.mxu0
    %v3388 = vadd.f32 %v3214, %v3259
    %v3389 = vadd.f32 %v3215, %v3261
    %v3390 = vadd.f32 %v3216, %v3300
    %v3391 = vadd.f32 %v3217, %v3302
    %v3392 = vadd.f32 %v3218, %v3341
    %v3393 = vadd.f32 %v3219, %v3343
    %v3394 = vadd.f32 %v3220, %v3382
    %v3395 = vadd.f32 %v3221, %v3384
    %v3396 = vxor.u32 %v3388, 2147483648
    %v3397 = vxor.u32 %v3389, 2147483648
    %v3398 = vmul.f32 %v3396, 1.442695
    %v3399 = vpow.pop %v3398
    %v3400 = vmul.f32 %v3397, 1.442695
    %v3401 = vpow.pop %v3400
    %v3402 = vadd.f32 %v3399, 1.0
    %v3403 = vadd.f32 %v3401, 1.0
    %v3404 = vrcp.pop %v3402
    %v3405 = vmul.f32 1.0, %v3404
    %v3406 = vrcp.pop %v3403
    %v3407 = vmul.f32 1.0, %v3406
    %v3408 = vxor.u32 %v3390, 2147483648
    %v3409 = vxor.u32 %v3391, 2147483648
    %v3410 = vmul.f32 %v3408, 1.442695
    %v3411 = vpow.pop %v3410
    %v3412 = vmul.f32 %v3409, 1.442695
    %v3413 = vpow.pop %v3412
    %v3414 = vadd.f32 %v3411, 1.0
    %v3415 = vadd.f32 %v3413, 1.0
    %v3416 = vrcp.pop %v3414
    %v3417 = vmul.f32 1.0, %v3416
    %v3418 = vrcp.pop %v3415
    %v3419 = vmul.f32 1.0, %v3418
    %v3420 = vtanh.pop %v3392
    %v3421 = vtanh.pop %v3393
    %v3422 = vxor.u32 %v3394, 2147483648
    %v3423 = vxor.u32 %v3395, 2147483648
    %v3424 = vmul.f32 %v3422, 1.442695
    %v3425 = vpow.pop %v3424
    %v3426 = vmul.f32 %v3423, 1.442695
    %v3427 = vpow.pop %v3426
    %v3428 = vadd.f32 %v3425, 1.0
    %v3429 = vadd.f32 %v3427, 1.0
    %v3430 = vrcp.pop %v3428
    %v3431 = vmul.f32 1.0, %v3430
    %v3432 = vrcp.pop %v3429
    %v3433 = vmul.f32 1.0, %v3432
    %v3434 = vmul.f32 %v3417, %v3204
    %v3435 = vmul.f32 %v3419, %v3205
    %v3436 = vmul.f32 %v3405, %v3420
    %v3437 = vmul.f32 %v3407, %v3421
    %v3438 = vadd.f32 %v3434, %v3436
    %v3439 = vadd.f32 %v3435, %v3437
    %v3440 = vtanh.pop %v3438
    %v3441 = vtanh.pop %v3439
    %v3442 = vmul.f32 %v3431, %v3440
    %v3443 = vmul.f32 %v3433, %v3441
    %s3444 = scalar_lea.vmem [#allocation4], 64
    %3445 = vst [vmem:[%s3444] sm:$0xff] %v3442
    %3446 = vst [vmem:[%s3444 + $0x8] sm:$0xff] %v3443
    %s3447 = scalar_lea.vmem [#allocation2], 320
    %v3448 = vld [vmem:[%s3447] sm:$0xff]
    %v3449 = vld [vmem:[%s3447 + $0x8] sm:$0xff]
    %v3450 = vld [vmem:[%s3447 + $0x10] sm:$0xff]
    %v3451 = vld [vmem:[%s3447 + $0x18] sm:$0xff]
    %v3452 = vld [vmem:[%s3447 + $0x20] sm:$0xff]
    %v3453 = vld [vmem:[%s3447 + $0x28] sm:$0xff]
    %v3454 = vld [vmem:[%s3447 + $0x30] sm:$0xff]
    %v3455 = vld [vmem:[%s3447 + $0x38] sm:$0xff]
    %v3456 = vpack.c.bf16 %v3442, %v3442
    %v3457 = vpack.c.bf16 %v3443, %v3443
    %3458 = vmatprep.subr.bf16.mxu0 %v2090
    %3459 = vmatpush1.bf16.msra.mxu0 %v2089
    %3460 = vmatprep.subr.bf16.mxu0 %v2082
    %3461 = vmatpush1.bf16.msra.mxu0 %v2081
    %3462 = vmatprep.subr.bf16.mxu0 %v2074
    %3463 = vmatpush1.bf16.msra.mxu0 %v2073
    %3464 = vmatprep.subr.bf16.mxu0 %v2066
    %3465 = vmatpush1.bf16.msra.mxu0 %v2065
    %3466 = vmatprep.subr.bf16.mxu0 %v2058
    %3467 = vmatpush1.bf16.msra.mxu0 %v2057
    %3468 = vmatprep.subr.bf16.mxu0 %v2050
    %3469 = vmatpush1.bf16.msra.mxu0 %v2049
    %3470 = vmatprep.subr.bf16.mxu0 %v2042
    %3471 = vmatpush1.bf16.msra.mxu0 %v2041
    %3472 = vmatprep.subr.bf16.mxu0 %v2034
    %3473 = vmatpush1.bf16.msra.mxu0 %v2033
    %3474 = vmatprep.subr.bf16.mxu0 %v2154
    %3475 = vmatpush2.bf16.msra.mxu0 %v2153
    %3476 = vmatprep.subr.bf16.mxu0 %v2146
    %3477 = vmatpush2.bf16.msra.mxu0 %v2145
    %3478 = vmatprep.subr.bf16.mxu0 %v2138
    %3479 = vmatpush2.bf16.msra.mxu0 %v2137
    %3480 = vmatprep.subr.bf16.mxu0 %v2130
    %3481 = vmatpush2.bf16.msra.mxu0 %v2129
    %3482 = vmatprep.subr.bf16.mxu0 %v2122
    %3483 = vmatpush2.bf16.msra.mxu0 %v2121
    %3484 = vmatprep.subr.bf16.mxu0 %v2114
    %3485 = vmatpush2.bf16.msra.mxu0 %v2113
    %3486 = vmatprep.subr.bf16.mxu0 %v2106
    %3487 = vmatpush2.bf16.msra.mxu0 %v2105
    %3488 = vmatprep.subr.bf16.mxu0 %v2098
    %3489 = vmatpush2.bf16.msra.mxu0 %v2097
    %3490 = vmatprep.mubr.bf16.mxu0 %v3457
    %3491 = vmatmul.mubr.bf16.gmra.mxu0 %v3456
    %v3492 = vpop.f32.mrf.mxu0
    %v3493 = vadd.f32 0.0, %v3492
    %v3494 = vpop.f32.mrf.mxu0
    %v3495 = vadd.f32 0.0, %v3494
    %v3496 = vpop.f32.mrf.mxu0
    %v3497 = vpop.f32.mrf.mxu0
    %3498 = vdwg.mxu0
    %3499 = vmatprep.subr.bf16.mxu0 %v2092
    %3500 = vmatpush1.bf16.msra.mxu0 %v2091
    %3501 = vmatprep.subr.bf16.mxu0 %v2084
    %3502 = vmatpush1.bf16.msra.mxu0 %v2083
    %3503 = vmatprep.subr.bf16.mxu0 %v2076
    %3504 = vmatpush1.bf16.msra.mxu0 %v2075
    %3505 = vmatprep.subr.bf16.mxu0 %v2068
    %3506 = vmatpush1.bf16.msra.mxu0 %v2067
    %3507 = vmatprep.subr.bf16.mxu0 %v2060
    %3508 = vmatpush1.bf16.msra.mxu0 %v2059
    %3509 = vmatprep.subr.bf16.mxu0 %v2052
    %3510 = vmatpush1.bf16.msra.mxu0 %v2051
    %3511 = vmatprep.subr.bf16.mxu0 %v2044
    %3512 = vmatpush1.bf16.msra.mxu0 %v2043
    %3513 = vmatprep.subr.bf16.mxu0 %v2036
    %3514 = vmatpush1.bf16.msra.mxu0 %v2035
    %3515 = vmatprep.subr.bf16.mxu0 %v2156
    %3516 = vmatpush2.bf16.msra.mxu0 %v2155
    %3517 = vmatprep.subr.bf16.mxu0 %v2148
    %3518 = vmatpush2.bf16.msra.mxu0 %v2147
    %3519 = vmatprep.subr.bf16.mxu0 %v2140
    %3520 = vmatpush2.bf16.msra.mxu0 %v2139
    %3521 = vmatprep.subr.bf16.mxu0 %v2132
    %3522 = vmatpush2.bf16.msra.mxu0 %v2131
    %3523 = vmatprep.subr.bf16.mxu0 %v2124
    %3524 = vmatpush2.bf16.msra.mxu0 %v2123
    %3525 = vmatprep.subr.bf16.mxu0 %v2116
    %3526 = vmatpush2.bf16.msra.mxu0 %v2115
    %3527 = vmatprep.subr.bf16.mxu0 %v2108
    %3528 = vmatpush2.bf16.msra.mxu0 %v2107
    %3529 = vmatprep.subr.bf16.mxu0 %v2100
    %3530 = vmatpush2.bf16.msra.mxu0 %v2099
    %3531 = vmatprep.mubr.bf16.mxu0 %v3457
    %3532 = vmatmul.mubr.bf16.gmra.mxu0 %v3456
    %v3533 = vpop.f32.mrf.mxu0
    %v3534 = vadd.f32 0.0, %v3533
    %v3535 = vpop.f32.mrf.mxu0
    %v3536 = vadd.f32 0.0, %v3535
    %v3537 = vpop.f32.mrf.mxu0
    %v3538 = vpop.f32.mrf.mxu0
    %3539 = vdwg.mxu0
    %3540 = vmatprep.subr.bf16.mxu0 %v2094
    %3541 = vmatpush1.bf16.msra.mxu0 %v2093
    %3542 = vmatprep.subr.bf16.mxu0 %v2086
    %3543 = vmatpush1.bf16.msra.mxu0 %v2085
    %3544 = vmatprep.subr.bf16.mxu0 %v2078
    %3545 = vmatpush1.bf16.msra.mxu0 %v2077
    %3546 = vmatprep.subr.bf16.mxu0 %v2070
    %3547 = vmatpush1.bf16.msra.mxu0 %v2069
    %3548 = vmatprep.subr.bf16.mxu0 %v2062
    %3549 = vmatpush1.bf16.msra.mxu0 %v2061
    %3550 = vmatprep.subr.bf16.mxu0 %v2054
    %3551 = vmatpush1.bf16.msra.mxu0 %v2053
    %3552 = vmatprep.subr.bf16.mxu0 %v2046
    %3553 = vmatpush1.bf16.msra.mxu0 %v2045
    %3554 = vmatprep.subr.bf16.mxu0 %v2038
    %3555 = vmatpush1.bf16.msra.mxu0 %v2037
    %3556 = vmatprep.subr.bf16.mxu0 %v2158
    %3557 = vmatpush2.bf16.msra.mxu0 %v2157
    %3558 = vmatprep.subr.bf16.mxu0 %v2150
    %3559 = vmatpush2.bf16.msra.mxu0 %v2149
    %3560 = vmatprep.subr.bf16.mxu0 %v2142
    %3561 = vmatpush2.bf16.msra.mxu0 %v2141
    %3562 = vmatprep.subr.bf16.mxu0 %v2134
    %3563 = vmatpush2.bf16.msra.mxu0 %v2133
    %3564 = vmatprep.subr.bf16.mxu0 %v2126
    %3565 = vmatpush2.bf16.msra.mxu0 %v2125
    %3566 = vmatprep.subr.bf16.mxu0 %v2118
    %3567 = vmatpush2.bf16.msra.mxu0 %v2117
    %3568 = vmatprep.subr.bf16.mxu0 %v2110
    %3569 = vmatpush2.bf16.msra.mxu0 %v2109
    %3570 = vmatprep.subr.bf16.mxu0 %v2102
    %3571 = vmatpush2.bf16.msra.mxu0 %v2101
    %3572 = vmatprep.mubr.bf16.mxu0 %v3457
    %3573 = vmatmul.mubr.bf16.gmra.mxu0 %v3456
    %v3574 = vpop.f32.mrf.mxu0
    %v3575 = vadd.f32 0.0, %v3574
    %v3576 = vpop.f32.mrf.mxu0
    %v3577 = vadd.f32 0.0, %v3576
    %v3578 = vpop.f32.mrf.mxu0
    %v3579 = vpop.f32.mrf.mxu0
    %3580 = vdwg.mxu0
    %3581 = vmatprep.subr.bf16.mxu0 %v2096
    %3582 = vmatpush1.bf16.msra.mxu0 %v2095
    %3583 = vmatprep.subr.bf16.mxu0 %v2088
    %3584 = vmatpush1.bf16.msra.mxu0 %v2087
    %3585 = vmatprep.subr.bf16.mxu0 %v2080
    %3586 = vmatpush1.bf16.msra.mxu0 %v2079
    %3587 = vmatprep.subr.bf16.mxu0 %v2072
    %3588 = vmatpush1.bf16.msra.mxu0 %v2071
    %3589 = vmatprep.subr.bf16.mxu0 %v2064
    %3590 = vmatpush1.bf16.msra.mxu0 %v2063
    %3591 = vmatprep.subr.bf16.mxu0 %v2056
    %3592 = vmatpush1.bf16.msra.mxu0 %v2055
    %3593 = vmatprep.subr.bf16.mxu0 %v2048
    %3594 = vmatpush1.bf16.msra.mxu0 %v2047
    %3595 = vmatprep.subr.bf16.mxu0 %v2040
    %3596 = vmatpush1.bf16.msra.mxu0 %v2039
    %3597 = vmatprep.subr.bf16.mxu0 %v2160
    %3598 = vmatpush2.bf16.msra.mxu0 %v2159
    %3599 = vmatprep.subr.bf16.mxu0 %v2152
    %3600 = vmatpush2.bf16.msra.mxu0 %v2151
    %3601 = vmatprep.subr.bf16.mxu0 %v2144
    %3602 = vmatpush2.bf16.msra.mxu0 %v2143
    %3603 = vmatprep.subr.bf16.mxu0 %v2136
    %3604 = vmatpush2.bf16.msra.mxu0 %v2135
    %3605 = vmatprep.subr.bf16.mxu0 %v2128
    %3606 = vmatpush2.bf16.msra.mxu0 %v2127
    %3607 = vmatprep.subr.bf16.mxu0 %v2120
    %3608 = vmatpush2.bf16.msra.mxu0 %v2119
    %3609 = vmatprep.subr.bf16.mxu0 %v2112
    %3610 = vmatpush2.bf16.msra.mxu0 %v2111
    %3611 = vmatprep.subr.bf16.mxu0 %v2104
    %3612 = vmatpush2.bf16.msra.mxu0 %v2103
    %3613 = vmatprep.mubr.bf16.mxu0 %v3457
    %3614 = vmatmul.mubr.bf16.gmra.mxu0 %v3456
    %v3615 = vpop.f32.mrf.mxu0
    %v3616 = vadd.f32 0.0, %v3615
    %v3617 = vpop.f32.mrf.mxu0
    %v3618 = vadd.f32 0.0, %v3617
    %v3619 = vpop.f32.mrf.mxu0
    %v3620 = vpop.f32.mrf.mxu0
    %3621 = vdwg.mxu0
    %v3622 = vadd.f32 %v3448, %v3493
    %v3623 = vadd.f32 %v3449, %v3495
    %v3624 = vadd.f32 %v3450, %v3534
    %v3625 = vadd.f32 %v3451, %v3536
    %v3626 = vadd.f32 %v3452, %v3575
    %v3627 = vadd.f32 %v3453, %v3577
    %v3628 = vadd.f32 %v3454, %v3616
    %v3629 = vadd.f32 %v3455, %v3618
    %v3630 = vxor.u32 %v3622, 2147483648
    %v3631 = vxor.u32 %v3623, 2147483648
    %v3632 = vmul.f32 %v3630, 1.442695
    %v3633 = vpow.pop %v3632
    %v3634 = vmul.f32 %v3631, 1.442695
    %v3635 = vpow.pop %v3634
    %v3636 = vadd.f32 %v3633, 1.0
    %v3637 = vadd.f32 %v3635, 1.0
    %v3638 = vrcp.pop %v3636
    %v3639 = vmul.f32 1.0, %v3638
    %v3640 = vrcp.pop %v3637
    %v3641 = vmul.f32 1.0, %v3640
    %v3642 = vxor.u32 %v3624, 2147483648
    %v3643 = vxor.u32 %v3625, 2147483648
    %v3644 = vmul.f32 %v3642, 1.442695
    %v3645 = vpow.pop %v3644
    %v3646 = vmul.f32 %v3643, 1.442695
    %v3647 = vpow.pop %v3646
    %v3648 = vadd.f32 %v3645, 1.0
    %v3649 = vadd.f32 %v3647, 1.0
    %v3650 = vrcp.pop %v3648
    %v3651 = vmul.f32 1.0, %v3650
    %v3652 = vrcp.pop %v3649
    %v3653 = vmul.f32 1.0, %v3652
    %v3654 = vtanh.pop %v3626
    %v3655 = vtanh.pop %v3627
    %v3656 = vxor.u32 %v3628, 2147483648
    %v3657 = vxor.u32 %v3629, 2147483648
    %v3658 = vmul.f32 %v3656, 1.442695
    %v3659 = vpow.pop %v3658
    %v3660 = vmul.f32 %v3657, 1.442695
    %v3661 = vpow.pop %v3660
    %v3662 = vadd.f32 %v3659, 1.0
    %v3663 = vadd.f32 %v3661, 1.0
    %v3664 = vrcp.pop %v3662
    %v3665 = vmul.f32 1.0, %v3664
    %v3666 = vrcp.pop %v3663
    %v3667 = vmul.f32 1.0, %v3666
    %v3668 = vmul.f32 %v3651, %v3438
    %v3669 = vmul.f32 %v3653, %v3439
    %v3670 = vmul.f32 %v3639, %v3654
    %v3671 = vmul.f32 %v3641, %v3655
    %v3672 = vadd.f32 %v3668, %v3670
    %v3673 = vadd.f32 %v3669, %v3671
    %v3674 = vtanh.pop %v3672
    %v3675 = vtanh.pop %v3673
    %v3676 = vmul.f32 %v3665, %v3674
    %v3677 = vmul.f32 %v3667, %v3675
    %s3678 = scalar_lea.vmem [#allocation4], 80
    %3679 = vst [vmem:[%s3678] sm:$0xff] %v3676
    %3680 = vst [vmem:[%s3678 + $0x8] sm:$0xff] %v3677
    %s3681 = scalar_lea.vmem [#allocation2], 384
    %v3682 = vld [vmem:[%s3681] sm:$0xff]
    %v3683 = vld [vmem:[%s3681 + $0x8] sm:$0xff]
    %v3684 = vld [vmem:[%s3681 + $0x10] sm:$0xff]
    %v3685 = vld [vmem:[%s3681 + $0x18] sm:$0xff]
    %v3686 = vld [vmem:[%s3681 + $0x20] sm:$0xff]
    %v3687 = vld [vmem:[%s3681 + $0x28] sm:$0xff]
    %v3688 = vld [vmem:[%s3681 + $0x30] sm:$0xff]
    %v3689 = vld [vmem:[%s3681 + $0x38] sm:$0xff]
    %v3690 = vpack.c.bf16 %v3676, %v3676
    %v3691 = vpack.c.bf16 %v3677, %v3677
    %3692 = vmatprep.subr.bf16.mxu0 %v2090
    %3693 = vmatpush1.bf16.msra.mxu0 %v2089
    %3694 = vmatprep.subr.bf16.mxu0 %v2082
    %3695 = vmatpush1.bf16.msra.mxu0 %v2081
    %3696 = vmatprep.subr.bf16.mxu0 %v2074
    %3697 = vmatpush1.bf16.msra.mxu0 %v2073
    %3698 = vmatprep.subr.bf16.mxu0 %v2066
    %3699 = vmatpush1.bf16.msra.mxu0 %v2065
    %3700 = vmatprep.subr.bf16.mxu0 %v2058
    %3701 = vmatpush1.bf16.msra.mxu0 %v2057
    %3702 = vmatprep.subr.bf16.mxu0 %v2050
    %3703 = vmatpush1.bf16.msra.mxu0 %v2049
    %3704 = vmatprep.subr.bf16.mxu0 %v2042
    %3705 = vmatpush1.bf16.msra.mxu0 %v2041
    %3706 = vmatprep.subr.bf16.mxu0 %v2034
    %3707 = vmatpush1.bf16.msra.mxu0 %v2033
    %3708 = vmatprep.subr.bf16.mxu0 %v2154
    %3709 = vmatpush2.bf16.msra.mxu0 %v2153
    %3710 = vmatprep.subr.bf16.mxu0 %v2146
    %3711 = vmatpush2.bf16.msra.mxu0 %v2145
    %3712 = vmatprep.subr.bf16.mxu0 %v2138
    %3713 = vmatpush2.bf16.msra.mxu0 %v2137
    %3714 = vmatprep.subr.bf16.mxu0 %v2130
    %3715 = vmatpush2.bf16.msra.mxu0 %v2129
    %3716 = vmatprep.subr.bf16.mxu0 %v2122
    %3717 = vmatpush2.bf16.msra.mxu0 %v2121
    %3718 = vmatprep.subr.bf16.mxu0 %v2114
    %3719 = vmatpush2.bf16.msra.mxu0 %v2113
    %3720 = vmatprep.subr.bf16.mxu0 %v2106
    %3721 = vmatpush2.bf16.msra.mxu0 %v2105
    %3722 = vmatprep.subr.bf16.mxu0 %v2098
    %3723 = vmatpush2.bf16.msra.mxu0 %v2097
    %3724 = vmatprep.mubr.bf16.mxu0 %v3691
    %3725 = vmatmul.mubr.bf16.gmra.mxu0 %v3690
    %v3726 = vpop.f32.mrf.mxu0
    %v3727 = vadd.f32 0.0, %v3726
    %v3728 = vpop.f32.mrf.mxu0
    %v3729 = vadd.f32 0.0, %v3728
    %v3730 = vpop.f32.mrf.mxu0
    %v3731 = vpop.f32.mrf.mxu0
    %3732 = vdwg.mxu0
    %3733 = vmatprep.subr.bf16.mxu0 %v2092
    %3734 = vmatpush1.bf16.msra.mxu0 %v2091
    %3735 = vmatprep.subr.bf16.mxu0 %v2084
    %3736 = vmatpush1.bf16.msra.mxu0 %v2083
    %3737 = vmatprep.subr.bf16.mxu0 %v2076
    %3738 = vmatpush1.bf16.msra.mxu0 %v2075
    %3739 = vmatprep.subr.bf16.mxu0 %v2068
    %3740 = vmatpush1.bf16.msra.mxu0 %v2067
    %3741 = vmatprep.subr.bf16.mxu0 %v2060
    %3742 = vmatpush1.bf16.msra.mxu0 %v2059
    %3743 = vmatprep.subr.bf16.mxu0 %v2052
    %3744 = vmatpush1.bf16.msra.mxu0 %v2051
    %3745 = vmatprep.subr.bf16.mxu0 %v2044
    %3746 = vmatpush1.bf16.msra.mxu0 %v2043
    %3747 = vmatprep.subr.bf16.mxu0 %v2036
    %3748 = vmatpush1.bf16.msra.mxu0 %v2035
    %3749 = vmatprep.subr.bf16.mxu0 %v2156
    %3750 = vmatpush2.bf16.msra.mxu0 %v2155
    %3751 = vmatprep.subr.bf16.mxu0 %v2148
    %3752 = vmatpush2.bf16.msra.mxu0 %v2147
    %3753 = vmatprep.subr.bf16.mxu0 %v2140
    %3754 = vmatpush2.bf16.msra.mxu0 %v2139
    %3755 = vmatprep.subr.bf16.mxu0 %v2132
    %3756 = vmatpush2.bf16.msra.mxu0 %v2131
    %3757 = vmatprep.subr.bf16.mxu0 %v2124
    %3758 = vmatpush2.bf16.msra.mxu0 %v2123
    %3759 = vmatprep.subr.bf16.mxu0 %v2116
    %3760 = vmatpush2.bf16.msra.mxu0 %v2115
    %3761 = vmatprep.subr.bf16.mxu0 %v2108
    %3762 = vmatpush2.bf16.msra.mxu0 %v2107
    %3763 = vmatprep.subr.bf16.mxu0 %v2100
    %3764 = vmatpush2.bf16.msra.mxu0 %v2099
    %3765 = vmatprep.mubr.bf16.mxu0 %v3691
    %3766 = vmatmul.mubr.bf16.gmra.mxu0 %v3690
    %v3767 = vpop.f32.mrf.mxu0
    %v3768 = vadd.f32 0.0, %v3767
    %v3769 = vpop.f32.mrf.mxu0
    %v3770 = vadd.f32 0.0, %v3769
    %v3771 = vpop.f32.mrf.mxu0
    %v3772 = vpop.f32.mrf.mxu0
    %3773 = vdwg.mxu0
    %3774 = vmatprep.subr.bf16.mxu0 %v2094
    %3775 = vmatpush1.bf16.msra.mxu0 %v2093
    %3776 = vmatprep.subr.bf16.mxu0 %v2086
    %3777 = vmatpush1.bf16.msra.mxu0 %v2085
    %3778 = vmatprep.subr.bf16.mxu0 %v2078
    %3779 = vmatpush1.bf16.msra.mxu0 %v2077
    %3780 = vmatprep.subr.bf16.mxu0 %v2070
    %3781 = vmatpush1.bf16.msra.mxu0 %v2069
    %3782 = vmatprep.subr.bf16.mxu0 %v2062
    %3783 = vmatpush1.bf16.msra.mxu0 %v2061
    %3784 = vmatprep.subr.bf16.mxu0 %v2054
    %3785 = vmatpush1.bf16.msra.mxu0 %v2053
    %3786 = vmatprep.subr.bf16.mxu0 %v2046
    %3787 = vmatpush1.bf16.msra.mxu0 %v2045
    %3788 = vmatprep.subr.bf16.mxu0 %v2038
    %3789 = vmatpush1.bf16.msra.mxu0 %v2037
    %3790 = vmatprep.subr.bf16.mxu0 %v2158
    %3791 = vmatpush2.bf16.msra.mxu0 %v2157
    %3792 = vmatprep.subr.bf16.mxu0 %v2150
    %3793 = vmatpush2.bf16.msra.mxu0 %v2149
    %3794 = vmatprep.subr.bf16.mxu0 %v2142
    %3795 = vmatpush2.bf16.msra.mxu0 %v2141
    %3796 = vmatprep.subr.bf16.mxu0 %v2134
    %3797 = vmatpush2.bf16.msra.mxu0 %v2133
    %3798 = vmatprep.subr.bf16.mxu0 %v2126
    %3799 = vmatpush2.bf16.msra.mxu0 %v2125
    %3800 = vmatprep.subr.bf16.mxu0 %v2118
    %3801 = vmatpush2.bf16.msra.mxu0 %v2117
    %3802 = vmatprep.subr.bf16.mxu0 %v2110
    %3803 = vmatpush2.bf16.msra.mxu0 %v2109
    %3804 = vmatprep.subr.bf16.mxu0 %v2102
    %3805 = vmatpush2.bf16.msra.mxu0 %v2101
    %3806 = vmatprep.mubr.bf16.mxu0 %v3691
    %3807 = vmatmul.mubr.bf16.gmra.mxu0 %v3690
    %v3808 = vpop.f32.mrf.mxu0
    %v3809 = vadd.f32 0.0, %v3808
    %v3810 = vpop.f32.mrf.mxu0
    %v3811 = vadd.f32 0.0, %v3810
    %v3812 = vpop.f32.mrf.mxu0
    %v3813 = vpop.f32.mrf.mxu0
    %3814 = vdwg.mxu0
    %3815 = vmatprep.subr.bf16.mxu0 %v2096
    %3816 = vmatpush1.bf16.msra.mxu0 %v2095
    %3817 = vmatprep.subr.bf16.mxu0 %v2088
    %3818 = vmatpush1.bf16.msra.mxu0 %v2087
    %3819 = vmatprep.subr.bf16.mxu0 %v2080
    %3820 = vmatpush1.bf16.msra.mxu0 %v2079
    %3821 = vmatprep.subr.bf16.mxu0 %v2072
    %3822 = vmatpush1.bf16.msra.mxu0 %v2071
    %3823 = vmatprep.subr.bf16.mxu0 %v2064
    %3824 = vmatpush1.bf16.msra.mxu0 %v2063
    %3825 = vmatprep.subr.bf16.mxu0 %v2056
    %3826 = vmatpush1.bf16.msra.mxu0 %v2055
    %3827 = vmatprep.subr.bf16.mxu0 %v2048
    %3828 = vmatpush1.bf16.msra.mxu0 %v2047
    %3829 = vmatprep.subr.bf16.mxu0 %v2040
    %3830 = vmatpush1.bf16.msra.mxu0 %v2039
    %3831 = vmatprep.subr.bf16.mxu0 %v2160
    %3832 = vmatpush2.bf16.msra.mxu0 %v2159
    %3833 = vmatprep.subr.bf16.mxu0 %v2152
    %3834 = vmatpush2.bf16.msra.mxu0 %v2151
    %3835 = vmatprep.subr.bf16.mxu0 %v2144
    %3836 = vmatpush2.bf16.msra.mxu0 %v2143
    %3837 = vmatprep.subr.bf16.mxu0 %v2136
    %3838 = vmatpush2.bf16.msra.mxu0 %v2135
    %3839 = vmatprep.subr.bf16.mxu0 %v2128
    %3840 = vmatpush2.bf16.msra.mxu0 %v2127
    %3841 = vmatprep.subr.bf16.mxu0 %v2120
    %3842 = vmatpush2.bf16.msra.mxu0 %v2119
    %3843 = vmatprep.subr.bf16.mxu0 %v2112
    %3844 = vmatpush2.bf16.msra.mxu0 %v2111
    %3845 = vmatprep.subr.bf16.mxu0 %v2104
    %3846 = vmatpush2.bf16.msra.mxu0 %v2103
    %3847 = vmatprep.mubr.bf16.mxu0 %v3691
    %3848 = vmatmul.mubr.bf16.gmra.mxu0 %v3690
    %v3849 = vpop.f32.mrf.mxu0
    %v3850 = vadd.f32 0.0, %v3849
    %v3851 = vpop.f32.mrf.mxu0
    %v3852 = vadd.f32 0.0, %v3851
    %v3853 = vpop.f32.mrf.mxu0
    %v3854 = vpop.f32.mrf.mxu0
    %3855 = vdwg.mxu0
    %v3856 = vadd.f32 %v3682, %v3727
    %v3857 = vadd.f32 %v3683, %v3729
    %v3858 = vadd.f32 %v3684, %v3768
    %v3859 = vadd.f32 %v3685, %v3770
    %v3860 = vadd.f32 %v3686, %v3809
    %v3861 = vadd.f32 %v3687, %v3811
    %v3862 = vadd.f32 %v3688, %v3850
    %v3863 = vadd.f32 %v3689, %v3852
    %v3864 = vxor.u32 %v3856, 2147483648
    %v3865 = vxor.u32 %v3857, 2147483648
    %v3866 = vmul.f32 %v3864, 1.442695
    %v3867 = vpow.pop %v3866
    %v3868 = vmul.f32 %v3865, 1.442695
    %v3869 = vpow.pop %v3868
    %v3870 = vadd.f32 %v3867, 1.0
    %v3871 = vadd.f32 %v3869, 1.0
    %v3872 = vrcp.pop %v3870
    %v3873 = vmul.f32 1.0, %v3872
    %v3874 = vrcp.pop %v3871
    %v3875 = vmul.f32 1.0, %v3874
    %v3876 = vxor.u32 %v3858, 2147483648
    %v3877 = vxor.u32 %v3859, 2147483648
    %v3878 = vmul.f32 %v3876, 1.442695
    %v3879 = vpow.pop %v3878
    %v3880 = vmul.f32 %v3877, 1.442695
    %v3881 = vpow.pop %v3880
    %v3882 = vadd.f32 %v3879, 1.0
    %v3883 = vadd.f32 %v3881, 1.0
    %v3884 = vrcp.pop %v3882
    %v3885 = vmul.f32 1.0, %v3884
    %v3886 = vrcp.pop %v3883
    %v3887 = vmul.f32 1.0, %v3886
    %v3888 = vtanh.pop %v3860
    %v3889 = vtanh.pop %v3861
    %v3890 = vxor.u32 %v3862, 2147483648
    %v3891 = vxor.u32 %v3863, 2147483648
    %v3892 = vmul.f32 %v3890, 1.442695
    %v3893 = vpow.pop %v3892
    %v3894 = vmul.f32 %v3891, 1.442695
    %v3895 = vpow.pop %v3894
    %v3896 = vadd.f32 %v3893, 1.0
    %v3897 = vadd.f32 %v3895, 1.0
    %v3898 = vrcp.pop %v3896
    %v3899 = vmul.f32 1.0, %v3898
    %v3900 = vrcp.pop %v3897
    %v3901 = vmul.f32 1.0, %v3900
    %v3902 = vmul.f32 %v3885, %v3672
    %v3903 = vmul.f32 %v3887, %v3673
    %v3904 = vmul.f32 %v3873, %v3888
    %v3905 = vmul.f32 %v3875, %v3889
    %v3906 = vadd.f32 %v3902, %v3904
    %v3907 = vadd.f32 %v3903, %v3905
    %v3908 = vtanh.pop %v3906
    %v3909 = vtanh.pop %v3907
    %v3910 = vmul.f32 %v3899, %v3908
    %v3911 = vmul.f32 %v3901, %v3909
    %s3912 = scalar_lea.vmem [#allocation4], 96
    %3913 = vst [vmem:[%s3912] sm:$0xff] %v3910
    %3914 = vst [vmem:[%s3912 + $0x8] sm:$0xff] %v3911
    %s3915 = scalar_lea.vmem [#allocation2], 448
    %v3916 = vld [vmem:[%s3915] sm:$0xff]
    %v3917 = vld [vmem:[%s3915 + $0x8] sm:$0xff]
    %v3918 = vld [vmem:[%s3915 + $0x10] sm:$0xff]
    %v3919 = vld [vmem:[%s3915 + $0x18] sm:$0xff]
    %v3920 = vld [vmem:[%s3915 + $0x20] sm:$0xff]
    %v3921 = vld [vmem:[%s3915 + $0x28] sm:$0xff]
    %v3922 = vld [vmem:[%s3915 + $0x30] sm:$0xff]
    %v3923 = vld [vmem:[%s3915 + $0x38] sm:$0xff]
    %v3924 = vpack.c.bf16 %v3910, %v3910
    %v3925 = vpack.c.bf16 %v3911, %v3911
    %3926 = vmatprep.subr.bf16.mxu0 %v2090
    %3927 = vmatpush1.bf16.msra.mxu0 %v2089
    %3928 = vmatprep.subr.bf16.mxu0 %v2082
    %3929 = vmatpush1.bf16.msra.mxu0 %v2081
    %3930 = vmatprep.subr.bf16.mxu0 %v2074
    %3931 = vmatpush1.bf16.msra.mxu0 %v2073
    %3932 = vmatprep.subr.bf16.mxu0 %v2066
    %3933 = vmatpush1.bf16.msra.mxu0 %v2065
    %3934 = vmatprep.subr.bf16.mxu0 %v2058
    %3935 = vmatpush1.bf16.msra.mxu0 %v2057
    %3936 = vmatprep.subr.bf16.mxu0 %v2050
    %3937 = vmatpush1.bf16.msra.mxu0 %v2049
    %3938 = vmatprep.subr.bf16.mxu0 %v2042
    %3939 = vmatpush1.bf16.msra.mxu0 %v2041
    %3940 = vmatprep.subr.bf16.mxu0 %v2034
    %3941 = vmatpush1.bf16.msra.mxu0 %v2033
    %3942 = vmatprep.subr.bf16.mxu0 %v2154
    %3943 = vmatpush2.bf16.msra.mxu0 %v2153
    %3944 = vmatprep.subr.bf16.mxu0 %v2146
    %3945 = vmatpush2.bf16.msra.mxu0 %v2145
    %3946 = vmatprep.subr.bf16.mxu0 %v2138
    %3947 = vmatpush2.bf16.msra.mxu0 %v2137
    %3948 = vmatprep.subr.bf16.mxu0 %v2130
    %3949 = vmatpush2.bf16.msra.mxu0 %v2129
    %3950 = vmatprep.subr.bf16.mxu0 %v2122
    %3951 = vmatpush2.bf16.msra.mxu0 %v2121
    %3952 = vmatprep.subr.bf16.mxu0 %v2114
    %3953 = vmatpush2.bf16.msra.mxu0 %v2113
    %3954 = vmatprep.subr.bf16.mxu0 %v2106
    %3955 = vmatpush2.bf16.msra.mxu0 %v2105
    %3956 = vmatprep.subr.bf16.mxu0 %v2098
    %3957 = vmatpush2.bf16.msra.mxu0 %v2097
    %3958 = vmatprep.mubr.bf16.mxu0 %v3925
    %3959 = vmatmul.mubr.bf16.gmra.mxu0 %v3924
    %v3960 = vpop.f32.mrf.mxu0
    %v3961 = vadd.f32 0.0, %v3960
    %v3962 = vpop.f32.mrf.mxu0
    %v3963 = vadd.f32 0.0, %v3962
    %v3964 = vpop.f32.mrf.mxu0
    %v3965 = vpop.f32.mrf.mxu0
    %3966 = vdwg.mxu0
    %3967 = vmatprep.subr.bf16.mxu0 %v2092
    %3968 = vmatpush1.bf16.msra.mxu0 %v2091
    %3969 = vmatprep.subr.bf16.mxu0 %v2084
    %3970 = vmatpush1.bf16.msra.mxu0 %v2083
    %3971 = vmatprep.subr.bf16.mxu0 %v2076
    %3972 = vmatpush1.bf16.msra.mxu0 %v2075
    %3973 = vmatprep.subr.bf16.mxu0 %v2068
    %3974 = vmatpush1.bf16.msra.mxu0 %v2067
    %3975 = vmatprep.subr.bf16.mxu0 %v2060
    %3976 = vmatpush1.bf16.msra.mxu0 %v2059
    %3977 = vmatprep.subr.bf16.mxu0 %v2052
    %3978 = vmatpush1.bf16.msra.mxu0 %v2051
    %3979 = vmatprep.subr.bf16.mxu0 %v2044
    %3980 = vmatpush1.bf16.msra.mxu0 %v2043
    %3981 = vmatprep.subr.bf16.mxu0 %v2036
    %3982 = vmatpush1.bf16.msra.mxu0 %v2035
    %3983 = vmatprep.subr.bf16.mxu0 %v2156
    %3984 = vmatpush2.bf16.msra.mxu0 %v2155
    %3985 = vmatprep.subr.bf16.mxu0 %v2148
    %3986 = vmatpush2.bf16.msra.mxu0 %v2147
    %3987 = vmatprep.subr.bf16.mxu0 %v2140
    %3988 = vmatpush2.bf16.msra.mxu0 %v2139
    %3989 = vmatprep.subr.bf16.mxu0 %v2132
    %3990 = vmatpush2.bf16.msra.mxu0 %v2131
    %3991 = vmatprep.subr.bf16.mxu0 %v2124
    %3992 = vmatpush2.bf16.msra.mxu0 %v2123
    %3993 = vmatprep.subr.bf16.mxu0 %v2116
    %3994 = vmatpush2.bf16.msra.mxu0 %v2115
    %3995 = vmatprep.subr.bf16.mxu0 %v2108
    %3996 = vmatpush2.bf16.msra.mxu0 %v2107
    %3997 = vmatprep.subr.bf16.mxu0 %v2100
    %3998 = vmatpush2.bf16.msra.mxu0 %v2099
    %3999 = vmatprep.mubr.bf16.mxu0 %v3925
    %4000 = vmatmul.mubr.bf16.gmra.mxu0 %v3924
    %v4001 = vpop.f32.mrf.mxu0
    %v4002 = vadd.f32 0.0, %v4001
    %v4003 = vpop.f32.mrf.mxu0
    %v4004 = vadd.f32 0.0, %v4003
    %v4005 = vpop.f32.mrf.mxu0
    %v4006 = vpop.f32.mrf.mxu0
    %4007 = vdwg.mxu0
    %4008 = vmatprep.subr.bf16.mxu0 %v2094
    %4009 = vmatpush1.bf16.msra.mxu0 %v2093
    %4010 = vmatprep.subr.bf16.mxu0 %v2086
    %4011 = vmatpush1.bf16.msra.mxu0 %v2085
    %4012 = vmatprep.subr.bf16.mxu0 %v2078
    %4013 = vmatpush1.bf16.msra.mxu0 %v2077
    %4014 = vmatprep.subr.bf16.mxu0 %v2070
    %4015 = vmatpush1.bf16.msra.mxu0 %v2069
    %4016 = vmatprep.subr.bf16.mxu0 %v2062
    %4017 = vmatpush1.bf16.msra.mxu0 %v2061
    %4018 = vmatprep.subr.bf16.mxu0 %v2054
    %4019 = vmatpush1.bf16.msra.mxu0 %v2053
    %4020 = vmatprep.subr.bf16.mxu0 %v2046
    %4021 = vmatpush1.bf16.msra.mxu0 %v2045
    %4022 = vmatprep.subr.bf16.mxu0 %v2038
    %4023 = vmatpush1.bf16.msra.mxu0 %v2037
    %4024 = vmatprep.subr.bf16.mxu0 %v2158
    %4025 = vmatpush2.bf16.msra.mxu0 %v2157
    %4026 = vmatprep.subr.bf16.mxu0 %v2150
    %4027 = vmatpush2.bf16.msra.mxu0 %v2149
    %4028 = vmatprep.subr.bf16.mxu0 %v2142
    %4029 = vmatpush2.bf16.msra.mxu0 %v2141
    %4030 = vmatprep.subr.bf16.mxu0 %v2134
    %4031 = vmatpush2.bf16.msra.mxu0 %v2133
    %4032 = vmatprep.subr.bf16.mxu0 %v2126
    %4033 = vmatpush2.bf16.msra.mxu0 %v2125
    %4034 = vmatprep.subr.bf16.mxu0 %v2118
    %4035 = vmatpush2.bf16.msra.mxu0 %v2117
    %4036 = vmatprep.subr.bf16.mxu0 %v2110
    %4037 = vmatpush2.bf16.msra.mxu0 %v2109
    %4038 = vmatprep.subr.bf16.mxu0 %v2102
    %4039 = vmatpush2.bf16.msra.mxu0 %v2101
    %4040 = vmatprep.mubr.bf16.mxu0 %v3925
    %4041 = vmatmul.mubr.bf16.gmra.mxu0 %v3924
    %v4042 = vpop.f32.mrf.mxu0
    %v4043 = vadd.f32 0.0, %v4042
    %v4044 = vpop.f32.mrf.mxu0
    %v4045 = vadd.f32 0.0, %v4044
    %v4046 = vpop.f32.mrf.mxu0
    %v4047 = vpop.f32.mrf.mxu0
    %4048 = vdwg.mxu0
    %4049 = vmatprep.subr.bf16.mxu0 %v2096
    %4050 = vmatpush1.bf16.msra.mxu0 %v2095
    %4051 = vmatprep.subr.bf16.mxu0 %v2088
    %4052 = vmatpush1.bf16.msra.mxu0 %v2087
    %4053 = vmatprep.subr.bf16.mxu0 %v2080
    %4054 = vmatpush1.bf16.msra.mxu0 %v2079
    %4055 = vmatprep.subr.bf16.mxu0 %v2072
    %4056 = vmatpush1.bf16.msra.mxu0 %v2071
    %4057 = vmatprep.subr.bf16.mxu0 %v2064
    %4058 = vmatpush1.bf16.msra.mxu0 %v2063
    %4059 = vmatprep.subr.bf16.mxu0 %v2056
    %4060 = vmatpush1.bf16.msra.mxu0 %v2055
    %4061 = vmatprep.subr.bf16.mxu0 %v2048
    %4062 = vmatpush1.bf16.msra.mxu0 %v2047
    %4063 = vmatprep.subr.bf16.mxu0 %v2040
    %4064 = vmatpush1.bf16.msra.mxu0 %v2039
    %4065 = vmatprep.subr.bf16.mxu0 %v2160
    %4066 = vmatpush2.bf16.msra.mxu0 %v2159
    %4067 = vmatprep.subr.bf16.mxu0 %v2152
    %4068 = vmatpush2.bf16.msra.mxu0 %v2151
    %4069 = vmatprep.subr.bf16.mxu0 %v2144
    %4070 = vmatpush2.bf16.msra.mxu0 %v2143
    %4071 = vmatprep.subr.bf16.mxu0 %v2136
    %4072 = vmatpush2.bf16.msra.mxu0 %v2135
    %4073 = vmatprep.subr.bf16.mxu0 %v2128
    %4074 = vmatpush2.bf16.msra.mxu0 %v2127
    %4075 = vmatprep.subr.bf16.mxu0 %v2120
    %4076 = vmatpush2.bf16.msra.mxu0 %v2119
    %4077 = vmatprep.subr.bf16.mxu0 %v2112
    %4078 = vmatpush2.bf16.msra.mxu0 %v2111
    %4079 = vmatprep.subr.bf16.mxu0 %v2104
    %4080 = vmatpush2.bf16.msra.mxu0 %v2103
    %4081 = vmatprep.mubr.bf16.mxu0 %v3925
    %4082 = vmatmul.mubr.bf16.gmra.mxu0 %v3924
    %v4083 = vpop.f32.mrf.mxu0
    %v4084 = vadd.f32 0.0, %v4083
    %v4085 = vpop.f32.mrf.mxu0
    %v4086 = vadd.f32 0.0, %v4085
    %v4087 = vpop.f32.mrf.mxu0
    %v4088 = vpop.f32.mrf.mxu0
    %4089 = vdwg.mxu0
    %v4090 = vadd.f32 %v3916, %v3961
    %v4091 = vadd.f32 %v3917, %v3963
    %v4092 = vadd.f32 %v3918, %v4002
    %v4093 = vadd.f32 %v3919, %v4004
    %v4094 = vadd.f32 %v3920, %v4043
    %v4095 = vadd.f32 %v3921, %v4045
    %v4096 = vadd.f32 %v3922, %v4084
    %v4097 = vadd.f32 %v3923, %v4086
    %v4098 = vxor.u32 %v4090, 2147483648
    %v4099 = vxor.u32 %v4091, 2147483648
    %v4100 = vmul.f32 %v4098, 1.442695
    %v4101 = vpow.pop %v4100
    %v4102 = vmul.f32 %v4099, 1.442695
    %v4103 = vpow.pop %v4102
    %v4104 = vadd.f32 %v4101, 1.0
    %v4105 = vadd.f32 %v4103, 1.0
    %v4106 = vrcp.pop %v4104
    %v4107 = vmul.f32 1.0, %v4106
    %v4108 = vrcp.pop %v4105
    %v4109 = vmul.f32 1.0, %v4108
    %v4110 = vxor.u32 %v4092, 2147483648
    %v4111 = vxor.u32 %v4093, 2147483648
    %v4112 = vmul.f32 %v4110, 1.442695
    %v4113 = vpow.pop %v4112
    %v4114 = vmul.f32 %v4111, 1.442695
    %v4115 = vpow.pop %v4114
    %v4116 = vadd.f32 %v4113, 1.0
    %v4117 = vadd.f32 %v4115, 1.0
    %v4118 = vrcp.pop %v4116
    %v4119 = vmul.f32 1.0, %v4118
    %v4120 = vrcp.pop %v4117
    %v4121 = vmul.f32 1.0, %v4120
    %v4122 = vtanh.pop %v4094
    %v4123 = vtanh.pop %v4095
    %v4124 = vxor.u32 %v4096, 2147483648
    %v4125 = vxor.u32 %v4097, 2147483648
    %v4126 = vmul.f32 %v4124, 1.442695
    %v4127 = vpow.pop %v4126
    %v4128 = vmul.f32 %v4125, 1.442695
    %v4129 = vpow.pop %v4128
    %v4130 = vadd.f32 %v4127, 1.0
    %v4131 = vadd.f32 %v4129, 1.0
    %v4132 = vrcp.pop %v4130
    %v4133 = vmul.f32 1.0, %v4132
    %v4134 = vrcp.pop %v4131
    %v4135 = vmul.f32 1.0, %v4134
    %v4136 = vmul.f32 %v4119, %v3906
    %v4137 = vmul.f32 %v4121, %v3907
    %v4138 = vmul.f32 %v4107, %v4122
    %v4139 = vmul.f32 %v4109, %v4123
    %v4140 = vadd.f32 %v4136, %v4138
    %v4141 = vadd.f32 %v4137, %v4139
    %v4142 = vtanh.pop %v4140
    %v4143 = vtanh.pop %v4141
    %v4144 = vmul.f32 %v4133, %v4142
    %v4145 = vmul.f32 %v4135, %v4143
    %s4146 = scalar_lea.vmem [#allocation4], 112
    %4147 = vst [vmem:[%s4146] sm:$0xff] %v4144
    %4148 = vst [vmem:[%s4146 + $0x8] sm:$0xff] %v4145
    %v4149 = vld [vmem:[#allocation13] sm:$0xff]
    %v4150 = vld [vmem:[#allocation13 + $0x8] sm:$0xff]
    %v4151 = vld [vmem:[#allocation13 + $0x10] sm:$0xff]
    %v4152 = vld [vmem:[#allocation13 + $0x18] sm:$0xff]
    %v4153 = vld [vmem:[#allocation13 + $0x20] sm:$0xff]
    %v4154 = vld [vmem:[#allocation13 + $0x28] sm:$0xff]
    %v4155 = vld [vmem:[#allocation13 + $0x30] sm:$0xff]
    %v4156 = vld [vmem:[#allocation13 + $0x38] sm:$0xff]
    %v4157 = vld [vmem:[#allocation13 + $0x40] sm:$0xff]
    %v4158 = vld [vmem:[#allocation13 + $0x48] sm:$0xff]
    %v4159 = vld [vmem:[#allocation13 + $0x50] sm:$0xff]
    %v4160 = vld [vmem:[#allocation13 + $0x58] sm:$0xff]
    %v4161 = vld [vmem:[#allocation13 + $0x60] sm:$0xff]
    %v4162 = vld [vmem:[#allocation13 + $0x68] sm:$0xff]
    %v4163 = vld [vmem:[#allocation13 + $0x70] sm:$0xff]
    %v4164 = vld [vmem:[#allocation13 + $0x78] sm:$0xff]
    %v4165 = vld [vmem:[#allocation13 + $0x80] sm:$0xff]
    %v4166 = vld [vmem:[#allocation13 + $0x88] sm:$0xff]
    %v4167 = vld [vmem:[#allocation13 + $0x90] sm:$0xff]
    %v4168 = vld [vmem:[#allocation13 + $0x98] sm:$0xff]
    %v4169 = vld [vmem:[#allocation13 + $0xa0] sm:$0xff]
    %v4170 = vld [vmem:[#allocation13 + $0xa8] sm:$0xff]
    %v4171 = vld [vmem:[#allocation13 + $0xb0] sm:$0xff]
    %v4172 = vld [vmem:[#allocation13 + $0xb8] sm:$0xff]
    %v4173 = vld [vmem:[#allocation13 + $0xc0] sm:$0xff]
    %v4174 = vld [vmem:[#allocation13 + $0xc8] sm:$0xff]
    %v4175 = vld [vmem:[#allocation13 + $0xd0] sm:$0xff]
    %v4176 = vld [vmem:[#allocation13 + $0xd8] sm:$0xff]
    %v4177 = vld [vmem:[#allocation13 + $0xe0] sm:$0xff]
    %v4178 = vld [vmem:[#allocation13 + $0xe8] sm:$0xff]
    %v4179 = vld [vmem:[#allocation13 + $0xf0] sm:$0xff]
    %v4180 = vld [vmem:[#allocation13 + $0xf8] sm:$0xff]
    %v4181 = vld [vmem:[#allocation13 + $0x100] sm:$0xff]
    %v4182 = vld [vmem:[#allocation13 + $0x108] sm:$0xff]
    %v4183 = vld [vmem:[#allocation13 + $0x110] sm:$0xff]
    %v4184 = vld [vmem:[#allocation13 + $0x118] sm:$0xff]
    %v4185 = vld [vmem:[#allocation13 + $0x120] sm:$0xff]
    %v4186 = vld [vmem:[#allocation13 + $0x128] sm:$0xff]
    %v4187 = vld [vmem:[#allocation13 + $0x130] sm:$0xff]
    %v4188 = vld [vmem:[#allocation13 + $0x138] sm:$0xff]
    %v4189 = vld [vmem:[#allocation13 + $0x140] sm:$0xff]
    %v4190 = vld [vmem:[#allocation13 + $0x148] sm:$0xff]
    %v4191 = vld [vmem:[#allocation13 + $0x150] sm:$0xff]
    %v4192 = vld [vmem:[#allocation13 + $0x158] sm:$0xff]
    %v4193 = vld [vmem:[#allocation13 + $0x160] sm:$0xff]
    %v4194 = vld [vmem:[#allocation13 + $0x168] sm:$0xff]
    %v4195 = vld [vmem:[#allocation13 + $0x170] sm:$0xff]
    %v4196 = vld [vmem:[#allocation13 + $0x178] sm:$0xff]
    %v4197 = vld [vmem:[#allocation13 + $0x180] sm:$0xff]
    %v4198 = vld [vmem:[#allocation13 + $0x188] sm:$0xff]
    %v4199 = vld [vmem:[#allocation13 + $0x190] sm:$0xff]
    %v4200 = vld [vmem:[#allocation13 + $0x198] sm:$0xff]
    %v4201 = vld [vmem:[#allocation13 + $0x1a0] sm:$0xff]
    %v4202 = vld [vmem:[#allocation13 + $0x1a8] sm:$0xff]
    %v4203 = vld [vmem:[#allocation13 + $0x1b0] sm:$0xff]
    %v4204 = vld [vmem:[#allocation13 + $0x1b8] sm:$0xff]
    %v4205 = vld [vmem:[#allocation13 + $0x1c0] sm:$0xff]
    %v4206 = vld [vmem:[#allocation13 + $0x1c8] sm:$0xff]
    %v4207 = vld [vmem:[#allocation13 + $0x1d0] sm:$0xff]
    %v4208 = vld [vmem:[#allocation13 + $0x1d8] sm:$0xff]
    %v4209 = vld [vmem:[#allocation13 + $0x1e0] sm:$0xff]
    %v4210 = vld [vmem:[#allocation13 + $0x1e8] sm:$0xff]
    %v4211 = vld [vmem:[#allocation13 + $0x1f0] sm:$0xff]
    %v4212 = vld [vmem:[#allocation13 + $0x1f8] sm:$0xff]
    %v4213 = vld [vmem:[#allocation13 + $0x200] sm:$0xff]
    %v4214 = vld [vmem:[#allocation13 + $0x208] sm:$0xff]
    %v4215 = vld [vmem:[#allocation13 + $0x210] sm:$0xff]
    %v4216 = vld [vmem:[#allocation13 + $0x218] sm:$0xff]
    %v4217 = vld [vmem:[#allocation13 + $0x220] sm:$0xff]
    %v4218 = vld [vmem:[#allocation13 + $0x228] sm:$0xff]
    %v4219 = vld [vmem:[#allocation13 + $0x230] sm:$0xff]
    %v4220 = vld [vmem:[#allocation13 + $0x238] sm:$0xff]
    %v4221 = vld [vmem:[#allocation13 + $0x240] sm:$0xff]
    %v4222 = vld [vmem:[#allocation13 + $0x248] sm:$0xff]
    %v4223 = vld [vmem:[#allocation13 + $0x250] sm:$0xff]
    %v4224 = vld [vmem:[#allocation13 + $0x258] sm:$0xff]
    %v4225 = vld [vmem:[#allocation13 + $0x260] sm:$0xff]
    %v4226 = vld [vmem:[#allocation13 + $0x268] sm:$0xff]
    %v4227 = vld [vmem:[#allocation13 + $0x270] sm:$0xff]
    %v4228 = vld [vmem:[#allocation13 + $0x278] sm:$0xff]
    %v4229 = vld [vmem:[#allocation13 + $0x280] sm:$0xff]
    %v4230 = vld [vmem:[#allocation13 + $0x288] sm:$0xff]
    %v4231 = vld [vmem:[#allocation13 + $0x290] sm:$0xff]
    %v4232 = vld [vmem:[#allocation13 + $0x298] sm:$0xff]
    %v4233 = vld [vmem:[#allocation13 + $0x2a0] sm:$0xff]
    %v4234 = vld [vmem:[#allocation13 + $0x2a8] sm:$0xff]
    %v4235 = vld [vmem:[#allocation13 + $0x2b0] sm:$0xff]
    %v4236 = vld [vmem:[#allocation13 + $0x2b8] sm:$0xff]
    %v4237 = vld [vmem:[#allocation13 + $0x2c0] sm:$0xff]
    %v4238 = vld [vmem:[#allocation13 + $0x2c8] sm:$0xff]
    %v4239 = vld [vmem:[#allocation13 + $0x2d0] sm:$0xff]
    %v4240 = vld [vmem:[#allocation13 + $0x2d8] sm:$0xff]
    %v4241 = vld [vmem:[#allocation13 + $0x2e0] sm:$0xff]
    %v4242 = vld [vmem:[#allocation13 + $0x2e8] sm:$0xff]
    %v4243 = vld [vmem:[#allocation13 + $0x2f0] sm:$0xff]
    %v4244 = vld [vmem:[#allocation13 + $0x2f8] sm:$0xff]
    %v4245 = vld [vmem:[#allocation13 + $0x300] sm:$0xff]
    %v4246 = vld [vmem:[#allocation13 + $0x308] sm:$0xff]
    %v4247 = vld [vmem:[#allocation13 + $0x310] sm:$0xff]
    %v4248 = vld [vmem:[#allocation13 + $0x318] sm:$0xff]
    %v4249 = vld [vmem:[#allocation13 + $0x320] sm:$0xff]
    %v4250 = vld [vmem:[#allocation13 + $0x328] sm:$0xff]
    %v4251 = vld [vmem:[#allocation13 + $0x330] sm:$0xff]
    %v4252 = vld [vmem:[#allocation13 + $0x338] sm:$0xff]
    %v4253 = vld [vmem:[#allocation13 + $0x340] sm:$0xff]
    %v4254 = vld [vmem:[#allocation13 + $0x348] sm:$0xff]
    %v4255 = vld [vmem:[#allocation13 + $0x350] sm:$0xff]
    %v4256 = vld [vmem:[#allocation13 + $0x358] sm:$0xff]
    %v4257 = vld [vmem:[#allocation13 + $0x360] sm:$0xff]
    %v4258 = vld [vmem:[#allocation13 + $0x368] sm:$0xff]
    %v4259 = vld [vmem:[#allocation13 + $0x370] sm:$0xff]
    %v4260 = vld [vmem:[#allocation13 + $0x378] sm:$0xff]
    %v4261 = vld [vmem:[#allocation13 + $0x380] sm:$0xff]
    %v4262 = vld [vmem:[#allocation13 + $0x388] sm:$0xff]
    %v4263 = vld [vmem:[#allocation13 + $0x390] sm:$0xff]
    %v4264 = vld [vmem:[#allocation13 + $0x398] sm:$0xff]
    %v4265 = vld [vmem:[#allocation13 + $0x3a0] sm:$0xff]
    %v4266 = vld [vmem:[#allocation13 + $0x3a8] sm:$0xff]
    %v4267 = vld [vmem:[#allocation13 + $0x3b0] sm:$0xff]
    %v4268 = vld [vmem:[#allocation13 + $0x3b8] sm:$0xff]
    %v4269 = vld [vmem:[#allocation13 + $0x3c0] sm:$0xff]
    %v4270 = vld [vmem:[#allocation13 + $0x3c8] sm:$0xff]
    %v4271 = vld [vmem:[#allocation13 + $0x3d0] sm:$0xff]
    %v4272 = vld [vmem:[#allocation13 + $0x3d8] sm:$0xff]
    %v4273 = vld [vmem:[#allocation13 + $0x3e0] sm:$0xff]
    %v4274 = vld [vmem:[#allocation13 + $0x3e8] sm:$0xff]
    %v4275 = vld [vmem:[#allocation13 + $0x3f0] sm:$0xff]
    %v4276 = vld [vmem:[#allocation13 + $0x3f8] sm:$0xff]
    %s4277 = scalar_lea.vmem [#allocation3], 448
    %v4278 = vld [vmem:[%s4277] sm:$0xff]
    %v4279 = vld [vmem:[%s4277 + $0x8] sm:$0xff]
    %v4280 = vld [vmem:[%s4277 + $0x10] sm:$0xff]
    %v4281 = vld [vmem:[%s4277 + $0x18] sm:$0xff]
    %v4282 = vld [vmem:[%s4277 + $0x20] sm:$0xff]
    %v4283 = vld [vmem:[%s4277 + $0x28] sm:$0xff]
    %v4284 = vld [vmem:[%s4277 + $0x30] sm:$0xff]
    %v4285 = vld [vmem:[%s4277 + $0x38] sm:$0xff]
    %v4414 = vunpack.c.l.b16 %v4149
    %v4415 = vunpack.c.h.b16 %v4149
    %v4416 = vunpack.c.l.b16 %v4150
    %v4417 = vunpack.c.h.b16 %v4150
    %v4418 = vunpack.c.l.b16 %v4151
    %v4419 = vunpack.c.h.b16 %v4151
    %v4420 = vunpack.c.l.b16 %v4152
    %v4421 = vunpack.c.h.b16 %v4152
    %v4422 = vunpack.c.l.b16 %v4153
    %v4423 = vunpack.c.h.b16 %v4153
    %v4424 = vunpack.c.l.b16 %v4154
    %v4425 = vunpack.c.h.b16 %v4154
    %v4426 = vunpack.c.l.b16 %v4155
    %v4427 = vunpack.c.h.b16 %v4155
    %v4428 = vunpack.c.l.b16 %v4156
    %v4429 = vunpack.c.h.b16 %v4156
    %v4430 = vunpack.c.l.b16 %v4157
    %v4431 = vunpack.c.h.b16 %v4157
    %v4432 = vunpack.c.l.b16 %v4158
    %v4433 = vunpack.c.h.b16 %v4158
    %v4434 = vunpack.c.l.b16 %v4159
    %v4435 = vunpack.c.h.b16 %v4159
    %v4436 = vunpack.c.l.b16 %v4160
    %v4437 = vunpack.c.h.b16 %v4160
    %v4438 = vunpack.c.l.b16 %v4161
    %v4439 = vunpack.c.h.b16 %v4161
    %v4440 = vunpack.c.l.b16 %v4162
    %v4441 = vunpack.c.h.b16 %v4162
    %v4442 = vunpack.c.l.b16 %v4163
    %v4443 = vunpack.c.h.b16 %v4163
    %v4444 = vunpack.c.l.b16 %v4164
    %v4445 = vunpack.c.h.b16 %v4164
    %v4446 = vunpack.c.l.b16 %v4165
    %v4447 = vunpack.c.h.b16 %v4165
    %v4448 = vunpack.c.l.b16 %v4166
    %v4449 = vunpack.c.h.b16 %v4166
    %v4450 = vunpack.c.l.b16 %v4167
    %v4451 = vunpack.c.h.b16 %v4167
    %v4452 = vunpack.c.l.b16 %v4168
    %v4453 = vunpack.c.h.b16 %v4168
    %v4454 = vunpack.c.l.b16 %v4169
    %v4455 = vunpack.c.h.b16 %v4169
    %v4456 = vunpack.c.l.b16 %v4170
    %v4457 = vunpack.c.h.b16 %v4170
    %v4458 = vunpack.c.l.b16 %v4171
    %v4459 = vunpack.c.h.b16 %v4171
    %v4460 = vunpack.c.l.b16 %v4172
    %v4461 = vunpack.c.h.b16 %v4172
    %v4462 = vunpack.c.l.b16 %v4173
    %v4463 = vunpack.c.h.b16 %v4173
    %v4464 = vunpack.c.l.b16 %v4174
    %v4465 = vunpack.c.h.b16 %v4174
    %v4466 = vunpack.c.l.b16 %v4175
    %v4467 = vunpack.c.h.b16 %v4175
    %v4468 = vunpack.c.l.b16 %v4176
    %v4469 = vunpack.c.h.b16 %v4176
    %v4470 = vunpack.c.l.b16 %v4177
    %v4471 = vunpack.c.h.b16 %v4177
    %v4472 = vunpack.c.l.b16 %v4178
    %v4473 = vunpack.c.h.b16 %v4178
    %v4474 = vunpack.c.l.b16 %v4179
    %v4475 = vunpack.c.h.b16 %v4179
    %v4476 = vunpack.c.l.b16 %v4180
    %v4477 = vunpack.c.h.b16 %v4180
    %v4478 = vunpack.c.l.b16 %v4181
    %v4479 = vunpack.c.h.b16 %v4181
    %v4480 = vunpack.c.l.b16 %v4182
    %v4481 = vunpack.c.h.b16 %v4182
    %v4482 = vunpack.c.l.b16 %v4183
    %v4483 = vunpack.c.h.b16 %v4183
    %v4484 = vunpack.c.l.b16 %v4184
    %v4485 = vunpack.c.h.b16 %v4184
    %v4486 = vunpack.c.l.b16 %v4185
    %v4487 = vunpack.c.h.b16 %v4185
    %v4488 = vunpack.c.l.b16 %v4186
    %v4489 = vunpack.c.h.b16 %v4186
    %v4490 = vunpack.c.l.b16 %v4187
    %v4491 = vunpack.c.h.b16 %v4187
    %v4492 = vunpack.c.l.b16 %v4188
    %v4493 = vunpack.c.h.b16 %v4188
    %v4494 = vunpack.c.l.b16 %v4189
    %v4495 = vunpack.c.h.b16 %v4189
    %v4496 = vunpack.c.l.b16 %v4190
    %v4497 = vunpack.c.h.b16 %v4190
    %v4498 = vunpack.c.l.b16 %v4191
    %v4499 = vunpack.c.h.b16 %v4191
    %v4500 = vunpack.c.l.b16 %v4192
    %v4501 = vunpack.c.h.b16 %v4192
    %v4502 = vunpack.c.l.b16 %v4193
    %v4503 = vunpack.c.h.b16 %v4193
    %v4504 = vunpack.c.l.b16 %v4194
    %v4505 = vunpack.c.h.b16 %v4194
    %v4506 = vunpack.c.l.b16 %v4195
    %v4507 = vunpack.c.h.b16 %v4195
    %v4508 = vunpack.c.l.b16 %v4196
    %v4509 = vunpack.c.h.b16 %v4196
    %v4510 = vunpack.c.l.b16 %v4197
    %v4511 = vunpack.c.h.b16 %v4197
    %v4512 = vunpack.c.l.b16 %v4198
    %v4513 = vunpack.c.h.b16 %v4198
    %v4514 = vunpack.c.l.b16 %v4199
    %v4515 = vunpack.c.h.b16 %v4199
    %v4516 = vunpack.c.l.b16 %v4200
    %v4517 = vunpack.c.h.b16 %v4200
    %v4518 = vunpack.c.l.b16 %v4201
    %v4519 = vunpack.c.h.b16 %v4201
    %v4520 = vunpack.c.l.b16 %v4202
    %v4521 = vunpack.c.h.b16 %v4202
    %v4522 = vunpack.c.l.b16 %v4203
    %v4523 = vunpack.c.h.b16 %v4203
    %v4524 = vunpack.c.l.b16 %v4204
    %v4525 = vunpack.c.h.b16 %v4204
    %v4526 = vunpack.c.l.b16 %v4205
    %v4527 = vunpack.c.h.b16 %v4205
    %v4528 = vunpack.c.l.b16 %v4206
    %v4529 = vunpack.c.h.b16 %v4206
    %v4530 = vunpack.c.l.b16 %v4207
    %v4531 = vunpack.c.h.b16 %v4207
    %v4532 = vunpack.c.l.b16 %v4208
    %v4533 = vunpack.c.h.b16 %v4208
    %v4534 = vunpack.c.l.b16 %v4209
    %v4535 = vunpack.c.h.b16 %v4209
    %v4536 = vunpack.c.l.b16 %v4210
    %v4537 = vunpack.c.h.b16 %v4210
    %v4538 = vunpack.c.l.b16 %v4211
    %v4539 = vunpack.c.h.b16 %v4211
    %v4540 = vunpack.c.l.b16 %v4212
    %v4541 = vunpack.c.h.b16 %v4212
    %v4542 = vunpack.c.l.b16 %v4213
    %v4543 = vunpack.c.h.b16 %v4213
    %v4544 = vunpack.c.l.b16 %v4214
    %v4545 = vunpack.c.h.b16 %v4214
    %v4546 = vunpack.c.l.b16 %v4215
    %v4547 = vunpack.c.h.b16 %v4215
    %v4548 = vunpack.c.l.b16 %v4216
    %v4549 = vunpack.c.h.b16 %v4216
    %v4550 = vunpack.c.l.b16 %v4217
    %v4551 = vunpack.c.h.b16 %v4217
    %v4552 = vunpack.c.l.b16 %v4218
    %v4553 = vunpack.c.h.b16 %v4218
    %v4554 = vunpack.c.l.b16 %v4219
    %v4555 = vunpack.c.h.b16 %v4219
    %v4556 = vunpack.c.l.b16 %v4220
    %v4557 = vunpack.c.h.b16 %v4220
    %v4558 = vunpack.c.l.b16 %v4221
    %v4559 = vunpack.c.h.b16 %v4221
    %v4560 = vunpack.c.l.b16 %v4222
    %v4561 = vunpack.c.h.b16 %v4222
    %v4562 = vunpack.c.l.b16 %v4223
    %v4563 = vunpack.c.h.b16 %v4223
    %v4564 = vunpack.c.l.b16 %v4224
    %v4565 = vunpack.c.h.b16 %v4224
    %v4566 = vunpack.c.l.b16 %v4225
    %v4567 = vunpack.c.h.b16 %v4225
    %v4568 = vunpack.c.l.b16 %v4226
    %v4569 = vunpack.c.h.b16 %v4226
    %v4570 = vunpack.c.l.b16 %v4227
    %v4571 = vunpack.c.h.b16 %v4227
    %v4572 = vunpack.c.l.b16 %v4228
    %v4573 = vunpack.c.h.b16 %v4228
    %v4574 = vunpack.c.l.b16 %v4229
    %v4575 = vunpack.c.h.b16 %v4229
    %v4576 = vunpack.c.l.b16 %v4230
    %v4577 = vunpack.c.h.b16 %v4230
    %v4578 = vunpack.c.l.b16 %v4231
    %v4579 = vunpack.c.h.b16 %v4231
    %v4580 = vunpack.c.l.b16 %v4232
    %v4581 = vunpack.c.h.b16 %v4232
    %v4582 = vunpack.c.l.b16 %v4233
    %v4583 = vunpack.c.h.b16 %v4233
    %v4584 = vunpack.c.l.b16 %v4234
    %v4585 = vunpack.c.h.b16 %v4234
    %v4586 = vunpack.c.l.b16 %v4235
    %v4587 = vunpack.c.h.b16 %v4235
    %v4588 = vunpack.c.l.b16 %v4236
    %v4589 = vunpack.c.h.b16 %v4236
    %v4590 = vunpack.c.l.b16 %v4237
    %v4591 = vunpack.c.h.b16 %v4237
    %v4592 = vunpack.c.l.b16 %v4238
    %v4593 = vunpack.c.h.b16 %v4238
    %v4594 = vunpack.c.l.b16 %v4239
    %v4595 = vunpack.c.h.b16 %v4239
    %v4596 = vunpack.c.l.b16 %v4240
    %v4597 = vunpack.c.h.b16 %v4240
    %v4598 = vunpack.c.l.b16 %v4241
    %v4599 = vunpack.c.h.b16 %v4241
    %v4600 = vunpack.c.l.b16 %v4242
    %v4601 = vunpack.c.h.b16 %v4242
    %v4602 = vunpack.c.l.b16 %v4243
    %v4603 = vunpack.c.h.b16 %v4243
    %v4604 = vunpack.c.l.b16 %v4244
    %v4605 = vunpack.c.h.b16 %v4244
    %v4606 = vunpack.c.l.b16 %v4245
    %v4607 = vunpack.c.h.b16 %v4245
    %v4608 = vunpack.c.l.b16 %v4246
    %v4609 = vunpack.c.h.b16 %v4246
    %v4610 = vunpack.c.l.b16 %v4247
    %v4611 = vunpack.c.h.b16 %v4247
    %v4612 = vunpack.c.l.b16 %v4248
    %v4613 = vunpack.c.h.b16 %v4248
    %v4614 = vunpack.c.l.b16 %v4249
    %v4615 = vunpack.c.h.b16 %v4249
    %v4616 = vunpack.c.l.b16 %v4250
    %v4617 = vunpack.c.h.b16 %v4250
    %v4618 = vunpack.c.l.b16 %v4251
    %v4619 = vunpack.c.h.b16 %v4251
    %v4620 = vunpack.c.l.b16 %v4252
    %v4621 = vunpack.c.h.b16 %v4252
    %v4622 = vunpack.c.l.b16 %v4253
    %v4623 = vunpack.c.h.b16 %v4253
    %v4624 = vunpack.c.l.b16 %v4254
    %v4625 = vunpack.c.h.b16 %v4254
    %v4626 = vunpack.c.l.b16 %v4255
    %v4627 = vunpack.c.h.b16 %v4255
    %v4628 = vunpack.c.l.b16 %v4256
    %v4629 = vunpack.c.h.b16 %v4256
    %v4630 = vunpack.c.l.b16 %v4257
    %v4631 = vunpack.c.h.b16 %v4257
    %v4632 = vunpack.c.l.b16 %v4258
    %v4633 = vunpack.c.h.b16 %v4258
    %v4634 = vunpack.c.l.b16 %v4259
    %v4635 = vunpack.c.h.b16 %v4259
    %v4636 = vunpack.c.l.b16 %v4260
    %v4637 = vunpack.c.h.b16 %v4260
    %v4638 = vunpack.c.l.b16 %v4261
    %v4639 = vunpack.c.h.b16 %v4261
    %v4640 = vunpack.c.l.b16 %v4262
    %v4641 = vunpack.c.h.b16 %v4262
    %v4642 = vunpack.c.l.b16 %v4263
    %v4643 = vunpack.c.h.b16 %v4263
    %v4644 = vunpack.c.l.b16 %v4264
    %v4645 = vunpack.c.h.b16 %v4264
    %v4646 = vunpack.c.l.b16 %v4265
    %v4647 = vunpack.c.h.b16 %v4265
    %v4648 = vunpack.c.l.b16 %v4266
    %v4649 = vunpack.c.h.b16 %v4266
    %v4650 = vunpack.c.l.b16 %v4267
    %v4651 = vunpack.c.h.b16 %v4267
    %v4652 = vunpack.c.l.b16 %v4268
    %v4653 = vunpack.c.h.b16 %v4268
    %v4654 = vunpack.c.l.b16 %v4269
    %v4655 = vunpack.c.h.b16 %v4269
    %v4656 = vunpack.c.l.b16 %v4270
    %v4657 = vunpack.c.h.b16 %v4270
    %v4658 = vunpack.c.l.b16 %v4271
    %v4659 = vunpack.c.h.b16 %v4271
    %v4660 = vunpack.c.l.b16 %v4272
    %v4661 = vunpack.c.h.b16 %v4272
    %v4662 = vunpack.c.l.b16 %v4273
    %v4663 = vunpack.c.h.b16 %v4273
    %v4664 = vunpack.c.l.b16 %v4274
    %v4665 = vunpack.c.h.b16 %v4274
    %v4666 = vunpack.c.l.b16 %v4275
    %v4667 = vunpack.c.h.b16 %v4275
    %v4668 = vunpack.c.l.b16 %v4276
    %v4669 = vunpack.c.h.b16 %v4276
    %v4670 = vpack.c.b16 %v4422, %v4414
    %v4671 = vpack.c.b16 %v4423, %v4415
    %v4672 = vpack.c.b16 %v4424, %v4416
    %v4673 = vpack.c.b16 %v4425, %v4417
    %v4674 = vpack.c.b16 %v4426, %v4418
    %v4675 = vpack.c.b16 %v4427, %v4419
    %v4676 = vpack.c.b16 %v4428, %v4420
    %v4677 = vpack.c.b16 %v4429, %v4421
    %v4678 = vpack.c.b16 %v4438, %v4430
    %v4679 = vpack.c.b16 %v4439, %v4431
    %v4680 = vpack.c.b16 %v4440, %v4432
    %v4681 = vpack.c.b16 %v4441, %v4433
    %v4682 = vpack.c.b16 %v4442, %v4434
    %v4683 = vpack.c.b16 %v4443, %v4435
    %v4684 = vpack.c.b16 %v4444, %v4436
    %v4685 = vpack.c.b16 %v4445, %v4437
    %v4686 = vpack.c.b16 %v4454, %v4446
    %v4687 = vpack.c.b16 %v4455, %v4447
    %v4688 = vpack.c.b16 %v4456, %v4448
    %v4689 = vpack.c.b16 %v4457, %v4449
    %v4690 = vpack.c.b16 %v4458, %v4450
    %v4691 = vpack.c.b16 %v4459, %v4451
    %v4692 = vpack.c.b16 %v4460, %v4452
    %v4693 = vpack.c.b16 %v4461, %v4453
    %v4694 = vpack.c.b16 %v4470, %v4462
    %v4695 = vpack.c.b16 %v4471, %v4463
    %v4696 = vpack.c.b16 %v4472, %v4464
    %v4697 = vpack.c.b16 %v4473, %v4465
    %v4698 = vpack.c.b16 %v4474, %v4466
    %v4699 = vpack.c.b16 %v4475, %v4467
    %v4700 = vpack.c.b16 %v4476, %v4468
    %v4701 = vpack.c.b16 %v4477, %v4469
    %v4702 = vpack.c.b16 %v4486, %v4478
    %v4703 = vpack.c.b16 %v4487, %v4479
    %v4704 = vpack.c.b16 %v4488, %v4480
    %v4705 = vpack.c.b16 %v4489, %v4481
    %v4706 = vpack.c.b16 %v4490, %v4482
    %v4707 = vpack.c.b16 %v4491, %v4483
    %v4708 = vpack.c.b16 %v4492, %v4484
    %v4709 = vpack.c.b16 %v4493, %v4485
    %v4710 = vpack.c.b16 %v4502, %v4494
    %v4711 = vpack.c.b16 %v4503, %v4495
    %v4712 = vpack.c.b16 %v4504, %v4496
    %v4713 = vpack.c.b16 %v4505, %v4497
    %v4714 = vpack.c.b16 %v4506, %v4498
    %v4715 = vpack.c.b16 %v4507, %v4499
    %v4716 = vpack.c.b16 %v4508, %v4500
    %v4717 = vpack.c.b16 %v4509, %v4501
    %v4718 = vpack.c.b16 %v4518, %v4510
    %v4719 = vpack.c.b16 %v4519, %v4511
    %v4720 = vpack.c.b16 %v4520, %v4512
    %v4721 = vpack.c.b16 %v4521, %v4513
    %v4722 = vpack.c.b16 %v4522, %v4514
    %v4723 = vpack.c.b16 %v4523, %v4515
    %v4724 = vpack.c.b16 %v4524, %v4516
    %v4725 = vpack.c.b16 %v4525, %v4517
    %v4726 = vpack.c.b16 %v4534, %v4526
    %v4727 = vpack.c.b16 %v4535, %v4527
    %v4728 = vpack.c.b16 %v4536, %v4528
    %v4729 = vpack.c.b16 %v4537, %v4529
    %v4730 = vpack.c.b16 %v4538, %v4530
    %v4731 = vpack.c.b16 %v4539, %v4531
    %v4732 = vpack.c.b16 %v4540, %v4532
    %v4733 = vpack.c.b16 %v4541, %v4533
    %v4734 = vpack.c.b16 %v4550, %v4542
    %v4735 = vpack.c.b16 %v4551, %v4543
    %v4736 = vpack.c.b16 %v4552, %v4544
    %v4737 = vpack.c.b16 %v4553, %v4545
    %v4738 = vpack.c.b16 %v4554, %v4546
    %v4739 = vpack.c.b16 %v4555, %v4547
    %v4740 = vpack.c.b16 %v4556, %v4548
    %v4741 = vpack.c.b16 %v4557, %v4549
    %v4742 = vpack.c.b16 %v4566, %v4558
    %v4743 = vpack.c.b16 %v4567, %v4559
    %v4744 = vpack.c.b16 %v4568, %v4560
    %v4745 = vpack.c.b16 %v4569, %v4561
    %v4746 = vpack.c.b16 %v4570, %v4562
    %v4747 = vpack.c.b16 %v4571, %v4563
    %v4748 = vpack.c.b16 %v4572, %v4564
    %v4749 = vpack.c.b16 %v4573, %v4565
    %v4750 = vpack.c.b16 %v4582, %v4574
    %v4751 = vpack.c.b16 %v4583, %v4575
    %v4752 = vpack.c.b16 %v4584, %v4576
    %v4753 = vpack.c.b16 %v4585, %v4577
    %v4754 = vpack.c.b16 %v4586, %v4578
    %v4755 = vpack.c.b16 %v4587, %v4579
    %v4756 = vpack.c.b16 %v4588, %v4580
    %v4757 = vpack.c.b16 %v4589, %v4581
    %v4758 = vpack.c.b16 %v4598, %v4590
    %v4759 = vpack.c.b16 %v4599, %v4591
    %v4760 = vpack.c.b16 %v4600, %v4592
    %v4761 = vpack.c.b16 %v4601, %v4593
    %v4762 = vpack.c.b16 %v4602, %v4594
    %v4763 = vpack.c.b16 %v4603, %v4595
    %v4764 = vpack.c.b16 %v4604, %v4596
    %v4765 = vpack.c.b16 %v4605, %v4597
    %v4766 = vpack.c.b16 %v4614, %v4606
    %v4767 = vpack.c.b16 %v4615, %v4607
    %v4768 = vpack.c.b16 %v4616, %v4608
    %v4769 = vpack.c.b16 %v4617, %v4609
    %v4770 = vpack.c.b16 %v4618, %v4610
    %v4771 = vpack.c.b16 %v4619, %v4611
    %v4772 = vpack.c.b16 %v4620, %v4612
    %v4773 = vpack.c.b16 %v4621, %v4613
    %v4774 = vpack.c.b16 %v4630, %v4622
    %v4775 = vpack.c.b16 %v4631, %v4623
    %v4776 = vpack.c.b16 %v4632, %v4624
    %v4777 = vpack.c.b16 %v4633, %v4625
    %v4778 = vpack.c.b16 %v4634, %v4626
    %v4779 = vpack.c.b16 %v4635, %v4627
    %v4780 = vpack.c.b16 %v4636, %v4628
    %v4781 = vpack.c.b16 %v4637, %v4629
    %v4782 = vpack.c.b16 %v4646, %v4638
    %v4783 = vpack.c.b16 %v4647, %v4639
    %v4784 = vpack.c.b16 %v4648, %v4640
    %v4785 = vpack.c.b16 %v4649, %v4641
    %v4786 = vpack.c.b16 %v4650, %v4642
    %v4787 = vpack.c.b16 %v4651, %v4643
    %v4788 = vpack.c.b16 %v4652, %v4644
    %v4789 = vpack.c.b16 %v4653, %v4645
    %v4790 = vpack.c.b16 %v4662, %v4654
    %v4791 = vpack.c.b16 %v4663, %v4655
    %v4792 = vpack.c.b16 %v4664, %v4656
    %v4793 = vpack.c.b16 %v4665, %v4657
    %v4794 = vpack.c.b16 %v4666, %v4658
    %v4795 = vpack.c.b16 %v4667, %v4659
    %v4796 = vpack.c.b16 %v4668, %v4660
    %v4797 = vpack.c.b16 %v4669, %v4661
    %4926 = vmatprep.subr.bf16.mxu0 %v4727
    %4927 = vmatpush1.bf16.msra.mxu0 %v4726
    %4928 = vmatprep.subr.bf16.mxu0 %v4719
    %4929 = vmatpush1.bf16.msra.mxu0 %v4718
    %4930 = vmatprep.subr.bf16.mxu0 %v4711
    %4931 = vmatpush1.bf16.msra.mxu0 %v4710
    %4932 = vmatprep.subr.bf16.mxu0 %v4703
    %4933 = vmatpush1.bf16.msra.mxu0 %v4702
    %4934 = vmatprep.subr.bf16.mxu0 %v4695
    %4935 = vmatpush1.bf16.msra.mxu0 %v4694
    %4936 = vmatprep.subr.bf16.mxu0 %v4687
    %4937 = vmatpush1.bf16.msra.mxu0 %v4686
    %4938 = vmatprep.subr.bf16.mxu0 %v4679
    %4939 = vmatpush1.bf16.msra.mxu0 %v4678
    %4940 = vmatprep.subr.bf16.mxu0 %v4671
    %4941 = vmatpush1.bf16.msra.mxu0 %v4670
    %4942 = vmatprep.subr.bf16.mxu0 %v4791
    %4943 = vmatpush2.bf16.msra.mxu0 %v4790
    %4944 = vmatprep.subr.bf16.mxu0 %v4783
    %4945 = vmatpush2.bf16.msra.mxu0 %v4782
    %4946 = vmatprep.subr.bf16.mxu0 %v4775
    %4947 = vmatpush2.bf16.msra.mxu0 %v4774
    %4948 = vmatprep.subr.bf16.mxu0 %v4767
    %4949 = vmatpush2.bf16.msra.mxu0 %v4766
    %4950 = vmatprep.subr.bf16.mxu0 %v4759
    %4951 = vmatpush2.bf16.msra.mxu0 %v4758
    %4952 = vmatprep.subr.bf16.mxu0 %v4751
    %4953 = vmatpush2.bf16.msra.mxu0 %v4750
    %4954 = vmatprep.subr.bf16.mxu0 %v4743
    %4955 = vmatpush2.bf16.msra.mxu0 %v4742
    %4956 = vmatprep.subr.bf16.mxu0 %v4735
    %4957 = vmatpush2.bf16.msra.mxu0 %v4734
    %4958 = vmatprep.mubr.bf16.mxu0 0
    %4959 = vmatmul.mubr.bf16.gmra.mxu0 0
    %v4960 = vpop.f32.mrf.mxu0
    %v4961 = vadd.f32 0.0, %v4960
    %v4962 = vpop.f32.mrf.mxu0
    %v4963 = vadd.f32 0.0, %v4962
    %v4964 = vpop.f32.mrf.mxu0
    %v4965 = vpop.f32.mrf.mxu0
    %4966 = vdwg.mxu0
    %4967 = vmatprep.subr.bf16.mxu0 %v4729
    %4968 = vmatpush1.bf16.msra.mxu0 %v4728
    %4969 = vmatprep.subr.bf16.mxu0 %v4721
    %4970 = vmatpush1.bf16.msra.mxu0 %v4720
    %4971 = vmatprep.subr.bf16.mxu0 %v4713
    %4972 = vmatpush1.bf16.msra.mxu0 %v4712
    %4973 = vmatprep.subr.bf16.mxu0 %v4705
    %4974 = vmatpush1.bf16.msra.mxu0 %v4704
    %4975 = vmatprep.subr.bf16.mxu0 %v4697
    %4976 = vmatpush1.bf16.msra.mxu0 %v4696
    %4977 = vmatprep.subr.bf16.mxu0 %v4689
    %4978 = vmatpush1.bf16.msra.mxu0 %v4688
    %4979 = vmatprep.subr.bf16.mxu0 %v4681
    %4980 = vmatpush1.bf16.msra.mxu0 %v4680
    %4981 = vmatprep.subr.bf16.mxu0 %v4673
    %4982 = vmatpush1.bf16.msra.mxu0 %v4672
    %4983 = vmatprep.subr.bf16.mxu0 %v4793
    %4984 = vmatpush2.bf16.msra.mxu0 %v4792
    %4985 = vmatprep.subr.bf16.mxu0 %v4785
    %4986 = vmatpush2.bf16.msra.mxu0 %v4784
    %4987 = vmatprep.subr.bf16.mxu0 %v4777
    %4988 = vmatpush2.bf16.msra.mxu0 %v4776
    %4989 = vmatprep.subr.bf16.mxu0 %v4769
    %4990 = vmatpush2.bf16.msra.mxu0 %v4768
    %4991 = vmatprep.subr.bf16.mxu0 %v4761
    %4992 = vmatpush2.bf16.msra.mxu0 %v4760
    %4993 = vmatprep.subr.bf16.mxu0 %v4753
    %4994 = vmatpush2.bf16.msra.mxu0 %v4752
    %4995 = vmatprep.subr.bf16.mxu0 %v4745
    %4996 = vmatpush2.bf16.msra.mxu0 %v4744
    %4997 = vmatprep.subr.bf16.mxu0 %v4737
    %4998 = vmatpush2.bf16.msra.mxu0 %v4736
    %4999 = vmatprep.mubr.bf16.mxu0 0
    %5000 = vmatmul.mubr.bf16.gmra.mxu0 0
    %v5001 = vpop.f32.mrf.mxu0
    %v5002 = vadd.f32 0.0, %v5001
    %v5003 = vpop.f32.mrf.mxu0
    %v5004 = vadd.f32 0.0, %v5003
    %v5005 = vpop.f32.mrf.mxu0
    %v5006 = vpop.f32.mrf.mxu0
    %5007 = vdwg.mxu0
    %5008 = vmatprep.subr.bf16.mxu0 %v4731
    %5009 = vmatpush1.bf16.msra.mxu0 %v4730
    %5010 = vmatprep.subr.bf16.mxu0 %v4723
    %5011 = vmatpush1.bf16.msra.mxu0 %v4722
    %5012 = vmatprep.subr.bf16.mxu0 %v4715
    %5013 = vmatpush1.bf16.msra.mxu0 %v4714
    %5014 = vmatprep.subr.bf16.mxu0 %v4707
    %5015 = vmatpush1.bf16.msra.mxu0 %v4706
    %5016 = vmatprep.subr.bf16.mxu0 %v4699
    %5017 = vmatpush1.bf16.msra.mxu0 %v4698
    %5018 = vmatprep.subr.bf16.mxu0 %v4691
    %5019 = vmatpush1.bf16.msra.mxu0 %v4690
    %5020 = vmatprep.subr.bf16.mxu0 %v4683
    %5021 = vmatpush1.bf16.msra.mxu0 %v4682
    %5022 = vmatprep.subr.bf16.mxu0 %v4675
    %5023 = vmatpush1.bf16.msra.mxu0 %v4674
    %5024 = vmatprep.subr.bf16.mxu0 %v4795
    %5025 = vmatpush2.bf16.msra.mxu0 %v4794
    %5026 = vmatprep.subr.bf16.mxu0 %v4787
    %5027 = vmatpush2.bf16.msra.mxu0 %v4786
    %5028 = vmatprep.subr.bf16.mxu0 %v4779
    %5029 = vmatpush2.bf16.msra.mxu0 %v4778
    %5030 = vmatprep.subr.bf16.mxu0 %v4771
    %5031 = vmatpush2.bf16.msra.mxu0 %v4770
    %5032 = vmatprep.subr.bf16.mxu0 %v4763
    %5033 = vmatpush2.bf16.msra.mxu0 %v4762
    %5034 = vmatprep.subr.bf16.mxu0 %v4755
    %5035 = vmatpush2.bf16.msra.mxu0 %v4754
    %5036 = vmatprep.subr.bf16.mxu0 %v4747
    %5037 = vmatpush2.bf16.msra.mxu0 %v4746
    %5038 = vmatprep.subr.bf16.mxu0 %v4739
    %5039 = vmatpush2.bf16.msra.mxu0 %v4738
    %5040 = vmatprep.mubr.bf16.mxu0 0
    %5041 = vmatmul.mubr.bf16.gmra.mxu0 0
    %v5042 = vpop.f32.mrf.mxu0
    %v5043 = vadd.f32 0.0, %v5042
    %v5044 = vpop.f32.mrf.mxu0
    %v5045 = vadd.f32 0.0, %v5044
    %v5046 = vpop.f32.mrf.mxu0
    %v5047 = vpop.f32.mrf.mxu0
    %5048 = vdwg.mxu0
    %5049 = vmatprep.subr.bf16.mxu0 %v4733
    %5050 = vmatpush1.bf16.msra.mxu0 %v4732
    %5051 = vmatprep.subr.bf16.mxu0 %v4725
    %5052 = vmatpush1.bf16.msra.mxu0 %v4724
    %5053 = vmatprep.subr.bf16.mxu0 %v4717
    %5054 = vmatpush1.bf16.msra.mxu0 %v4716
    %5055 = vmatprep.subr.bf16.mxu0 %v4709
    %5056 = vmatpush1.bf16.msra.mxu0 %v4708
    %5057 = vmatprep.subr.bf16.mxu0 %v4701
    %5058 = vmatpush1.bf16.msra.mxu0 %v4700
    %5059 = vmatprep.subr.bf16.mxu0 %v4693
    %5060 = vmatpush1.bf16.msra.mxu0 %v4692
    %5061 = vmatprep.subr.bf16.mxu0 %v4685
    %5062 = vmatpush1.bf16.msra.mxu0 %v4684
    %5063 = vmatprep.subr.bf16.mxu0 %v4677
    %5064 = vmatpush1.bf16.msra.mxu0 %v4676
    %5065 = vmatprep.subr.bf16.mxu0 %v4797
    %5066 = vmatpush2.bf16.msra.mxu0 %v4796
    %5067 = vmatprep.subr.bf16.mxu0 %v4789
    %5068 = vmatpush2.bf16.msra.mxu0 %v4788
    %5069 = vmatprep.subr.bf16.mxu0 %v4781
    %5070 = vmatpush2.bf16.msra.mxu0 %v4780
    %5071 = vmatprep.subr.bf16.mxu0 %v4773
    %5072 = vmatpush2.bf16.msra.mxu0 %v4772
    %5073 = vmatprep.subr.bf16.mxu0 %v4765
    %5074 = vmatpush2.bf16.msra.mxu0 %v4764
    %5075 = vmatprep.subr.bf16.mxu0 %v4757
    %5076 = vmatpush2.bf16.msra.mxu0 %v4756
    %5077 = vmatprep.subr.bf16.mxu0 %v4749
    %5078 = vmatpush2.bf16.msra.mxu0 %v4748
    %5079 = vmatprep.subr.bf16.mxu0 %v4741
    %5080 = vmatpush2.bf16.msra.mxu0 %v4740
    %5081 = vmatprep.mubr.bf16.mxu0 0
    %5082 = vmatmul.mubr.bf16.gmra.mxu0 0
    %v5083 = vpop.f32.mrf.mxu0
    %v5084 = vadd.f32 0.0, %v5083
    %v5085 = vpop.f32.mrf.mxu0
    %v5086 = vadd.f32 0.0, %v5085
    %v5087 = vpop.f32.mrf.mxu0
    %v5088 = vpop.f32.mrf.mxu0
    %5089 = vdwg.mxu0
    %v5090 = vadd.f32 %v4278, %v4961
    %v5091 = vadd.f32 %v4279, %v4963
    %v5092 = vadd.f32 %v4280, %v5002
    %v5093 = vadd.f32 %v4281, %v5004
    %v5094 = vadd.f32 %v4282, %v5043
    %v5095 = vadd.f32 %v4283, %v5045
    %v5096 = vadd.f32 %v4284, %v5084
    %v5097 = vadd.f32 %v4285, %v5086
    %v5098 = vxor.u32 %v5090, 2147483648
    %v5099 = vxor.u32 %v5091, 2147483648
    %v5100 = vmul.f32 %v5098, 1.442695
    %v5101 = vpow.pop %v5100
    %v5102 = vmul.f32 %v5099, 1.442695
    %v5103 = vpow.pop %v5102
    %v5104 = vadd.f32 %v5101, 1.0
    %v5105 = vadd.f32 %v5103, 1.0
    %v5106 = vrcp.pop %v5104
    %v5107 = vmul.f32 1.0, %v5106
    %v5108 = vrcp.pop %v5105
    %v5109 = vmul.f32 1.0, %v5108
    %v5110 = vxor.u32 %v5092, 2147483648
    %v5111 = vxor.u32 %v5093, 2147483648
    %v5112 = vmul.f32 %v5110, 1.442695
    %v5113 = vpow.pop %v5112
    %v5114 = vmul.f32 %v5111, 1.442695
    %v5115 = vpow.pop %v5114
    %v5116 = vadd.f32 %v5113, 1.0
    %v5117 = vadd.f32 %v5115, 1.0
    %v5118 = vrcp.pop %v5116
    %v5119 = vmul.f32 1.0, %v5118
    %v5120 = vrcp.pop %v5117
    %v5121 = vmul.f32 1.0, %v5120
    %v5122 = vtanh.pop %v5094
    %v5123 = vtanh.pop %v5095
    %v5124 = vxor.u32 %v5096, 2147483648
    %v5125 = vxor.u32 %v5097, 2147483648
    %v5126 = vmul.f32 %v5124, 1.442695
    %v5127 = vpow.pop %v5126
    %v5128 = vmul.f32 %v5125, 1.442695
    %v5129 = vpow.pop %v5128
    %v5130 = vadd.f32 %v5127, 1.0
    %v5131 = vadd.f32 %v5129, 1.0
    %v5132 = vrcp.pop %v5130
    %v5133 = vmul.f32 1.0, %v5132
    %v5134 = vrcp.pop %v5131
    %v5135 = vmul.f32 1.0, %v5134
    %v5136 = vmul.f32 %v5119, 0.0
    %v5137 = vmul.f32 %v5121, 0.0
    %v5138 = vmul.f32 %v5107, %v5122
    %v5139 = vmul.f32 %v5109, %v5123
    %v5140 = vadd.f32 %v5136, %v5138
    %v5141 = vadd.f32 %v5137, %v5139
    %v5142 = vtanh.pop %v5140
    %v5143 = vtanh.pop %v5141
    %v5144 = vmul.f32 %v5133, %v5142
    %v5145 = vmul.f32 %v5135, %v5143
    %s5146 = scalar_lea.vmem [#allocation5], 112
    %5147 = vst [vmem:[%s5146] sm:$0xff] %v5144
    %5148 = vst [vmem:[%s5146 + $0x8] sm:$0xff] %v5145
    %s5149 = scalar_lea.vmem [#allocation3], 384
    %v5150 = vld [vmem:[%s5149] sm:$0xff]
    %v5151 = vld [vmem:[%s5149 + $0x8] sm:$0xff]
    %v5152 = vld [vmem:[%s5149 + $0x10] sm:$0xff]
    %v5153 = vld [vmem:[%s5149 + $0x18] sm:$0xff]
    %v5154 = vld [vmem:[%s5149 + $0x20] sm:$0xff]
    %v5155 = vld [vmem:[%s5149 + $0x28] sm:$0xff]
    %v5156 = vld [vmem:[%s5149 + $0x30] sm:$0xff]
    %v5157 = vld [vmem:[%s5149 + $0x38] sm:$0xff]
    %v5158 = vpack.c.bf16 %v5144, %v5144
    %v5159 = vpack.c.bf16 %v5145, %v5145
    %5160 = vmatprep.subr.bf16.mxu0 %v4727
    %5161 = vmatpush1.bf16.msra.mxu0 %v4726
    %5162 = vmatprep.subr.bf16.mxu0 %v4719
    %5163 = vmatpush1.bf16.msra.mxu0 %v4718
    %5164 = vmatprep.subr.bf16.mxu0 %v4711
    %5165 = vmatpush1.bf16.msra.mxu0 %v4710
    %5166 = vmatprep.subr.bf16.mxu0 %v4703
    %5167 = vmatpush1.bf16.msra.mxu0 %v4702
    %5168 = vmatprep.subr.bf16.mxu0 %v4695
    %5169 = vmatpush1.bf16.msra.mxu0 %v4694
    %5170 = vmatprep.subr.bf16.mxu0 %v4687
    %5171 = vmatpush1.bf16.msra.mxu0 %v4686
    %5172 = vmatprep.subr.bf16.mxu0 %v4679
    %5173 = vmatpush1.bf16.msra.mxu0 %v4678
    %5174 = vmatprep.subr.bf16.mxu0 %v4671
    %5175 = vmatpush1.bf16.msra.mxu0 %v4670
    %5176 = vmatprep.subr.bf16.mxu0 %v4791
    %5177 = vmatpush2.bf16.msra.mxu0 %v4790
    %5178 = vmatprep.subr.bf16.mxu0 %v4783
    %5179 = vmatpush2.bf16.msra.mxu0 %v4782
    %5180 = vmatprep.subr.bf16.mxu0 %v4775
    %5181 = vmatpush2.bf16.msra.mxu0 %v4774
    %5182 = vmatprep.subr.bf16.mxu0 %v4767
    %5183 = vmatpush2.bf16.msra.mxu0 %v4766
    %5184 = vmatprep.subr.bf16.mxu0 %v4759
    %5185 = vmatpush2.bf16.msra.mxu0 %v4758
    %5186 = vmatprep.subr.bf16.mxu0 %v4751
    %5187 = vmatpush2.bf16.msra.mxu0 %v4750
    %5188 = vmatprep.subr.bf16.mxu0 %v4743
    %5189 = vmatpush2.bf16.msra.mxu0 %v4742
    %5190 = vmatprep.subr.bf16.mxu0 %v4735
    %5191 = vmatpush2.bf16.msra.mxu0 %v4734
    %5192 = vmatprep.mubr.bf16.mxu0 %v5159
    %5193 = vmatmul.mubr.bf16.gmra.mxu0 %v5158
    %v5194 = vpop.f32.mrf.mxu0
    %v5195 = vadd.f32 0.0, %v5194
    %v5196 = vpop.f32.mrf.mxu0
    %v5197 = vadd.f32 0.0, %v5196
    %v5198 = vpop.f32.mrf.mxu0
    %v5199 = vpop.f32.mrf.mxu0
    %5200 = vdwg.mxu0
    %5201 = vmatprep.subr.bf16.mxu0 %v4729
    %5202 = vmatpush1.bf16.msra.mxu0 %v4728
    %5203 = vmatprep.subr.bf16.mxu0 %v4721
    %5204 = vmatpush1.bf16.msra.mxu0 %v4720
    %5205 = vmatprep.subr.bf16.mxu0 %v4713
    %5206 = vmatpush1.bf16.msra.mxu0 %v4712
    %5207 = vmatprep.subr.bf16.mxu0 %v4705
    %5208 = vmatpush1.bf16.msra.mxu0 %v4704
    %5209 = vmatprep.subr.bf16.mxu0 %v4697
    %5210 = vmatpush1.bf16.msra.mxu0 %v4696
    %5211 = vmatprep.subr.bf16.mxu0 %v4689
    %5212 = vmatpush1.bf16.msra.mxu0 %v4688
    %5213 = vmatprep.subr.bf16.mxu0 %v4681
    %5214 = vmatpush1.bf16.msra.mxu0 %v4680
    %5215 = vmatprep.subr.bf16.mxu0 %v4673
    %5216 = vmatpush1.bf16.msra.mxu0 %v4672
    %5217 = vmatprep.subr.bf16.mxu0 %v4793
    %5218 = vmatpush2.bf16.msra.mxu0 %v4792
    %5219 = vmatprep.subr.bf16.mxu0 %v4785
    %5220 = vmatpush2.bf16.msra.mxu0 %v4784
    %5221 = vmatprep.subr.bf16.mxu0 %v4777
    %5222 = vmatpush2.bf16.msra.mxu0 %v4776
    %5223 = vmatprep.subr.bf16.mxu0 %v4769
    %5224 = vmatpush2.bf16.msra.mxu0 %v4768
    %5225 = vmatprep.subr.bf16.mxu0 %v4761
    %5226 = vmatpush2.bf16.msra.mxu0 %v4760
    %5227 = vmatprep.subr.bf16.mxu0 %v4753
    %5228 = vmatpush2.bf16.msra.mxu0 %v4752
    %5229 = vmatprep.subr.bf16.mxu0 %v4745
    %5230 = vmatpush2.bf16.msra.mxu0 %v4744
    %5231 = vmatprep.subr.bf16.mxu0 %v4737
    %5232 = vmatpush2.bf16.msra.mxu0 %v4736
    %5233 = vmatprep.mubr.bf16.mxu0 %v5159
    %5234 = vmatmul.mubr.bf16.gmra.mxu0 %v5158
    %v5235 = vpop.f32.mrf.mxu0
    %v5236 = vadd.f32 0.0, %v5235
    %v5237 = vpop.f32.mrf.mxu0
    %v5238 = vadd.f32 0.0, %v5237
    %v5239 = vpop.f32.mrf.mxu0
    %v5240 = vpop.f32.mrf.mxu0
    %5241 = vdwg.mxu0
    %5242 = vmatprep.subr.bf16.mxu0 %v4731
    %5243 = vmatpush1.bf16.msra.mxu0 %v4730
    %5244 = vmatprep.subr.bf16.mxu0 %v4723
    %5245 = vmatpush1.bf16.msra.mxu0 %v4722
    %5246 = vmatprep.subr.bf16.mxu0 %v4715
    %5247 = vmatpush1.bf16.msra.mxu0 %v4714
    %5248 = vmatprep.subr.bf16.mxu0 %v4707
    %5249 = vmatpush1.bf16.msra.mxu0 %v4706
    %5250 = vmatprep.subr.bf16.mxu0 %v4699
    %5251 = vmatpush1.bf16.msra.mxu0 %v4698
    %5252 = vmatprep.subr.bf16.mxu0 %v4691
    %5253 = vmatpush1.bf16.msra.mxu0 %v4690
    %5254 = vmatprep.subr.bf16.mxu0 %v4683
    %5255 = vmatpush1.bf16.msra.mxu0 %v4682
    %5256 = vmatprep.subr.bf16.mxu0 %v4675
    %5257 = vmatpush1.bf16.msra.mxu0 %v4674
    %5258 = vmatprep.subr.bf16.mxu0 %v4795
    %5259 = vmatpush2.bf16.msra.mxu0 %v4794
    %5260 = vmatprep.subr.bf16.mxu0 %v4787
    %5261 = vmatpush2.bf16.msra.mxu0 %v4786
    %5262 = vmatprep.subr.bf16.mxu0 %v4779
    %5263 = vmatpush2.bf16.msra.mxu0 %v4778
    %5264 = vmatprep.subr.bf16.mxu0 %v4771
    %5265 = vmatpush2.bf16.msra.mxu0 %v4770
    %5266 = vmatprep.subr.bf16.mxu0 %v4763
    %5267 = vmatpush2.bf16.msra.mxu0 %v4762
    %5268 = vmatprep.subr.bf16.mxu0 %v4755
    %5269 = vmatpush2.bf16.msra.mxu0 %v4754
    %5270 = vmatprep.subr.bf16.mxu0 %v4747
    %5271 = vmatpush2.bf16.msra.mxu0 %v4746
    %5272 = vmatprep.subr.bf16.mxu0 %v4739
    %5273 = vmatpush2.bf16.msra.mxu0 %v4738
    %5274 = vmatprep.mubr.bf16.mxu0 %v5159
    %5275 = vmatmul.mubr.bf16.gmra.mxu0 %v5158
    %v5276 = vpop.f32.mrf.mxu0
    %v5277 = vadd.f32 0.0, %v5276
    %v5278 = vpop.f32.mrf.mxu0
    %v5279 = vadd.f32 0.0, %v5278
    %v5280 = vpop.f32.mrf.mxu0
    %v5281 = vpop.f32.mrf.mxu0
    %5282 = vdwg.mxu0
    %5283 = vmatprep.subr.bf16.mxu0 %v4733
    %5284 = vmatpush1.bf16.msra.mxu0 %v4732
    %5285 = vmatprep.subr.bf16.mxu0 %v4725
    %5286 = vmatpush1.bf16.msra.mxu0 %v4724
    %5287 = vmatprep.subr.bf16.mxu0 %v4717
    %5288 = vmatpush1.bf16.msra.mxu0 %v4716
    %5289 = vmatprep.subr.bf16.mxu0 %v4709
    %5290 = vmatpush1.bf16.msra.mxu0 %v4708
    %5291 = vmatprep.subr.bf16.mxu0 %v4701
    %5292 = vmatpush1.bf16.msra.mxu0 %v4700
    %5293 = vmatprep.subr.bf16.mxu0 %v4693
    %5294 = vmatpush1.bf16.msra.mxu0 %v4692
    %5295 = vmatprep.subr.bf16.mxu0 %v4685
    %5296 = vmatpush1.bf16.msra.mxu0 %v4684
    %5297 = vmatprep.subr.bf16.mxu0 %v4677
    %5298 = vmatpush1.bf16.msra.mxu0 %v4676
    %5299 = vmatprep.subr.bf16.mxu0 %v4797
    %5300 = vmatpush2.bf16.msra.mxu0 %v4796
    %5301 = vmatprep.subr.bf16.mxu0 %v4789
    %5302 = vmatpush2.bf16.msra.mxu0 %v4788
    %5303 = vmatprep.subr.bf16.mxu0 %v4781
    %5304 = vmatpush2.bf16.msra.mxu0 %v4780
    %5305 = vmatprep.subr.bf16.mxu0 %v4773
    %5306 = vmatpush2.bf16.msra.mxu0 %v4772
    %5307 = vmatprep.subr.bf16.mxu0 %v4765
    %5308 = vmatpush2.bf16.msra.mxu0 %v4764
    %5309 = vmatprep.subr.bf16.mxu0 %v4757
    %5310 = vmatpush2.bf16.msra.mxu0 %v4756
    %5311 = vmatprep.subr.bf16.mxu0 %v4749
    %5312 = vmatpush2.bf16.msra.mxu0 %v4748
    %5313 = vmatprep.subr.bf16.mxu0 %v4741
    %5314 = vmatpush2.bf16.msra.mxu0 %v4740
    %5315 = vmatprep.mubr.bf16.mxu0 %v5159
    %5316 = vmatmul.mubr.bf16.gmra.mxu0 %v5158
    %v5317 = vpop.f32.mrf.mxu0
    %v5318 = vadd.f32 0.0, %v5317
    %v5319 = vpop.f32.mrf.mxu0
    %v5320 = vadd.f32 0.0, %v5319
    %v5321 = vpop.f32.mrf.mxu0
    %v5322 = vpop.f32.mrf.mxu0
    %5323 = vdwg.mxu0
    %v5324 = vadd.f32 %v5150, %v5195
    %v5325 = vadd.f32 %v5151, %v5197
    %v5326 = vadd.f32 %v5152, %v5236
    %v5327 = vadd.f32 %v5153, %v5238
    %v5328 = vadd.f32 %v5154, %v5277
    %v5329 = vadd.f32 %v5155, %v5279
    %v5330 = vadd.f32 %v5156, %v5318
    %v5331 = vadd.f32 %v5157, %v5320
    %v5332 = vxor.u32 %v5324, 2147483648
    %v5333 = vxor.u32 %v5325, 2147483648
    %v5334 = vmul.f32 %v5332, 1.442695
    %v5335 = vpow.pop %v5334
    %v5336 = vmul.f32 %v5333, 1.442695
    %v5337 = vpow.pop %v5336
    %v5338 = vadd.f32 %v5335, 1.0
    %v5339 = vadd.f32 %v5337, 1.0
    %v5340 = vrcp.pop %v5338
    %v5341 = vmul.f32 1.0, %v5340
    %v5342 = vrcp.pop %v5339
    %v5343 = vmul.f32 1.0, %v5342
    %v5344 = vxor.u32 %v5326, 2147483648
    %v5345 = vxor.u32 %v5327, 2147483648
    %v5346 = vmul.f32 %v5344, 1.442695
    %v5347 = vpow.pop %v5346
    %v5348 = vmul.f32 %v5345, 1.442695
    %v5349 = vpow.pop %v5348
    %v5350 = vadd.f32 %v5347, 1.0
    %v5351 = vadd.f32 %v5349, 1.0
    %v5352 = vrcp.pop %v5350
    %v5353 = vmul.f32 1.0, %v5352
    %v5354 = vrcp.pop %v5351
    %v5355 = vmul.f32 1.0, %v5354
    %v5356 = vtanh.pop %v5328
    %v5357 = vtanh.pop %v5329
    %v5358 = vxor.u32 %v5330, 2147483648
    %v5359 = vxor.u32 %v5331, 2147483648
    %v5360 = vmul.f32 %v5358, 1.442695
    %v5361 = vpow.pop %v5360
    %v5362 = vmul.f32 %v5359, 1.442695
    %v5363 = vpow.pop %v5362
    %v5364 = vadd.f32 %v5361, 1.0
    %v5365 = vadd.f32 %v5363, 1.0
    %v5366 = vrcp.pop %v5364
    %v5367 = vmul.f32 1.0, %v5366
    %v5368 = vrcp.pop %v5365
    %v5369 = vmul.f32 1.0, %v5368
    %v5370 = vmul.f32 %v5353, %v5140
    %v5371 = vmul.f32 %v5355, %v5141
    %v5372 = vmul.f32 %v5341, %v5356
    %v5373 = vmul.f32 %v5343, %v5357
    %v5374 = vadd.f32 %v5370, %v5372
    %v5375 = vadd.f32 %v5371, %v5373
    %v5376 = vtanh.pop %v5374
    %v5377 = vtanh.pop %v5375
    %v5378 = vmul.f32 %v5367, %v5376
    %v5379 = vmul.f32 %v5369, %v5377
    %s5380 = scalar_lea.vmem [#allocation5], 96
    %5381 = vst [vmem:[%s5380] sm:$0xff] %v5378
    %5382 = vst [vmem:[%s5380 + $0x8] sm:$0xff] %v5379
    %s5383 = scalar_lea.vmem [#allocation3], 320
    %v5384 = vld [vmem:[%s5383] sm:$0xff]
    %v5385 = vld [vmem:[%s5383 + $0x8] sm:$0xff]
    %v5386 = vld [vmem:[%s5383 + $0x10] sm:$0xff]
    %v5387 = vld [vmem:[%s5383 + $0x18] sm:$0xff]
    %v5388 = vld [vmem:[%s5383 + $0x20] sm:$0xff]
    %v5389 = vld [vmem:[%s5383 + $0x28] sm:$0xff]
    %v5390 = vld [vmem:[%s5383 + $0x30] sm:$0xff]
    %v5391 = vld [vmem:[%s5383 + $0x38] sm:$0xff]
    %v5392 = vpack.c.bf16 %v5378, %v5378
    %v5393 = vpack.c.bf16 %v5379, %v5379
    %5394 = vmatprep.subr.bf16.mxu0 %v4727
    %5395 = vmatpush1.bf16.msra.mxu0 %v4726
    %5396 = vmatprep.subr.bf16.mxu0 %v4719
    %5397 = vmatpush1.bf16.msra.mxu0 %v4718
    %5398 = vmatprep.subr.bf16.mxu0 %v4711
    %5399 = vmatpush1.bf16.msra.mxu0 %v4710
    %5400 = vmatprep.subr.bf16.mxu0 %v4703
    %5401 = vmatpush1.bf16.msra.mxu0 %v4702
    %5402 = vmatprep.subr.bf16.mxu0 %v4695
    %5403 = vmatpush1.bf16.msra.mxu0 %v4694
    %5404 = vmatprep.subr.bf16.mxu0 %v4687
    %5405 = vmatpush1.bf16.msra.mxu0 %v4686
    %5406 = vmatprep.subr.bf16.mxu0 %v4679
    %5407 = vmatpush1.bf16.msra.mxu0 %v4678
    %5408 = vmatprep.subr.bf16.mxu0 %v4671
    %5409 = vmatpush1.bf16.msra.mxu0 %v4670
    %5410 = vmatprep.subr.bf16.mxu0 %v4791
    %5411 = vmatpush2.bf16.msra.mxu0 %v4790
    %5412 = vmatprep.subr.bf16.mxu0 %v4783
    %5413 = vmatpush2.bf16.msra.mxu0 %v4782
    %5414 = vmatprep.subr.bf16.mxu0 %v4775
    %5415 = vmatpush2.bf16.msra.mxu0 %v4774
    %5416 = vmatprep.subr.bf16.mxu0 %v4767
    %5417 = vmatpush2.bf16.msra.mxu0 %v4766
    %5418 = vmatprep.subr.bf16.mxu0 %v4759
    %5419 = vmatpush2.bf16.msra.mxu0 %v4758
    %5420 = vmatprep.subr.bf16.mxu0 %v4751
    %5421 = vmatpush2.bf16.msra.mxu0 %v4750
    %5422 = vmatprep.subr.bf16.mxu0 %v4743
    %5423 = vmatpush2.bf16.msra.mxu0 %v4742
    %5424 = vmatprep.subr.bf16.mxu0 %v4735
    %5425 = vmatpush2.bf16.msra.mxu0 %v4734
    %5426 = vmatprep.mubr.bf16.mxu0 %v5393
    %5427 = vmatmul.mubr.bf16.gmra.mxu0 %v5392
    %v5428 = vpop.f32.mrf.mxu0
    %v5429 = vadd.f32 0.0, %v5428
    %v5430 = vpop.f32.mrf.mxu0
    %v5431 = vadd.f32 0.0, %v5430
    %v5432 = vpop.f32.mrf.mxu0
    %v5433 = vpop.f32.mrf.mxu0
    %5434 = vdwg.mxu0
    %5435 = vmatprep.subr.bf16.mxu0 %v4729
    %5436 = vmatpush1.bf16.msra.mxu0 %v4728
    %5437 = vmatprep.subr.bf16.mxu0 %v4721
    %5438 = vmatpush1.bf16.msra.mxu0 %v4720
    %5439 = vmatprep.subr.bf16.mxu0 %v4713
    %5440 = vmatpush1.bf16.msra.mxu0 %v4712
    %5441 = vmatprep.subr.bf16.mxu0 %v4705
    %5442 = vmatpush1.bf16.msra.mxu0 %v4704
    %5443 = vmatprep.subr.bf16.mxu0 %v4697
    %5444 = vmatpush1.bf16.msra.mxu0 %v4696
    %5445 = vmatprep.subr.bf16.mxu0 %v4689
    %5446 = vmatpush1.bf16.msra.mxu0 %v4688
    %5447 = vmatprep.subr.bf16.mxu0 %v4681
    %5448 = vmatpush1.bf16.msra.mxu0 %v4680
    %5449 = vmatprep.subr.bf16.mxu0 %v4673
    %5450 = vmatpush1.bf16.msra.mxu0 %v4672
    %5451 = vmatprep.subr.bf16.mxu0 %v4793
    %5452 = vmatpush2.bf16.msra.mxu0 %v4792
    %5453 = vmatprep.subr.bf16.mxu0 %v4785
    %5454 = vmatpush2.bf16.msra.mxu0 %v4784
    %5455 = vmatprep.subr.bf16.mxu0 %v4777
    %5456 = vmatpush2.bf16.msra.mxu0 %v4776
    %5457 = vmatprep.subr.bf16.mxu0 %v4769
    %5458 = vmatpush2.bf16.msra.mxu0 %v4768
    %5459 = vmatprep.subr.bf16.mxu0 %v4761
    %5460 = vmatpush2.bf16.msra.mxu0 %v4760
    %5461 = vmatprep.subr.bf16.mxu0 %v4753
    %5462 = vmatpush2.bf16.msra.mxu0 %v4752
    %5463 = vmatprep.subr.bf16.mxu0 %v4745
    %5464 = vmatpush2.bf16.msra.mxu0 %v4744
    %5465 = vmatprep.subr.bf16.mxu0 %v4737
    %5466 = vmatpush2.bf16.msra.mxu0 %v4736
    %5467 = vmatprep.mubr.bf16.mxu0 %v5393
    %5468 = vmatmul.mubr.bf16.gmra.mxu0 %v5392
    %v5469 = vpop.f32.mrf.mxu0
    %v5470 = vadd.f32 0.0, %v5469
    %v5471 = vpop.f32.mrf.mxu0
    %v5472 = vadd.f32 0.0, %v5471
    %v5473 = vpop.f32.mrf.mxu0
    %v5474 = vpop.f32.mrf.mxu0
    %5475 = vdwg.mxu0
    %5476 = vmatprep.subr.bf16.mxu0 %v4731
    %5477 = vmatpush1.bf16.msra.mxu0 %v4730
    %5478 = vmatprep.subr.bf16.mxu0 %v4723
    %5479 = vmatpush1.bf16.msra.mxu0 %v4722
    %5480 = vmatprep.subr.bf16.mxu0 %v4715
    %5481 = vmatpush1.bf16.msra.mxu0 %v4714
    %5482 = vmatprep.subr.bf16.mxu0 %v4707
    %5483 = vmatpush1.bf16.msra.mxu0 %v4706
    %5484 = vmatprep.subr.bf16.mxu0 %v4699
    %5485 = vmatpush1.bf16.msra.mxu0 %v4698
    %5486 = vmatprep.subr.bf16.mxu0 %v4691
    %5487 = vmatpush1.bf16.msra.mxu0 %v4690
    %5488 = vmatprep.subr.bf16.mxu0 %v4683
    %5489 = vmatpush1.bf16.msra.mxu0 %v4682
    %5490 = vmatprep.subr.bf16.mxu0 %v4675
    %5491 = vmatpush1.bf16.msra.mxu0 %v4674
    %5492 = vmatprep.subr.bf16.mxu0 %v4795
    %5493 = vmatpush2.bf16.msra.mxu0 %v4794
    %5494 = vmatprep.subr.bf16.mxu0 %v4787
    %5495 = vmatpush2.bf16.msra.mxu0 %v4786
    %5496 = vmatprep.subr.bf16.mxu0 %v4779
    %5497 = vmatpush2.bf16.msra.mxu0 %v4778
    %5498 = vmatprep.subr.bf16.mxu0 %v4771
    %5499 = vmatpush2.bf16.msra.mxu0 %v4770
    %5500 = vmatprep.subr.bf16.mxu0 %v4763
    %5501 = vmatpush2.bf16.msra.mxu0 %v4762
    %5502 = vmatprep.subr.bf16.mxu0 %v4755
    %5503 = vmatpush2.bf16.msra.mxu0 %v4754
    %5504 = vmatprep.subr.bf16.mxu0 %v4747
    %5505 = vmatpush2.bf16.msra.mxu0 %v4746
    %5506 = vmatprep.subr.bf16.mxu0 %v4739
    %5507 = vmatpush2.bf16.msra.mxu0 %v4738
    %5508 = vmatprep.mubr.bf16.mxu0 %v5393
    %5509 = vmatmul.mubr.bf16.gmra.mxu0 %v5392
    %v5510 = vpop.f32.mrf.mxu0
    %v5511 = vadd.f32 0.0, %v5510
    %v5512 = vpop.f32.mrf.mxu0
    %v5513 = vadd.f32 0.0, %v5512
    %v5514 = vpop.f32.mrf.mxu0
    %v5515 = vpop.f32.mrf.mxu0
    %5516 = vdwg.mxu0
    %5517 = vmatprep.subr.bf16.mxu0 %v4733
    %5518 = vmatpush1.bf16.msra.mxu0 %v4732
    %5519 = vmatprep.subr.bf16.mxu0 %v4725
    %5520 = vmatpush1.bf16.msra.mxu0 %v4724
    %5521 = vmatprep.subr.bf16.mxu0 %v4717
    %5522 = vmatpush1.bf16.msra.mxu0 %v4716
    %5523 = vmatprep.subr.bf16.mxu0 %v4709
    %5524 = vmatpush1.bf16.msra.mxu0 %v4708
    %5525 = vmatprep.subr.bf16.mxu0 %v4701
    %5526 = vmatpush1.bf16.msra.mxu0 %v4700
    %5527 = vmatprep.subr.bf16.mxu0 %v4693
    %5528 = vmatpush1.bf16.msra.mxu0 %v4692
    %5529 = vmatprep.subr.bf16.mxu0 %v4685
    %5530 = vmatpush1.bf16.msra.mxu0 %v4684
    %5531 = vmatprep.subr.bf16.mxu0 %v4677
    %5532 = vmatpush1.bf16.msra.mxu0 %v4676
    %5533 = vmatprep.subr.bf16.mxu0 %v4797
    %5534 = vmatpush2.bf16.msra.mxu0 %v4796
    %5535 = vmatprep.subr.bf16.mxu0 %v4789
    %5536 = vmatpush2.bf16.msra.mxu0 %v4788
    %5537 = vmatprep.subr.bf16.mxu0 %v4781
    %5538 = vmatpush2.bf16.msra.mxu0 %v4780
    %5539 = vmatprep.subr.bf16.mxu0 %v4773
    %5540 = vmatpush2.bf16.msra.mxu0 %v4772
    %5541 = vmatprep.subr.bf16.mxu0 %v4765
    %5542 = vmatpush2.bf16.msra.mxu0 %v4764
    %5543 = vmatprep.subr.bf16.mxu0 %v4757
    %5544 = vmatpush2.bf16.msra.mxu0 %v4756
    %5545 = vmatprep.subr.bf16.mxu0 %v4749
    %5546 = vmatpush2.bf16.msra.mxu0 %v4748
    %5547 = vmatprep.subr.bf16.mxu0 %v4741
    %5548 = vmatpush2.bf16.msra.mxu0 %v4740
    %5549 = vmatprep.mubr.bf16.mxu0 %v5393
    %5550 = vmatmul.mubr.bf16.gmra.mxu0 %v5392
    %v5551 = vpop.f32.mrf.mxu0
    %v5552 = vadd.f32 0.0, %v5551
    %v5553 = vpop.f32.mrf.mxu0
    %v5554 = vadd.f32 0.0, %v5553
    %v5555 = vpop.f32.mrf.mxu0
    %v5556 = vpop.f32.mrf.mxu0
    %5557 = vdwg.mxu0
    %v5558 = vadd.f32 %v5384, %v5429
    %v5559 = vadd.f32 %v5385, %v5431
    %v5560 = vadd.f32 %v5386, %v5470
    %v5561 = vadd.f32 %v5387, %v5472
    %v5562 = vadd.f32 %v5388, %v5511
    %v5563 = vadd.f32 %v5389, %v5513
    %v5564 = vadd.f32 %v5390, %v5552
    %v5565 = vadd.f32 %v5391, %v5554
    %v5566 = vxor.u32 %v5558, 2147483648
    %v5567 = vxor.u32 %v5559, 2147483648
    %v5568 = vmul.f32 %v5566, 1.442695
    %v5569 = vpow.pop %v5568
    %v5570 = vmul.f32 %v5567, 1.442695
    %v5571 = vpow.pop %v5570
    %v5572 = vadd.f32 %v5569, 1.0
    %v5573 = vadd.f32 %v5571, 1.0
    %v5574 = vrcp.pop %v5572
    %v5575 = vmul.f32 1.0, %v5574
    %v5576 = vrcp.pop %v5573
    %v5577 = vmul.f32 1.0, %v5576
    %v5578 = vxor.u32 %v5560, 2147483648
    %v5579 = vxor.u32 %v5561, 2147483648
    %v5580 = vmul.f32 %v5578, 1.442695
    %v5581 = vpow.pop %v5580
    %v5582 = vmul.f32 %v5579, 1.442695
    %v5583 = vpow.pop %v5582
    %v5584 = vadd.f32 %v5581, 1.0
    %v5585 = vadd.f32 %v5583, 1.0
    %v5586 = vrcp.pop %v5584
    %v5587 = vmul.f32 1.0, %v5586
    %v5588 = vrcp.pop %v5585
    %v5589 = vmul.f32 1.0, %v5588
    %v5590 = vtanh.pop %v5562
    %v5591 = vtanh.pop %v5563
    %v5592 = vxor.u32 %v5564, 2147483648
    %v5593 = vxor.u32 %v5565, 2147483648
    %v5594 = vmul.f32 %v5592, 1.442695
    %v5595 = vpow.pop %v5594
    %v5596 = vmul.f32 %v5593, 1.442695
    %v5597 = vpow.pop %v5596
    %v5598 = vadd.f32 %v5595, 1.0
    %v5599 = vadd.f32 %v5597, 1.0
    %v5600 = vrcp.pop %v5598
    %v5601 = vmul.f32 1.0, %v5600
    %v5602 = vrcp.pop %v5599
    %v5603 = vmul.f32 1.0, %v5602
    %v5604 = vmul.f32 %v5587, %v5374
    %v5605 = vmul.f32 %v5589, %v5375
    %v5606 = vmul.f32 %v5575, %v5590
    %v5607 = vmul.f32 %v5577, %v5591
    %v5608 = vadd.f32 %v5604, %v5606
    %v5609 = vadd.f32 %v5605, %v5607
    %v5610 = vtanh.pop %v5608
    %v5611 = vtanh.pop %v5609
    %v5612 = vmul.f32 %v5601, %v5610
    %v5613 = vmul.f32 %v5603, %v5611
    %s5614 = scalar_lea.vmem [#allocation5], 80
    %5615 = vst [vmem:[%s5614] sm:$0xff] %v5612
    %5616 = vst [vmem:[%s5614 + $0x8] sm:$0xff] %v5613
    %s5617 = scalar_lea.vmem [#allocation3], 256
    %v5618 = vld [vmem:[%s5617] sm:$0xff]
    %v5619 = vld [vmem:[%s5617 + $0x8] sm:$0xff]
    %v5620 = vld [vmem:[%s5617 + $0x10] sm:$0xff]
    %v5621 = vld [vmem:[%s5617 + $0x18] sm:$0xff]
    %v5622 = vld [vmem:[%s5617 + $0x20] sm:$0xff]
    %v5623 = vld [vmem:[%s5617 + $0x28] sm:$0xff]
    %v5624 = vld [vmem:[%s5617 + $0x30] sm:$0xff]
    %v5625 = vld [vmem:[%s5617 + $0x38] sm:$0xff]
    %v5626 = vpack.c.bf16 %v5612, %v5612
    %v5627 = vpack.c.bf16 %v5613, %v5613
    %5628 = vmatprep.subr.bf16.mxu0 %v4727
    %5629 = vmatpush1.bf16.msra.mxu0 %v4726
    %5630 = vmatprep.subr.bf16.mxu0 %v4719
    %5631 = vmatpush1.bf16.msra.mxu0 %v4718
    %5632 = vmatprep.subr.bf16.mxu0 %v4711
    %5633 = vmatpush1.bf16.msra.mxu0 %v4710
    %5634 = vmatprep.subr.bf16.mxu0 %v4703
    %5635 = vmatpush1.bf16.msra.mxu0 %v4702
    %5636 = vmatprep.subr.bf16.mxu0 %v4695
    %5637 = vmatpush1.bf16.msra.mxu0 %v4694
    %5638 = vmatprep.subr.bf16.mxu0 %v4687
    %5639 = vmatpush1.bf16.msra.mxu0 %v4686
    %5640 = vmatprep.subr.bf16.mxu0 %v4679
    %5641 = vmatpush1.bf16.msra.mxu0 %v4678
    %5642 = vmatprep.subr.bf16.mxu0 %v4671
    %5643 = vmatpush1.bf16.msra.mxu0 %v4670
    %5644 = vmatprep.subr.bf16.mxu0 %v4791
    %5645 = vmatpush2.bf16.msra.mxu0 %v4790
    %5646 = vmatprep.subr.bf16.mxu0 %v4783
    %5647 = vmatpush2.bf16.msra.mxu0 %v4782
    %5648 = vmatprep.subr.bf16.mxu0 %v4775
    %5649 = vmatpush2.bf16.msra.mxu0 %v4774
    %5650 = vmatprep.subr.bf16.mxu0 %v4767
    %5651 = vmatpush2.bf16.msra.mxu0 %v4766
    %5652 = vmatprep.subr.bf16.mxu0 %v4759
    %5653 = vmatpush2.bf16.msra.mxu0 %v4758
    %5654 = vmatprep.subr.bf16.mxu0 %v4751
    %5655 = vmatpush2.bf16.msra.mxu0 %v4750
    %5656 = vmatprep.subr.bf16.mxu0 %v4743
    %5657 = vmatpush2.bf16.msra.mxu0 %v4742
    %5658 = vmatprep.subr.bf16.mxu0 %v4735
    %5659 = vmatpush2.bf16.msra.mxu0 %v4734
    %5660 = vmatprep.mubr.bf16.mxu0 %v5627
    %5661 = vmatmul.mubr.bf16.gmra.mxu0 %v5626
    %v5662 = vpop.f32.mrf.mxu0
    %v5663 = vadd.f32 0.0, %v5662
    %v5664 = vpop.f32.mrf.mxu0
    %v5665 = vadd.f32 0.0, %v5664
    %v5666 = vpop.f32.mrf.mxu0
    %v5667 = vpop.f32.mrf.mxu0
    %5668 = vdwg.mxu0
    %5669 = vmatprep.subr.bf16.mxu0 %v4729
    %5670 = vmatpush1.bf16.msra.mxu0 %v4728
    %5671 = vmatprep.subr.bf16.mxu0 %v4721
    %5672 = vmatpush1.bf16.msra.mxu0 %v4720
    %5673 = vmatprep.subr.bf16.mxu0 %v4713
    %5674 = vmatpush1.bf16.msra.mxu0 %v4712
    %5675 = vmatprep.subr.bf16.mxu0 %v4705
    %5676 = vmatpush1.bf16.msra.mxu0 %v4704
    %5677 = vmatprep.subr.bf16.mxu0 %v4697
    %5678 = vmatpush1.bf16.msra.mxu0 %v4696
    %5679 = vmatprep.subr.bf16.mxu0 %v4689
    %5680 = vmatpush1.bf16.msra.mxu0 %v4688
    %5681 = vmatprep.subr.bf16.mxu0 %v4681
    %5682 = vmatpush1.bf16.msra.mxu0 %v4680
    %5683 = vmatprep.subr.bf16.mxu0 %v4673
    %5684 = vmatpush1.bf16.msra.mxu0 %v4672
    %5685 = vmatprep.subr.bf16.mxu0 %v4793
    %5686 = vmatpush2.bf16.msra.mxu0 %v4792
    %5687 = vmatprep.subr.bf16.mxu0 %v4785
    %5688 = vmatpush2.bf16.msra.mxu0 %v4784
    %5689 = vmatprep.subr.bf16.mxu0 %v4777
    %5690 = vmatpush2.bf16.msra.mxu0 %v4776
    %5691 = vmatprep.subr.bf16.mxu0 %v4769
    %5692 = vmatpush2.bf16.msra.mxu0 %v4768
    %5693 = vmatprep.subr.bf16.mxu0 %v4761
    %5694 = vmatpush2.bf16.msra.mxu0 %v4760
    %5695 = vmatprep.subr.bf16.mxu0 %v4753
    %5696 = vmatpush2.bf16.msra.mxu0 %v4752
    %5697 = vmatprep.subr.bf16.mxu0 %v4745
    %5698 = vmatpush2.bf16.msra.mxu0 %v4744
    %5699 = vmatprep.subr.bf16.mxu0 %v4737
    %5700 = vmatpush2.bf16.msra.mxu0 %v4736
    %5701 = vmatprep.mubr.bf16.mxu0 %v5627
    %5702 = vmatmul.mubr.bf16.gmra.mxu0 %v5626
    %v5703 = vpop.f32.mrf.mxu0
    %v5704 = vadd.f32 0.0, %v5703
    %v5705 = vpop.f32.mrf.mxu0
    %v5706 = vadd.f32 0.0, %v5705
    %v5707 = vpop.f32.mrf.mxu0
    %v5708 = vpop.f32.mrf.mxu0
    %5709 = vdwg.mxu0
    %5710 = vmatprep.subr.bf16.mxu0 %v4731
    %5711 = vmatpush1.bf16.msra.mxu0 %v4730
    %5712 = vmatprep.subr.bf16.mxu0 %v4723
    %5713 = vmatpush1.bf16.msra.mxu0 %v4722
    %5714 = vmatprep.subr.bf16.mxu0 %v4715
    %5715 = vmatpush1.bf16.msra.mxu0 %v4714
    %5716 = vmatprep.subr.bf16.mxu0 %v4707
    %5717 = vmatpush1.bf16.msra.mxu0 %v4706
    %5718 = vmatprep.subr.bf16.mxu0 %v4699
    %5719 = vmatpush1.bf16.msra.mxu0 %v4698
    %5720 = vmatprep.subr.bf16.mxu0 %v4691
    %5721 = vmatpush1.bf16.msra.mxu0 %v4690
    %5722 = vmatprep.subr.bf16.mxu0 %v4683
    %5723 = vmatpush1.bf16.msra.mxu0 %v4682
    %5724 = vmatprep.subr.bf16.mxu0 %v4675
    %5725 = vmatpush1.bf16.msra.mxu0 %v4674
    %5726 = vmatprep.subr.bf16.mxu0 %v4795
    %5727 = vmatpush2.bf16.msra.mxu0 %v4794
    %5728 = vmatprep.subr.bf16.mxu0 %v4787
    %5729 = vmatpush2.bf16.msra.mxu0 %v4786
    %5730 = vmatprep.subr.bf16.mxu0 %v4779
    %5731 = vmatpush2.bf16.msra.mxu0 %v4778
    %5732 = vmatprep.subr.bf16.mxu0 %v4771
    %5733 = vmatpush2.bf16.msra.mxu0 %v4770
    %5734 = vmatprep.subr.bf16.mxu0 %v4763
    %5735 = vmatpush2.bf16.msra.mxu0 %v4762
    %5736 = vmatprep.subr.bf16.mxu0 %v4755
    %5737 = vmatpush2.bf16.msra.mxu0 %v4754
    %5738 = vmatprep.subr.bf16.mxu0 %v4747
    %5739 = vmatpush2.bf16.msra.mxu0 %v4746
    %5740 = vmatprep.subr.bf16.mxu0 %v4739
    %5741 = vmatpush2.bf16.msra.mxu0 %v4738
    %5742 = vmatprep.mubr.bf16.mxu0 %v5627
    %5743 = vmatmul.mubr.bf16.gmra.mxu0 %v5626
    %v5744 = vpop.f32.mrf.mxu0
    %v5745 = vadd.f32 0.0, %v5744
    %v5746 = vpop.f32.mrf.mxu0
    %v5747 = vadd.f32 0.0, %v5746
    %v5748 = vpop.f32.mrf.mxu0
    %v5749 = vpop.f32.mrf.mxu0
    %5750 = vdwg.mxu0
    %5751 = vmatprep.subr.bf16.mxu0 %v4733
    %5752 = vmatpush1.bf16.msra.mxu0 %v4732
    %5753 = vmatprep.subr.bf16.mxu0 %v4725
    %5754 = vmatpush1.bf16.msra.mxu0 %v4724
    %5755 = vmatprep.subr.bf16.mxu0 %v4717
    %5756 = vmatpush1.bf16.msra.mxu0 %v4716
    %5757 = vmatprep.subr.bf16.mxu0 %v4709
    %5758 = vmatpush1.bf16.msra.mxu0 %v4708
    %5759 = vmatprep.subr.bf16.mxu0 %v4701
    %5760 = vmatpush1.bf16.msra.mxu0 %v4700
    %5761 = vmatprep.subr.bf16.mxu0 %v4693
    %5762 = vmatpush1.bf16.msra.mxu0 %v4692
    %5763 = vmatprep.subr.bf16.mxu0 %v4685
    %5764 = vmatpush1.bf16.msra.mxu0 %v4684
    %5765 = vmatprep.subr.bf16.mxu0 %v4677
    %5766 = vmatpush1.bf16.msra.mxu0 %v4676
    %5767 = vmatprep.subr.bf16.mxu0 %v4797
    %5768 = vmatpush2.bf16.msra.mxu0 %v4796
    %5769 = vmatprep.subr.bf16.mxu0 %v4789
    %5770 = vmatpush2.bf16.msra.mxu0 %v4788
    %5771 = vmatprep.subr.bf16.mxu0 %v4781
    %5772 = vmatpush2.bf16.msra.mxu0 %v4780
    %5773 = vmatprep.subr.bf16.mxu0 %v4773
    %5774 = vmatpush2.bf16.msra.mxu0 %v4772
    %5775 = vmatprep.subr.bf16.mxu0 %v4765
    %5776 = vmatpush2.bf16.msra.mxu0 %v4764
    %5777 = vmatprep.subr.bf16.mxu0 %v4757
    %5778 = vmatpush2.bf16.msra.mxu0 %v4756
    %5779 = vmatprep.subr.bf16.mxu0 %v4749
    %5780 = vmatpush2.bf16.msra.mxu0 %v4748
    %5781 = vmatprep.subr.bf16.mxu0 %v4741
    %5782 = vmatpush2.bf16.msra.mxu0 %v4740
    %5783 = vmatprep.mubr.bf16.mxu0 %v5627
    %5784 = vmatmul.mubr.bf16.gmra.mxu0 %v5626
    %v5785 = vpop.f32.mrf.mxu0
    %v5786 = vadd.f32 0.0, %v5785
    %v5787 = vpop.f32.mrf.mxu0
    %v5788 = vadd.f32 0.0, %v5787
    %v5789 = vpop.f32.mrf.mxu0
    %v5790 = vpop.f32.mrf.mxu0
    %5791 = vdwg.mxu0
    %v5792 = vadd.f32 %v5618, %v5663
    %v5793 = vadd.f32 %v5619, %v5665
    %v5794 = vadd.f32 %v5620, %v5704
    %v5795 = vadd.f32 %v5621, %v5706
    %v5796 = vadd.f32 %v5622, %v5745
    %v5797 = vadd.f32 %v5623, %v5747
    %v5798 = vadd.f32 %v5624, %v5786
    %v5799 = vadd.f32 %v5625, %v5788
    %v5800 = vxor.u32 %v5792, 2147483648
    %v5801 = vxor.u32 %v5793, 2147483648
    %v5802 = vmul.f32 %v5800, 1.442695
    %v5803 = vpow.pop %v5802
    %v5804 = vmul.f32 %v5801, 1.442695
    %v5805 = vpow.pop %v5804
    %v5806 = vadd.f32 %v5803, 1.0
    %v5807 = vadd.f32 %v5805, 1.0
    %v5808 = vrcp.pop %v5806
    %v5809 = vmul.f32 1.0, %v5808
    %v5810 = vrcp.pop %v5807
    %v5811 = vmul.f32 1.0, %v5810
    %v5812 = vxor.u32 %v5794, 2147483648
    %v5813 = vxor.u32 %v5795, 2147483648
    %v5814 = vmul.f32 %v5812, 1.442695
    %v5815 = vpow.pop %v5814
    %v5816 = vmul.f32 %v5813, 1.442695
    %v5817 = vpow.pop %v5816
    %v5818 = vadd.f32 %v5815, 1.0
    %v5819 = vadd.f32 %v5817, 1.0
    %v5820 = vrcp.pop %v5818
    %v5821 = vmul.f32 1.0, %v5820
    %v5822 = vrcp.pop %v5819
    %v5823 = vmul.f32 1.0, %v5822
    %v5824 = vtanh.pop %v5796
    %v5825 = vtanh.pop %v5797
    %v5826 = vxor.u32 %v5798, 2147483648
    %v5827 = vxor.u32 %v5799, 2147483648
    %v5828 = vmul.f32 %v5826, 1.442695
    %v5829 = vpow.pop %v5828
    %v5830 = vmul.f32 %v5827, 1.442695
    %v5831 = vpow.pop %v5830
    %v5832 = vadd.f32 %v5829, 1.0
    %v5833 = vadd.f32 %v5831, 1.0
    %v5834 = vrcp.pop %v5832
    %v5835 = vmul.f32 1.0, %v5834
    %v5836 = vrcp.pop %v5833
    %v5837 = vmul.f32 1.0, %v5836
    %v5838 = vmul.f32 %v5821, %v5608
    %v5839 = vmul.f32 %v5823, %v5609
    %v5840 = vmul.f32 %v5809, %v5824
    %v5841 = vmul.f32 %v5811, %v5825
    %v5842 = vadd.f32 %v5838, %v5840
    %v5843 = vadd.f32 %v5839, %v5841
    %v5844 = vtanh.pop %v5842
    %v5845 = vtanh.pop %v5843
    %v5846 = vmul.f32 %v5835, %v5844
    %v5847 = vmul.f32 %v5837, %v5845
    %s5848 = scalar_lea.vmem [#allocation5], 64
    %5849 = vst [vmem:[%s5848] sm:$0xff] %v5846
    %5850 = vst [vmem:[%s5848 + $0x8] sm:$0xff] %v5847
    %s5851 = scalar_lea.vmem [#allocation3], 192
    %v5852 = vld [vmem:[%s5851] sm:$0xff]
    %v5853 = vld [vmem:[%s5851 + $0x8] sm:$0xff]
    %v5854 = vld [vmem:[%s5851 + $0x10] sm:$0xff]
    %v5855 = vld [vmem:[%s5851 + $0x18] sm:$0xff]
    %v5856 = vld [vmem:[%s5851 + $0x20] sm:$0xff]
    %v5857 = vld [vmem:[%s5851 + $0x28] sm:$0xff]
    %v5858 = vld [vmem:[%s5851 + $0x30] sm:$0xff]
    %v5859 = vld [vmem:[%s5851 + $0x38] sm:$0xff]
    %v5860 = vpack.c.bf16 %v5846, %v5846
    %v5861 = vpack.c.bf16 %v5847, %v5847
    %5862 = vmatprep.subr.bf16.mxu0 %v4727
    %5863 = vmatpush1.bf16.msra.mxu0 %v4726
    %5864 = vmatprep.subr.bf16.mxu0 %v4719
    %5865 = vmatpush1.bf16.msra.mxu0 %v4718
    %5866 = vmatprep.subr.bf16.mxu0 %v4711
    %5867 = vmatpush1.bf16.msra.mxu0 %v4710
    %5868 = vmatprep.subr.bf16.mxu0 %v4703
    %5869 = vmatpush1.bf16.msra.mxu0 %v4702
    %5870 = vmatprep.subr.bf16.mxu0 %v4695
    %5871 = vmatpush1.bf16.msra.mxu0 %v4694
    %5872 = vmatprep.subr.bf16.mxu0 %v4687
    %5873 = vmatpush1.bf16.msra.mxu0 %v4686
    %5874 = vmatprep.subr.bf16.mxu0 %v4679
    %5875 = vmatpush1.bf16.msra.mxu0 %v4678
    %5876 = vmatprep.subr.bf16.mxu0 %v4671
    %5877 = vmatpush1.bf16.msra.mxu0 %v4670
    %5878 = vmatprep.subr.bf16.mxu0 %v4791
    %5879 = vmatpush2.bf16.msra.mxu0 %v4790
    %5880 = vmatprep.subr.bf16.mxu0 %v4783
    %5881 = vmatpush2.bf16.msra.mxu0 %v4782
    %5882 = vmatprep.subr.bf16.mxu0 %v4775
    %5883 = vmatpush2.bf16.msra.mxu0 %v4774
    %5884 = vmatprep.subr.bf16.mxu0 %v4767
    %5885 = vmatpush2.bf16.msra.mxu0 %v4766
    %5886 = vmatprep.subr.bf16.mxu0 %v4759
    %5887 = vmatpush2.bf16.msra.mxu0 %v4758
    %5888 = vmatprep.subr.bf16.mxu0 %v4751
    %5889 = vmatpush2.bf16.msra.mxu0 %v4750
    %5890 = vmatprep.subr.bf16.mxu0 %v4743
    %5891 = vmatpush2.bf16.msra.mxu0 %v4742
    %5892 = vmatprep.subr.bf16.mxu0 %v4735
    %5893 = vmatpush2.bf16.msra.mxu0 %v4734
    %5894 = vmatprep.mubr.bf16.mxu0 %v5861
    %5895 = vmatmul.mubr.bf16.gmra.mxu0 %v5860
    %v5896 = vpop.f32.mrf.mxu0
    %v5897 = vadd.f32 0.0, %v5896
    %v5898 = vpop.f32.mrf.mxu0
    %v5899 = vadd.f32 0.0, %v5898
    %v5900 = vpop.f32.mrf.mxu0
    %v5901 = vpop.f32.mrf.mxu0
    %5902 = vdwg.mxu0
    %5903 = vmatprep.subr.bf16.mxu0 %v4729
    %5904 = vmatpush1.bf16.msra.mxu0 %v4728
    %5905 = vmatprep.subr.bf16.mxu0 %v4721
    %5906 = vmatpush1.bf16.msra.mxu0 %v4720
    %5907 = vmatprep.subr.bf16.mxu0 %v4713
    %5908 = vmatpush1.bf16.msra.mxu0 %v4712
    %5909 = vmatprep.subr.bf16.mxu0 %v4705
    %5910 = vmatpush1.bf16.msra.mxu0 %v4704
    %5911 = vmatprep.subr.bf16.mxu0 %v4697
    %5912 = vmatpush1.bf16.msra.mxu0 %v4696
    %5913 = vmatprep.subr.bf16.mxu0 %v4689
    %5914 = vmatpush1.bf16.msra.mxu0 %v4688
    %5915 = vmatprep.subr.bf16.mxu0 %v4681
    %5916 = vmatpush1.bf16.msra.mxu0 %v4680
    %5917 = vmatprep.subr.bf16.mxu0 %v4673
    %5918 = vmatpush1.bf16.msra.mxu0 %v4672
    %5919 = vmatprep.subr.bf16.mxu0 %v4793
    %5920 = vmatpush2.bf16.msra.mxu0 %v4792
    %5921 = vmatprep.subr.bf16.mxu0 %v4785
    %5922 = vmatpush2.bf16.msra.mxu0 %v4784
    %5923 = vmatprep.subr.bf16.mxu0 %v4777
    %5924 = vmatpush2.bf16.msra.mxu0 %v4776
    %5925 = vmatprep.subr.bf16.mxu0 %v4769
    %5926 = vmatpush2.bf16.msra.mxu0 %v4768
    %5927 = vmatprep.subr.bf16.mxu0 %v4761
    %5928 = vmatpush2.bf16.msra.mxu0 %v4760
    %5929 = vmatprep.subr.bf16.mxu0 %v4753
    %5930 = vmatpush2.bf16.msra.mxu0 %v4752
    %5931 = vmatprep.subr.bf16.mxu0 %v4745
    %5932 = vmatpush2.bf16.msra.mxu0 %v4744
    %5933 = vmatprep.subr.bf16.mxu0 %v4737
    %5934 = vmatpush2.bf16.msra.mxu0 %v4736
    %5935 = vmatprep.mubr.bf16.mxu0 %v5861
    %5936 = vmatmul.mubr.bf16.gmra.mxu0 %v5860
    %v5937 = vpop.f32.mrf.mxu0
    %v5938 = vadd.f32 0.0, %v5937
    %v5939 = vpop.f32.mrf.mxu0
    %v5940 = vadd.f32 0.0, %v5939
    %v5941 = vpop.f32.mrf.mxu0
    %v5942 = vpop.f32.mrf.mxu0
    %5943 = vdwg.mxu0
    %5944 = vmatprep.subr.bf16.mxu0 %v4731
    %5945 = vmatpush1.bf16.msra.mxu0 %v4730
    %5946 = vmatprep.subr.bf16.mxu0 %v4723
    %5947 = vmatpush1.bf16.msra.mxu0 %v4722
    %5948 = vmatprep.subr.bf16.mxu0 %v4715
    %5949 = vmatpush1.bf16.msra.mxu0 %v4714
    %5950 = vmatprep.subr.bf16.mxu0 %v4707
    %5951 = vmatpush1.bf16.msra.mxu0 %v4706
    %5952 = vmatprep.subr.bf16.mxu0 %v4699
    %5953 = vmatpush1.bf16.msra.mxu0 %v4698
    %5954 = vmatprep.subr.bf16.mxu0 %v4691
    %5955 = vmatpush1.bf16.msra.mxu0 %v4690
    %5956 = vmatprep.subr.bf16.mxu0 %v4683
    %5957 = vmatpush1.bf16.msra.mxu0 %v4682
    %5958 = vmatprep.subr.bf16.mxu0 %v4675
    %5959 = vmatpush1.bf16.msra.mxu0 %v4674
    %5960 = vmatprep.subr.bf16.mxu0 %v4795
    %5961 = vmatpush2.bf16.msra.mxu0 %v4794
    %5962 = vmatprep.subr.bf16.mxu0 %v4787
    %5963 = vmatpush2.bf16.msra.mxu0 %v4786
    %5964 = vmatprep.subr.bf16.mxu0 %v4779
    %5965 = vmatpush2.bf16.msra.mxu0 %v4778
    %5966 = vmatprep.subr.bf16.mxu0 %v4771
    %5967 = vmatpush2.bf16.msra.mxu0 %v4770
    %5968 = vmatprep.subr.bf16.mxu0 %v4763
    %5969 = vmatpush2.bf16.msra.mxu0 %v4762
    %5970 = vmatprep.subr.bf16.mxu0 %v4755
    %5971 = vmatpush2.bf16.msra.mxu0 %v4754
    %5972 = vmatprep.subr.bf16.mxu0 %v4747
    %5973 = vmatpush2.bf16.msra.mxu0 %v4746
    %5974 = vmatprep.subr.bf16.mxu0 %v4739
    %5975 = vmatpush2.bf16.msra.mxu0 %v4738
    %5976 = vmatprep.mubr.bf16.mxu0 %v5861
    %5977 = vmatmul.mubr.bf16.gmra.mxu0 %v5860
    %v5978 = vpop.f32.mrf.mxu0
    %v5979 = vadd.f32 0.0, %v5978
    %v5980 = vpop.f32.mrf.mxu0
    %v5981 = vadd.f32 0.0, %v5980
    %v5982 = vpop.f32.mrf.mxu0
    %v5983 = vpop.f32.mrf.mxu0
    %5984 = vdwg.mxu0
    %5985 = vmatprep.subr.bf16.mxu0 %v4733
    %5986 = vmatpush1.bf16.msra.mxu0 %v4732
    %5987 = vmatprep.subr.bf16.mxu0 %v4725
    %5988 = vmatpush1.bf16.msra.mxu0 %v4724
    %5989 = vmatprep.subr.bf16.mxu0 %v4717
    %5990 = vmatpush1.bf16.msra.mxu0 %v4716
    %5991 = vmatprep.subr.bf16.mxu0 %v4709
    %5992 = vmatpush1.bf16.msra.mxu0 %v4708
    %5993 = vmatprep.subr.bf16.mxu0 %v4701
    %5994 = vmatpush1.bf16.msra.mxu0 %v4700
    %5995 = vmatprep.subr.bf16.mxu0 %v4693
    %5996 = vmatpush1.bf16.msra.mxu0 %v4692
    %5997 = vmatprep.subr.bf16.mxu0 %v4685
    %5998 = vmatpush1.bf16.msra.mxu0 %v4684
    %5999 = vmatprep.subr.bf16.mxu0 %v4677
    %6000 = vmatpush1.bf16.msra.mxu0 %v4676
    %6001 = vmatprep.subr.bf16.mxu0 %v4797
    %6002 = vmatpush2.bf16.msra.mxu0 %v4796
    %6003 = vmatprep.subr.bf16.mxu0 %v4789
    %6004 = vmatpush2.bf16.msra.mxu0 %v4788
    %6005 = vmatprep.subr.bf16.mxu0 %v4781
    %6006 = vmatpush2.bf16.msra.mxu0 %v4780
    %6007 = vmatprep.subr.bf16.mxu0 %v4773
    %6008 = vmatpush2.bf16.msra.mxu0 %v4772
    %6009 = vmatprep.subr.bf16.mxu0 %v4765
    %6010 = vmatpush2.bf16.msra.mxu0 %v4764
    %6011 = vmatprep.subr.bf16.mxu0 %v4757
    %6012 = vmatpush2.bf16.msra.mxu0 %v4756
    %6013 = vmatprep.subr.bf16.mxu0 %v4749
    %6014 = vmatpush2.bf16.msra.mxu0 %v4748
    %6015 = vmatprep.subr.bf16.mxu0 %v4741
    %6016 = vmatpush2.bf16.msra.mxu0 %v4740
    %6017 = vmatprep.mubr.bf16.mxu0 %v5861
    %6018 = vmatmul.mubr.bf16.gmra.mxu0 %v5860
    %v6019 = vpop.f32.mrf.mxu0
    %v6020 = vadd.f32 0.0, %v6019
    %v6021 = vpop.f32.mrf.mxu0
    %v6022 = vadd.f32 0.0, %v6021
    %v6023 = vpop.f32.mrf.mxu0
    %v6024 = vpop.f32.mrf.mxu0
    %6025 = vdwg.mxu0
    %v6026 = vadd.f32 %v5852, %v5897
    %v6027 = vadd.f32 %v5853, %v5899
    %v6028 = vadd.f32 %v5854, %v5938
    %v6029 = vadd.f32 %v5855, %v5940
    %v6030 = vadd.f32 %v5856, %v5979
    %v6031 = vadd.f32 %v5857, %v5981
    %v6032 = vadd.f32 %v5858, %v6020
    %v6033 = vadd.f32 %v5859, %v6022
    %v6034 = vxor.u32 %v6026, 2147483648
    %v6035 = vxor.u32 %v6027, 2147483648
    %v6036 = vmul.f32 %v6034, 1.442695
    %v6037 = vpow.pop %v6036
    %v6038 = vmul.f32 %v6035, 1.442695
    %v6039 = vpow.pop %v6038
    %v6040 = vadd.f32 %v6037, 1.0
    %v6041 = vadd.f32 %v6039, 1.0
    %v6042 = vrcp.pop %v6040
    %v6043 = vmul.f32 1.0, %v6042
    %v6044 = vrcp.pop %v6041
    %v6045 = vmul.f32 1.0, %v6044
    %v6046 = vxor.u32 %v6028, 2147483648
    %v6047 = vxor.u32 %v6029, 2147483648
    %v6048 = vmul.f32 %v6046, 1.442695
    %v6049 = vpow.pop %v6048
    %v6050 = vmul.f32 %v6047, 1.442695
    %v6051 = vpow.pop %v6050
    %v6052 = vadd.f32 %v6049, 1.0
    %v6053 = vadd.f32 %v6051, 1.0
    %v6054 = vrcp.pop %v6052
    %v6055 = vmul.f32 1.0, %v6054
    %v6056 = vrcp.pop %v6053
    %v6057 = vmul.f32 1.0, %v6056
    %v6058 = vtanh.pop %v6030
    %v6059 = vtanh.pop %v6031
    %v6060 = vxor.u32 %v6032, 2147483648
    %v6061 = vxor.u32 %v6033, 2147483648
    %v6062 = vmul.f32 %v6060, 1.442695
    %v6063 = vpow.pop %v6062
    %v6064 = vmul.f32 %v6061, 1.442695
    %v6065 = vpow.pop %v6064
    %v6066 = vadd.f32 %v6063, 1.0
    %v6067 = vadd.f32 %v6065, 1.0
    %v6068 = vrcp.pop %v6066
    %v6069 = vmul.f32 1.0, %v6068
    %v6070 = vrcp.pop %v6067
    %v6071 = vmul.f32 1.0, %v6070
    %v6072 = vmul.f32 %v6055, %v5842
    %v6073 = vmul.f32 %v6057, %v5843
    %v6074 = vmul.f32 %v6043, %v6058
    %v6075 = vmul.f32 %v6045, %v6059
    %v6076 = vadd.f32 %v6072, %v6074
    %v6077 = vadd.f32 %v6073, %v6075
    %v6078 = vtanh.pop %v6076
    %v6079 = vtanh.pop %v6077
    %v6080 = vmul.f32 %v6069, %v6078
    %v6081 = vmul.f32 %v6071, %v6079
    %s6082 = scalar_lea.vmem [#allocation5], 48
    %6083 = vst [vmem:[%s6082] sm:$0xff] %v6080
    %6084 = vst [vmem:[%s6082 + $0x8] sm:$0xff] %v6081
    %s6085 = scalar_lea.vmem [#allocation3], 128
    %v6086 = vld [vmem:[%s6085] sm:$0xff]
    %v6087 = vld [vmem:[%s6085 + $0x8] sm:$0xff]
    %v6088 = vld [vmem:[%s6085 + $0x10] sm:$0xff]
    %v6089 = vld [vmem:[%s6085 + $0x18] sm:$0xff]
    %v6090 = vld [vmem:[%s6085 + $0x20] sm:$0xff]
    %v6091 = vld [vmem:[%s6085 + $0x28] sm:$0xff]
    %v6092 = vld [vmem:[%s6085 + $0x30] sm:$0xff]
    %v6093 = vld [vmem:[%s6085 + $0x38] sm:$0xff]
    %v6094 = vpack.c.bf16 %v6080, %v6080
    %v6095 = vpack.c.bf16 %v6081, %v6081
    %6096 = vmatprep.subr.bf16.mxu0 %v4727
    %6097 = vmatpush1.bf16.msra.mxu0 %v4726
    %6098 = vmatprep.subr.bf16.mxu0 %v4719
    %6099 = vmatpush1.bf16.msra.mxu0 %v4718
    %6100 = vmatprep.subr.bf16.mxu0 %v4711
    %6101 = vmatpush1.bf16.msra.mxu0 %v4710
    %6102 = vmatprep.subr.bf16.mxu0 %v4703
    %6103 = vmatpush1.bf16.msra.mxu0 %v4702
    %6104 = vmatprep.subr.bf16.mxu0 %v4695
    %6105 = vmatpush1.bf16.msra.mxu0 %v4694
    %6106 = vmatprep.subr.bf16.mxu0 %v4687
    %6107 = vmatpush1.bf16.msra.mxu0 %v4686
    %6108 = vmatprep.subr.bf16.mxu0 %v4679
    %6109 = vmatpush1.bf16.msra.mxu0 %v4678
    %6110 = vmatprep.subr.bf16.mxu0 %v4671
    %6111 = vmatpush1.bf16.msra.mxu0 %v4670
    %6112 = vmatprep.subr.bf16.mxu0 %v4791
    %6113 = vmatpush2.bf16.msra.mxu0 %v4790
    %6114 = vmatprep.subr.bf16.mxu0 %v4783
    %6115 = vmatpush2.bf16.msra.mxu0 %v4782
    %6116 = vmatprep.subr.bf16.mxu0 %v4775
    %6117 = vmatpush2.bf16.msra.mxu0 %v4774
    %6118 = vmatprep.subr.bf16.mxu0 %v4767
    %6119 = vmatpush2.bf16.msra.mxu0 %v4766
    %6120 = vmatprep.subr.bf16.mxu0 %v4759
    %6121 = vmatpush2.bf16.msra.mxu0 %v4758
    %6122 = vmatprep.subr.bf16.mxu0 %v4751
    %6123 = vmatpush2.bf16.msra.mxu0 %v4750
    %6124 = vmatprep.subr.bf16.mxu0 %v4743
    %6125 = vmatpush2.bf16.msra.mxu0 %v4742
    %6126 = vmatprep.subr.bf16.mxu0 %v4735
    %6127 = vmatpush2.bf16.msra.mxu0 %v4734
    %6128 = vmatprep.mubr.bf16.mxu0 %v6095
    %6129 = vmatmul.mubr.bf16.gmra.mxu0 %v6094
    %v6130 = vpop.f32.mrf.mxu0
    %v6131 = vadd.f32 0.0, %v6130
    %v6132 = vpop.f32.mrf.mxu0
    %v6133 = vadd.f32 0.0, %v6132
    %v6134 = vpop.f32.mrf.mxu0
    %v6135 = vpop.f32.mrf.mxu0
    %6136 = vdwg.mxu0
    %6137 = vmatprep.subr.bf16.mxu0 %v4729
    %6138 = vmatpush1.bf16.msra.mxu0 %v4728
    %6139 = vmatprep.subr.bf16.mxu0 %v4721
    %6140 = vmatpush1.bf16.msra.mxu0 %v4720
    %6141 = vmatprep.subr.bf16.mxu0 %v4713
    %6142 = vmatpush1.bf16.msra.mxu0 %v4712
    %6143 = vmatprep.subr.bf16.mxu0 %v4705
    %6144 = vmatpush1.bf16.msra.mxu0 %v4704
    %6145 = vmatprep.subr.bf16.mxu0 %v4697
    %6146 = vmatpush1.bf16.msra.mxu0 %v4696
    %6147 = vmatprep.subr.bf16.mxu0 %v4689
    %6148 = vmatpush1.bf16.msra.mxu0 %v4688
    %6149 = vmatprep.subr.bf16.mxu0 %v4681
    %6150 = vmatpush1.bf16.msra.mxu0 %v4680
    %6151 = vmatprep.subr.bf16.mxu0 %v4673
    %6152 = vmatpush1.bf16.msra.mxu0 %v4672
    %6153 = vmatprep.subr.bf16.mxu0 %v4793
    %6154 = vmatpush2.bf16.msra.mxu0 %v4792
    %6155 = vmatprep.subr.bf16.mxu0 %v4785
    %6156 = vmatpush2.bf16.msra.mxu0 %v4784
    %6157 = vmatprep.subr.bf16.mxu0 %v4777
    %6158 = vmatpush2.bf16.msra.mxu0 %v4776
    %6159 = vmatprep.subr.bf16.mxu0 %v4769
    %6160 = vmatpush2.bf16.msra.mxu0 %v4768
    %6161 = vmatprep.subr.bf16.mxu0 %v4761
    %6162 = vmatpush2.bf16.msra.mxu0 %v4760
    %6163 = vmatprep.subr.bf16.mxu0 %v4753
    %6164 = vmatpush2.bf16.msra.mxu0 %v4752
    %6165 = vmatprep.subr.bf16.mxu0 %v4745
    %6166 = vmatpush2.bf16.msra.mxu0 %v4744
    %6167 = vmatprep.subr.bf16.mxu0 %v4737
    %6168 = vmatpush2.bf16.msra.mxu0 %v4736
    %6169 = vmatprep.mubr.bf16.mxu0 %v6095
    %6170 = vmatmul.mubr.bf16.gmra.mxu0 %v6094
    %v6171 = vpop.f32.mrf.mxu0
    %v6172 = vadd.f32 0.0, %v6171
    %v6173 = vpop.f32.mrf.mxu0
    %v6174 = vadd.f32 0.0, %v6173
    %v6175 = vpop.f32.mrf.mxu0
    %v6176 = vpop.f32.mrf.mxu0
    %6177 = vdwg.mxu0
    %6178 = vmatprep.subr.bf16.mxu0 %v4731
    %6179 = vmatpush1.bf16.msra.mxu0 %v4730
    %6180 = vmatprep.subr.bf16.mxu0 %v4723
    %6181 = vmatpush1.bf16.msra.mxu0 %v4722
    %6182 = vmatprep.subr.bf16.mxu0 %v4715
    %6183 = vmatpush1.bf16.msra.mxu0 %v4714
    %6184 = vmatprep.subr.bf16.mxu0 %v4707
    %6185 = vmatpush1.bf16.msra.mxu0 %v4706
    %6186 = vmatprep.subr.bf16.mxu0 %v4699
    %6187 = vmatpush1.bf16.msra.mxu0 %v4698
    %6188 = vmatprep.subr.bf16.mxu0 %v4691
    %6189 = vmatpush1.bf16.msra.mxu0 %v4690
    %6190 = vmatprep.subr.bf16.mxu0 %v4683
    %6191 = vmatpush1.bf16.msra.mxu0 %v4682
    %6192 = vmatprep.subr.bf16.mxu0 %v4675
    %6193 = vmatpush1.bf16.msra.mxu0 %v4674
    %6194 = vmatprep.subr.bf16.mxu0 %v4795
    %6195 = vmatpush2.bf16.msra.mxu0 %v4794
    %6196 = vmatprep.subr.bf16.mxu0 %v4787
    %6197 = vmatpush2.bf16.msra.mxu0 %v4786
    %6198 = vmatprep.subr.bf16.mxu0 %v4779
    %6199 = vmatpush2.bf16.msra.mxu0 %v4778
    %6200 = vmatprep.subr.bf16.mxu0 %v4771
    %6201 = vmatpush2.bf16.msra.mxu0 %v4770
    %6202 = vmatprep.subr.bf16.mxu0 %v4763
    %6203 = vmatpush2.bf16.msra.mxu0 %v4762
    %6204 = vmatprep.subr.bf16.mxu0 %v4755
    %6205 = vmatpush2.bf16.msra.mxu0 %v4754
    %6206 = vmatprep.subr.bf16.mxu0 %v4747
    %6207 = vmatpush2.bf16.msra.mxu0 %v4746
    %6208 = vmatprep.subr.bf16.mxu0 %v4739
    %6209 = vmatpush2.bf16.msra.mxu0 %v4738
    %6210 = vmatprep.mubr.bf16.mxu0 %v6095
    %6211 = vmatmul.mubr.bf16.gmra.mxu0 %v6094
    %v6212 = vpop.f32.mrf.mxu0
    %v6213 = vadd.f32 0.0, %v6212
    %v6214 = vpop.f32.mrf.mxu0
    %v6215 = vadd.f32 0.0, %v6214
    %v6216 = vpop.f32.mrf.mxu0
    %v6217 = vpop.f32.mrf.mxu0
    %6218 = vdwg.mxu0
    %6219 = vmatprep.subr.bf16.mxu0 %v4733
    %6220 = vmatpush1.bf16.msra.mxu0 %v4732
    %6221 = vmatprep.subr.bf16.mxu0 %v4725
    %6222 = vmatpush1.bf16.msra.mxu0 %v4724
    %6223 = vmatprep.subr.bf16.mxu0 %v4717
    %6224 = vmatpush1.bf16.msra.mxu0 %v4716
    %6225 = vmatprep.subr.bf16.mxu0 %v4709
    %6226 = vmatpush1.bf16.msra.mxu0 %v4708
    %6227 = vmatprep.subr.bf16.mxu0 %v4701
    %6228 = vmatpush1.bf16.msra.mxu0 %v4700
    %6229 = vmatprep.subr.bf16.mxu0 %v4693
    %6230 = vmatpush1.bf16.msra.mxu0 %v4692
    %6231 = vmatprep.subr.bf16.mxu0 %v4685
    %6232 = vmatpush1.bf16.msra.mxu0 %v4684
    %6233 = vmatprep.subr.bf16.mxu0 %v4677
    %6234 = vmatpush1.bf16.msra.mxu0 %v4676
    %6235 = vmatprep.subr.bf16.mxu0 %v4797
    %6236 = vmatpush2.bf16.msra.mxu0 %v4796
    %6237 = vmatprep.subr.bf16.mxu0 %v4789
    %6238 = vmatpush2.bf16.msra.mxu0 %v4788
    %6239 = vmatprep.subr.bf16.mxu0 %v4781
    %6240 = vmatpush2.bf16.msra.mxu0 %v4780
    %6241 = vmatprep.subr.bf16.mxu0 %v4773
    %6242 = vmatpush2.bf16.msra.mxu0 %v4772
    %6243 = vmatprep.subr.bf16.mxu0 %v4765
    %6244 = vmatpush2.bf16.msra.mxu0 %v4764
    %6245 = vmatprep.subr.bf16.mxu0 %v4757
    %6246 = vmatpush2.bf16.msra.mxu0 %v4756
    %6247 = vmatprep.subr.bf16.mxu0 %v4749
    %6248 = vmatpush2.bf16.msra.mxu0 %v4748
    %6249 = vmatprep.subr.bf16.mxu0 %v4741
    %6250 = vmatpush2.bf16.msra.mxu0 %v4740
    %6251 = vmatprep.mubr.bf16.mxu0 %v6095
    %6252 = vmatmul.mubr.bf16.gmra.mxu0 %v6094
    %v6253 = vpop.f32.mrf.mxu0
    %v6254 = vadd.f32 0.0, %v6253
    %v6255 = vpop.f32.mrf.mxu0
    %v6256 = vadd.f32 0.0, %v6255
    %v6257 = vpop.f32.mrf.mxu0
    %v6258 = vpop.f32.mrf.mxu0
    %6259 = vdwg.mxu0
    %v6260 = vadd.f32 %v6086, %v6131
    %v6261 = vadd.f32 %v6087, %v6133
    %v6262 = vadd.f32 %v6088, %v6172
    %v6263 = vadd.f32 %v6089, %v6174
    %v6264 = vadd.f32 %v6090, %v6213
    %v6265 = vadd.f32 %v6091, %v6215
    %v6266 = vadd.f32 %v6092, %v6254
    %v6267 = vadd.f32 %v6093, %v6256
    %v6268 = vxor.u32 %v6260, 2147483648
    %v6269 = vxor.u32 %v6261, 2147483648
    %v6270 = vmul.f32 %v6268, 1.442695
    %v6271 = vpow.pop %v6270
    %v6272 = vmul.f32 %v6269, 1.442695
    %v6273 = vpow.pop %v6272
    %v6274 = vadd.f32 %v6271, 1.0
    %v6275 = vadd.f32 %v6273, 1.0
    %v6276 = vrcp.pop %v6274
    %v6277 = vmul.f32 1.0, %v6276
    %v6278 = vrcp.pop %v6275
    %v6279 = vmul.f32 1.0, %v6278
    %v6280 = vxor.u32 %v6262, 2147483648
    %v6281 = vxor.u32 %v6263, 2147483648
    %v6282 = vmul.f32 %v6280, 1.442695
    %v6283 = vpow.pop %v6282
    %v6284 = vmul.f32 %v6281, 1.442695
    %v6285 = vpow.pop %v6284
    %v6286 = vadd.f32 %v6283, 1.0
    %v6287 = vadd.f32 %v6285, 1.0
    %v6288 = vrcp.pop %v6286
    %v6289 = vmul.f32 1.0, %v6288
    %v6290 = vrcp.pop %v6287
    %v6291 = vmul.f32 1.0, %v6290
    %v6292 = vtanh.pop %v6264
    %v6293 = vtanh.pop %v6265
    %v6294 = vxor.u32 %v6266, 2147483648
    %v6295 = vxor.u32 %v6267, 2147483648
    %v6296 = vmul.f32 %v6294, 1.442695
    %v6297 = vpow.pop %v6296
    %v6298 = vmul.f32 %v6295, 1.442695
    %v6299 = vpow.pop %v6298
    %v6300 = vadd.f32 %v6297, 1.0
    %v6301 = vadd.f32 %v6299, 1.0
    %v6302 = vrcp.pop %v6300
    %v6303 = vmul.f32 1.0, %v6302
    %v6304 = vrcp.pop %v6301
    %v6305 = vmul.f32 1.0, %v6304
    %v6306 = vmul.f32 %v6289, %v6076
    %v6307 = vmul.f32 %v6291, %v6077
    %v6308 = vmul.f32 %v6277, %v6292
    %v6309 = vmul.f32 %v6279, %v6293
    %v6310 = vadd.f32 %v6306, %v6308
    %v6311 = vadd.f32 %v6307, %v6309
    %v6312 = vtanh.pop %v6310
    %v6313 = vtanh.pop %v6311
    %v6314 = vmul.f32 %v6303, %v6312
    %v6315 = vmul.f32 %v6305, %v6313
    %s6316 = scalar_lea.vmem [#allocation5], 32
    %6317 = vst [vmem:[%s6316] sm:$0xff] %v6314
    %6318 = vst [vmem:[%s6316 + $0x8] sm:$0xff] %v6315
    %s6319 = scalar_lea.vmem [#allocation3], 64
    %v6320 = vld [vmem:[%s6319] sm:$0xff]
    %v6321 = vld [vmem:[%s6319 + $0x8] sm:$0xff]
    %v6322 = vld [vmem:[%s6319 + $0x10] sm:$0xff]
    %v6323 = vld [vmem:[%s6319 + $0x18] sm:$0xff]
    %v6324 = vld [vmem:[%s6319 + $0x20] sm:$0xff]
    %v6325 = vld [vmem:[%s6319 + $0x28] sm:$0xff]
    %v6326 = vld [vmem:[%s6319 + $0x30] sm:$0xff]
    %v6327 = vld [vmem:[%s6319 + $0x38] sm:$0xff]
    %v6328 = vpack.c.bf16 %v6314, %v6314
    %v6329 = vpack.c.bf16 %v6315, %v6315
    %6330 = vmatprep.subr.bf16.mxu0 %v4727
    %6331 = vmatpush1.bf16.msra.mxu0 %v4726
    %6332 = vmatprep.subr.bf16.mxu0 %v4719
    %6333 = vmatpush1.bf16.msra.mxu0 %v4718
    %6334 = vmatprep.subr.bf16.mxu0 %v4711
    %6335 = vmatpush1.bf16.msra.mxu0 %v4710
    %6336 = vmatprep.subr.bf16.mxu0 %v4703
    %6337 = vmatpush1.bf16.msra.mxu0 %v4702
    %6338 = vmatprep.subr.bf16.mxu0 %v4695
    %6339 = vmatpush1.bf16.msra.mxu0 %v4694
    %6340 = vmatprep.subr.bf16.mxu0 %v4687
    %6341 = vmatpush1.bf16.msra.mxu0 %v4686
    %6342 = vmatprep.subr.bf16.mxu0 %v4679
    %6343 = vmatpush1.bf16.msra.mxu0 %v4678
    %6344 = vmatprep.subr.bf16.mxu0 %v4671
    %6345 = vmatpush1.bf16.msra.mxu0 %v4670
    %6346 = vmatprep.subr.bf16.mxu0 %v4791
    %6347 = vmatpush2.bf16.msra.mxu0 %v4790
    %6348 = vmatprep.subr.bf16.mxu0 %v4783
    %6349 = vmatpush2.bf16.msra.mxu0 %v4782
    %6350 = vmatprep.subr.bf16.mxu0 %v4775
    %6351 = vmatpush2.bf16.msra.mxu0 %v4774
    %6352 = vmatprep.subr.bf16.mxu0 %v4767
    %6353 = vmatpush2.bf16.msra.mxu0 %v4766
    %6354 = vmatprep.subr.bf16.mxu0 %v4759
    %6355 = vmatpush2.bf16.msra.mxu0 %v4758
    %6356 = vmatprep.subr.bf16.mxu0 %v4751
    %6357 = vmatpush2.bf16.msra.mxu0 %v4750
    %6358 = vmatprep.subr.bf16.mxu0 %v4743
    %6359 = vmatpush2.bf16.msra.mxu0 %v4742
    %6360 = vmatprep.subr.bf16.mxu0 %v4735
    %6361 = vmatpush2.bf16.msra.mxu0 %v4734
    %6362 = vmatprep.mubr.bf16.mxu0 %v6329
    %6363 = vmatmul.mubr.bf16.gmra.mxu0 %v6328
    %v6364 = vpop.f32.mrf.mxu0
    %v6365 = vadd.f32 0.0, %v6364
    %v6366 = vpop.f32.mrf.mxu0
    %v6367 = vadd.f32 0.0, %v6366
    %v6368 = vpop.f32.mrf.mxu0
    %v6369 = vpop.f32.mrf.mxu0
    %6370 = vdwg.mxu0
    %6371 = vmatprep.subr.bf16.mxu0 %v4729
    %6372 = vmatpush1.bf16.msra.mxu0 %v4728
    %6373 = vmatprep.subr.bf16.mxu0 %v4721
    %6374 = vmatpush1.bf16.msra.mxu0 %v4720
    %6375 = vmatprep.subr.bf16.mxu0 %v4713
    %6376 = vmatpush1.bf16.msra.mxu0 %v4712
    %6377 = vmatprep.subr.bf16.mxu0 %v4705
    %6378 = vmatpush1.bf16.msra.mxu0 %v4704
    %6379 = vmatprep.subr.bf16.mxu0 %v4697
    %6380 = vmatpush1.bf16.msra.mxu0 %v4696
    %6381 = vmatprep.subr.bf16.mxu0 %v4689
    %6382 = vmatpush1.bf16.msra.mxu0 %v4688
    %6383 = vmatprep.subr.bf16.mxu0 %v4681
    %6384 = vmatpush1.bf16.msra.mxu0 %v4680
    %6385 = vmatprep.subr.bf16.mxu0 %v4673
    %6386 = vmatpush1.bf16.msra.mxu0 %v4672
    %6387 = vmatprep.subr.bf16.mxu0 %v4793
    %6388 = vmatpush2.bf16.msra.mxu0 %v4792
    %6389 = vmatprep.subr.bf16.mxu0 %v4785
    %6390 = vmatpush2.bf16.msra.mxu0 %v4784
    %6391 = vmatprep.subr.bf16.mxu0 %v4777
    %6392 = vmatpush2.bf16.msra.mxu0 %v4776
    %6393 = vmatprep.subr.bf16.mxu0 %v4769
    %6394 = vmatpush2.bf16.msra.mxu0 %v4768
    %6395 = vmatprep.subr.bf16.mxu0 %v4761
    %6396 = vmatpush2.bf16.msra.mxu0 %v4760
    %6397 = vmatprep.subr.bf16.mxu0 %v4753
    %6398 = vmatpush2.bf16.msra.mxu0 %v4752
    %6399 = vmatprep.subr.bf16.mxu0 %v4745
    %6400 = vmatpush2.bf16.msra.mxu0 %v4744
    %6401 = vmatprep.subr.bf16.mxu0 %v4737
    %6402 = vmatpush2.bf16.msra.mxu0 %v4736
    %6403 = vmatprep.mubr.bf16.mxu0 %v6329
    %6404 = vmatmul.mubr.bf16.gmra.mxu0 %v6328
    %v6405 = vpop.f32.mrf.mxu0
    %v6406 = vadd.f32 0.0, %v6405
    %v6407 = vpop.f32.mrf.mxu0
    %v6408 = vadd.f32 0.0, %v6407
    %v6409 = vpop.f32.mrf.mxu0
    %v6410 = vpop.f32.mrf.mxu0
    %6411 = vdwg.mxu0
    %6412 = vmatprep.subr.bf16.mxu0 %v4731
    %6413 = vmatpush1.bf16.msra.mxu0 %v4730
    %6414 = vmatprep.subr.bf16.mxu0 %v4723
    %6415 = vmatpush1.bf16.msra.mxu0 %v4722
    %6416 = vmatprep.subr.bf16.mxu0 %v4715
    %6417 = vmatpush1.bf16.msra.mxu0 %v4714
    %6418 = vmatprep.subr.bf16.mxu0 %v4707
    %6419 = vmatpush1.bf16.msra.mxu0 %v4706
    %6420 = vmatprep.subr.bf16.mxu0 %v4699
    %6421 = vmatpush1.bf16.msra.mxu0 %v4698
    %6422 = vmatprep.subr.bf16.mxu0 %v4691
    %6423 = vmatpush1.bf16.msra.mxu0 %v4690
    %6424 = vmatprep.subr.bf16.mxu0 %v4683
    %6425 = vmatpush1.bf16.msra.mxu0 %v4682
    %6426 = vmatprep.subr.bf16.mxu0 %v4675
    %6427 = vmatpush1.bf16.msra.mxu0 %v4674
    %6428 = vmatprep.subr.bf16.mxu0 %v4795
    %6429 = vmatpush2.bf16.msra.mxu0 %v4794
    %6430 = vmatprep.subr.bf16.mxu0 %v4787
    %6431 = vmatpush2.bf16.msra.mxu0 %v4786
    %6432 = vmatprep.subr.bf16.mxu0 %v4779
    %6433 = vmatpush2.bf16.msra.mxu0 %v4778
    %6434 = vmatprep.subr.bf16.mxu0 %v4771
    %6435 = vmatpush2.bf16.msra.mxu0 %v4770
    %6436 = vmatprep.subr.bf16.mxu0 %v4763
    %6437 = vmatpush2.bf16.msra.mxu0 %v4762
    %6438 = vmatprep.subr.bf16.mxu0 %v4755
    %6439 = vmatpush2.bf16.msra.mxu0 %v4754
    %6440 = vmatprep.subr.bf16.mxu0 %v4747
    %6441 = vmatpush2.bf16.msra.mxu0 %v4746
    %6442 = vmatprep.subr.bf16.mxu0 %v4739
    %6443 = vmatpush2.bf16.msra.mxu0 %v4738
    %6444 = vmatprep.mubr.bf16.mxu0 %v6329
    %6445 = vmatmul.mubr.bf16.gmra.mxu0 %v6328
    %v6446 = vpop.f32.mrf.mxu0
    %v6447 = vadd.f32 0.0, %v6446
    %v6448 = vpop.f32.mrf.mxu0
    %v6449 = vadd.f32 0.0, %v6448
    %v6450 = vpop.f32.mrf.mxu0
    %v6451 = vpop.f32.mrf.mxu0
    %6452 = vdwg.mxu0
    %6453 = vmatprep.subr.bf16.mxu0 %v4733
    %6454 = vmatpush1.bf16.msra.mxu0 %v4732
    %6455 = vmatprep.subr.bf16.mxu0 %v4725
    %6456 = vmatpush1.bf16.msra.mxu0 %v4724
    %6457 = vmatprep.subr.bf16.mxu0 %v4717
    %6458 = vmatpush1.bf16.msra.mxu0 %v4716
    %6459 = vmatprep.subr.bf16.mxu0 %v4709
    %6460 = vmatpush1.bf16.msra.mxu0 %v4708
    %6461 = vmatprep.subr.bf16.mxu0 %v4701
    %6462 = vmatpush1.bf16.msra.mxu0 %v4700
    %6463 = vmatprep.subr.bf16.mxu0 %v4693
    %6464 = vmatpush1.bf16.msra.mxu0 %v4692
    %6465 = vmatprep.subr.bf16.mxu0 %v4685
    %6466 = vmatpush1.bf16.msra.mxu0 %v4684
    %6467 = vmatprep.subr.bf16.mxu0 %v4677
    %6468 = vmatpush1.bf16.msra.mxu0 %v4676
    %6469 = vmatprep.subr.bf16.mxu0 %v4797
    %6470 = vmatpush2.bf16.msra.mxu0 %v4796
    %6471 = vmatprep.subr.bf16.mxu0 %v4789
    %6472 = vmatpush2.bf16.msra.mxu0 %v4788
    %6473 = vmatprep.subr.bf16.mxu0 %v4781
    %6474 = vmatpush2.bf16.msra.mxu0 %v4780
    %6475 = vmatprep.subr.bf16.mxu0 %v4773
    %6476 = vmatpush2.bf16.msra.mxu0 %v4772
    %6477 = vmatprep.subr.bf16.mxu0 %v4765
    %6478 = vmatpush2.bf16.msra.mxu0 %v4764
    %6479 = vmatprep.subr.bf16.mxu0 %v4757
    %6480 = vmatpush2.bf16.msra.mxu0 %v4756
    %6481 = vmatprep.subr.bf16.mxu0 %v4749
    %6482 = vmatpush2.bf16.msra.mxu0 %v4748
    %6483 = vmatprep.subr.bf16.mxu0 %v4741
    %6484 = vmatpush2.bf16.msra.mxu0 %v4740
    %6485 = vmatprep.mubr.bf16.mxu0 %v6329
    %6486 = vmatmul.mubr.bf16.gmra.mxu0 %v6328
    %v6487 = vpop.f32.mrf.mxu0
    %v6488 = vadd.f32 0.0, %v6487
    %v6489 = vpop.f32.mrf.mxu0
    %v6490 = vadd.f32 0.0, %v6489
    %v6491 = vpop.f32.mrf.mxu0
    %v6492 = vpop.f32.mrf.mxu0
    %6493 = vdwg.mxu0
    %v6494 = vadd.f32 %v6320, %v6365
    %v6495 = vadd.f32 %v6321, %v6367
    %v6496 = vadd.f32 %v6322, %v6406
    %v6497 = vadd.f32 %v6323, %v6408
    %v6498 = vadd.f32 %v6324, %v6447
    %v6499 = vadd.f32 %v6325, %v6449
    %v6500 = vadd.f32 %v6326, %v6488
    %v6501 = vadd.f32 %v6327, %v6490
    %v6502 = vxor.u32 %v6494, 2147483648
    %v6503 = vxor.u32 %v6495, 2147483648
    %v6504 = vmul.f32 %v6502, 1.442695
    %v6505 = vpow.pop %v6504
    %v6506 = vmul.f32 %v6503, 1.442695
    %v6507 = vpow.pop %v6506
    %v6508 = vadd.f32 %v6505, 1.0
    %v6509 = vadd.f32 %v6507, 1.0
    %v6510 = vrcp.pop %v6508
    %v6511 = vmul.f32 1.0, %v6510
    %v6512 = vrcp.pop %v6509
    %v6513 = vmul.f32 1.0, %v6512
    %v6514 = vxor.u32 %v6496, 2147483648
    %v6515 = vxor.u32 %v6497, 2147483648
    %v6516 = vmul.f32 %v6514, 1.442695
    %v6517 = vpow.pop %v6516
    %v6518 = vmul.f32 %v6515, 1.442695
    %v6519 = vpow.pop %v6518
    %v6520 = vadd.f32 %v6517, 1.0
    %v6521 = vadd.f32 %v6519, 1.0
    %v6522 = vrcp.pop %v6520
    %v6523 = vmul.f32 1.0, %v6522
    %v6524 = vrcp.pop %v6521
    %v6525 = vmul.f32 1.0, %v6524
    %v6526 = vtanh.pop %v6498
    %v6527 = vtanh.pop %v6499
    %v6528 = vxor.u32 %v6500, 2147483648
    %v6529 = vxor.u32 %v6501, 2147483648
    %v6530 = vmul.f32 %v6528, 1.442695
    %v6531 = vpow.pop %v6530
    %v6532 = vmul.f32 %v6529, 1.442695
    %v6533 = vpow.pop %v6532
    %v6534 = vadd.f32 %v6531, 1.0
    %v6535 = vadd.f32 %v6533, 1.0
    %v6536 = vrcp.pop %v6534
    %v6537 = vmul.f32 1.0, %v6536
    %v6538 = vrcp.pop %v6535
    %v6539 = vmul.f32 1.0, %v6538
    %v6540 = vmul.f32 %v6523, %v6310
    %v6541 = vmul.f32 %v6525, %v6311
    %v6542 = vmul.f32 %v6511, %v6526
    %v6543 = vmul.f32 %v6513, %v6527
    %v6544 = vadd.f32 %v6540, %v6542
    %v6545 = vadd.f32 %v6541, %v6543
    %v6546 = vtanh.pop %v6544
    %v6547 = vtanh.pop %v6545
    %v6548 = vmul.f32 %v6537, %v6546
    %v6549 = vmul.f32 %v6539, %v6547
    %s6550 = scalar_lea.vmem [#allocation5], 16
    %6551 = vst [vmem:[%s6550] sm:$0xff] %v6548
    %6552 = vst [vmem:[%s6550 + $0x8] sm:$0xff] %v6549
    %v6553 = vld [vmem:[#allocation3] sm:$0xff]
    %v6554 = vld [vmem:[#allocation3 + $0x8] sm:$0xff]
    %v6555 = vld [vmem:[#allocation3 + $0x10] sm:$0xff]
    %v6556 = vld [vmem:[#allocation3 + $0x18] sm:$0xff]
    %v6557 = vld [vmem:[#allocation3 + $0x20] sm:$0xff]
    %v6558 = vld [vmem:[#allocation3 + $0x28] sm:$0xff]
    %v6559 = vld [vmem:[#allocation3 + $0x30] sm:$0xff]
    %v6560 = vld [vmem:[#allocation3 + $0x38] sm:$0xff]
    %v6561 = vpack.c.bf16 %v6548, %v6548
    %v6562 = vpack.c.bf16 %v6549, %v6549
    %6563 = vmatprep.subr.bf16.mxu0 %v4727
    %6564 = vmatpush1.bf16.msra.mxu0 %v4726
    %6565 = vmatprep.subr.bf16.mxu0 %v4719
    %6566 = vmatpush1.bf16.msra.mxu0 %v4718
    %6567 = vmatprep.subr.bf16.mxu0 %v4711
    %6568 = vmatpush1.bf16.msra.mxu0 %v4710
    %6569 = vmatprep.subr.bf16.mxu0 %v4703
    %6570 = vmatpush1.bf16.msra.mxu0 %v4702
    %6571 = vmatprep.subr.bf16.mxu0 %v4695
    %6572 = vmatpush1.bf16.msra.mxu0 %v4694
    %6573 = vmatprep.subr.bf16.mxu0 %v4687
    %6574 = vmatpush1.bf16.msra.mxu0 %v4686
    %6575 = vmatprep.subr.bf16.mxu0 %v4679
    %6576 = vmatpush1.bf16.msra.mxu0 %v4678
    %6577 = vmatprep.subr.bf16.mxu0 %v4671
    %6578 = vmatpush1.bf16.msra.mxu0 %v4670
    %6579 = vmatprep.subr.bf16.mxu0 %v4791
    %6580 = vmatpush2.bf16.msra.mxu0 %v4790
    %6581 = vmatprep.subr.bf16.mxu0 %v4783
    %6582 = vmatpush2.bf16.msra.mxu0 %v4782
    %6583 = vmatprep.subr.bf16.mxu0 %v4775
    %6584 = vmatpush2.bf16.msra.mxu0 %v4774
    %6585 = vmatprep.subr.bf16.mxu0 %v4767
    %6586 = vmatpush2.bf16.msra.mxu0 %v4766
    %6587 = vmatprep.subr.bf16.mxu0 %v4759
    %6588 = vmatpush2.bf16.msra.mxu0 %v4758
    %6589 = vmatprep.subr.bf16.mxu0 %v4751
    %6590 = vmatpush2.bf16.msra.mxu0 %v4750
    %6591 = vmatprep.subr.bf16.mxu0 %v4743
    %6592 = vmatpush2.bf16.msra.mxu0 %v4742
    %6593 = vmatprep.subr.bf16.mxu0 %v4735
    %6594 = vmatpush2.bf16.msra.mxu0 %v4734
    %6595 = vmatprep.mubr.bf16.mxu0 %v6562
    %6596 = vmatmul.mubr.bf16.gmra.mxu0 %v6561
    %v6597 = vpop.f32.mrf.mxu0
    %v6598 = vadd.f32 0.0, %v6597
    %v6599 = vpop.f32.mrf.mxu0
    %v6600 = vadd.f32 0.0, %v6599
    %v6601 = vpop.f32.mrf.mxu0
    %v6602 = vpop.f32.mrf.mxu0
    %6603 = vdwg.mxu0
    %6604 = vmatprep.subr.bf16.mxu0 %v4729
    %6605 = vmatpush1.bf16.msra.mxu0 %v4728
    %6606 = vmatprep.subr.bf16.mxu0 %v4721
    %6607 = vmatpush1.bf16.msra.mxu0 %v4720
    %6608 = vmatprep.subr.bf16.mxu0 %v4713
    %6609 = vmatpush1.bf16.msra.mxu0 %v4712
    %6610 = vmatprep.subr.bf16.mxu0 %v4705
    %6611 = vmatpush1.bf16.msra.mxu0 %v4704
    %6612 = vmatprep.subr.bf16.mxu0 %v4697
    %6613 = vmatpush1.bf16.msra.mxu0 %v4696
    %6614 = vmatprep.subr.bf16.mxu0 %v4689
    %6615 = vmatpush1.bf16.msra.mxu0 %v4688
    %6616 = vmatprep.subr.bf16.mxu0 %v4681
    %6617 = vmatpush1.bf16.msra.mxu0 %v4680
    %6618 = vmatprep.subr.bf16.mxu0 %v4673
    %6619 = vmatpush1.bf16.msra.mxu0 %v4672
    %6620 = vmatprep.subr.bf16.mxu0 %v4793
    %6621 = vmatpush2.bf16.msra.mxu0 %v4792
    %6622 = vmatprep.subr.bf16.mxu0 %v4785
    %6623 = vmatpush2.bf16.msra.mxu0 %v4784
    %6624 = vmatprep.subr.bf16.mxu0 %v4777
    %6625 = vmatpush2.bf16.msra.mxu0 %v4776
    %6626 = vmatprep.subr.bf16.mxu0 %v4769
    %6627 = vmatpush2.bf16.msra.mxu0 %v4768
    %6628 = vmatprep.subr.bf16.mxu0 %v4761
    %6629 = vmatpush2.bf16.msra.mxu0 %v4760
    %6630 = vmatprep.subr.bf16.mxu0 %v4753
    %6631 = vmatpush2.bf16.msra.mxu0 %v4752
    %6632 = vmatprep.subr.bf16.mxu0 %v4745
    %6633 = vmatpush2.bf16.msra.mxu0 %v4744
    %6634 = vmatprep.subr.bf16.mxu0 %v4737
    %6635 = vmatpush2.bf16.msra.mxu0 %v4736
    %6636 = vmatprep.mubr.bf16.mxu0 %v6562
    %6637 = vmatmul.mubr.bf16.gmra.mxu0 %v6561
    %v6638 = vpop.f32.mrf.mxu0
    %v6639 = vadd.f32 0.0, %v6638
    %v6640 = vpop.f32.mrf.mxu0
    %v6641 = vadd.f32 0.0, %v6640
    %v6642 = vpop.f32.mrf.mxu0
    %v6643 = vpop.f32.mrf.mxu0
    %6644 = vdwg.mxu0
    %6645 = vmatprep.subr.bf16.mxu0 %v4731
    %6646 = vmatpush1.bf16.msra.mxu0 %v4730
    %6647 = vmatprep.subr.bf16.mxu0 %v4723
    %6648 = vmatpush1.bf16.msra.mxu0 %v4722
    %6649 = vmatprep.subr.bf16.mxu0 %v4715
    %6650 = vmatpush1.bf16.msra.mxu0 %v4714
    %6651 = vmatprep.subr.bf16.mxu0 %v4707
    %6652 = vmatpush1.bf16.msra.mxu0 %v4706
    %6653 = vmatprep.subr.bf16.mxu0 %v4699
    %6654 = vmatpush1.bf16.msra.mxu0 %v4698
    %6655 = vmatprep.subr.bf16.mxu0 %v4691
    %6656 = vmatpush1.bf16.msra.mxu0 %v4690
    %6657 = vmatprep.subr.bf16.mxu0 %v4683
    %6658 = vmatpush1.bf16.msra.mxu0 %v4682
    %6659 = vmatprep.subr.bf16.mxu0 %v4675
    %6660 = vmatpush1.bf16.msra.mxu0 %v4674
    %6661 = vmatprep.subr.bf16.mxu0 %v4795
    %6662 = vmatpush2.bf16.msra.mxu0 %v4794
    %6663 = vmatprep.subr.bf16.mxu0 %v4787
    %6664 = vmatpush2.bf16.msra.mxu0 %v4786
    %6665 = vmatprep.subr.bf16.mxu0 %v4779
    %6666 = vmatpush2.bf16.msra.mxu0 %v4778
    %6667 = vmatprep.subr.bf16.mxu0 %v4771
    %6668 = vmatpush2.bf16.msra.mxu0 %v4770
    %6669 = vmatprep.subr.bf16.mxu0 %v4763
    %6670 = vmatpush2.bf16.msra.mxu0 %v4762
    %6671 = vmatprep.subr.bf16.mxu0 %v4755
    %6672 = vmatpush2.bf16.msra.mxu0 %v4754
    %6673 = vmatprep.subr.bf16.mxu0 %v4747
    %6674 = vmatpush2.bf16.msra.mxu0 %v4746
    %6675 = vmatprep.subr.bf16.mxu0 %v4739
    %6676 = vmatpush2.bf16.msra.mxu0 %v4738
    %6677 = vmatprep.mubr.bf16.mxu0 %v6562
    %6678 = vmatmul.mubr.bf16.gmra.mxu0 %v6561
    %v6679 = vpop.f32.mrf.mxu0
    %v6680 = vadd.f32 0.0, %v6679
    %v6681 = vpop.f32.mrf.mxu0
    %v6682 = vadd.f32 0.0, %v6681
    %v6683 = vpop.f32.mrf.mxu0
    %v6684 = vpop.f32.mrf.mxu0
    %6685 = vdwg.mxu0
    %6686 = vmatprep.subr.bf16.mxu0 %v4733
    %6687 = vmatpush1.bf16.msra.mxu0 %v4732
    %6688 = vmatprep.subr.bf16.mxu0 %v4725
    %6689 = vmatpush1.bf16.msra.mxu0 %v4724
    %6690 = vmatprep.subr.bf16.mxu0 %v4717
    %6691 = vmatpush1.bf16.msra.mxu0 %v4716
    %6692 = vmatprep.subr.bf16.mxu0 %v4709
    %6693 = vmatpush1.bf16.msra.mxu0 %v4708
    %6694 = vmatprep.subr.bf16.mxu0 %v4701
    %6695 = vmatpush1.bf16.msra.mxu0 %v4700
    %6696 = vmatprep.subr.bf16.mxu0 %v4693
    %6697 = vmatpush1.bf16.msra.mxu0 %v4692
    %6698 = vmatprep.subr.bf16.mxu0 %v4685
    %6699 = vmatpush1.bf16.msra.mxu0 %v4684
    %6700 = vmatprep.subr.bf16.mxu0 %v4677
    %6701 = vmatpush1.bf16.msra.mxu0 %v4676
    %6702 = vmatprep.subr.bf16.mxu0 %v4797
    %6703 = vmatpush2.bf16.msra.mxu0 %v4796
    %6704 = vmatprep.subr.bf16.mxu0 %v4789
    %6705 = vmatpush2.bf16.msra.mxu0 %v4788
    %6706 = vmatprep.subr.bf16.mxu0 %v4781
    %6707 = vmatpush2.bf16.msra.mxu0 %v4780
    %6708 = vmatprep.subr.bf16.mxu0 %v4773
    %6709 = vmatpush2.bf16.msra.mxu0 %v4772
    %6710 = vmatprep.subr.bf16.mxu0 %v4765
    %6711 = vmatpush2.bf16.msra.mxu0 %v4764
    %6712 = vmatprep.subr.bf16.mxu0 %v4757
    %6713 = vmatpush2.bf16.msra.mxu0 %v4756
    %6714 = vmatprep.subr.bf16.mxu0 %v4749
    %6715 = vmatpush2.bf16.msra.mxu0 %v4748
    %6716 = vmatprep.subr.bf16.mxu0 %v4741
    %6717 = vmatpush2.bf16.msra.mxu0 %v4740
    %6718 = vmatprep.mubr.bf16.mxu0 %v6562
    %6719 = vmatmul.mubr.bf16.gmra.mxu0 %v6561
    %v6720 = vpop.f32.mrf.mxu0
    %v6721 = vadd.f32 0.0, %v6720
    %v6722 = vpop.f32.mrf.mxu0
    %v6723 = vadd.f32 0.0, %v6722
    %v6724 = vpop.f32.mrf.mxu0
    %v6725 = vpop.f32.mrf.mxu0
    %6726 = vdwg.mxu0
    %v6727 = vadd.f32 %v6553, %v6598
    %v6728 = vadd.f32 %v6554, %v6600
    %v6729 = vadd.f32 %v6555, %v6639
    %v6730 = vadd.f32 %v6556, %v6641
    %v6731 = vadd.f32 %v6557, %v6680
    %v6732 = vadd.f32 %v6558, %v6682
    %v6733 = vadd.f32 %v6559, %v6721
    %v6734 = vadd.f32 %v6560, %v6723
    %v6735 = vxor.u32 %v6727, 2147483648
    %v6736 = vxor.u32 %v6728, 2147483648
    %v6737 = vmul.f32 %v6735, 1.442695
    %v6738 = vpow.pop %v6737
    %v6739 = vmul.f32 %v6736, 1.442695
    %v6740 = vpow.pop %v6739
    %v6741 = vadd.f32 %v6738, 1.0
    %v6742 = vadd.f32 %v6740, 1.0
    %v6743 = vrcp.pop %v6741
    %v6744 = vmul.f32 1.0, %v6743
    %v6745 = vrcp.pop %v6742
    %v6746 = vmul.f32 1.0, %v6745
    %v6747 = vxor.u32 %v6729, 2147483648
    %v6748 = vxor.u32 %v6730, 2147483648
    %v6749 = vmul.f32 %v6747, 1.442695
    %v6750 = vpow.pop %v6749
    %v6751 = vmul.f32 %v6748, 1.442695
    %v6752 = vpow.pop %v6751
    %v6753 = vadd.f32 %v6750, 1.0
    %v6754 = vadd.f32 %v6752, 1.0
    %v6755 = vrcp.pop %v6753
    %v6756 = vmul.f32 1.0, %v6755
    %v6757 = vrcp.pop %v6754
    %v6758 = vmul.f32 1.0, %v6757
    %v6759 = vtanh.pop %v6731
    %v6760 = vtanh.pop %v6732
    %v6761 = vxor.u32 %v6733, 2147483648
    %v6762 = vxor.u32 %v6734, 2147483648
    %v6763 = vmul.f32 %v6761, 1.442695
    %v6764 = vpow.pop %v6763
    %v6765 = vmul.f32 %v6762, 1.442695
    %v6766 = vpow.pop %v6765
    %v6767 = vadd.f32 %v6764, 1.0
    %v6768 = vadd.f32 %v6766, 1.0
    %v6769 = vrcp.pop %v6767
    %v6770 = vmul.f32 1.0, %v6769
    %v6771 = vrcp.pop %v6768
    %v6772 = vmul.f32 1.0, %v6771
    %v6773 = vmul.f32 %v6756, %v6544
    %v6774 = vmul.f32 %v6758, %v6545
    %v6775 = vmul.f32 %v6744, %v6759
    %v6776 = vmul.f32 %v6746, %v6760
    %v6777 = vadd.f32 %v6773, %v6775
    %v6778 = vadd.f32 %v6774, %v6776
    %v6779 = vtanh.pop %v6777
    %v6780 = vtanh.pop %v6778
    %v6781 = vmul.f32 %v6770, %v6779
    %v6782 = vmul.f32 %v6772, %v6780
    %6783 = vst [vmem:[#allocation5] sm:$0xff] %v6781
    %6784 = vst [vmem:[#allocation5 + $0x8] sm:$0xff] %v6782
    %v6785 = vld [vmem:[#allocation4] sm:$0xff]
    %v6786 = vld [vmem:[#allocation4 + $0x8] sm:$0xff]
    %v6787 = vld [vmem:[#allocation4 + $0x10] sm:$0xff]
    %v6788 = vld [vmem:[#allocation4 + $0x18] sm:$0xff]
    %v6789 = vld [vmem:[#allocation4 + $0x20] sm:$0xff]
    %v6790 = vld [vmem:[#allocation4 + $0x28] sm:$0xff]
    %v6791 = vld [vmem:[#allocation4 + $0x30] sm:$0xff]
    %v6792 = vld [vmem:[#allocation4 + $0x38] sm:$0xff]
    %v6793 = vld [vmem:[#allocation4 + $0x40] sm:$0xff]
    %v6794 = vld [vmem:[#allocation4 + $0x48] sm:$0xff]
    %v6795 = vld [vmem:[#allocation4 + $0x50] sm:$0xff]
    %v6796 = vld [vmem:[#allocation4 + $0x58] sm:$0xff]
    %v6797 = vld [vmem:[#allocation4 + $0x60] sm:$0xff]
    %v6798 = vld [vmem:[#allocation4 + $0x68] sm:$0xff]
    %v6799 = vld [vmem:[#allocation4 + $0x70] sm:$0xff]
    %v6800 = vld [vmem:[#allocation4 + $0x78] sm:$0xff]
    %v6801 = vld [vmem:[#allocation5] sm:$0xff]
    %v6802 = vld [vmem:[#allocation5 + $0x8] sm:$0xff]
    %v6803 = vld [vmem:[#allocation5 + $0x10] sm:$0xff]
    %v6804 = vld [vmem:[#allocation5 + $0x18] sm:$0xff]
    %v6805 = vld [vmem:[#allocation5 + $0x20] sm:$0xff]
    %v6806 = vld [vmem:[#allocation5 + $0x28] sm:$0xff]
    %v6807 = vld [vmem:[#allocation5 + $0x30] sm:$0xff]
    %v6808 = vld [vmem:[#allocation5 + $0x38] sm:$0xff]
    %v6809 = vld [vmem:[#allocation5 + $0x40] sm:$0xff]
    %v6810 = vld [vmem:[#allocation5 + $0x48] sm:$0xff]
    %v6811 = vld [vmem:[#allocation5 + $0x50] sm:$0xff]
    %v6812 = vld [vmem:[#allocation5 + $0x58] sm:$0xff]
    %v6813 = vld [vmem:[#allocation5 + $0x60] sm:$0xff]
    %v6814 = vld [vmem:[#allocation5 + $0x68] sm:$0xff]
    %v6815 = vld [vmem:[#allocation5 + $0x70] sm:$0xff]
    %v6816 = vld [vmem:[#allocation5 + $0x78] sm:$0xff]
    %v6817 = vld [vmem:[#allocation14] sm:$0xff]
    %v6818 = vld [vmem:[#allocation14 + $0x8] sm:$0xff]
    %v6819 = vld [vmem:[#allocation14 + $0x10] sm:$0xff]
    %v6820 = vld [vmem:[#allocation14 + $0x18] sm:$0xff]
    %v6821 = vld [vmem:[#allocation14 + $0x20] sm:$0xff]
    %v6822 = vld [vmem:[#allocation14 + $0x28] sm:$0xff]
    %v6823 = vld [vmem:[#allocation14 + $0x30] sm:$0xff]
    %v6824 = vld [vmem:[#allocation14 + $0x38] sm:$0xff]
    %v6825 = vld [vmem:[#allocation14 + $0x40] sm:$0xff]
    %v6826 = vld [vmem:[#allocation14 + $0x48] sm:$0xff]
    %v6827 = vld [vmem:[#allocation14 + $0x50] sm:$0xff]
    %v6828 = vld [vmem:[#allocation14 + $0x58] sm:$0xff]
    %v6829 = vld [vmem:[#allocation14 + $0x60] sm:$0xff]
    %v6830 = vld [vmem:[#allocation14 + $0x68] sm:$0xff]
    %v6831 = vld [vmem:[#allocation14 + $0x70] sm:$0xff]
    %v6832 = vld [vmem:[#allocation14 + $0x78] sm:$0xff]
    %v6833 = vld [vmem:[#allocation14 + $0x80] sm:$0xff]
    %v6834 = vld [vmem:[#allocation14 + $0x88] sm:$0xff]
    %v6835 = vld [vmem:[#allocation14 + $0x90] sm:$0xff]
    %v6836 = vld [vmem:[#allocation14 + $0x98] sm:$0xff]
    %v6837 = vld [vmem:[#allocation14 + $0xa0] sm:$0xff]
    %v6838 = vld [vmem:[#allocation14 + $0xa8] sm:$0xff]
    %v6839 = vld [vmem:[#allocation14 + $0xb0] sm:$0xff]
    %v6840 = vld [vmem:[#allocation14 + $0xb8] sm:$0xff]
    %v6841 = vld [vmem:[#allocation14 + $0xc0] sm:$0xff]
    %v6842 = vld [vmem:[#allocation14 + $0xc8] sm:$0xff]
    %v6843 = vld [vmem:[#allocation14 + $0xd0] sm:$0xff]
    %v6844 = vld [vmem:[#allocation14 + $0xd8] sm:$0xff]
    %v6845 = vld [vmem:[#allocation14 + $0xe0] sm:$0xff]
    %v6846 = vld [vmem:[#allocation14 + $0xe8] sm:$0xff]
    %v6847 = vld [vmem:[#allocation14 + $0xf0] sm:$0xff]
    %v6848 = vld [vmem:[#allocation14 + $0xf8] sm:$0xff]
    %v6849 = vld [vmem:[#allocation14 + $0x100] sm:$0xff]
    %v6850 = vld [vmem:[#allocation14 + $0x108] sm:$0xff]
    %v6851 = vld [vmem:[#allocation14 + $0x110] sm:$0xff]
    %v6852 = vld [vmem:[#allocation14 + $0x118] sm:$0xff]
    %v6853 = vld [vmem:[#allocation14 + $0x120] sm:$0xff]
    %v6854 = vld [vmem:[#allocation14 + $0x128] sm:$0xff]
    %v6855 = vld [vmem:[#allocation14 + $0x130] sm:$0xff]
    %v6856 = vld [vmem:[#allocation14 + $0x138] sm:$0xff]
    %v6857 = vld [vmem:[#allocation14 + $0x140] sm:$0xff]
    %v6858 = vld [vmem:[#allocation14 + $0x148] sm:$0xff]
    %v6859 = vld [vmem:[#allocation14 + $0x150] sm:$0xff]
    %v6860 = vld [vmem:[#allocation14 + $0x158] sm:$0xff]
    %v6861 = vld [vmem:[#allocation14 + $0x160] sm:$0xff]
    %v6862 = vld [vmem:[#allocation14 + $0x168] sm:$0xff]
    %v6863 = vld [vmem:[#allocation14 + $0x170] sm:$0xff]
    %v6864 = vld [vmem:[#allocation14 + $0x178] sm:$0xff]
    %v6865 = vld [vmem:[#allocation14 + $0x180] sm:$0xff]
    %v6866 = vld [vmem:[#allocation14 + $0x188] sm:$0xff]
    %v6867 = vld [vmem:[#allocation14 + $0x190] sm:$0xff]
    %v6868 = vld [vmem:[#allocation14 + $0x198] sm:$0xff]
    %v6869 = vld [vmem:[#allocation14 + $0x1a0] sm:$0xff]
    %v6870 = vld [vmem:[#allocation14 + $0x1a8] sm:$0xff]
    %v6871 = vld [vmem:[#allocation14 + $0x1b0] sm:$0xff]
    %v6872 = vld [vmem:[#allocation14 + $0x1b8] sm:$0xff]
    %v6873 = vld [vmem:[#allocation14 + $0x1c0] sm:$0xff]
    %v6874 = vld [vmem:[#allocation14 + $0x1c8] sm:$0xff]
    %v6875 = vld [vmem:[#allocation14 + $0x1d0] sm:$0xff]
    %v6876 = vld [vmem:[#allocation14 + $0x1d8] sm:$0xff]
    %v6877 = vld [vmem:[#allocation14 + $0x1e0] sm:$0xff]
    %v6878 = vld [vmem:[#allocation14 + $0x1e8] sm:$0xff]
    %v6879 = vld [vmem:[#allocation14 + $0x1f0] sm:$0xff]
    %v6880 = vld [vmem:[#allocation14 + $0x1f8] sm:$0xff]
    %v6881 = vld [vmem:[#allocation14 + $0x200] sm:$0xff]
    %v6882 = vld [vmem:[#allocation14 + $0x208] sm:$0xff]
    %v6883 = vld [vmem:[#allocation14 + $0x210] sm:$0xff]
    %v6884 = vld [vmem:[#allocation14 + $0x218] sm:$0xff]
    %v6885 = vld [vmem:[#allocation14 + $0x220] sm:$0xff]
    %v6886 = vld [vmem:[#allocation14 + $0x228] sm:$0xff]
    %v6887 = vld [vmem:[#allocation14 + $0x230] sm:$0xff]
    %v6888 = vld [vmem:[#allocation14 + $0x238] sm:$0xff]
    %v6889 = vld [vmem:[#allocation14 + $0x240] sm:$0xff]
    %v6890 = vld [vmem:[#allocation14 + $0x248] sm:$0xff]
    %v6891 = vld [vmem:[#allocation14 + $0x250] sm:$0xff]
    %v6892 = vld [vmem:[#allocation14 + $0x258] sm:$0xff]
    %v6893 = vld [vmem:[#allocation14 + $0x260] sm:$0xff]
    %v6894 = vld [vmem:[#allocation14 + $0x268] sm:$0xff]
    %v6895 = vld [vmem:[#allocation14 + $0x270] sm:$0xff]
    %v6896 = vld [vmem:[#allocation14 + $0x278] sm:$0xff]
    %v6897 = vld [vmem:[#allocation14 + $0x280] sm:$0xff]
    %v6898 = vld [vmem:[#allocation14 + $0x288] sm:$0xff]
    %v6899 = vld [vmem:[#allocation14 + $0x290] sm:$0xff]
    %v6900 = vld [vmem:[#allocation14 + $0x298] sm:$0xff]
    %v6901 = vld [vmem:[#allocation14 + $0x2a0] sm:$0xff]
    %v6902 = vld [vmem:[#allocation14 + $0x2a8] sm:$0xff]
    %v6903 = vld [vmem:[#allocation14 + $0x2b0] sm:$0xff]
    %v6904 = vld [vmem:[#allocation14 + $0x2b8] sm:$0xff]
    %v6905 = vld [vmem:[#allocation14 + $0x2c0] sm:$0xff]
    %v6906 = vld [vmem:[#allocation14 + $0x2c8] sm:$0xff]
    %v6907 = vld [vmem:[#allocation14 + $0x2d0] sm:$0xff]
    %v6908 = vld [vmem:[#allocation14 + $0x2d8] sm:$0xff]
    %v6909 = vld [vmem:[#allocation14 + $0x2e0] sm:$0xff]
    %v6910 = vld [vmem:[#allocation14 + $0x2e8] sm:$0xff]
    %v6911 = vld [vmem:[#allocation14 + $0x2f0] sm:$0xff]
    %v6912 = vld [vmem:[#allocation14 + $0x2f8] sm:$0xff]
    %v6913 = vld [vmem:[#allocation14 + $0x300] sm:$0xff]
    %v6914 = vld [vmem:[#allocation14 + $0x308] sm:$0xff]
    %v6915 = vld [vmem:[#allocation14 + $0x310] sm:$0xff]
    %v6916 = vld [vmem:[#allocation14 + $0x318] sm:$0xff]
    %v6917 = vld [vmem:[#allocation14 + $0x320] sm:$0xff]
    %v6918 = vld [vmem:[#allocation14 + $0x328] sm:$0xff]
    %v6919 = vld [vmem:[#allocation14 + $0x330] sm:$0xff]
    %v6920 = vld [vmem:[#allocation14 + $0x338] sm:$0xff]
    %v6921 = vld [vmem:[#allocation14 + $0x340] sm:$0xff]
    %v6922 = vld [vmem:[#allocation14 + $0x348] sm:$0xff]
    %v6923 = vld [vmem:[#allocation14 + $0x350] sm:$0xff]
    %v6924 = vld [vmem:[#allocation14 + $0x358] sm:$0xff]
    %v6925 = vld [vmem:[#allocation14 + $0x360] sm:$0xff]
    %v6926 = vld [vmem:[#allocation14 + $0x368] sm:$0xff]
    %v6927 = vld [vmem:[#allocation14 + $0x370] sm:$0xff]
    %v6928 = vld [vmem:[#allocation14 + $0x378] sm:$0xff]
    %v6929 = vld [vmem:[#allocation14 + $0x380] sm:$0xff]
    %v6930 = vld [vmem:[#allocation14 + $0x388] sm:$0xff]
    %v6931 = vld [vmem:[#allocation14 + $0x390] sm:$0xff]
    %v6932 = vld [vmem:[#allocation14 + $0x398] sm:$0xff]
    %v6933 = vld [vmem:[#allocation14 + $0x3a0] sm:$0xff]
    %v6934 = vld [vmem:[#allocation14 + $0x3a8] sm:$0xff]
    %v6935 = vld [vmem:[#allocation14 + $0x3b0] sm:$0xff]
    %v6936 = vld [vmem:[#allocation14 + $0x3b8] sm:$0xff]
    %v6937 = vld [vmem:[#allocation14 + $0x3c0] sm:$0xff]
    %v6938 = vld [vmem:[#allocation14 + $0x3c8] sm:$0xff]
    %v6939 = vld [vmem:[#allocation14 + $0x3d0] sm:$0xff]
    %v6940 = vld [vmem:[#allocation14 + $0x3d8] sm:$0xff]
    %v6941 = vld [vmem:[#allocation14 + $0x3e0] sm:$0xff]
    %v6942 = vld [vmem:[#allocation14 + $0x3e8] sm:$0xff]
    %v6943 = vld [vmem:[#allocation14 + $0x3f0] sm:$0xff]
    %v6944 = vld [vmem:[#allocation14 + $0x3f8] sm:$0xff]
    %v6945 = vld [vmem:[#allocation14 + $0x400] sm:$0xff]
    %v6946 = vld [vmem:[#allocation14 + $0x408] sm:$0xff]
    %v6947 = vld [vmem:[#allocation14 + $0x410] sm:$0xff]
    %v6948 = vld [vmem:[#allocation14 + $0x418] sm:$0xff]
    %v6949 = vld [vmem:[#allocation14 + $0x420] sm:$0xff]
    %v6950 = vld [vmem:[#allocation14 + $0x428] sm:$0xff]
    %v6951 = vld [vmem:[#allocation14 + $0x430] sm:$0xff]
    %v6952 = vld [vmem:[#allocation14 + $0x438] sm:$0xff]
    %v6953 = vld [vmem:[#allocation14 + $0x440] sm:$0xff]
    %v6954 = vld [vmem:[#allocation14 + $0x448] sm:$0xff]
    %v6955 = vld [vmem:[#allocation14 + $0x450] sm:$0xff]
    %v6956 = vld [vmem:[#allocation14 + $0x458] sm:$0xff]
    %v6957 = vld [vmem:[#allocation14 + $0x460] sm:$0xff]
    %v6958 = vld [vmem:[#allocation14 + $0x468] sm:$0xff]
    %v6959 = vld [vmem:[#allocation14 + $0x470] sm:$0xff]
    %v6960 = vld [vmem:[#allocation14 + $0x478] sm:$0xff]
    %v6961 = vld [vmem:[#allocation14 + $0x480] sm:$0xff]
    %v6962 = vld [vmem:[#allocation14 + $0x488] sm:$0xff]
    %v6963 = vld [vmem:[#allocation14 + $0x490] sm:$0xff]
    %v6964 = vld [vmem:[#allocation14 + $0x498] sm:$0xff]
    %v6965 = vld [vmem:[#allocation14 + $0x4a0] sm:$0xff]
    %v6966 = vld [vmem:[#allocation14 + $0x4a8] sm:$0xff]
    %v6967 = vld [vmem:[#allocation14 + $0x4b0] sm:$0xff]
    %v6968 = vld [vmem:[#allocation14 + $0x4b8] sm:$0xff]
    %v6969 = vld [vmem:[#allocation14 + $0x4c0] sm:$0xff]
    %v6970 = vld [vmem:[#allocation14 + $0x4c8] sm:$0xff]
    %v6971 = vld [vmem:[#allocation14 + $0x4d0] sm:$0xff]
    %v6972 = vld [vmem:[#allocation14 + $0x4d8] sm:$0xff]
    %v6973 = vld [vmem:[#allocation14 + $0x4e0] sm:$0xff]
    %v6974 = vld [vmem:[#allocation14 + $0x4e8] sm:$0xff]
    %v6975 = vld [vmem:[#allocation14 + $0x4f0] sm:$0xff]
    %v6976 = vld [vmem:[#allocation14 + $0x4f8] sm:$0xff]
    %v6977 = vld [vmem:[#allocation14 + $0x500] sm:$0xff]
    %v6978 = vld [vmem:[#allocation14 + $0x508] sm:$0xff]
    %v6979 = vld [vmem:[#allocation14 + $0x510] sm:$0xff]
    %v6980 = vld [vmem:[#allocation14 + $0x518] sm:$0xff]
    %v6981 = vld [vmem:[#allocation14 + $0x520] sm:$0xff]
    %v6982 = vld [vmem:[#allocation14 + $0x528] sm:$0xff]
    %v6983 = vld [vmem:[#allocation14 + $0x530] sm:$0xff]
    %v6984 = vld [vmem:[#allocation14 + $0x538] sm:$0xff]
    %v6985 = vld [vmem:[#allocation14 + $0x540] sm:$0xff]
    %v6986 = vld [vmem:[#allocation14 + $0x548] sm:$0xff]
    %v6987 = vld [vmem:[#allocation14 + $0x550] sm:$0xff]
    %v6988 = vld [vmem:[#allocation14 + $0x558] sm:$0xff]
    %v6989 = vld [vmem:[#allocation14 + $0x560] sm:$0xff]
    %v6990 = vld [vmem:[#allocation14 + $0x568] sm:$0xff]
    %v6991 = vld [vmem:[#allocation14 + $0x570] sm:$0xff]
    %v6992 = vld [vmem:[#allocation14 + $0x578] sm:$0xff]
    %v6993 = vld [vmem:[#allocation14 + $0x580] sm:$0xff]
    %v6994 = vld [vmem:[#allocation14 + $0x588] sm:$0xff]
    %v6995 = vld [vmem:[#allocation14 + $0x590] sm:$0xff]
    %v6996 = vld [vmem:[#allocation14 + $0x598] sm:$0xff]
    %v6997 = vld [vmem:[#allocation14 + $0x5a0] sm:$0xff]
    %v6998 = vld [vmem:[#allocation14 + $0x5a8] sm:$0xff]
    %v6999 = vld [vmem:[#allocation14 + $0x5b0] sm:$0xff]
    %v7000 = vld [vmem:[#allocation14 + $0x5b8] sm:$0xff]
    %v7001 = vld [vmem:[#allocation14 + $0x5c0] sm:$0xff]
    %v7002 = vld [vmem:[#allocation14 + $0x5c8] sm:$0xff]
    %v7003 = vld [vmem:[#allocation14 + $0x5d0] sm:$0xff]
    %v7004 = vld [vmem:[#allocation14 + $0x5d8] sm:$0xff]
    %v7005 = vld [vmem:[#allocation14 + $0x5e0] sm:$0xff]
    %v7006 = vld [vmem:[#allocation14 + $0x5e8] sm:$0xff]
    %v7007 = vld [vmem:[#allocation14 + $0x5f0] sm:$0xff]
    %v7008 = vld [vmem:[#allocation14 + $0x5f8] sm:$0xff]
    %v7009 = vld [vmem:[#allocation14 + $0x600] sm:$0xff]
    %v7010 = vld [vmem:[#allocation14 + $0x608] sm:$0xff]
    %v7011 = vld [vmem:[#allocation14 + $0x610] sm:$0xff]
    %v7012 = vld [vmem:[#allocation14 + $0x618] sm:$0xff]
    %v7013 = vld [vmem:[#allocation14 + $0x620] sm:$0xff]
    %v7014 = vld [vmem:[#allocation14 + $0x628] sm:$0xff]
    %v7015 = vld [vmem:[#allocation14 + $0x630] sm:$0xff]
    %v7016 = vld [vmem:[#allocation14 + $0x638] sm:$0xff]
    %v7017 = vld [vmem:[#allocation14 + $0x640] sm:$0xff]
    %v7018 = vld [vmem:[#allocation14 + $0x648] sm:$0xff]
    %v7019 = vld [vmem:[#allocation14 + $0x650] sm:$0xff]
    %v7020 = vld [vmem:[#allocation14 + $0x658] sm:$0xff]
    %v7021 = vld [vmem:[#allocation14 + $0x660] sm:$0xff]
    %v7022 = vld [vmem:[#allocation14 + $0x668] sm:$0xff]
    %v7023 = vld [vmem:[#allocation14 + $0x670] sm:$0xff]
    %v7024 = vld [vmem:[#allocation14 + $0x678] sm:$0xff]
    %v7025 = vld [vmem:[#allocation14 + $0x680] sm:$0xff]
    %v7026 = vld [vmem:[#allocation14 + $0x688] sm:$0xff]
    %v7027 = vld [vmem:[#allocation14 + $0x690] sm:$0xff]
    %v7028 = vld [vmem:[#allocation14 + $0x698] sm:$0xff]
    %v7029 = vld [vmem:[#allocation14 + $0x6a0] sm:$0xff]
    %v7030 = vld [vmem:[#allocation14 + $0x6a8] sm:$0xff]
    %v7031 = vld [vmem:[#allocation14 + $0x6b0] sm:$0xff]
    %v7032 = vld [vmem:[#allocation14 + $0x6b8] sm:$0xff]
    %v7033 = vld [vmem:[#allocation14 + $0x6c0] sm:$0xff]
    %v7034 = vld [vmem:[#allocation14 + $0x6c8] sm:$0xff]
    %v7035 = vld [vmem:[#allocation14 + $0x6d0] sm:$0xff]
    %v7036 = vld [vmem:[#allocation14 + $0x6d8] sm:$0xff]
    %v7037 = vld [vmem:[#allocation14 + $0x6e0] sm:$0xff]
    %v7038 = vld [vmem:[#allocation14 + $0x6e8] sm:$0xff]
    %v7039 = vld [vmem:[#allocation14 + $0x6f0] sm:$0xff]
    %v7040 = vld [vmem:[#allocation14 + $0x6f8] sm:$0xff]
    %v7041 = vld [vmem:[#allocation14 + $0x700] sm:$0xff]
    %v7042 = vld [vmem:[#allocation14 + $0x708] sm:$0xff]
    %v7043 = vld [vmem:[#allocation14 + $0x710] sm:$0xff]
    %v7044 = vld [vmem:[#allocation14 + $0x718] sm:$0xff]
    %v7045 = vld [vmem:[#allocation14 + $0x720] sm:$0xff]
    %v7046 = vld [vmem:[#allocation14 + $0x728] sm:$0xff]
    %v7047 = vld [vmem:[#allocation14 + $0x730] sm:$0xff]
    %v7048 = vld [vmem:[#allocation14 + $0x738] sm:$0xff]
    %v7049 = vld [vmem:[#allocation14 + $0x740] sm:$0xff]
    %v7050 = vld [vmem:[#allocation14 + $0x748] sm:$0xff]
    %v7051 = vld [vmem:[#allocation14 + $0x750] sm:$0xff]
    %v7052 = vld [vmem:[#allocation14 + $0x758] sm:$0xff]
    %v7053 = vld [vmem:[#allocation14 + $0x760] sm:$0xff]
    %v7054 = vld [vmem:[#allocation14 + $0x768] sm:$0xff]
    %v7055 = vld [vmem:[#allocation14 + $0x770] sm:$0xff]
    %v7056 = vld [vmem:[#allocation14 + $0x778] sm:$0xff]
    %v7057 = vld [vmem:[#allocation14 + $0x780] sm:$0xff]
    %v7058 = vld [vmem:[#allocation14 + $0x788] sm:$0xff]
    %v7059 = vld [vmem:[#allocation14 + $0x790] sm:$0xff]
    %v7060 = vld [vmem:[#allocation14 + $0x798] sm:$0xff]
    %v7061 = vld [vmem:[#allocation14 + $0x7a0] sm:$0xff]
    %v7062 = vld [vmem:[#allocation14 + $0x7a8] sm:$0xff]
    %v7063 = vld [vmem:[#allocation14 + $0x7b0] sm:$0xff]
    %v7064 = vld [vmem:[#allocation14 + $0x7b8] sm:$0xff]
    %v7065 = vld [vmem:[#allocation14 + $0x7c0] sm:$0xff]
    %v7066 = vld [vmem:[#allocation14 + $0x7c8] sm:$0xff]
    %v7067 = vld [vmem:[#allocation14 + $0x7d0] sm:$0xff]
    %v7068 = vld [vmem:[#allocation14 + $0x7d8] sm:$0xff]
    %v7069 = vld [vmem:[#allocation14 + $0x7e0] sm:$0xff]
    %v7070 = vld [vmem:[#allocation14 + $0x7e8] sm:$0xff]
    %v7071 = vld [vmem:[#allocation14 + $0x7f0] sm:$0xff]
    %v7072 = vld [vmem:[#allocation14 + $0x7f8] sm:$0xff]
    %v7073 = vld [vmem:[#allocation16] sm:$0xff]
    %v7074 = vld [vmem:[#allocation16 + $0x8] sm:$0xff]
    %v7075 = vld [vmem:[#allocation16 + $0x10] sm:$0xff]
    %v7076 = vld [vmem:[#allocation16 + $0x18] sm:$0xff]
    %v7077 = vld [vmem:[#allocation16 + $0x20] sm:$0xff]
    %v7078 = vld [vmem:[#allocation16 + $0x28] sm:$0xff]
    %v7079 = vld [vmem:[#allocation16 + $0x30] sm:$0xff]
    %v7080 = vld [vmem:[#allocation16 + $0x38] sm:$0xff]
    %v7081 = vld [vmem:[#allocation16 + $0x40] sm:$0xff]
    %v7082 = vld [vmem:[#allocation16 + $0x48] sm:$0xff]
    %v7083 = vld [vmem:[#allocation16 + $0x50] sm:$0xff]
    %v7084 = vld [vmem:[#allocation16 + $0x58] sm:$0xff]
    %v7085 = vld [vmem:[#allocation16 + $0x60] sm:$0xff]
    %v7086 = vld [vmem:[#allocation16 + $0x68] sm:$0xff]
    %v7087 = vld [vmem:[#allocation16 + $0x70] sm:$0xff]
    %v7088 = vld [vmem:[#allocation16 + $0x78] sm:$0xff]
    %v7089 = vld [vmem:[#allocation16 + $0x80] sm:$0xff]
    %v7090 = vld [vmem:[#allocation16 + $0x88] sm:$0xff]
    %v7091 = vld [vmem:[#allocation16 + $0x90] sm:$0xff]
    %v7092 = vld [vmem:[#allocation16 + $0x98] sm:$0xff]
    %v7093 = vld [vmem:[#allocation16 + $0xa0] sm:$0xff]
    %v7094 = vld [vmem:[#allocation16 + $0xa8] sm:$0xff]
    %v7095 = vld [vmem:[#allocation16 + $0xb0] sm:$0xff]
    %v7096 = vld [vmem:[#allocation16 + $0xb8] sm:$0xff]
    %v7097 = vld [vmem:[#allocation16 + $0xc0] sm:$0xff]
    %v7098 = vld [vmem:[#allocation16 + $0xc8] sm:$0xff]
    %v7099 = vld [vmem:[#allocation16 + $0xd0] sm:$0xff]
    %v7100 = vld [vmem:[#allocation16 + $0xd8] sm:$0xff]
    %v7101 = vld [vmem:[#allocation16 + $0xe0] sm:$0xff]
    %v7102 = vld [vmem:[#allocation16 + $0xe8] sm:$0xff]
    %v7103 = vld [vmem:[#allocation16 + $0xf0] sm:$0xff]
    %v7104 = vld [vmem:[#allocation16 + $0xf8] sm:$0xff]
    %v7105 = vld [vmem:[#allocation16 + $0x100] sm:$0xff]
    %v7106 = vld [vmem:[#allocation16 + $0x108] sm:$0xff]
    %v7107 = vld [vmem:[#allocation16 + $0x110] sm:$0xff]
    %v7108 = vld [vmem:[#allocation16 + $0x118] sm:$0xff]
    %v7109 = vld [vmem:[#allocation16 + $0x120] sm:$0xff]
    %v7110 = vld [vmem:[#allocation16 + $0x128] sm:$0xff]
    %v7111 = vld [vmem:[#allocation16 + $0x130] sm:$0xff]
    %v7112 = vld [vmem:[#allocation16 + $0x138] sm:$0xff]
    %v7113 = vld [vmem:[#allocation16 + $0x140] sm:$0xff]
    %v7114 = vld [vmem:[#allocation16 + $0x148] sm:$0xff]
    %v7115 = vld [vmem:[#allocation16 + $0x150] sm:$0xff]
    %v7116 = vld [vmem:[#allocation16 + $0x158] sm:$0xff]
    %v7117 = vld [vmem:[#allocation16 + $0x160] sm:$0xff]
    %v7118 = vld [vmem:[#allocation16 + $0x168] sm:$0xff]
    %v7119 = vld [vmem:[#allocation16 + $0x170] sm:$0xff]
    %v7120 = vld [vmem:[#allocation16 + $0x178] sm:$0xff]
    %v7121 = vld [vmem:[#allocation16 + $0x180] sm:$0xff]
    %v7122 = vld [vmem:[#allocation16 + $0x188] sm:$0xff]
    %v7123 = vld [vmem:[#allocation16 + $0x190] sm:$0xff]
    %v7124 = vld [vmem:[#allocation16 + $0x198] sm:$0xff]
    %v7125 = vld [vmem:[#allocation16 + $0x1a0] sm:$0xff]
    %v7126 = vld [vmem:[#allocation16 + $0x1a8] sm:$0xff]
    %v7127 = vld [vmem:[#allocation16 + $0x1b0] sm:$0xff]
    %v7128 = vld [vmem:[#allocation16 + $0x1b8] sm:$0xff]
    %v7129 = vld [vmem:[#allocation16 + $0x1c0] sm:$0xff]
    %v7130 = vld [vmem:[#allocation16 + $0x1c8] sm:$0xff]
    %v7131 = vld [vmem:[#allocation16 + $0x1d0] sm:$0xff]
    %v7132 = vld [vmem:[#allocation16 + $0x1d8] sm:$0xff]
    %v7133 = vld [vmem:[#allocation16 + $0x1e0] sm:$0xff]
    %v7134 = vld [vmem:[#allocation16 + $0x1e8] sm:$0xff]
    %v7135 = vld [vmem:[#allocation16 + $0x1f0] sm:$0xff]
    %v7136 = vld [vmem:[#allocation16 + $0x1f8] sm:$0xff]
    %v7137 = vld [vmem:[#allocation16 + $0x200] sm:$0xff]
    %v7138 = vld [vmem:[#allocation16 + $0x208] sm:$0xff]
    %v7139 = vld [vmem:[#allocation16 + $0x210] sm:$0xff]
    %v7140 = vld [vmem:[#allocation16 + $0x218] sm:$0xff]
    %v7141 = vld [vmem:[#allocation16 + $0x220] sm:$0xff]
    %v7142 = vld [vmem:[#allocation16 + $0x228] sm:$0xff]
    %v7143 = vld [vmem:[#allocation16 + $0x230] sm:$0xff]
    %v7144 = vld [vmem:[#allocation16 + $0x238] sm:$0xff]
    %v7145 = vld [vmem:[#allocation16 + $0x240] sm:$0xff]
    %v7146 = vld [vmem:[#allocation16 + $0x248] sm:$0xff]
    %v7147 = vld [vmem:[#allocation16 + $0x250] sm:$0xff]
    %v7148 = vld [vmem:[#allocation16 + $0x258] sm:$0xff]
    %v7149 = vld [vmem:[#allocation16 + $0x260] sm:$0xff]
    %v7150 = vld [vmem:[#allocation16 + $0x268] sm:$0xff]
    %v7151 = vld [vmem:[#allocation16 + $0x270] sm:$0xff]
    %v7152 = vld [vmem:[#allocation16 + $0x278] sm:$0xff]
    %v7153 = vld [vmem:[#allocation16 + $0x280] sm:$0xff]
    %v7154 = vld [vmem:[#allocation16 + $0x288] sm:$0xff]
    %v7155 = vld [vmem:[#allocation16 + $0x290] sm:$0xff]
    %v7156 = vld [vmem:[#allocation16 + $0x298] sm:$0xff]
    %v7157 = vld [vmem:[#allocation16 + $0x2a0] sm:$0xff]
    %v7158 = vld [vmem:[#allocation16 + $0x2a8] sm:$0xff]
    %v7159 = vld [vmem:[#allocation16 + $0x2b0] sm:$0xff]
    %v7160 = vld [vmem:[#allocation16 + $0x2b8] sm:$0xff]
    %v7161 = vld [vmem:[#allocation16 + $0x2c0] sm:$0xff]
    %v7162 = vld [vmem:[#allocation16 + $0x2c8] sm:$0xff]
    %v7163 = vld [vmem:[#allocation16 + $0x2d0] sm:$0xff]
    %v7164 = vld [vmem:[#allocation16 + $0x2d8] sm:$0xff]
    %v7165 = vld [vmem:[#allocation16 + $0x2e0] sm:$0xff]
    %v7166 = vld [vmem:[#allocation16 + $0x2e8] sm:$0xff]
    %v7167 = vld [vmem:[#allocation16 + $0x2f0] sm:$0xff]
    %v7168 = vld [vmem:[#allocation16 + $0x2f8] sm:$0xff]
    %v7169 = vld [vmem:[#allocation16 + $0x300] sm:$0xff]
    %v7170 = vld [vmem:[#allocation16 + $0x308] sm:$0xff]
    %v7171 = vld [vmem:[#allocation16 + $0x310] sm:$0xff]
    %v7172 = vld [vmem:[#allocation16 + $0x318] sm:$0xff]
    %v7173 = vld [vmem:[#allocation16 + $0x320] sm:$0xff]
    %v7174 = vld [vmem:[#allocation16 + $0x328] sm:$0xff]
    %v7175 = vld [vmem:[#allocation16 + $0x330] sm:$0xff]
    %v7176 = vld [vmem:[#allocation16 + $0x338] sm:$0xff]
    %v7177 = vld [vmem:[#allocation16 + $0x340] sm:$0xff]
    %v7178 = vld [vmem:[#allocation16 + $0x348] sm:$0xff]
    %v7179 = vld [vmem:[#allocation16 + $0x350] sm:$0xff]
    %v7180 = vld [vmem:[#allocation16 + $0x358] sm:$0xff]
    %v7181 = vld [vmem:[#allocation16 + $0x360] sm:$0xff]
    %v7182 = vld [vmem:[#allocation16 + $0x368] sm:$0xff]
    %v7183 = vld [vmem:[#allocation16 + $0x370] sm:$0xff]
    %v7184 = vld [vmem:[#allocation16 + $0x378] sm:$0xff]
    %v7185 = vld [vmem:[#allocation16 + $0x380] sm:$0xff]
    %v7186 = vld [vmem:[#allocation16 + $0x388] sm:$0xff]
    %v7187 = vld [vmem:[#allocation16 + $0x390] sm:$0xff]
    %v7188 = vld [vmem:[#allocation16 + $0x398] sm:$0xff]
    %v7189 = vld [vmem:[#allocation16 + $0x3a0] sm:$0xff]
    %v7190 = vld [vmem:[#allocation16 + $0x3a8] sm:$0xff]
    %v7191 = vld [vmem:[#allocation16 + $0x3b0] sm:$0xff]
    %v7192 = vld [vmem:[#allocation16 + $0x3b8] sm:$0xff]
    %v7193 = vld [vmem:[#allocation16 + $0x3c0] sm:$0xff]
    %v7194 = vld [vmem:[#allocation16 + $0x3c8] sm:$0xff]
    %v7195 = vld [vmem:[#allocation16 + $0x3d0] sm:$0xff]
    %v7196 = vld [vmem:[#allocation16 + $0x3d8] sm:$0xff]
    %v7197 = vld [vmem:[#allocation16 + $0x3e0] sm:$0xff]
    %v7198 = vld [vmem:[#allocation16 + $0x3e8] sm:$0xff]
    %v7199 = vld [vmem:[#allocation16 + $0x3f0] sm:$0xff]
    %v7200 = vld [vmem:[#allocation16 + $0x3f8] sm:$0xff]
    %v7201 = vld [vmem:[#allocation16 + $0x400] sm:$0xff]
    %v7202 = vld [vmem:[#allocation16 + $0x408] sm:$0xff]
    %v7203 = vld [vmem:[#allocation16 + $0x410] sm:$0xff]
    %v7204 = vld [vmem:[#allocation16 + $0x418] sm:$0xff]
    %v7205 = vld [vmem:[#allocation16 + $0x420] sm:$0xff]
    %v7206 = vld [vmem:[#allocation16 + $0x428] sm:$0xff]
    %v7207 = vld [vmem:[#allocation16 + $0x430] sm:$0xff]
    %v7208 = vld [vmem:[#allocation16 + $0x438] sm:$0xff]
    %v7209 = vld [vmem:[#allocation16 + $0x440] sm:$0xff]
    %v7210 = vld [vmem:[#allocation16 + $0x448] sm:$0xff]
    %v7211 = vld [vmem:[#allocation16 + $0x450] sm:$0xff]
    %v7212 = vld [vmem:[#allocation16 + $0x458] sm:$0xff]
    %v7213 = vld [vmem:[#allocation16 + $0x460] sm:$0xff]
    %v7214 = vld [vmem:[#allocation16 + $0x468] sm:$0xff]
    %v7215 = vld [vmem:[#allocation16 + $0x470] sm:$0xff]
    %v7216 = vld [vmem:[#allocation16 + $0x478] sm:$0xff]
    %v7217 = vld [vmem:[#allocation16 + $0x480] sm:$0xff]
    %v7218 = vld [vmem:[#allocation16 + $0x488] sm:$0xff]
    %v7219 = vld [vmem:[#allocation16 + $0x490] sm:$0xff]
    %v7220 = vld [vmem:[#allocation16 + $0x498] sm:$0xff]
    %v7221 = vld [vmem:[#allocation16 + $0x4a0] sm:$0xff]
    %v7222 = vld [vmem:[#allocation16 + $0x4a8] sm:$0xff]
    %v7223 = vld [vmem:[#allocation16 + $0x4b0] sm:$0xff]
    %v7224 = vld [vmem:[#allocation16 + $0x4b8] sm:$0xff]
    %v7225 = vld [vmem:[#allocation16 + $0x4c0] sm:$0xff]
    %v7226 = vld [vmem:[#allocation16 + $0x4c8] sm:$0xff]
    %v7227 = vld [vmem:[#allocation16 + $0x4d0] sm:$0xff]
    %v7228 = vld [vmem:[#allocation16 + $0x4d8] sm:$0xff]
    %v7229 = vld [vmem:[#allocation16 + $0x4e0] sm:$0xff]
    %v7230 = vld [vmem:[#allocation16 + $0x4e8] sm:$0xff]
    %v7231 = vld [vmem:[#allocation16 + $0x4f0] sm:$0xff]
    %v7232 = vld [vmem:[#allocation16 + $0x4f8] sm:$0xff]
    %v7233 = vld [vmem:[#allocation16 + $0x500] sm:$0xff]
    %v7234 = vld [vmem:[#allocation16 + $0x508] sm:$0xff]
    %v7235 = vld [vmem:[#allocation16 + $0x510] sm:$0xff]
    %v7236 = vld [vmem:[#allocation16 + $0x518] sm:$0xff]
    %v7237 = vld [vmem:[#allocation16 + $0x520] sm:$0xff]
    %v7238 = vld [vmem:[#allocation16 + $0x528] sm:$0xff]
    %v7239 = vld [vmem:[#allocation16 + $0x530] sm:$0xff]
    %v7240 = vld [vmem:[#allocation16 + $0x538] sm:$0xff]
    %v7241 = vld [vmem:[#allocation16 + $0x540] sm:$0xff]
    %v7242 = vld [vmem:[#allocation16 + $0x548] sm:$0xff]
    %v7243 = vld [vmem:[#allocation16 + $0x550] sm:$0xff]
    %v7244 = vld [vmem:[#allocation16 + $0x558] sm:$0xff]
    %v7245 = vld [vmem:[#allocation16 + $0x560] sm:$0xff]
    %v7246 = vld [vmem:[#allocation16 + $0x568] sm:$0xff]
    %v7247 = vld [vmem:[#allocation16 + $0x570] sm:$0xff]
    %v7248 = vld [vmem:[#allocation16 + $0x578] sm:$0xff]
    %v7249 = vld [vmem:[#allocation16 + $0x580] sm:$0xff]
    %v7250 = vld [vmem:[#allocation16 + $0x588] sm:$0xff]
    %v7251 = vld [vmem:[#allocation16 + $0x590] sm:$0xff]
    %v7252 = vld [vmem:[#allocation16 + $0x598] sm:$0xff]
    %v7253 = vld [vmem:[#allocation16 + $0x5a0] sm:$0xff]
    %v7254 = vld [vmem:[#allocation16 + $0x5a8] sm:$0xff]
    %v7255 = vld [vmem:[#allocation16 + $0x5b0] sm:$0xff]
    %v7256 = vld [vmem:[#allocation16 + $0x5b8] sm:$0xff]
    %v7257 = vld [vmem:[#allocation16 + $0x5c0] sm:$0xff]
    %v7258 = vld [vmem:[#allocation16 + $0x5c8] sm:$0xff]
    %v7259 = vld [vmem:[#allocation16 + $0x5d0] sm:$0xff]
    %v7260 = vld [vmem:[#allocation16 + $0x5d8] sm:$0xff]
    %v7261 = vld [vmem:[#allocation16 + $0x5e0] sm:$0xff]
    %v7262 = vld [vmem:[#allocation16 + $0x5e8] sm:$0xff]
    %v7263 = vld [vmem:[#allocation16 + $0x5f0] sm:$0xff]
    %v7264 = vld [vmem:[#allocation16 + $0x5f8] sm:$0xff]
    %v7265 = vld [vmem:[#allocation16 + $0x600] sm:$0xff]
    %v7266 = vld [vmem:[#allocation16 + $0x608] sm:$0xff]
    %v7267 = vld [vmem:[#allocation16 + $0x610] sm:$0xff]
    %v7268 = vld [vmem:[#allocation16 + $0x618] sm:$0xff]
    %v7269 = vld [vmem:[#allocation16 + $0x620] sm:$0xff]
    %v7270 = vld [vmem:[#allocation16 + $0x628] sm:$0xff]
    %v7271 = vld [vmem:[#allocation16 + $0x630] sm:$0xff]
    %v7272 = vld [vmem:[#allocation16 + $0x638] sm:$0xff]
    %v7273 = vld [vmem:[#allocation16 + $0x640] sm:$0xff]
    %v7274 = vld [vmem:[#allocation16 + $0x648] sm:$0xff]
    %v7275 = vld [vmem:[#allocation16 + $0x650] sm:$0xff]
    %v7276 = vld [vmem:[#allocation16 + $0x658] sm:$0xff]
    %v7277 = vld [vmem:[#allocation16 + $0x660] sm:$0xff]
    %v7278 = vld [vmem:[#allocation16 + $0x668] sm:$0xff]
    %v7279 = vld [vmem:[#allocation16 + $0x670] sm:$0xff]
    %v7280 = vld [vmem:[#allocation16 + $0x678] sm:$0xff]
    %v7281 = vld [vmem:[#allocation16 + $0x680] sm:$0xff]
    %v7282 = vld [vmem:[#allocation16 + $0x688] sm:$0xff]
    %v7283 = vld [vmem:[#allocation16 + $0x690] sm:$0xff]
    %v7284 = vld [vmem:[#allocation16 + $0x698] sm:$0xff]
    %v7285 = vld [vmem:[#allocation16 + $0x6a0] sm:$0xff]
    %v7286 = vld [vmem:[#allocation16 + $0x6a8] sm:$0xff]
    %v7287 = vld [vmem:[#allocation16 + $0x6b0] sm:$0xff]
    %v7288 = vld [vmem:[#allocation16 + $0x6b8] sm:$0xff]
    %v7289 = vld [vmem:[#allocation16 + $0x6c0] sm:$0xff]
    %v7290 = vld [vmem:[#allocation16 + $0x6c8] sm:$0xff]
    %v7291 = vld [vmem:[#allocation16 + $0x6d0] sm:$0xff]
    %v7292 = vld [vmem:[#allocation16 + $0x6d8] sm:$0xff]
    %v7293 = vld [vmem:[#allocation16 + $0x6e0] sm:$0xff]
    %v7294 = vld [vmem:[#allocation16 + $0x6e8] sm:$0xff]
    %v7295 = vld [vmem:[#allocation16 + $0x6f0] sm:$0xff]
    %v7296 = vld [vmem:[#allocation16 + $0x6f8] sm:$0xff]
    %v7297 = vld [vmem:[#allocation16 + $0x700] sm:$0xff]
    %v7298 = vld [vmem:[#allocation16 + $0x708] sm:$0xff]
    %v7299 = vld [vmem:[#allocation16 + $0x710] sm:$0xff]
    %v7300 = vld [vmem:[#allocation16 + $0x718] sm:$0xff]
    %v7301 = vld [vmem:[#allocation16 + $0x720] sm:$0xff]
    %v7302 = vld [vmem:[#allocation16 + $0x728] sm:$0xff]
    %v7303 = vld [vmem:[#allocation16 + $0x730] sm:$0xff]
    %v7304 = vld [vmem:[#allocation16 + $0x738] sm:$0xff]
    %v7305 = vld [vmem:[#allocation16 + $0x740] sm:$0xff]
    %v7306 = vld [vmem:[#allocation16 + $0x748] sm:$0xff]
    %v7307 = vld [vmem:[#allocation16 + $0x750] sm:$0xff]
    %v7308 = vld [vmem:[#allocation16 + $0x758] sm:$0xff]
    %v7309 = vld [vmem:[#allocation16 + $0x760] sm:$0xff]
    %v7310 = vld [vmem:[#allocation16 + $0x768] sm:$0xff]
    %v7311 = vld [vmem:[#allocation16 + $0x770] sm:$0xff]
    %v7312 = vld [vmem:[#allocation16 + $0x778] sm:$0xff]
    %v7313 = vld [vmem:[#allocation16 + $0x780] sm:$0xff]
    %v7314 = vld [vmem:[#allocation16 + $0x788] sm:$0xff]
    %v7315 = vld [vmem:[#allocation16 + $0x790] sm:$0xff]
    %v7316 = vld [vmem:[#allocation16 + $0x798] sm:$0xff]
    %v7317 = vld [vmem:[#allocation16 + $0x7a0] sm:$0xff]
    %v7318 = vld [vmem:[#allocation16 + $0x7a8] sm:$0xff]
    %v7319 = vld [vmem:[#allocation16 + $0x7b0] sm:$0xff]
    %v7320 = vld [vmem:[#allocation16 + $0x7b8] sm:$0xff]
    %v7321 = vld [vmem:[#allocation16 + $0x7c0] sm:$0xff]
    %v7322 = vld [vmem:[#allocation16 + $0x7c8] sm:$0xff]
    %v7323 = vld [vmem:[#allocation16 + $0x7d0] sm:$0xff]
    %v7324 = vld [vmem:[#allocation16 + $0x7d8] sm:$0xff]
    %v7325 = vld [vmem:[#allocation16 + $0x7e0] sm:$0xff]
    %v7326 = vld [vmem:[#allocation16 + $0x7e8] sm:$0xff]
    %v7327 = vld [vmem:[#allocation16 + $0x7f0] sm:$0xff]
    %v7328 = vld [vmem:[#allocation16 + $0x7f8] sm:$0xff]
    %7329 = vmatprep.subr.mxu0 %v7194
    %7330 = vmatpush1.msra.mxu0 %v7193
    %7331 = vmatprep.subr.mxu0 %v7186
    %7332 = vmatpush1.msra.mxu0 %v7185
    %7333 = vmatprep.subr.mxu0 %v7178
    %7334 = vmatpush1.msra.mxu0 %v7177
    %7335 = vmatprep.subr.mxu0 %v7170
    %7336 = vmatpush1.msra.mxu0 %v7169
    %7337 = vmatprep.subr.mxu0 %v7162
    %7338 = vmatpush1.msra.mxu0 %v7161
    %7339 = vmatprep.subr.mxu0 %v7154
    %7340 = vmatpush1.msra.mxu0 %v7153
    %7341 = vmatprep.subr.mxu0 %v7146
    %7342 = vmatpush1.msra.mxu0 %v7145
    %7343 = vmatprep.subr.mxu0 %v7138
    %7344 = vmatpush1.msra.mxu0 %v7137
    %7345 = vmatprep.subr.mxu0 %v7130
    %7346 = vmatpush1.msra.mxu0 %v7129
    %7347 = vmatprep.subr.mxu0 %v7122
    %7348 = vmatpush1.msra.mxu0 %v7121
    %7349 = vmatprep.subr.mxu0 %v7114
    %7350 = vmatpush1.msra.mxu0 %v7113
    %7351 = vmatprep.subr.mxu0 %v7106
    %7352 = vmatpush1.msra.mxu0 %v7105
    %7353 = vmatprep.subr.mxu0 %v7098
    %7354 = vmatpush1.msra.mxu0 %v7097
    %7355 = vmatprep.subr.mxu0 %v7090
    %7356 = vmatpush1.msra.mxu0 %v7089
    %7357 = vmatprep.subr.mxu0 %v7082
    %7358 = vmatpush1.msra.mxu0 %v7081
    %7359 = vmatprep.subr.mxu0 %v7074
    %7360 = vmatpush1.msra.mxu0 %v7073
    %7361 = vmatprep.subr.mxu0 %v7322
    %7362 = vmatpush2.msra.mxu0 %v7321
    %7363 = vmatprep.subr.mxu0 %v7314
    %7364 = vmatpush2.msra.mxu0 %v7313
    %7365 = vmatprep.subr.mxu0 %v7306
    %7366 = vmatpush2.msra.mxu0 %v7305
    %7367 = vmatprep.subr.mxu0 %v7298
    %7368 = vmatpush2.msra.mxu0 %v7297
    %7369 = vmatprep.subr.mxu0 %v7290
    %7370 = vmatpush2.msra.mxu0 %v7289
    %7371 = vmatprep.subr.mxu0 %v7282
    %7372 = vmatpush2.msra.mxu0 %v7281
    %7373 = vmatprep.subr.mxu0 %v7274
    %7374 = vmatpush2.msra.mxu0 %v7273
    %7375 = vmatprep.subr.mxu0 %v7266
    %7376 = vmatpush2.msra.mxu0 %v7265
    %7377 = vmatprep.subr.mxu0 %v7258
    %7378 = vmatpush2.msra.mxu0 %v7257
    %7379 = vmatprep.subr.mxu0 %v7250
    %7380 = vmatpush2.msra.mxu0 %v7249
    %7381 = vmatprep.subr.mxu0 %v7242
    %7382 = vmatpush2.msra.mxu0 %v7241
    %7383 = vmatprep.subr.mxu0 %v7234
    %7384 = vmatpush2.msra.mxu0 %v7233
    %7385 = vmatprep.subr.mxu0 %v7226
    %7386 = vmatpush2.msra.mxu0 %v7225
    %7387 = vmatprep.subr.mxu0 %v7218
    %7388 = vmatpush2.msra.mxu0 %v7217
    %7389 = vmatprep.subr.mxu0 %v7210
    %7390 = vmatpush2.msra.mxu0 %v7209
    %7391 = vmatprep.subr.mxu0 %v7202
    %7392 = vmatpush2.msra.mxu0 %v7201
    %7393 = vmatprep.mubr.f32.mxu0 %v6802
    %7394 = vmatmul.mubr.f32.gmra.mxu0 %v6801
    %v7395 = vpop.f32.mrf.mxu0
    %v7396 = vadd.f32 0.0, %v7395
    %v7397 = vpop.f32.mrf.mxu0
    %v7398 = vadd.f32 0.0, %v7397
    %7399 = vmatprep.mubr.f32.mxu0 %v6804
    %7400 = vmatmul.mubr.f32.gmra.mxu0 %v6803
    %v7401 = vpop.f32.mrf.mxu0
    %v7402 = vadd.f32 0.0, %v7401
    %v7403 = vpop.f32.mrf.mxu0
    %v7404 = vadd.f32 0.0, %v7403
    %7405 = vmatprep.mubr.f32.mxu0 %v6806
    %7406 = vmatmul.mubr.f32.gmra.mxu0 %v6805
    %v7407 = vpop.f32.mrf.mxu0
    %v7408 = vadd.f32 0.0, %v7407
    %v7409 = vpop.f32.mrf.mxu0
    %v7410 = vadd.f32 0.0, %v7409
    %7411 = vmatprep.mubr.f32.mxu0 %v6808
    %7412 = vmatmul.mubr.f32.gmra.mxu0 %v6807
    %v7413 = vpop.f32.mrf.mxu0
    %v7414 = vadd.f32 0.0, %v7413
    %v7415 = vpop.f32.mrf.mxu0
    %v7416 = vadd.f32 0.0, %v7415
    %7417 = vmatprep.mubr.f32.mxu0 %v6810
    %7418 = vmatmul.mubr.f32.gmra.mxu0 %v6809
    %v7419 = vpop.f32.mrf.mxu0
    %v7420 = vadd.f32 0.0, %v7419
    %v7421 = vpop.f32.mrf.mxu0
    %v7422 = vadd.f32 0.0, %v7421
    %7423 = vmatprep.mubr.f32.mxu0 %v6812
    %7424 = vmatmul.mubr.f32.gmra.mxu0 %v6811
    %v7425 = vpop.f32.mrf.mxu0
    %v7426 = vadd.f32 0.0, %v7425
    %v7427 = vpop.f32.mrf.mxu0
    %v7428 = vadd.f32 0.0, %v7427
    %7429 = vmatprep.mubr.f32.mxu0 %v6814
    %7430 = vmatmul.mubr.f32.gmra.mxu0 %v6813
    %v7431 = vpop.f32.mrf.mxu0
    %v7432 = vadd.f32 0.0, %v7431
    %v7433 = vpop.f32.mrf.mxu0
    %v7434 = vadd.f32 0.0, %v7433
    %7435 = vmatprep.mubr.f32.mxu0 %v6816
    %7436 = vmatmul.mubr.f32.gmra.mxu0 %v6815
    %v7437 = vpop.f32.mrf.mxu0
    %v7438 = vadd.f32 0.0, %v7437
    %v7439 = vpop.f32.mrf.mxu0
    %v7440 = vadd.f32 0.0, %v7439
    %7441 = vdwg.mxu0
    %7442 = vmatprep.subr.mxu0 %v7196
    %7443 = vmatpush1.msra.mxu0 %v7195
    %7444 = vmatprep.subr.mxu0 %v7188
    %7445 = vmatpush1.msra.mxu0 %v7187
    %7446 = vmatprep.subr.mxu0 %v7180
    %7447 = vmatpush1.msra.mxu0 %v7179
    %7448 = vmatprep.subr.mxu0 %v7172
    %7449 = vmatpush1.msra.mxu0 %v7171
    %7450 = vmatprep.subr.mxu0 %v7164
    %7451 = vmatpush1.msra.mxu0 %v7163
    %7452 = vmatprep.subr.mxu0 %v7156
    %7453 = vmatpush1.msra.mxu0 %v7155
    %7454 = vmatprep.subr.mxu0 %v7148
    %7455 = vmatpush1.msra.mxu0 %v7147
    %7456 = vmatprep.subr.mxu0 %v7140
    %7457 = vmatpush1.msra.mxu0 %v7139
    %7458 = vmatprep.subr.mxu0 %v7132
    %7459 = vmatpush1.msra.mxu0 %v7131
    %7460 = vmatprep.subr.mxu0 %v7124
    %7461 = vmatpush1.msra.mxu0 %v7123
    %7462 = vmatprep.subr.mxu0 %v7116
    %7463 = vmatpush1.msra.mxu0 %v7115
    %7464 = vmatprep.subr.mxu0 %v7108
    %7465 = vmatpush1.msra.mxu0 %v7107
    %7466 = vmatprep.subr.mxu0 %v7100
    %7467 = vmatpush1.msra.mxu0 %v7099
    %7468 = vmatprep.subr.mxu0 %v7092
    %7469 = vmatpush1.msra.mxu0 %v7091
    %7470 = vmatprep.subr.mxu0 %v7084
    %7471 = vmatpush1.msra.mxu0 %v7083
    %7472 = vmatprep.subr.mxu0 %v7076
    %7473 = vmatpush1.msra.mxu0 %v7075
    %7474 = vmatprep.subr.mxu0 %v7324
    %7475 = vmatpush2.msra.mxu0 %v7323
    %7476 = vmatprep.subr.mxu0 %v7316
    %7477 = vmatpush2.msra.mxu0 %v7315
    %7478 = vmatprep.subr.mxu0 %v7308
    %7479 = vmatpush2.msra.mxu0 %v7307
    %7480 = vmatprep.subr.mxu0 %v7300
    %7481 = vmatpush2.msra.mxu0 %v7299
    %7482 = vmatprep.subr.mxu0 %v7292
    %7483 = vmatpush2.msra.mxu0 %v7291
    %7484 = vmatprep.subr.mxu0 %v7284
    %7485 = vmatpush2.msra.mxu0 %v7283
    %7486 = vmatprep.subr.mxu0 %v7276
    %7487 = vmatpush2.msra.mxu0 %v7275
    %7488 = vmatprep.subr.mxu0 %v7268
    %7489 = vmatpush2.msra.mxu0 %v7267
    %7490 = vmatprep.subr.mxu0 %v7260
    %7491 = vmatpush2.msra.mxu0 %v7259
    %7492 = vmatprep.subr.mxu0 %v7252
    %7493 = vmatpush2.msra.mxu0 %v7251
    %7494 = vmatprep.subr.mxu0 %v7244
    %7495 = vmatpush2.msra.mxu0 %v7243
    %7496 = vmatprep.subr.mxu0 %v7236
    %7497 = vmatpush2.msra.mxu0 %v7235
    %7498 = vmatprep.subr.mxu0 %v7228
    %7499 = vmatpush2.msra.mxu0 %v7227
    %7500 = vmatprep.subr.mxu0 %v7220
    %7501 = vmatpush2.msra.mxu0 %v7219
    %7502 = vmatprep.subr.mxu0 %v7212
    %7503 = vmatpush2.msra.mxu0 %v7211
    %7504 = vmatprep.subr.mxu0 %v7204
    %7505 = vmatpush2.msra.mxu0 %v7203
    %7506 = vmatprep.mubr.f32.mxu0 %v6802
    %7507 = vmatmul.mubr.f32.gmra.mxu0 %v6801
    %v7508 = vpop.f32.mrf.mxu0
    %v7509 = vadd.f32 0.0, %v7508
    %v7510 = vpop.f32.mrf.mxu0
    %v7511 = vadd.f32 0.0, %v7510
    %7512 = vmatprep.mubr.f32.mxu0 %v6804
    %7513 = vmatmul.mubr.f32.gmra.mxu0 %v6803
    %v7514 = vpop.f32.mrf.mxu0
    %v7515 = vadd.f32 0.0, %v7514
    %v7516 = vpop.f32.mrf.mxu0
    %v7517 = vadd.f32 0.0, %v7516
    %7518 = vmatprep.mubr.f32.mxu0 %v6806
    %7519 = vmatmul.mubr.f32.gmra.mxu0 %v6805
    %v7520 = vpop.f32.mrf.mxu0
    %v7521 = vadd.f32 0.0, %v7520
    %v7522 = vpop.f32.mrf.mxu0
    %v7523 = vadd.f32 0.0, %v7522
    %7524 = vmatprep.mubr.f32.mxu0 %v6808
    %7525 = vmatmul.mubr.f32.gmra.mxu0 %v6807
    %v7526 = vpop.f32.mrf.mxu0
    %v7527 = vadd.f32 0.0, %v7526
    %v7528 = vpop.f32.mrf.mxu0
    %v7529 = vadd.f32 0.0, %v7528
    %7530 = vmatprep.mubr.f32.mxu0 %v6810
    %7531 = vmatmul.mubr.f32.gmra.mxu0 %v6809
    %v7532 = vpop.f32.mrf.mxu0
    %v7533 = vadd.f32 0.0, %v7532
    %v7534 = vpop.f32.mrf.mxu0
    %v7535 = vadd.f32 0.0, %v7534
    %7536 = vmatprep.mubr.f32.mxu0 %v6812
    %7537 = vmatmul.mubr.f32.gmra.mxu0 %v6811
    %v7538 = vpop.f32.mrf.mxu0
    %v7539 = vadd.f32 0.0, %v7538
    %v7540 = vpop.f32.mrf.mxu0
    %v7541 = vadd.f32 0.0, %v7540
    %7542 = vmatprep.mubr.f32.mxu0 %v6814
    %7543 = vmatmul.mubr.f32.gmra.mxu0 %v6813
    %v7544 = vpop.f32.mrf.mxu0
    %v7545 = vadd.f32 0.0, %v7544
    %v7546 = vpop.f32.mrf.mxu0
    %v7547 = vadd.f32 0.0, %v7546
    %7548 = vmatprep.mubr.f32.mxu0 %v6816
    %7549 = vmatmul.mubr.f32.gmra.mxu0 %v6815
    %v7550 = vpop.f32.mrf.mxu0
    %v7551 = vadd.f32 0.0, %v7550
    %v7552 = vpop.f32.mrf.mxu0
    %v7553 = vadd.f32 0.0, %v7552
    %7554 = vdwg.mxu0
    %7555 = vmatprep.subr.mxu0 %v7198
    %7556 = vmatpush1.msra.mxu0 %v7197
    %7557 = vmatprep.subr.mxu0 %v7190
    %7558 = vmatpush1.msra.mxu0 %v7189
    %7559 = vmatprep.subr.mxu0 %v7182
    %7560 = vmatpush1.msra.mxu0 %v7181
    %7561 = vmatprep.subr.mxu0 %v7174
    %7562 = vmatpush1.msra.mxu0 %v7173
    %7563 = vmatprep.subr.mxu0 %v7166
    %7564 = vmatpush1.msra.mxu0 %v7165
    %7565 = vmatprep.subr.mxu0 %v7158
    %7566 = vmatpush1.msra.mxu0 %v7157
    %7567 = vmatprep.subr.mxu0 %v7150
    %7568 = vmatpush1.msra.mxu0 %v7149
    %7569 = vmatprep.subr.mxu0 %v7142
    %7570 = vmatpush1.msra.mxu0 %v7141
    %7571 = vmatprep.subr.mxu0 %v7134
    %7572 = vmatpush1.msra.mxu0 %v7133
    %7573 = vmatprep.subr.mxu0 %v7126
    %7574 = vmatpush1.msra.mxu0 %v7125
    %7575 = vmatprep.subr.mxu0 %v7118
    %7576 = vmatpush1.msra.mxu0 %v7117
    %7577 = vmatprep.subr.mxu0 %v7110
    %7578 = vmatpush1.msra.mxu0 %v7109
    %7579 = vmatprep.subr.mxu0 %v7102
    %7580 = vmatpush1.msra.mxu0 %v7101
    %7581 = vmatprep.subr.mxu0 %v7094
    %7582 = vmatpush1.msra.mxu0 %v7093
    %7583 = vmatprep.subr.mxu0 %v7086
    %7584 = vmatpush1.msra.mxu0 %v7085
    %7585 = vmatprep.subr.mxu0 %v7078
    %7586 = vmatpush1.msra.mxu0 %v7077
    %7587 = vmatprep.subr.mxu0 %v7326
    %7588 = vmatpush2.msra.mxu0 %v7325
    %7589 = vmatprep.subr.mxu0 %v7318
    %7590 = vmatpush2.msra.mxu0 %v7317
    %7591 = vmatprep.subr.mxu0 %v7310
    %7592 = vmatpush2.msra.mxu0 %v7309
    %7593 = vmatprep.subr.mxu0 %v7302
    %7594 = vmatpush2.msra.mxu0 %v7301
    %7595 = vmatprep.subr.mxu0 %v7294
    %7596 = vmatpush2.msra.mxu0 %v7293
    %7597 = vmatprep.subr.mxu0 %v7286
    %7598 = vmatpush2.msra.mxu0 %v7285
    %7599 = vmatprep.subr.mxu0 %v7278
    %7600 = vmatpush2.msra.mxu0 %v7277
    %7601 = vmatprep.subr.mxu0 %v7270
    %7602 = vmatpush2.msra.mxu0 %v7269
    %7603 = vmatprep.subr.mxu0 %v7262
    %7604 = vmatpush2.msra.mxu0 %v7261
    %7605 = vmatprep.subr.mxu0 %v7254
    %7606 = vmatpush2.msra.mxu0 %v7253
    %7607 = vmatprep.subr.mxu0 %v7246
    %7608 = vmatpush2.msra.mxu0 %v7245
    %7609 = vmatprep.subr.mxu0 %v7238
    %7610 = vmatpush2.msra.mxu0 %v7237
    %7611 = vmatprep.subr.mxu0 %v7230
    %7612 = vmatpush2.msra.mxu0 %v7229
    %7613 = vmatprep.subr.mxu0 %v7222
    %7614 = vmatpush2.msra.mxu0 %v7221
    %7615 = vmatprep.subr.mxu0 %v7214
    %7616 = vmatpush2.msra.mxu0 %v7213
    %7617 = vmatprep.subr.mxu0 %v7206
    %7618 = vmatpush2.msra.mxu0 %v7205
    %7619 = vmatprep.mubr.f32.mxu0 %v6802
    %7620 = vmatmul.mubr.f32.gmra.mxu0 %v6801
    %v7621 = vpop.f32.mrf.mxu0
    %v7622 = vpop.f32.mrf.mxu0
    %7623 = vmatprep.mubr.f32.mxu0 %v6804
    %7624 = vmatmul.mubr.f32.gmra.mxu0 %v6803
    %v7625 = vpop.f32.mrf.mxu0
    %v7626 = vpop.f32.mrf.mxu0
    %7627 = vmatprep.mubr.f32.mxu0 %v6806
    %7628 = vmatmul.mubr.f32.gmra.mxu0 %v6805
    %v7629 = vpop.f32.mrf.mxu0
    %v7630 = vpop.f32.mrf.mxu0
    %7631 = vmatprep.mubr.f32.mxu0 %v6808
    %7632 = vmatmul.mubr.f32.gmra.mxu0 %v6807
    %v7633 = vpop.f32.mrf.mxu0
    %v7634 = vpop.f32.mrf.mxu0
    %7635 = vmatprep.mubr.f32.mxu0 %v6810
    %7636 = vmatmul.mubr.f32.gmra.mxu0 %v6809
    %v7637 = vpop.f32.mrf.mxu0
    %v7638 = vpop.f32.mrf.mxu0
    %7639 = vmatprep.mubr.f32.mxu0 %v6812
    %7640 = vmatmul.mubr.f32.gmra.mxu0 %v6811
    %v7641 = vpop.f32.mrf.mxu0
    %v7642 = vpop.f32.mrf.mxu0
    %7643 = vmatprep.mubr.f32.mxu0 %v6814
    %7644 = vmatmul.mubr.f32.gmra.mxu0 %v6813
    %v7645 = vpop.f32.mrf.mxu0
    %v7646 = vpop.f32.mrf.mxu0
    %7647 = vmatprep.mubr.f32.mxu0 %v6816
    %7648 = vmatmul.mubr.f32.gmra.mxu0 %v6815
    %v7649 = vpop.f32.mrf.mxu0
    %v7650 = vadd.f32 0.0, %v7649
    %v7651 = vpop.f32.mrf.mxu0
    %v7652 = vadd.f32 0.0, %v7651
    %7653 = vdwg.mxu0
    %7654 = vmatprep.subr.mxu0 %v7200
    %7655 = vmatpush1.msra.mxu0 %v7199
    %7656 = vmatprep.subr.mxu0 %v7192
    %7657 = vmatpush1.msra.mxu0 %v7191
    %7658 = vmatprep.subr.mxu0 %v7184
    %7659 = vmatpush1.msra.mxu0 %v7183
    %7660 = vmatprep.subr.mxu0 %v7176
    %7661 = vmatpush1.msra.mxu0 %v7175
    %7662 = vmatprep.subr.mxu0 %v7168
    %7663 = vmatpush1.msra.mxu0 %v7167
    %7664 = vmatprep.subr.mxu0 %v7160
    %7665 = vmatpush1.msra.mxu0 %v7159
    %7666 = vmatprep.subr.mxu0 %v7152
    %7667 = vmatpush1.msra.mxu0 %v7151
    %7668 = vmatprep.subr.mxu0 %v7144
    %7669 = vmatpush1.msra.mxu0 %v7143
    %7670 = vmatprep.subr.mxu0 %v7136
    %7671 = vmatpush1.msra.mxu0 %v7135
    %7672 = vmatprep.subr.mxu0 %v7128
    %7673 = vmatpush1.msra.mxu0 %v7127
    %7674 = vmatprep.subr.mxu0 %v7120
    %7675 = vmatpush1.msra.mxu0 %v7119
    %7676 = vmatprep.subr.mxu0 %v7112
    %7677 = vmatpush1.msra.mxu0 %v7111
    %7678 = vmatprep.subr.mxu0 %v7104
    %7679 = vmatpush1.msra.mxu0 %v7103
    %7680 = vmatprep.subr.mxu0 %v7096
    %7681 = vmatpush1.msra.mxu0 %v7095
    %7682 = vmatprep.subr.mxu0 %v7088
    %7683 = vmatpush1.msra.mxu0 %v7087
    %7684 = vmatprep.subr.mxu0 %v7080
    %7685 = vmatpush1.msra.mxu0 %v7079
    %7686 = vmatprep.subr.mxu0 %v7328
    %7687 = vmatpush2.msra.mxu0 %v7327
    %7688 = vmatprep.subr.mxu0 %v7320
    %7689 = vmatpush2.msra.mxu0 %v7319
    %7690 = vmatprep.subr.mxu0 %v7312
    %7691 = vmatpush2.msra.mxu0 %v7311
    %7692 = vmatprep.subr.mxu0 %v7304
    %7693 = vmatpush2.msra.mxu0 %v7303
    %7694 = vmatprep.subr.mxu0 %v7296
    %7695 = vmatpush2.msra.mxu0 %v7295
    %7696 = vmatprep.subr.mxu0 %v7288
    %7697 = vmatpush2.msra.mxu0 %v7287
    %7698 = vmatprep.subr.mxu0 %v7280
    %7699 = vmatpush2.msra.mxu0 %v7279
    %7700 = vmatprep.subr.mxu0 %v7272
    %7701 = vmatpush2.msra.mxu0 %v7271
    %7702 = vmatprep.subr.mxu0 %v7264
    %7703 = vmatpush2.msra.mxu0 %v7263
    %7704 = vmatprep.subr.mxu0 %v7256
    %7705 = vmatpush2.msra.mxu0 %v7255
    %7706 = vmatprep.subr.mxu0 %v7248
    %7707 = vmatpush2.msra.mxu0 %v7247
    %7708 = vmatprep.subr.mxu0 %v7240
    %7709 = vmatpush2.msra.mxu0 %v7239
    %7710 = vmatprep.subr.mxu0 %v7232
    %7711 = vmatpush2.msra.mxu0 %v7231
    %7712 = vmatprep.subr.mxu0 %v7224
    %7713 = vmatpush2.msra.mxu0 %v7223
    %7714 = vmatprep.subr.mxu0 %v7216
    %7715 = vmatpush2.msra.mxu0 %v7215
    %7716 = vmatprep.subr.mxu0 %v7208
    %7717 = vmatpush2.msra.mxu0 %v7207
    %7718 = vmatprep.mubr.f32.mxu0 %v6802
    %7719 = vmatmul.mubr.f32.gmra.mxu0 %v6801
    %v7720 = vpop.f32.mrf.mxu0
    %v7721 = vpop.f32.mrf.mxu0
    %7722 = vmatprep.mubr.f32.mxu0 %v6804
    %7723 = vmatmul.mubr.f32.gmra.mxu0 %v6803
    %v7724 = vpop.f32.mrf.mxu0
    %v7725 = vpop.f32.mrf.mxu0
    %7726 = vmatprep.mubr.f32.mxu0 %v6806
    %7727 = vmatmul.mubr.f32.gmra.mxu0 %v6805
    %v7728 = vpop.f32.mrf.mxu0
    %v7729 = vpop.f32.mrf.mxu0
    %7730 = vmatprep.mubr.f32.mxu0 %v6808
    %7731 = vmatmul.mubr.f32.gmra.mxu0 %v6807
    %v7732 = vpop.f32.mrf.mxu0
    %v7733 = vpop.f32.mrf.mxu0
    %7734 = vmatprep.mubr.f32.mxu0 %v6810
    %7735 = vmatmul.mubr.f32.gmra.mxu0 %v6809
    %v7736 = vpop.f32.mrf.mxu0
    %v7737 = vpop.f32.mrf.mxu0
    %7738 = vmatprep.mubr.f32.mxu0 %v6812
    %7739 = vmatmul.mubr.f32.gmra.mxu0 %v6811
    %v7740 = vpop.f32.mrf.mxu0
    %v7741 = vpop.f32.mrf.mxu0
    %7742 = vmatprep.mubr.f32.mxu0 %v6814
    %7743 = vmatmul.mubr.f32.gmra.mxu0 %v6813
    %v7744 = vpop.f32.mrf.mxu0
    %v7745 = vpop.f32.mrf.mxu0
    %7746 = vmatprep.mubr.f32.mxu0 %v6816
    %7747 = vmatmul.mubr.f32.gmra.mxu0 %v6815
    %v7748 = vpop.f32.mrf.mxu0
    %v7749 = vadd.f32 0.0, %v7748
    %v7750 = vpop.f32.mrf.mxu0
    %v7751 = vadd.f32 0.0, %v7750
    %7752 = vdwg.mxu0
    %7753 = vmatprep.subr.mxu0 %v6938
    %7754 = vmatpush1.msra.mxu0 %v6937
    %7755 = vmatprep.subr.mxu0 %v6930
    %7756 = vmatpush1.msra.mxu0 %v6929
    %7757 = vmatprep.subr.mxu0 %v6922
    %7758 = vmatpush1.msra.mxu0 %v6921
    %7759 = vmatprep.subr.mxu0 %v6914
    %7760 = vmatpush1.msra.mxu0 %v6913
    %7761 = vmatprep.subr.mxu0 %v6906
    %7762 = vmatpush1.msra.mxu0 %v6905
    %7763 = vmatprep.subr.mxu0 %v6898
    %7764 = vmatpush1.msra.mxu0 %v6897
    %7765 = vmatprep.subr.mxu0 %v6890
    %7766 = vmatpush1.msra.mxu0 %v6889
    %7767 = vmatprep.subr.mxu0 %v6882
    %7768 = vmatpush1.msra.mxu0 %v6881
    %7769 = vmatprep.subr.mxu0 %v6874
    %7770 = vmatpush1.msra.mxu0 %v6873
    %7771 = vmatprep.subr.mxu0 %v6866
    %7772 = vmatpush1.msra.mxu0 %v6865
    %7773 = vmatprep.subr.mxu0 %v6858
    %7774 = vmatpush1.msra.mxu0 %v6857
    %7775 = vmatprep.subr.mxu0 %v6850
    %7776 = vmatpush1.msra.mxu0 %v6849
    %7777 = vmatprep.subr.mxu0 %v6842
    %7778 = vmatpush1.msra.mxu0 %v6841
    %7779 = vmatprep.subr.mxu0 %v6834
    %7780 = vmatpush1.msra.mxu0 %v6833
    %7781 = vmatprep.subr.mxu0 %v6826
    %7782 = vmatpush1.msra.mxu0 %v6825
    %7783 = vmatprep.subr.mxu0 %v6818
    %7784 = vmatpush1.msra.mxu0 %v6817
    %7785 = vmatprep.subr.mxu0 %v7066
    %7786 = vmatpush2.msra.mxu0 %v7065
    %7787 = vmatprep.subr.mxu0 %v7058
    %7788 = vmatpush2.msra.mxu0 %v7057
    %7789 = vmatprep.subr.mxu0 %v7050
    %7790 = vmatpush2.msra.mxu0 %v7049
    %7791 = vmatprep.subr.mxu0 %v7042
    %7792 = vmatpush2.msra.mxu0 %v7041
    %7793 = vmatprep.subr.mxu0 %v7034
    %7794 = vmatpush2.msra.mxu0 %v7033
    %7795 = vmatprep.subr.mxu0 %v7026
    %7796 = vmatpush2.msra.mxu0 %v7025
    %7797 = vmatprep.subr.mxu0 %v7018
    %7798 = vmatpush2.msra.mxu0 %v7017
    %7799 = vmatprep.subr.mxu0 %v7010
    %7800 = vmatpush2.msra.mxu0 %v7009
    %7801 = vmatprep.subr.mxu0 %v7002
    %7802 = vmatpush2.msra.mxu0 %v7001
    %7803 = vmatprep.subr.mxu0 %v6994
    %7804 = vmatpush2.msra.mxu0 %v6993
    %7805 = vmatprep.subr.mxu0 %v6986
    %7806 = vmatpush2.msra.mxu0 %v6985
    %7807 = vmatprep.subr.mxu0 %v6978
    %7808 = vmatpush2.msra.mxu0 %v6977
    %7809 = vmatprep.subr.mxu0 %v6970
    %7810 = vmatpush2.msra.mxu0 %v6969
    %7811 = vmatprep.subr.mxu0 %v6962
    %7812 = vmatpush2.msra.mxu0 %v6961
    %7813 = vmatprep.subr.mxu0 %v6954
    %7814 = vmatpush2.msra.mxu0 %v6953
    %7815 = vmatprep.subr.mxu0 %v6946
    %7816 = vmatpush2.msra.mxu0 %v6945
    %7817 = vmatprep.mubr.f32.mxu0 %v6786
    %7818 = vmatmul.mubr.f32.gmra.mxu0 %v6785
    %v7819 = vpop.f32.mrf.mxu0
    %v7820 = vadd.f32 %v7396, %v7819
    %v7821 = vpop.f32.mrf.mxu0
    %v7822 = vadd.f32 %v7398, %v7821
    %7823 = vmatprep.mubr.f32.mxu0 %v6788
    %7824 = vmatmul.mubr.f32.gmra.mxu0 %v6787
    %v7825 = vpop.f32.mrf.mxu0
    %v7826 = vadd.f32 %v7402, %v7825
    %v7827 = vpop.f32.mrf.mxu0
    %v7828 = vadd.f32 %v7404, %v7827
    %7829 = vmatprep.mubr.f32.mxu0 %v6790
    %7830 = vmatmul.mubr.f32.gmra.mxu0 %v6789
    %v7831 = vpop.f32.mrf.mxu0
    %v7832 = vadd.f32 %v7408, %v7831
    %v7833 = vpop.f32.mrf.mxu0
    %v7834 = vadd.f32 %v7410, %v7833
    %7835 = vmatprep.mubr.f32.mxu0 %v6792
    %7836 = vmatmul.mubr.f32.gmra.mxu0 %v6791
    %v7837 = vpop.f32.mrf.mxu0
    %v7838 = vadd.f32 %v7414, %v7837
    %v7839 = vpop.f32.mrf.mxu0
    %v7840 = vadd.f32 %v7416, %v7839
    %7841 = vmatprep.mubr.f32.mxu0 %v6794
    %7842 = vmatmul.mubr.f32.gmra.mxu0 %v6793
    %v7843 = vpop.f32.mrf.mxu0
    %v7844 = vadd.f32 %v7420, %v7843
    %v7845 = vpop.f32.mrf.mxu0
    %v7846 = vadd.f32 %v7422, %v7845
    %7847 = vmatprep.mubr.f32.mxu0 %v6796
    %7848 = vmatmul.mubr.f32.gmra.mxu0 %v6795
    %v7849 = vpop.f32.mrf.mxu0
    %v7850 = vadd.f32 %v7426, %v7849
    %v7851 = vpop.f32.mrf.mxu0
    %v7852 = vadd.f32 %v7428, %v7851
    %7853 = vmatprep.mubr.f32.mxu0 %v6798
    %7854 = vmatmul.mubr.f32.gmra.mxu0 %v6797
    %v7855 = vpop.f32.mrf.mxu0
    %v7856 = vadd.f32 %v7432, %v7855
    %v7857 = vpop.f32.mrf.mxu0
    %v7858 = vadd.f32 %v7434, %v7857
    %7859 = vmatprep.mubr.f32.mxu0 %v6800
    %7860 = vmatmul.mubr.f32.gmra.mxu0 %v6799
    %v7861 = vpop.f32.mrf.mxu0
    %v7862 = vadd.f32 %v7438, %v7861
    %v7863 = vpop.f32.mrf.mxu0
    %v7864 = vadd.f32 %v7440, %v7863
    %7865 = vdwg.mxu0
    %7866 = vmatprep.subr.mxu0 %v6940
    %7867 = vmatpush1.msra.mxu0 %v6939
    %7868 = vmatprep.subr.mxu0 %v6932
    %7869 = vmatpush1.msra.mxu0 %v6931
    %7870 = vmatprep.subr.mxu0 %v6924
    %7871 = vmatpush1.msra.mxu0 %v6923
    %7872 = vmatprep.subr.mxu0 %v6916
    %7873 = vmatpush1.msra.mxu0 %v6915
    %7874 = vmatprep.subr.mxu0 %v6908
    %7875 = vmatpush1.msra.mxu0 %v6907
    %7876 = vmatprep.subr.mxu0 %v6900
    %7877 = vmatpush1.msra.mxu0 %v6899
    %7878 = vmatprep.subr.mxu0 %v6892
    %7879 = vmatpush1.msra.mxu0 %v6891
    %7880 = vmatprep.subr.mxu0 %v6884
    %7881 = vmatpush1.msra.mxu0 %v6883
    %7882 = vmatprep.subr.mxu0 %v6876
    %7883 = vmatpush1.msra.mxu0 %v6875
    %7884 = vmatprep.subr.mxu0 %v6868
    %7885 = vmatpush1.msra.mxu0 %v6867
    %7886 = vmatprep.subr.mxu0 %v6860
    %7887 = vmatpush1.msra.mxu0 %v6859
    %7888 = vmatprep.subr.mxu0 %v6852
    %7889 = vmatpush1.msra.mxu0 %v6851
    %7890 = vmatprep.subr.mxu0 %v6844
    %7891 = vmatpush1.msra.mxu0 %v6843
    %7892 = vmatprep.subr.mxu0 %v6836
    %7893 = vmatpush1.msra.mxu0 %v6835
    %7894 = vmatprep.subr.mxu0 %v6828
    %7895 = vmatpush1.msra.mxu0 %v6827
    %7896 = vmatprep.subr.mxu0 %v6820
    %7897 = vmatpush1.msra.mxu0 %v6819
    %7898 = vmatprep.subr.mxu0 %v7068
    %7899 = vmatpush2.msra.mxu0 %v7067
    %7900 = vmatprep.subr.mxu0 %v7060
    %7901 = vmatpush2.msra.mxu0 %v7059
    %7902 = vmatprep.subr.mxu0 %v7052
    %7903 = vmatpush2.msra.mxu0 %v7051
    %7904 = vmatprep.subr.mxu0 %v7044
    %7905 = vmatpush2.msra.mxu0 %v7043
    %7906 = vmatprep.subr.mxu0 %v7036
    %7907 = vmatpush2.msra.mxu0 %v7035
    %7908 = vmatprep.subr.mxu0 %v7028
    %7909 = vmatpush2.msra.mxu0 %v7027
    %7910 = vmatprep.subr.mxu0 %v7020
    %7911 = vmatpush2.msra.mxu0 %v7019
    %7912 = vmatprep.subr.mxu0 %v7012
    %7913 = vmatpush2.msra.mxu0 %v7011
    %7914 = vmatprep.subr.mxu0 %v7004
    %7915 = vmatpush2.msra.mxu0 %v7003
    %7916 = vmatprep.subr.mxu0 %v6996
    %7917 = vmatpush2.msra.mxu0 %v6995
    %7918 = vmatprep.subr.mxu0 %v6988
    %7919 = vmatpush2.msra.mxu0 %v6987
    %7920 = vmatprep.subr.mxu0 %v6980
    %7921 = vmatpush2.msra.mxu0 %v6979
    %7922 = vmatprep.subr.mxu0 %v6972
    %7923 = vmatpush2.msra.mxu0 %v6971
    %7924 = vmatprep.subr.mxu0 %v6964
    %7925 = vmatpush2.msra.mxu0 %v6963
    %7926 = vmatprep.subr.mxu0 %v6956
    %7927 = vmatpush2.msra.mxu0 %v6955
    %7928 = vmatprep.subr.mxu0 %v6948
    %7929 = vmatpush2.msra.mxu0 %v6947
    %7930 = vmatprep.mubr.f32.mxu0 %v6786
    %7931 = vmatmul.mubr.f32.gmra.mxu0 %v6785
    %v7932 = vpop.f32.mrf.mxu0
    %v7933 = vadd.f32 %v7509, %v7932
    %v7934 = vpop.f32.mrf.mxu0
    %v7935 = vadd.f32 %v7511, %v7934
    %7936 = vmatprep.mubr.f32.mxu0 %v6788
    %7937 = vmatmul.mubr.f32.gmra.mxu0 %v6787
    %v7938 = vpop.f32.mrf.mxu0
    %v7939 = vadd.f32 %v7515, %v7938
    %v7940 = vpop.f32.mrf.mxu0
    %v7941 = vadd.f32 %v7517, %v7940
    %7942 = vmatprep.mubr.f32.mxu0 %v6790
    %7943 = vmatmul.mubr.f32.gmra.mxu0 %v6789
    %v7944 = vpop.f32.mrf.mxu0
    %v7945 = vadd.f32 %v7521, %v7944
    %v7946 = vpop.f32.mrf.mxu0
    %v7947 = vadd.f32 %v7523, %v7946
    %7948 = vmatprep.mubr.f32.mxu0 %v6792
    %7949 = vmatmul.mubr.f32.gmra.mxu0 %v6791
    %v7950 = vpop.f32.mrf.mxu0
    %v7951 = vadd.f32 %v7527, %v7950
    %v7952 = vpop.f32.mrf.mxu0
    %v7953 = vadd.f32 %v7529, %v7952
    %7954 = vmatprep.mubr.f32.mxu0 %v6794
    %7955 = vmatmul.mubr.f32.gmra.mxu0 %v6793
    %v7956 = vpop.f32.mrf.mxu0
    %v7957 = vadd.f32 %v7533, %v7956
    %v7958 = vpop.f32.mrf.mxu0
    %v7959 = vadd.f32 %v7535, %v7958
    %7960 = vmatprep.mubr.f32.mxu0 %v6796
    %7961 = vmatmul.mubr.f32.gmra.mxu0 %v6795
    %v7962 = vpop.f32.mrf.mxu0
    %v7963 = vadd.f32 %v7539, %v7962
    %v7964 = vpop.f32.mrf.mxu0
    %v7965 = vadd.f32 %v7541, %v7964
    %7966 = vmatprep.mubr.f32.mxu0 %v6798
    %7967 = vmatmul.mubr.f32.gmra.mxu0 %v6797
    %v7968 = vpop.f32.mrf.mxu0
    %v7969 = vadd.f32 %v7545, %v7968
    %v7970 = vpop.f32.mrf.mxu0
    %v7971 = vadd.f32 %v7547, %v7970
    %7972 = vmatprep.mubr.f32.mxu0 %v6800
    %7973 = vmatmul.mubr.f32.gmra.mxu0 %v6799
    %v7974 = vpop.f32.mrf.mxu0
    %v7975 = vadd.f32 %v7551, %v7974
    %v7976 = vpop.f32.mrf.mxu0
    %v7977 = vadd.f32 %v7553, %v7976
    %7978 = vdwg.mxu0
    %7979 = vmatprep.subr.mxu0 %v6942
    %7980 = vmatpush1.msra.mxu0 %v6941
    %7981 = vmatprep.subr.mxu0 %v6934
    %7982 = vmatpush1.msra.mxu0 %v6933
    %7983 = vmatprep.subr.mxu0 %v6926
    %7984 = vmatpush1.msra.mxu0 %v6925
    %7985 = vmatprep.subr.mxu0 %v6918
    %7986 = vmatpush1.msra.mxu0 %v6917
    %7987 = vmatprep.subr.mxu0 %v6910
    %7988 = vmatpush1.msra.mxu0 %v6909
    %7989 = vmatprep.subr.mxu0 %v6902
    %7990 = vmatpush1.msra.mxu0 %v6901
    %7991 = vmatprep.subr.mxu0 %v6894
    %7992 = vmatpush1.msra.mxu0 %v6893
    %7993 = vmatprep.subr.mxu0 %v6886
    %7994 = vmatpush1.msra.mxu0 %v6885
    %7995 = vmatprep.subr.mxu0 %v6878
    %7996 = vmatpush1.msra.mxu0 %v6877
    %7997 = vmatprep.subr.mxu0 %v6870
    %7998 = vmatpush1.msra.mxu0 %v6869
    %7999 = vmatprep.subr.mxu0 %v6862
    %8000 = vmatpush1.msra.mxu0 %v6861
    %8001 = vmatprep.subr.mxu0 %v6854
    %8002 = vmatpush1.msra.mxu0 %v6853
    %8003 = vmatprep.subr.mxu0 %v6846
    %8004 = vmatpush1.msra.mxu0 %v6845
    %8005 = vmatprep.subr.mxu0 %v6838
    %8006 = vmatpush1.msra.mxu0 %v6837
    %8007 = vmatprep.subr.mxu0 %v6830
    %8008 = vmatpush1.msra.mxu0 %v6829
    %8009 = vmatprep.subr.mxu0 %v6822
    %8010 = vmatpush1.msra.mxu0 %v6821
    %8011 = vmatprep.subr.mxu0 %v7070
    %8012 = vmatpush2.msra.mxu0 %v7069
    %8013 = vmatprep.subr.mxu0 %v7062
    %8014 = vmatpush2.msra.mxu0 %v7061
    %8015 = vmatprep.subr.mxu0 %v7054
    %8016 = vmatpush2.msra.mxu0 %v7053
    %8017 = vmatprep.subr.mxu0 %v7046
    %8018 = vmatpush2.msra.mxu0 %v7045
    %8019 = vmatprep.subr.mxu0 %v7038
    %8020 = vmatpush2.msra.mxu0 %v7037
    %8021 = vmatprep.subr.mxu0 %v7030
    %8022 = vmatpush2.msra.mxu0 %v7029
    %8023 = vmatprep.subr.mxu0 %v7022
    %8024 = vmatpush2.msra.mxu0 %v7021
    %8025 = vmatprep.subr.mxu0 %v7014
    %8026 = vmatpush2.msra.mxu0 %v7013
    %8027 = vmatprep.subr.mxu0 %v7006
    %8028 = vmatpush2.msra.mxu0 %v7005
    %8029 = vmatprep.subr.mxu0 %v6998
    %8030 = vmatpush2.msra.mxu0 %v6997
    %8031 = vmatprep.subr.mxu0 %v6990
    %8032 = vmatpush2.msra.mxu0 %v6989
    %8033 = vmatprep.subr.mxu0 %v6982
    %8034 = vmatpush2.msra.mxu0 %v6981
    %8035 = vmatprep.subr.mxu0 %v6974
    %8036 = vmatpush2.msra.mxu0 %v6973
    %8037 = vmatprep.subr.mxu0 %v6966
    %8038 = vmatpush2.msra.mxu0 %v6965
    %8039 = vmatprep.subr.mxu0 %v6958
    %8040 = vmatpush2.msra.mxu0 %v6957
    %8041 = vmatprep.subr.mxu0 %v6950
    %8042 = vmatpush2.msra.mxu0 %v6949
    %8043 = vmatprep.mubr.f32.mxu0 %v6786
    %8044 = vmatmul.mubr.f32.gmra.mxu0 %v6785
    %v8045 = vpop.f32.mrf.mxu0
    %v8046 = vpop.f32.mrf.mxu0
    %8047 = vmatprep.mubr.f32.mxu0 %v6788
    %8048 = vmatmul.mubr.f32.gmra.mxu0 %v6787
    %v8049 = vpop.f32.mrf.mxu0
    %v8050 = vpop.f32.mrf.mxu0
    %8051 = vmatprep.mubr.f32.mxu0 %v6790
    %8052 = vmatmul.mubr.f32.gmra.mxu0 %v6789
    %v8053 = vpop.f32.mrf.mxu0
    %v8054 = vpop.f32.mrf.mxu0
    %8055 = vmatprep.mubr.f32.mxu0 %v6792
    %8056 = vmatmul.mubr.f32.gmra.mxu0 %v6791
    %v8057 = vpop.f32.mrf.mxu0
    %v8058 = vpop.f32.mrf.mxu0
    %8059 = vmatprep.mubr.f32.mxu0 %v6794
    %8060 = vmatmul.mubr.f32.gmra.mxu0 %v6793
    %v8061 = vpop.f32.mrf.mxu0
    %v8062 = vpop.f32.mrf.mxu0
    %8063 = vmatprep.mubr.f32.mxu0 %v6796
    %8064 = vmatmul.mubr.f32.gmra.mxu0 %v6795
    %v8065 = vpop.f32.mrf.mxu0
    %v8066 = vpop.f32.mrf.mxu0
    %8067 = vmatprep.mubr.f32.mxu0 %v6798
    %8068 = vmatmul.mubr.f32.gmra.mxu0 %v6797
    %v8069 = vpop.f32.mrf.mxu0
    %v8070 = vpop.f32.mrf.mxu0
    %8071 = vmatprep.mubr.f32.mxu0 %v6800
    %8072 = vmatmul.mubr.f32.gmra.mxu0 %v6799
    %v8073 = vpop.f32.mrf.mxu0
    %v8074 = vadd.f32 %v7650, %v8073
    %v8075 = vpop.f32.mrf.mxu0
    %v8076 = vadd.f32 %v7652, %v8075
    %8077 = vdwg.mxu0
    %8078 = vmatprep.subr.mxu0 %v6944
    %8079 = vmatpush1.msra.mxu0 %v6943
    %8080 = vmatprep.subr.mxu0 %v6936
    %8081 = vmatpush1.msra.mxu0 %v6935
    %8082 = vmatprep.subr.mxu0 %v6928
    %8083 = vmatpush1.msra.mxu0 %v6927
    %8084 = vmatprep.subr.mxu0 %v6920
    %8085 = vmatpush1.msra.mxu0 %v6919
    %8086 = vmatprep.subr.mxu0 %v6912
    %8087 = vmatpush1.msra.mxu0 %v6911
    %8088 = vmatprep.subr.mxu0 %v6904
    %8089 = vmatpush1.msra.mxu0 %v6903
    %8090 = vmatprep.subr.mxu0 %v6896
    %8091 = vmatpush1.msra.mxu0 %v6895
    %8092 = vmatprep.subr.mxu0 %v6888
    %8093 = vmatpush1.msra.mxu0 %v6887
    %8094 = vmatprep.subr.mxu0 %v6880
    %8095 = vmatpush1.msra.mxu0 %v6879
    %8096 = vmatprep.subr.mxu0 %v6872
    %8097 = vmatpush1.msra.mxu0 %v6871
    %8098 = vmatprep.subr.mxu0 %v6864
    %8099 = vmatpush1.msra.mxu0 %v6863
    %8100 = vmatprep.subr.mxu0 %v6856
    %8101 = vmatpush1.msra.mxu0 %v6855
    %8102 = vmatprep.subr.mxu0 %v6848
    %8103 = vmatpush1.msra.mxu0 %v6847
    %8104 = vmatprep.subr.mxu0 %v6840
    %8105 = vmatpush1.msra.mxu0 %v6839
    %8106 = vmatprep.subr.mxu0 %v6832
    %8107 = vmatpush1.msra.mxu0 %v6831
    %8108 = vmatprep.subr.mxu0 %v6824
    %8109 = vmatpush1.msra.mxu0 %v6823
    %8110 = vmatprep.subr.mxu0 %v7072
    %8111 = vmatpush2.msra.mxu0 %v7071
    %8112 = vmatprep.subr.mxu0 %v7064
    %8113 = vmatpush2.msra.mxu0 %v7063
    %8114 = vmatprep.subr.mxu0 %v7056
    %8115 = vmatpush2.msra.mxu0 %v7055
    %8116 = vmatprep.subr.mxu0 %v7048
    %8117 = vmatpush2.msra.mxu0 %v7047
    %8118 = vmatprep.subr.mxu0 %v7040
    %8119 = vmatpush2.msra.mxu0 %v7039
    %8120 = vmatprep.subr.mxu0 %v7032
    %8121 = vmatpush2.msra.mxu0 %v7031
    %8122 = vmatprep.subr.mxu0 %v7024
    %8123 = vmatpush2.msra.mxu0 %v7023
    %8124 = vmatprep.subr.mxu0 %v7016
    %8125 = vmatpush2.msra.mxu0 %v7015
    %8126 = vmatprep.subr.mxu0 %v7008
    %8127 = vmatpush2.msra.mxu0 %v7007
    %8128 = vmatprep.subr.mxu0 %v7000
    %8129 = vmatpush2.msra.mxu0 %v6999
    %8130 = vmatprep.subr.mxu0 %v6992
    %8131 = vmatpush2.msra.mxu0 %v6991
    %8132 = vmatprep.subr.mxu0 %v6984
    %8133 = vmatpush2.msra.mxu0 %v6983
    %8134 = vmatprep.subr.mxu0 %v6976
    %8135 = vmatpush2.msra.mxu0 %v6975
    %8136 = vmatprep.subr.mxu0 %v6968
    %8137 = vmatpush2.msra.mxu0 %v6967
    %8138 = vmatprep.subr.mxu0 %v6960
    %8139 = vmatpush2.msra.mxu0 %v6959
    %8140 = vmatprep.subr.mxu0 %v6952
    %8141 = vmatpush2.msra.mxu0 %v6951
    %8142 = vmatprep.mubr.f32.mxu0 %v6786
    %8143 = vmatmul.mubr.f32.gmra.mxu0 %v6785
    %v8144 = vpop.f32.mrf.mxu0
    %v8145 = vpop.f32.mrf.mxu0
    %8146 = vmatprep.mubr.f32.mxu0 %v6788
    %8147 = vmatmul.mubr.f32.gmra.mxu0 %v6787
    %v8148 = vpop.f32.mrf.mxu0
    %v8149 = vpop.f32.mrf.mxu0
    %8150 = vmatprep.mubr.f32.mxu0 %v6790
    %8151 = vmatmul.mubr.f32.gmra.mxu0 %v6789
    %v8152 = vpop.f32.mrf.mxu0
    %v8153 = vpop.f32.mrf.mxu0
    %8154 = vmatprep.mubr.f32.mxu0 %v6792
    %8155 = vmatmul.mubr.f32.gmra.mxu0 %v6791
    %v8156 = vpop.f32.mrf.mxu0
    %v8157 = vpop.f32.mrf.mxu0
    %8158 = vmatprep.mubr.f32.mxu0 %v6794
    %8159 = vmatmul.mubr.f32.gmra.mxu0 %v6793
    %v8160 = vpop.f32.mrf.mxu0
    %v8161 = vpop.f32.mrf.mxu0
    %8162 = vmatprep.mubr.f32.mxu0 %v6796
    %8163 = vmatmul.mubr.f32.gmra.mxu0 %v6795
    %v8164 = vpop.f32.mrf.mxu0
    %v8165 = vpop.f32.mrf.mxu0
    %8166 = vmatprep.mubr.f32.mxu0 %v6798
    %8167 = vmatmul.mubr.f32.gmra.mxu0 %v6797
    %v8168 = vpop.f32.mrf.mxu0
    %v8169 = vpop.f32.mrf.mxu0
    %8170 = vmatprep.mubr.f32.mxu0 %v6800
    %8171 = vmatmul.mubr.f32.gmra.mxu0 %v6799
    %v8172 = vpop.f32.mrf.mxu0
    %v8173 = vadd.f32 %v7749, %v8172
    %v8174 = vpop.f32.mrf.mxu0
    %v8175 = vadd.f32 %v7751, %v8174
    %8176 = vdwg.mxu0
    %v8177 = vld [vmem:[%s7] sm:$0xff]
    %v8179 = vlaneseq
    %v8180 = vshrl.u32 %v8179, 7
    %v8181 = vsub.s32 0, %v8180
    %v8182 = vrot.slane %v8177, %v8181
    %v8183 = vlaneseq
    %v8184 = vshrl.u32 %v8183, 7
    %v8185 = vsub.s32 1, %v8184
    %v8186 = vrot.slane %v8177, %v8185
    %v8187 = vlaneseq
    %v8188 = vshrl.u32 %v8187, 7
    %v8189 = vsub.s32 2, %v8188
    %v8190 = vrot.slane %v8177, %v8189
    %v8191 = vlaneseq
    %v8192 = vshrl.u32 %v8191, 7
    %v8193 = vsub.s32 3, %v8192
    %v8194 = vrot.slane %v8177, %v8193
    %v8195 = vlaneseq
    %v8196 = vshrl.u32 %v8195, 7
    %v8197 = vsub.s32 4, %v8196
    %v8198 = vrot.slane %v8177, %v8197
    %v8199 = vlaneseq
    %v8200 = vshrl.u32 %v8199, 7
    %v8201 = vsub.s32 5, %v8200
    %v8202 = vrot.slane %v8177, %v8201
    %v8203 = vlaneseq
    %v8204 = vshrl.u32 %v8203, 7
    %v8205 = vsub.s32 6, %v8204
    %v8206 = vrot.slane %v8177, %v8205
    %v8207 = vlaneseq
    %v8208 = vshrl.u32 %v8207, 7
    %v8209 = vsub.s32 7, %v8208
    %v8210 = vrot.slane %v8177, %v8209
    %v8219 = vadd.f32 %v7820, %v8182
    %v8220 = vadd.f32 %v7822, %v8186
    %v8221 = vadd.f32 %v7933, %v8190
    %v8222 = vadd.f32 %v7935, %v8194
    %v8223 = vadd.f32 %v7826, %v8182
    %v8224 = vadd.f32 %v7828, %v8186
    %v8225 = vadd.f32 %v7939, %v8190
    %v8226 = vadd.f32 %v7941, %v8194
    %v8227 = vadd.f32 %v7832, %v8182
    %v8228 = vadd.f32 %v7834, %v8186
    %v8229 = vadd.f32 %v7945, %v8190
    %v8230 = vadd.f32 %v7947, %v8194
    %v8231 = vadd.f32 %v7838, %v8182
    %v8232 = vadd.f32 %v7840, %v8186
    %v8233 = vadd.f32 %v7951, %v8190
    %v8234 = vadd.f32 %v7953, %v8194
    %v8235 = vadd.f32 %v7844, %v8182
    %v8236 = vadd.f32 %v7846, %v8186
    %v8237 = vadd.f32 %v7957, %v8190
    %v8238 = vadd.f32 %v7959, %v8194
    %v8239 = vadd.f32 %v7850, %v8182
    %v8240 = vadd.f32 %v7852, %v8186
    %v8241 = vadd.f32 %v7963, %v8190
    %v8242 = vadd.f32 %v7965, %v8194
    %v8243 = vadd.f32 %v7856, %v8182
    %v8244 = vadd.f32 %v7858, %v8186
    %v8245 = vadd.f32 %v7969, %v8190
    %v8246 = vadd.f32 %v7971, %v8194
    %v8247 = vadd.f32 %v7862, %v8182
    %v8248 = vadd.f32 %v7864, %v8186
    %v8249 = vadd.f32 %v7975, %v8190
    %v8250 = vadd.f32 %v7977, %v8194
    %v8251 = vadd.f32 %v8074, %v8198
    %v8252 = vadd.f32 %v8076, %v8202
    %v8253 = vadd.f32 %v8173, %v8206
    %v8254 = vadd.f32 %v8175, %v8210
    %8255 = vst [vmem:[#allocation6] sm:$0xff] %v8219
    %8256 = vst [vmem:[#allocation6 + $0x8] sm:$0xff] %v8220
    %8257 = vst [vmem:[#allocation6 + $0x10] sm:$0xff] %v8221
    %8258 = vst [vmem:[#allocation6 + $0x18] sm:$0xff] %v8222
    %8259 = vst [vmem:[#allocation6 + $0x20] sm:$0xff] %v8223
    %8260 = vst [vmem:[#allocation6 + $0x28] sm:$0xff] %v8224
    %8261 = vst [vmem:[#allocation6 + $0x30] sm:$0xff] %v8225
    %8262 = vst [vmem:[#allocation6 + $0x38] sm:$0xff] %v8226
    %8263 = vst [vmem:[#allocation6 + $0x40] sm:$0xff] %v8227
    %8264 = vst [vmem:[#allocation6 + $0x48] sm:$0xff] %v8228
    %8265 = vst [vmem:[#allocation6 + $0x50] sm:$0xff] %v8229
    %8266 = vst [vmem:[#allocation6 + $0x58] sm:$0xff] %v8230
    %8267 = vst [vmem:[#allocation6 + $0x60] sm:$0xff] %v8231
    %8268 = vst [vmem:[#allocation6 + $0x68] sm:$0xff] %v8232
    %8269 = vst [vmem:[#allocation6 + $0x70] sm:$0xff] %v8233
    %8270 = vst [vmem:[#allocation6 + $0x78] sm:$0xff] %v8234
    %8271 = vst [vmem:[#allocation6 + $0x80] sm:$0xff] %v8235
    %8272 = vst [vmem:[#allocation6 + $0x88] sm:$0xff] %v8236
    %8273 = vst [vmem:[#allocation6 + $0x90] sm:$0xff] %v8237
    %8274 = vst [vmem:[#allocation6 + $0x98] sm:$0xff] %v8238
    %8275 = vst [vmem:[#allocation6 + $0xa0] sm:$0xff] %v8239
    %8276 = vst [vmem:[#allocation6 + $0xa8] sm:$0xff] %v8240
    %8277 = vst [vmem:[#allocation6 + $0xb0] sm:$0xff] %v8241
    %8278 = vst [vmem:[#allocation6 + $0xb8] sm:$0xff] %v8242
    %8279 = vst [vmem:[#allocation6 + $0xc0] sm:$0xff] %v8243
    %8280 = vst [vmem:[#allocation6 + $0xc8] sm:$0xff] %v8244
    %8281 = vst [vmem:[#allocation6 + $0xd0] sm:$0xff] %v8245
    %8282 = vst [vmem:[#allocation6 + $0xd8] sm:$0xff] %v8246
    %8283 = vst [vmem:[#allocation6 + $0xe0] sm:$0xff] %v8247
    %8284 = vst [vmem:[#allocation6 + $0xe8] sm:$0xff] %v8248
    %8285 = vst [vmem:[#allocation6 + $0xf0] sm:$0xff] %v8249
    %8286 = vst [vmem:[#allocation6 + $0xf8] sm:$0xff] %v8250
    %v8287 = vld [vmem:[%s8] sm:$0xff]
    %v8288 = vld [vmem:[%s8 + $0x8] sm:$0xff]
    %v8289 = vld [vmem:[%s8 + $0x10] sm:$0xff]
    %v8290 = vld [vmem:[%s8 + $0x18] sm:$0xff]
    %v8291 = vld [vmem:[%s8 + $0x20] sm:$0xff]
    %v8292 = vld [vmem:[%s8 + $0x28] sm:$0xff]
    %v8293 = vld [vmem:[%s8 + $0x30] sm:$0xff]
    %v8294 = vld [vmem:[%s8 + $0x38] sm:$0xff]
    %v8295 = vld [vmem:[%s8 + $0x40] sm:$0xff]
    %v8296 = vld [vmem:[%s8 + $0x48] sm:$0xff]
    %v8297 = vld [vmem:[%s8 + $0x50] sm:$0xff]
    %v8298 = vld [vmem:[%s8 + $0x58] sm:$0xff]
    %v8299 = vld [vmem:[%s8 + $0x60] sm:$0xff]
    %v8300 = vld [vmem:[%s8 + $0x68] sm:$0xff]
    %v8301 = vld [vmem:[%s8 + $0x70] sm:$0xff]
    %v8302 = vld [vmem:[%s8 + $0x78] sm:$0xff]
    %v8303 = vld [vmem:[%s8 + $0x80] sm:$0xff]
    %v8304 = vld [vmem:[%s8 + $0x88] sm:$0xff]
    %v8305 = vld [vmem:[%s8 + $0x90] sm:$0xff]
    %v8306 = vld [vmem:[%s8 + $0x98] sm:$0xff]
    %v8307 = vld [vmem:[%s8 + $0xa0] sm:$0xff]
    %v8308 = vld [vmem:[%s8 + $0xa8] sm:$0xff]
    %v8309 = vld [vmem:[%s8 + $0xb0] sm:$0xff]
    %v8310 = vld [vmem:[%s8 + $0xb8] sm:$0xff]
    %v8311 = vld [vmem:[%s8 + $0xc0] sm:$0xff]
    %v8312 = vld [vmem:[%s8 + $0xc8] sm:$0xff]
    %v8313 = vld [vmem:[%s8 + $0xd0] sm:$0xff]
    %v8314 = vld [vmem:[%s8 + $0xd8] sm:$0xff]
    %v8315 = vld [vmem:[%s8 + $0xe0] sm:$0xff]
    %v8316 = vld [vmem:[%s8 + $0xe8] sm:$0xff]
    %v8317 = vld [vmem:[%s8 + $0xf0] sm:$0xff]
    %v8318 = vld [vmem:[%s8 + $0xf8] sm:$0xff]
    %v8319 = vld [vmem:[#allocation6] sm:$0xff]
    %v8320 = vld [vmem:[#allocation6 + $0x8] sm:$0xff]
    %v8321 = vld [vmem:[#allocation6 + $0x10] sm:$0xff]
    %v8322 = vld [vmem:[#allocation6 + $0x18] sm:$0xff]
    %v8355 = vunpack.c.l.b16 %v8287
    %v8356 = vunpack.c.h.b16 %v8287
    %v8357 = vunpack.c.l.b16 %v8288
    %v8358 = vunpack.c.h.b16 %v8288
    %v8359 = vunpack.c.l.b16 %v8289
    %v8360 = vunpack.c.h.b16 %v8289
    %v8361 = vunpack.c.l.b16 %v8290
    %v8362 = vunpack.c.h.b16 %v8290
    %v8363 = vunpack.c.l.b16 %v8291
    %v8364 = vunpack.c.h.b16 %v8291
    %v8365 = vunpack.c.l.b16 %v8292
    %v8366 = vunpack.c.h.b16 %v8292
    %v8367 = vunpack.c.l.b16 %v8293
    %v8368 = vunpack.c.h.b16 %v8293
    %v8369 = vunpack.c.l.b16 %v8294
    %v8370 = vunpack.c.h.b16 %v8294
    %v8371 = vunpack.c.l.b16 %v8295
    %v8372 = vunpack.c.h.b16 %v8295
    %v8373 = vunpack.c.l.b16 %v8296
    %v8374 = vunpack.c.h.b16 %v8296
    %v8375 = vunpack.c.l.b16 %v8297
    %v8376 = vunpack.c.h.b16 %v8297
    %v8377 = vunpack.c.l.b16 %v8298
    %v8378 = vunpack.c.h.b16 %v8298
    %v8379 = vunpack.c.l.b16 %v8299
    %v8380 = vunpack.c.h.b16 %v8299
    %v8381 = vunpack.c.l.b16 %v8300
    %v8382 = vunpack.c.h.b16 %v8300
    %v8383 = vunpack.c.l.b16 %v8301
    %v8384 = vunpack.c.h.b16 %v8301
    %v8385 = vunpack.c.l.b16 %v8302
    %v8386 = vunpack.c.h.b16 %v8302
    %v8387 = vunpack.c.l.b16 %v8303
    %v8388 = vunpack.c.h.b16 %v8303
    %v8389 = vunpack.c.l.b16 %v8304
    %v8390 = vunpack.c.h.b16 %v8304
    %v8391 = vunpack.c.l.b16 %v8305
    %v8392 = vunpack.c.h.b16 %v8305
    %v8393 = vunpack.c.l.b16 %v8306
    %v8394 = vunpack.c.h.b16 %v8306
    %v8395 = vunpack.c.l.b16 %v8307
    %v8396 = vunpack.c.h.b16 %v8307
    %v8397 = vunpack.c.l.b16 %v8308
    %v8398 = vunpack.c.h.b16 %v8308
    %v8399 = vunpack.c.l.b16 %v8309
    %v8400 = vunpack.c.h.b16 %v8309
    %v8401 = vunpack.c.l.b16 %v8310
    %v8402 = vunpack.c.h.b16 %v8310
    %v8403 = vunpack.c.l.b16 %v8311
    %v8404 = vunpack.c.h.b16 %v8311
    %v8405 = vunpack.c.l.b16 %v8312
    %v8406 = vunpack.c.h.b16 %v8312
    %v8407 = vunpack.c.l.b16 %v8313
    %v8408 = vunpack.c.h.b16 %v8313
    %v8409 = vunpack.c.l.b16 %v8314
    %v8410 = vunpack.c.h.b16 %v8314
    %v8411 = vunpack.c.l.b16 %v8315
    %v8412 = vunpack.c.h.b16 %v8315
    %v8413 = vunpack.c.l.b16 %v8316
    %v8414 = vunpack.c.h.b16 %v8316
    %v8415 = vunpack.c.l.b16 %v8317
    %v8416 = vunpack.c.h.b16 %v8317
    %v8417 = vunpack.c.l.b16 %v8318
    %v8418 = vunpack.c.h.b16 %v8318
    %v8419 = vpack.c.b16 %v8359, %v8355
    %v8420 = vpack.c.b16 %v8360, %v8356
    %v8421 = vpack.c.b16 %v8361, %v8357
    %v8422 = vpack.c.b16 %v8362, %v8358
    %v8423 = vpack.c.b16 %v8367, %v8363
    %v8424 = vpack.c.b16 %v8368, %v8364
    %v8425 = vpack.c.b16 %v8369, %v8365
    %v8426 = vpack.c.b16 %v8370, %v8366
    %v8427 = vpack.c.b16 %v8375, %v8371
    %v8428 = vpack.c.b16 %v8376, %v8372
    %v8429 = vpack.c.b16 %v8377, %v8373
    %v8430 = vpack.c.b16 %v8378, %v8374
    %v8431 = vpack.c.b16 %v8383, %v8379
    %v8432 = vpack.c.b16 %v8384, %v8380
    %v8433 = vpack.c.b16 %v8385, %v8381
    %v8434 = vpack.c.b16 %v8386, %v8382
    %v8435 = vpack.c.b16 %v8391, %v8387
    %v8436 = vpack.c.b16 %v8392, %v8388
    %v8437 = vpack.c.b16 %v8393, %v8389
    %v8438 = vpack.c.b16 %v8394, %v8390
    %v8439 = vpack.c.b16 %v8399, %v8395
    %v8440 = vpack.c.b16 %v8400, %v8396
    %v8441 = vpack.c.b16 %v8401, %v8397
    %v8442 = vpack.c.b16 %v8402, %v8398
    %v8443 = vpack.c.b16 %v8407, %v8403
    %v8444 = vpack.c.b16 %v8408, %v8404
    %v8445 = vpack.c.b16 %v8409, %v8405
    %v8446 = vpack.c.b16 %v8410, %v8406
    %v8447 = vpack.c.b16 %v8415, %v8411
    %v8448 = vpack.c.b16 %v8416, %v8412
    %v8449 = vpack.c.b16 %v8417, %v8413
    %v8450 = vpack.c.b16 %v8418, %v8414
    %8483 = vmatprep.subr.bf16.mxu0 %v8448
    %8484 = vmatpush1.bf16.msra.mxu0 %v8447
    %8485 = vmatprep.subr.bf16.mxu0 %v8444
    %8486 = vmatpush1.bf16.msra.mxu0 %v8443
    %8487 = vmatprep.subr.bf16.mxu0 %v8440
    %8488 = vmatpush1.bf16.msra.mxu0 %v8439
    %8489 = vmatprep.subr.bf16.mxu0 %v8436
    %8490 = vmatpush1.bf16.msra.mxu0 %v8435
    %8491 = vmatprep.subr.bf16.mxu0 %v8432
    %8492 = vmatpush1.bf16.msra.mxu0 %v8431
    %8493 = vmatprep.subr.bf16.mxu0 %v8428
    %8494 = vmatpush1.bf16.msra.mxu0 %v8427
    %8495 = vmatprep.subr.bf16.mxu0 %v8424
    %8496 = vmatpush1.bf16.msra.mxu0 %v8423
    %8497 = vmatprep.subr.bf16.mxu0 %v8420
    %8498 = vmatpush1.bf16.msra.mxu0 %v8419
    %8499 = vmatprep.subr.bf16.mxu0 0
    %8500 = vmatpush2.bf16.msra.mxu0 0
    %8501 = vmatprep.subr.bf16.mxu0 0
    %8502 = vmatpush2.bf16.msra.mxu0 0
    %8503 = vmatprep.subr.bf16.mxu0 0
    %8504 = vmatpush2.bf16.msra.mxu0 0
    %8505 = vmatprep.subr.bf16.mxu0 0
    %8506 = vmatpush2.bf16.msra.mxu0 0
    %8507 = vmatprep.subr.bf16.mxu0 0
    %8508 = vmatpush2.bf16.msra.mxu0 0
    %8509 = vmatprep.subr.bf16.mxu0 0
    %8510 = vmatpush2.bf16.msra.mxu0 0
    %8511 = vmatprep.subr.bf16.mxu0 0
    %8512 = vmatpush2.bf16.msra.mxu0 0
    %8513 = vmatprep.subr.bf16.mxu0 0
    %8514 = vmatpush2.bf16.msra.mxu0 0
    %8515 = vmatprep.mubr.bf16.mxu0 0
    %8516 = vmatmul.mubr.bf16.gmra.mxu0 0
    %v8517 = vpop.f32.mrf.mxu0
    %v8518 = vadd.f32 0.0, %v8517
    %v8519 = vpop.f32.mrf.mxu0
    %v8520 = vadd.f32 0.0, %v8519
    %v8521 = vpop.f32.mrf.mxu0
    %v8522 = vpop.f32.mrf.mxu0
    %8523 = vdwg.mxu0
    %8524 = vmatprep.subr.bf16.mxu0 %v8450
    %8525 = vmatpush1.bf16.msra.mxu0 %v8449
    %8526 = vmatprep.subr.bf16.mxu0 %v8446
    %8527 = vmatpush1.bf16.msra.mxu0 %v8445
    %8528 = vmatprep.subr.bf16.mxu0 %v8442
    %8529 = vmatpush1.bf16.msra.mxu0 %v8441
    %8530 = vmatprep.subr.bf16.mxu0 %v8438
    %8531 = vmatpush1.bf16.msra.mxu0 %v8437
    %8532 = vmatprep.subr.bf16.mxu0 %v8434
    %8533 = vmatpush1.bf16.msra.mxu0 %v8433
    %8534 = vmatprep.subr.bf16.mxu0 %v8430
    %8535 = vmatpush1.bf16.msra.mxu0 %v8429
    %8536 = vmatprep.subr.bf16.mxu0 %v8426
    %8537 = vmatpush1.bf16.msra.mxu0 %v8425
    %8538 = vmatprep.subr.bf16.mxu0 %v8422
    %8539 = vmatpush1.bf16.msra.mxu0 %v8421
    %8540 = vmatprep.subr.bf16.mxu0 0
    %8541 = vmatpush2.bf16.msra.mxu0 0
    %8542 = vmatprep.subr.bf16.mxu0 0
    %8543 = vmatpush2.bf16.msra.mxu0 0
    %8544 = vmatprep.subr.bf16.mxu0 0
    %8545 = vmatpush2.bf16.msra.mxu0 0
    %8546 = vmatprep.subr.bf16.mxu0 0
    %8547 = vmatpush2.bf16.msra.mxu0 0
    %8548 = vmatprep.subr.bf16.mxu0 0
    %8549 = vmatpush2.bf16.msra.mxu0 0
    %8550 = vmatprep.subr.bf16.mxu0 0
    %8551 = vmatpush2.bf16.msra.mxu0 0
    %8552 = vmatprep.subr.bf16.mxu0 0
    %8553 = vmatpush2.bf16.msra.mxu0 0
    %8554 = vmatprep.subr.bf16.mxu0 0
    %8555 = vmatpush2.bf16.msra.mxu0 0
    %8556 = vmatprep.mubr.bf16.mxu0 0
    %8557 = vmatmul.mubr.bf16.gmra.mxu0 0
    %v8558 = vpop.f32.mrf.mxu0
    %v8559 = vadd.f32 0.0, %v8558
    %v8560 = vpop.f32.mrf.mxu0
    %v8561 = vadd.f32 0.0, %v8560
    %v8562 = vpop.f32.mrf.mxu0
    %v8563 = vpop.f32.mrf.mxu0
    %8564 = vdwg.mxu0
    %v8565 = vadd.f32 %v8319, %v8518
    %v8566 = vadd.f32 %v8320, %v8520
    %v8567 = vadd.f32 %v8321, %v8559
    %v8568 = vadd.f32 %v8322, %v8561
    %v8569 = vxor.u32 %v8565, 2147483648
    %v8570 = vmul.f32 %v8569, 1.442695
    %v8571 = vpow.pop %v8570
    %v8572 = vadd.f32 %v8571, 1.0
    %v8573 = vrcp.pop %v8572
    %v8574 = vmul.f32 1.0, %v8573
    %v8575 = vxor.u32 %v8566, 2147483648
    %v8576 = vmul.f32 %v8575, 1.442695
    %v8577 = vpow.pop %v8576
    %v8578 = vadd.f32 %v8577, 1.0
    %v8579 = vrcp.pop %v8578
    %v8580 = vmul.f32 1.0, %v8579
    %v8581 = vtanh.pop %v8567
    %v8582 = vxor.u32 %v8568, 2147483648
    %v8583 = vmul.f32 %v8582, 1.442695
    %v8584 = vpow.pop %v8583
    %v8585 = vadd.f32 %v8584, 1.0
    %v8586 = vrcp.pop %v8585
    %v8587 = vmul.f32 1.0, %v8586
    %v8588 = vmul.f32 %v8580, 0.0
    %v8589 = vmul.f32 %v8574, %v8581
    %v8590 = vadd.f32 %v8588, %v8589
    %v8591 = vtanh.pop %v8590
    %v8592 = vmul.f32 %v8587, %v8591
    %s8593 = scalar_lea.vmem [#allocation6], 32
    %v8594 = vld [vmem:[%s8593] sm:$0xff]
    %v8595 = vld [vmem:[%s8593 + $0x8] sm:$0xff]
    %v8596 = vld [vmem:[%s8593 + $0x10] sm:$0xff]
    %v8597 = vld [vmem:[%s8593 + $0x18] sm:$0xff]
    %v8598 = vpack.c.bf16 %v8592, %v8592
    %8599 = vmatprep.subr.bf16.mxu0 %v8448
    %8600 = vmatpush1.bf16.msra.mxu0 %v8447
    %8601 = vmatprep.subr.bf16.mxu0 %v8444
    %8602 = vmatpush1.bf16.msra.mxu0 %v8443
    %8603 = vmatprep.subr.bf16.mxu0 %v8440
    %8604 = vmatpush1.bf16.msra.mxu0 %v8439
    %8605 = vmatprep.subr.bf16.mxu0 %v8436
    %8606 = vmatpush1.bf16.msra.mxu0 %v8435
    %8607 = vmatprep.subr.bf16.mxu0 %v8432
    %8608 = vmatpush1.bf16.msra.mxu0 %v8431
    %8609 = vmatprep.subr.bf16.mxu0 %v8428
    %8610 = vmatpush1.bf16.msra.mxu0 %v8427
    %8611 = vmatprep.subr.bf16.mxu0 %v8424
    %8612 = vmatpush1.bf16.msra.mxu0 %v8423
    %8613 = vmatprep.subr.bf16.mxu0 %v8420
    %8614 = vmatpush1.bf16.msra.mxu0 %v8419
    %8615 = vmatprep.subr.bf16.mxu0 0
    %8616 = vmatpush2.bf16.msra.mxu0 0
    %8617 = vmatprep.subr.bf16.mxu0 0
    %8618 = vmatpush2.bf16.msra.mxu0 0
    %8619 = vmatprep.subr.bf16.mxu0 0
    %8620 = vmatpush2.bf16.msra.mxu0 0
    %8621 = vmatprep.subr.bf16.mxu0 0
    %8622 = vmatpush2.bf16.msra.mxu0 0
    %8623 = vmatprep.subr.bf16.mxu0 0
    %8624 = vmatpush2.bf16.msra.mxu0 0
    %8625 = vmatprep.subr.bf16.mxu0 0
    %8626 = vmatpush2.bf16.msra.mxu0 0
    %8627 = vmatprep.subr.bf16.mxu0 0
    %8628 = vmatpush2.bf16.msra.mxu0 0
    %8629 = vmatprep.subr.bf16.mxu0 0
    %8630 = vmatpush2.bf16.msra.mxu0 0
    %8631 = vmatprep.mubr.bf16.mxu0 0
    %8632 = vmatmul.mubr.bf16.gmra.mxu0 %v8598
    %v8633 = vpop.f32.mrf.mxu0
    %v8634 = vadd.f32 0.0, %v8633
    %v8635 = vpop.f32.mrf.mxu0
    %v8636 = vadd.f32 0.0, %v8635
    %v8637 = vpop.f32.mrf.mxu0
    %v8638 = vpop.f32.mrf.mxu0
    %8639 = vdwg.mxu0
    %8640 = vmatprep.subr.bf16.mxu0 %v8450
    %8641 = vmatpush1.bf16.msra.mxu0 %v8449
    %8642 = vmatprep.subr.bf16.mxu0 %v8446
    %8643 = vmatpush1.bf16.msra.mxu0 %v8445
    %8644 = vmatprep.subr.bf16.mxu0 %v8442
    %8645 = vmatpush1.bf16.msra.mxu0 %v8441
    %8646 = vmatprep.subr.bf16.mxu0 %v8438
    %8647 = vmatpush1.bf16.msra.mxu0 %v8437
    %8648 = vmatprep.subr.bf16.mxu0 %v8434
    %8649 = vmatpush1.bf16.msra.mxu0 %v8433
    %8650 = vmatprep.subr.bf16.mxu0 %v8430
    %8651 = vmatpush1.bf16.msra.mxu0 %v8429
    %8652 = vmatprep.subr.bf16.mxu0 %v8426
    %8653 = vmatpush1.bf16.msra.mxu0 %v8425
    %8654 = vmatprep.subr.bf16.mxu0 %v8422
    %8655 = vmatpush1.bf16.msra.mxu0 %v8421
    %8656 = vmatprep.subr.bf16.mxu0 0
    %8657 = vmatpush2.bf16.msra.mxu0 0
    %8658 = vmatprep.subr.bf16.mxu0 0
    %8659 = vmatpush2.bf16.msra.mxu0 0
    %8660 = vmatprep.subr.bf16.mxu0 0
    %8661 = vmatpush2.bf16.msra.mxu0 0
    %8662 = vmatprep.subr.bf16.mxu0 0
    %8663 = vmatpush2.bf16.msra.mxu0 0
    %8664 = vmatprep.subr.bf16.mxu0 0
    %8665 = vmatpush2.bf16.msra.mxu0 0
    %8666 = vmatprep.subr.bf16.mxu0 0
    %8667 = vmatpush2.bf16.msra.mxu0 0
    %8668 = vmatprep.subr.bf16.mxu0 0
    %8669 = vmatpush2.bf16.msra.mxu0 0
    %8670 = vmatprep.subr.bf16.mxu0 0
    %8671 = vmatpush2.bf16.msra.mxu0 0
    %8672 = vmatprep.mubr.bf16.mxu0 0
    %8673 = vmatmul.mubr.bf16.gmra.mxu0 %v8598
    %v8674 = vpop.f32.mrf.mxu0
    %v8675 = vadd.f32 0.0, %v8674
    %v8676 = vpop.f32.mrf.mxu0
    %v8677 = vadd.f32 0.0, %v8676
    %v8678 = vpop.f32.mrf.mxu0
    %v8679 = vpop.f32.mrf.mxu0
    %8680 = vdwg.mxu0
    %v8681 = vadd.f32 %v8594, %v8634
    %v8682 = vadd.f32 %v8595, %v8636
    %v8683 = vadd.f32 %v8596, %v8675
    %v8684 = vadd.f32 %v8597, %v8677
    %v8685 = vxor.u32 %v8681, 2147483648
    %v8686 = vmul.f32 %v8685, 1.442695
    %v8687 = vpow.pop %v8686
    %v8688 = vadd.f32 %v8687, 1.0
    %v8689 = vrcp.pop %v8688
    %v8690 = vmul.f32 1.0, %v8689
    %v8691 = vxor.u32 %v8682, 2147483648
    %v8692 = vmul.f32 %v8691, 1.442695
    %v8693 = vpow.pop %v8692
    %v8694 = vadd.f32 %v8693, 1.0
    %v8695 = vrcp.pop %v8694
    %v8696 = vmul.f32 1.0, %v8695
    %v8697 = vtanh.pop %v8683
    %v8698 = vxor.u32 %v8684, 2147483648
    %v8699 = vmul.f32 %v8698, 1.442695
    %v8700 = vpow.pop %v8699
    %v8701 = vadd.f32 %v8700, 1.0
    %v8702 = vrcp.pop %v8701
    %v8703 = vmul.f32 1.0, %v8702
    %v8704 = vmul.f32 %v8696, %v8590
    %v8705 = vmul.f32 %v8690, %v8697
    %v8706 = vadd.f32 %v8704, %v8705
    %v8707 = vtanh.pop %v8706
    %v8708 = vmul.f32 %v8703, %v8707
    %s8709 = scalar_lea.vmem [#allocation6], 64
    %v8710 = vld [vmem:[%s8709] sm:$0xff]
    %v8711 = vld [vmem:[%s8709 + $0x8] sm:$0xff]
    %v8712 = vld [vmem:[%s8709 + $0x10] sm:$0xff]
    %v8713 = vld [vmem:[%s8709 + $0x18] sm:$0xff]
    %v8714 = vpack.c.bf16 %v8708, %v8708
    %8715 = vmatprep.subr.bf16.mxu0 %v8448
    %8716 = vmatpush1.bf16.msra.mxu0 %v8447
    %8717 = vmatprep.subr.bf16.mxu0 %v8444
    %8718 = vmatpush1.bf16.msra.mxu0 %v8443
    %8719 = vmatprep.subr.bf16.mxu0 %v8440
    %8720 = vmatpush1.bf16.msra.mxu0 %v8439
    %8721 = vmatprep.subr.bf16.mxu0 %v8436
    %8722 = vmatpush1.bf16.msra.mxu0 %v8435
    %8723 = vmatprep.subr.bf16.mxu0 %v8432
    %8724 = vmatpush1.bf16.msra.mxu0 %v8431
    %8725 = vmatprep.subr.bf16.mxu0 %v8428
    %8726 = vmatpush1.bf16.msra.mxu0 %v8427
    %8727 = vmatprep.subr.bf16.mxu0 %v8424
    %8728 = vmatpush1.bf16.msra.mxu0 %v8423
    %8729 = vmatprep.subr.bf16.mxu0 %v8420
    %8730 = vmatpush1.bf16.msra.mxu0 %v8419
    %8731 = vmatprep.subr.bf16.mxu0 0
    %8732 = vmatpush2.bf16.msra.mxu0 0
    %8733 = vmatprep.subr.bf16.mxu0 0
    %8734 = vmatpush2.bf16.msra.mxu0 0
    %8735 = vmatprep.subr.bf16.mxu0 0
    %8736 = vmatpush2.bf16.msra.mxu0 0
    %8737 = vmatprep.subr.bf16.mxu0 0
    %8738 = vmatpush2.bf16.msra.mxu0 0
    %8739 = vmatprep.subr.bf16.mxu0 0
    %8740 = vmatpush2.bf16.msra.mxu0 0
    %8741 = vmatprep.subr.bf16.mxu0 0
    %8742 = vmatpush2.bf16.msra.mxu0 0
    %8743 = vmatprep.subr.bf16.mxu0 0
    %8744 = vmatpush2.bf16.msra.mxu0 0
    %8745 = vmatprep.subr.bf16.mxu0 0
    %8746 = vmatpush2.bf16.msra.mxu0 0
    %8747 = vmatprep.mubr.bf16.mxu0 0
    %8748 = vmatmul.mubr.bf16.gmra.mxu0 %v8714
    %v8749 = vpop.f32.mrf.mxu0
    %v8750 = vadd.f32 0.0, %v8749
    %v8751 = vpop.f32.mrf.mxu0
    %v8752 = vadd.f32 0.0, %v8751
    %v8753 = vpop.f32.mrf.mxu0
    %v8754 = vpop.f32.mrf.mxu0
    %8755 = vdwg.mxu0
    %8756 = vmatprep.subr.bf16.mxu0 %v8450
    %8757 = vmatpush1.bf16.msra.mxu0 %v8449
    %8758 = vmatprep.subr.bf16.mxu0 %v8446
    %8759 = vmatpush1.bf16.msra.mxu0 %v8445
    %8760 = vmatprep.subr.bf16.mxu0 %v8442
    %8761 = vmatpush1.bf16.msra.mxu0 %v8441
    %8762 = vmatprep.subr.bf16.mxu0 %v8438
    %8763 = vmatpush1.bf16.msra.mxu0 %v8437
    %8764 = vmatprep.subr.bf16.mxu0 %v8434
    %8765 = vmatpush1.bf16.msra.mxu0 %v8433
    %8766 = vmatprep.subr.bf16.mxu0 %v8430
    %8767 = vmatpush1.bf16.msra.mxu0 %v8429
    %8768 = vmatprep.subr.bf16.mxu0 %v8426
    %8769 = vmatpush1.bf16.msra.mxu0 %v8425
    %8770 = vmatprep.subr.bf16.mxu0 %v8422
    %8771 = vmatpush1.bf16.msra.mxu0 %v8421
    %8772 = vmatprep.subr.bf16.mxu0 0
    %8773 = vmatpush2.bf16.msra.mxu0 0
    %8774 = vmatprep.subr.bf16.mxu0 0
    %8775 = vmatpush2.bf16.msra.mxu0 0
    %8776 = vmatprep.subr.bf16.mxu0 0
    %8777 = vmatpush2.bf16.msra.mxu0 0
    %8778 = vmatprep.subr.bf16.mxu0 0
    %8779 = vmatpush2.bf16.msra.mxu0 0
    %8780 = vmatprep.subr.bf16.mxu0 0
    %8781 = vmatpush2.bf16.msra.mxu0 0
    %8782 = vmatprep.subr.bf16.mxu0 0
    %8783 = vmatpush2.bf16.msra.mxu0 0
    %8784 = vmatprep.subr.bf16.mxu0 0
    %8785 = vmatpush2.bf16.msra.mxu0 0
    %8786 = vmatprep.subr.bf16.mxu0 0
    %8787 = vmatpush2.bf16.msra.mxu0 0
    %8788 = vmatprep.mubr.bf16.mxu0 0
    %8789 = vmatmul.mubr.bf16.gmra.mxu0 %v8714
    %v8790 = vpop.f32.mrf.mxu0
    %v8791 = vadd.f32 0.0, %v8790
    %v8792 = vpop.f32.mrf.mxu0
    %v8793 = vadd.f32 0.0, %v8792
    %v8794 = vpop.f32.mrf.mxu0
    %v8795 = vpop.f32.mrf.mxu0
    %8796 = vdwg.mxu0
    %v8797 = vadd.f32 %v8710, %v8750
    %v8798 = vadd.f32 %v8711, %v8752
    %v8799 = vadd.f32 %v8712, %v8791
    %v8800 = vadd.f32 %v8713, %v8793
    %v8801 = vxor.u32 %v8797, 2147483648
    %v8802 = vmul.f32 %v8801, 1.442695
    %v8803 = vpow.pop %v8802
    %v8804 = vadd.f32 %v8803, 1.0
    %v8805 = vrcp.pop %v8804
    %v8806 = vmul.f32 1.0, %v8805
    %v8807 = vxor.u32 %v8798, 2147483648
    %v8808 = vmul.f32 %v8807, 1.442695
    %v8809 = vpow.pop %v8808
    %v8810 = vadd.f32 %v8809, 1.0
    %v8811 = vrcp.pop %v8810
    %v8812 = vmul.f32 1.0, %v8811
    %v8813 = vtanh.pop %v8799
    %v8814 = vxor.u32 %v8800, 2147483648
    %v8815 = vmul.f32 %v8814, 1.442695
    %v8816 = vpow.pop %v8815
    %v8817 = vadd.f32 %v8816, 1.0
    %v8818 = vrcp.pop %v8817
    %v8819 = vmul.f32 1.0, %v8818
    %v8820 = vmul.f32 %v8812, %v8706
    %v8821 = vmul.f32 %v8806, %v8813
    %v8822 = vadd.f32 %v8820, %v8821
    %v8823 = vtanh.pop %v8822
    %v8824 = vmul.f32 %v8819, %v8823
    %s8825 = scalar_lea.vmem [#allocation6], 96
    %v8826 = vld [vmem:[%s8825] sm:$0xff]
    %v8827 = vld [vmem:[%s8825 + $0x8] sm:$0xff]
    %v8828 = vld [vmem:[%s8825 + $0x10] sm:$0xff]
    %v8829 = vld [vmem:[%s8825 + $0x18] sm:$0xff]
    %v8830 = vpack.c.bf16 %v8824, %v8824
    %8831 = vmatprep.subr.bf16.mxu0 %v8448
    %8832 = vmatpush1.bf16.msra.mxu0 %v8447
    %8833 = vmatprep.subr.bf16.mxu0 %v8444
    %8834 = vmatpush1.bf16.msra.mxu0 %v8443
    %8835 = vmatprep.subr.bf16.mxu0 %v8440
    %8836 = vmatpush1.bf16.msra.mxu0 %v8439
    %8837 = vmatprep.subr.bf16.mxu0 %v8436
    %8838 = vmatpush1.bf16.msra.mxu0 %v8435
    %8839 = vmatprep.subr.bf16.mxu0 %v8432
    %8840 = vmatpush1.bf16.msra.mxu0 %v8431
    %8841 = vmatprep.subr.bf16.mxu0 %v8428
    %8842 = vmatpush1.bf16.msra.mxu0 %v8427
    %8843 = vmatprep.subr.bf16.mxu0 %v8424
    %8844 = vmatpush1.bf16.msra.mxu0 %v8423
    %8845 = vmatprep.subr.bf16.mxu0 %v8420
    %8846 = vmatpush1.bf16.msra.mxu0 %v8419
    %8847 = vmatprep.subr.bf16.mxu0 0
    %8848 = vmatpush2.bf16.msra.mxu0 0
    %8849 = vmatprep.subr.bf16.mxu0 0
    %8850 = vmatpush2.bf16.msra.mxu0 0
    %8851 = vmatprep.subr.bf16.mxu0 0
    %8852 = vmatpush2.bf16.msra.mxu0 0
    %8853 = vmatprep.subr.bf16.mxu0 0
    %8854 = vmatpush2.bf16.msra.mxu0 0
    %8855 = vmatprep.subr.bf16.mxu0 0
    %8856 = vmatpush2.bf16.msra.mxu0 0
    %8857 = vmatprep.subr.bf16.mxu0 0
    %8858 = vmatpush2.bf16.msra.mxu0 0
    %8859 = vmatprep.subr.bf16.mxu0 0
    %8860 = vmatpush2.bf16.msra.mxu0 0
    %8861 = vmatprep.subr.bf16.mxu0 0
    %8862 = vmatpush2.bf16.msra.mxu0 0
    %8863 = vmatprep.mubr.bf16.mxu0 0
    %8864 = vmatmul.mubr.bf16.gmra.mxu0 %v8830
    %v8865 = vpop.f32.mrf.mxu0
    %v8866 = vadd.f32 0.0, %v8865
    %v8867 = vpop.f32.mrf.mxu0
    %v8868 = vadd.f32 0.0, %v8867
    %v8869 = vpop.f32.mrf.mxu0
    %v8870 = vpop.f32.mrf.mxu0
    %8871 = vdwg.mxu0
    %8872 = vmatprep.subr.bf16.mxu0 %v8450
    %8873 = vmatpush1.bf16.msra.mxu0 %v8449
    %8874 = vmatprep.subr.bf16.mxu0 %v8446
    %8875 = vmatpush1.bf16.msra.mxu0 %v8445
    %8876 = vmatprep.subr.bf16.mxu0 %v8442
    %8877 = vmatpush1.bf16.msra.mxu0 %v8441
    %8878 = vmatprep.subr.bf16.mxu0 %v8438
    %8879 = vmatpush1.bf16.msra.mxu0 %v8437
    %8880 = vmatprep.subr.bf16.mxu0 %v8434
    %8881 = vmatpush1.bf16.msra.mxu0 %v8433
    %8882 = vmatprep.subr.bf16.mxu0 %v8430
    %8883 = vmatpush1.bf16.msra.mxu0 %v8429
    %8884 = vmatprep.subr.bf16.mxu0 %v8426
    %8885 = vmatpush1.bf16.msra.mxu0 %v8425
    %8886 = vmatprep.subr.bf16.mxu0 %v8422
    %8887 = vmatpush1.bf16.msra.mxu0 %v8421
    %8888 = vmatprep.subr.bf16.mxu0 0
    %8889 = vmatpush2.bf16.msra.mxu0 0
    %8890 = vmatprep.subr.bf16.mxu0 0
    %8891 = vmatpush2.bf16.msra.mxu0 0
    %8892 = vmatprep.subr.bf16.mxu0 0
    %8893 = vmatpush2.bf16.msra.mxu0 0
    %8894 = vmatprep.subr.bf16.mxu0 0
    %8895 = vmatpush2.bf16.msra.mxu0 0
    %8896 = vmatprep.subr.bf16.mxu0 0
    %8897 = vmatpush2.bf16.msra.mxu0 0
    %8898 = vmatprep.subr.bf16.mxu0 0
    %8899 = vmatpush2.bf16.msra.mxu0 0
    %8900 = vmatprep.subr.bf16.mxu0 0
    %8901 = vmatpush2.bf16.msra.mxu0 0
    %8902 = vmatprep.subr.bf16.mxu0 0
    %8903 = vmatpush2.bf16.msra.mxu0 0
    %8904 = vmatprep.mubr.bf16.mxu0 0
    %8905 = vmatmul.mubr.bf16.gmra.mxu0 %v8830
    %v8906 = vpop.f32.mrf.mxu0
    %v8907 = vadd.f32 0.0, %v8906
    %v8908 = vpop.f32.mrf.mxu0
    %v8909 = vadd.f32 0.0, %v8908
    %v8910 = vpop.f32.mrf.mxu0
    %v8911 = vpop.f32.mrf.mxu0
    %8912 = vdwg.mxu0
    %v8913 = vadd.f32 %v8826, %v8866
    %v8914 = vadd.f32 %v8827, %v8868
    %v8915 = vadd.f32 %v8828, %v8907
    %v8916 = vadd.f32 %v8829, %v8909
    %v8917 = vxor.u32 %v8913, 2147483648
    %v8918 = vmul.f32 %v8917, 1.442695
    %v8919 = vpow.pop %v8918
    %v8920 = vadd.f32 %v8919, 1.0
    %v8921 = vrcp.pop %v8920
    %v8922 = vmul.f32 1.0, %v8921
    %v8923 = vxor.u32 %v8914, 2147483648
    %v8924 = vmul.f32 %v8923, 1.442695
    %v8925 = vpow.pop %v8924
    %v8926 = vadd.f32 %v8925, 1.0
    %v8927 = vrcp.pop %v8926
    %v8928 = vmul.f32 1.0, %v8927
    %v8929 = vtanh.pop %v8915
    %v8930 = vxor.u32 %v8916, 2147483648
    %v8931 = vmul.f32 %v8930, 1.442695
    %v8932 = vpow.pop %v8931
    %v8933 = vadd.f32 %v8932, 1.0
    %v8934 = vrcp.pop %v8933
    %v8935 = vmul.f32 1.0, %v8934
    %v8936 = vmul.f32 %v8928, %v8822
    %v8937 = vmul.f32 %v8922, %v8929
    %v8938 = vadd.f32 %v8936, %v8937
    %v8939 = vtanh.pop %v8938
    %v8940 = vmul.f32 %v8935, %v8939
    %s8941 = scalar_lea.vmem [#allocation6], 128
    %v8942 = vld [vmem:[%s8941] sm:$0xff]
    %v8943 = vld [vmem:[%s8941 + $0x8] sm:$0xff]
    %v8944 = vld [vmem:[%s8941 + $0x10] sm:$0xff]
    %v8945 = vld [vmem:[%s8941 + $0x18] sm:$0xff]
    %v8946 = vpack.c.bf16 %v8940, %v8940
    %8947 = vmatprep.subr.bf16.mxu0 %v8448
    %8948 = vmatpush1.bf16.msra.mxu0 %v8447
    %8949 = vmatprep.subr.bf16.mxu0 %v8444
    %8950 = vmatpush1.bf16.msra.mxu0 %v8443
    %8951 = vmatprep.subr.bf16.mxu0 %v8440
    %8952 = vmatpush1.bf16.msra.mxu0 %v8439
    %8953 = vmatprep.subr.bf16.mxu0 %v8436
    %8954 = vmatpush1.bf16.msra.mxu0 %v8435
    %8955 = vmatprep.subr.bf16.mxu0 %v8432
    %8956 = vmatpush1.bf16.msra.mxu0 %v8431
    %8957 = vmatprep.subr.bf16.mxu0 %v8428
    %8958 = vmatpush1.bf16.msra.mxu0 %v8427
    %8959 = vmatprep.subr.bf16.mxu0 %v8424
    %8960 = vmatpush1.bf16.msra.mxu0 %v8423
    %8961 = vmatprep.subr.bf16.mxu0 %v8420
    %8962 = vmatpush1.bf16.msra.mxu0 %v8419
    %8963 = vmatprep.subr.bf16.mxu0 0
    %8964 = vmatpush2.bf16.msra.mxu0 0
    %8965 = vmatprep.subr.bf16.mxu0 0
    %8966 = vmatpush2.bf16.msra.mxu0 0
    %8967 = vmatprep.subr.bf16.mxu0 0
    %8968 = vmatpush2.bf16.msra.mxu0 0
    %8969 = vmatprep.subr.bf16.mxu0 0
    %8970 = vmatpush2.bf16.msra.mxu0 0
    %8971 = vmatprep.subr.bf16.mxu0 0
    %8972 = vmatpush2.bf16.msra.mxu0 0
    %8973 = vmatprep.subr.bf16.mxu0 0
    %8974 = vmatpush2.bf16.msra.mxu0 0
    %8975 = vmatprep.subr.bf16.mxu0 0
    %8976 = vmatpush2.bf16.msra.mxu0 0
    %8977 = vmatprep.subr.bf16.mxu0 0
    %8978 = vmatpush2.bf16.msra.mxu0 0
    %8979 = vmatprep.mubr.bf16.mxu0 0
    %8980 = vmatmul.mubr.bf16.gmra.mxu0 %v8946
    %v8981 = vpop.f32.mrf.mxu0
    %v8982 = vadd.f32 0.0, %v8981
    %v8983 = vpop.f32.mrf.mxu0
    %v8984 = vadd.f32 0.0, %v8983
    %v8985 = vpop.f32.mrf.mxu0
    %v8986 = vpop.f32.mrf.mxu0
    %8987 = vdwg.mxu0
    %8988 = vmatprep.subr.bf16.mxu0 %v8450
    %8989 = vmatpush1.bf16.msra.mxu0 %v8449
    %8990 = vmatprep.subr.bf16.mxu0 %v8446
    %8991 = vmatpush1.bf16.msra.mxu0 %v8445
    %8992 = vmatprep.subr.bf16.mxu0 %v8442
    %8993 = vmatpush1.bf16.msra.mxu0 %v8441
    %8994 = vmatprep.subr.bf16.mxu0 %v8438
    %8995 = vmatpush1.bf16.msra.mxu0 %v8437
    %8996 = vmatprep.subr.bf16.mxu0 %v8434
    %8997 = vmatpush1.bf16.msra.mxu0 %v8433
    %8998 = vmatprep.subr.bf16.mxu0 %v8430
    %8999 = vmatpush1.bf16.msra.mxu0 %v8429
    %9000 = vmatprep.subr.bf16.mxu0 %v8426
    %9001 = vmatpush1.bf16.msra.mxu0 %v8425
    %9002 = vmatprep.subr.bf16.mxu0 %v8422
    %9003 = vmatpush1.bf16.msra.mxu0 %v8421
    %9004 = vmatprep.subr.bf16.mxu0 0
    %9005 = vmatpush2.bf16.msra.mxu0 0
    %9006 = vmatprep.subr.bf16.mxu0 0
    %9007 = vmatpush2.bf16.msra.mxu0 0
    %9008 = vmatprep.subr.bf16.mxu0 0
    %9009 = vmatpush2.bf16.msra.mxu0 0
    %9010 = vmatprep.subr.bf16.mxu0 0
    %9011 = vmatpush2.bf16.msra.mxu0 0
    %9012 = vmatprep.subr.bf16.mxu0 0
    %9013 = vmatpush2.bf16.msra.mxu0 0
    %9014 = vmatprep.subr.bf16.mxu0 0
    %9015 = vmatpush2.bf16.msra.mxu0 0
    %9016 = vmatprep.subr.bf16.mxu0 0
    %9017 = vmatpush2.bf16.msra.mxu0 0
    %9018 = vmatprep.subr.bf16.mxu0 0
    %9019 = vmatpush2.bf16.msra.mxu0 0
    %9020 = vmatprep.mubr.bf16.mxu0 0
    %9021 = vmatmul.mubr.bf16.gmra.mxu0 %v8946
    %v9022 = vpop.f32.mrf.mxu0
    %v9023 = vadd.f32 0.0, %v9022
    %v9024 = vpop.f32.mrf.mxu0
    %v9025 = vadd.f32 0.0, %v9024
    %v9026 = vpop.f32.mrf.mxu0
    %v9027 = vpop.f32.mrf.mxu0
    %9028 = vdwg.mxu0
    %v9029 = vadd.f32 %v8942, %v8982
    %v9030 = vadd.f32 %v8943, %v8984
    %v9031 = vadd.f32 %v8944, %v9023
    %v9032 = vadd.f32 %v8945, %v9025
    %v9033 = vxor.u32 %v9029, 2147483648
    %v9034 = vmul.f32 %v9033, 1.442695
    %v9035 = vpow.pop %v9034
    %v9036 = vadd.f32 %v9035, 1.0
    %v9037 = vrcp.pop %v9036
    %v9038 = vmul.f32 1.0, %v9037
    %v9039 = vxor.u32 %v9030, 2147483648
    %v9040 = vmul.f32 %v9039, 1.442695
    %v9041 = vpow.pop %v9040
    %v9042 = vadd.f32 %v9041, 1.0
    %v9043 = vrcp.pop %v9042
    %v9044 = vmul.f32 1.0, %v9043
    %v9045 = vtanh.pop %v9031
    %v9046 = vxor.u32 %v9032, 2147483648
    %v9047 = vmul.f32 %v9046, 1.442695
    %v9048 = vpow.pop %v9047
    %v9049 = vadd.f32 %v9048, 1.0
    %v9050 = vrcp.pop %v9049
    %v9051 = vmul.f32 1.0, %v9050
    %v9052 = vmul.f32 %v9044, %v8938
    %v9053 = vmul.f32 %v9038, %v9045
    %v9054 = vadd.f32 %v9052, %v9053
    %v9055 = vtanh.pop %v9054
    %v9056 = vmul.f32 %v9051, %v9055
    %s9057 = scalar_lea.vmem [#allocation6], 160
    %v9058 = vld [vmem:[%s9057] sm:$0xff]
    %v9059 = vld [vmem:[%s9057 + $0x8] sm:$0xff]
    %v9060 = vld [vmem:[%s9057 + $0x10] sm:$0xff]
    %v9061 = vld [vmem:[%s9057 + $0x18] sm:$0xff]
    %v9062 = vpack.c.bf16 %v9056, %v9056
    %9063 = vmatprep.subr.bf16.mxu0 %v8448
    %9064 = vmatpush1.bf16.msra.mxu0 %v8447
    %9065 = vmatprep.subr.bf16.mxu0 %v8444
    %9066 = vmatpush1.bf16.msra.mxu0 %v8443
    %9067 = vmatprep.subr.bf16.mxu0 %v8440
    %9068 = vmatpush1.bf16.msra.mxu0 %v8439
    %9069 = vmatprep.subr.bf16.mxu0 %v8436
    %9070 = vmatpush1.bf16.msra.mxu0 %v8435
    %9071 = vmatprep.subr.bf16.mxu0 %v8432
    %9072 = vmatpush1.bf16.msra.mxu0 %v8431
    %9073 = vmatprep.subr.bf16.mxu0 %v8428
    %9074 = vmatpush1.bf16.msra.mxu0 %v8427
    %9075 = vmatprep.subr.bf16.mxu0 %v8424
    %9076 = vmatpush1.bf16.msra.mxu0 %v8423
    %9077 = vmatprep.subr.bf16.mxu0 %v8420
    %9078 = vmatpush1.bf16.msra.mxu0 %v8419
    %9079 = vmatprep.subr.bf16.mxu0 0
    %9080 = vmatpush2.bf16.msra.mxu0 0
    %9081 = vmatprep.subr.bf16.mxu0 0
    %9082 = vmatpush2.bf16.msra.mxu0 0
    %9083 = vmatprep.subr.bf16.mxu0 0
    %9084 = vmatpush2.bf16.msra.mxu0 0
    %9085 = vmatprep.subr.bf16.mxu0 0
    %9086 = vmatpush2.bf16.msra.mxu0 0
    %9087 = vmatprep.subr.bf16.mxu0 0
    %9088 = vmatpush2.bf16.msra.mxu0 0
    %9089 = vmatprep.subr.bf16.mxu0 0
    %9090 = vmatpush2.bf16.msra.mxu0 0
    %9091 = vmatprep.subr.bf16.mxu0 0
    %9092 = vmatpush2.bf16.msra.mxu0 0
    %9093 = vmatprep.subr.bf16.mxu0 0
    %9094 = vmatpush2.bf16.msra.mxu0 0
    %9095 = vmatprep.mubr.bf16.mxu0 0
    %9096 = vmatmul.mubr.bf16.gmra.mxu0 %v9062
    %v9097 = vpop.f32.mrf.mxu0
    %v9098 = vadd.f32 0.0, %v9097
    %v9099 = vpop.f32.mrf.mxu0
    %v9100 = vadd.f32 0.0, %v9099
    %v9101 = vpop.f32.mrf.mxu0
    %v9102 = vpop.f32.mrf.mxu0
    %9103 = vdwg.mxu0
    %9104 = vmatprep.subr.bf16.mxu0 %v8450
    %9105 = vmatpush1.bf16.msra.mxu0 %v8449
    %9106 = vmatprep.subr.bf16.mxu0 %v8446
    %9107 = vmatpush1.bf16.msra.mxu0 %v8445
    %9108 = vmatprep.subr.bf16.mxu0 %v8442
    %9109 = vmatpush1.bf16.msra.mxu0 %v8441
    %9110 = vmatprep.subr.bf16.mxu0 %v8438
    %9111 = vmatpush1.bf16.msra.mxu0 %v8437
    %9112 = vmatprep.subr.bf16.mxu0 %v8434
    %9113 = vmatpush1.bf16.msra.mxu0 %v8433
    %9114 = vmatprep.subr.bf16.mxu0 %v8430
    %9115 = vmatpush1.bf16.msra.mxu0 %v8429
    %9116 = vmatprep.subr.bf16.mxu0 %v8426
    %9117 = vmatpush1.bf16.msra.mxu0 %v8425
    %9118 = vmatprep.subr.bf16.mxu0 %v8422
    %9119 = vmatpush1.bf16.msra.mxu0 %v8421
    %9120 = vmatprep.subr.bf16.mxu0 0
    %9121 = vmatpush2.bf16.msra.mxu0 0
    %9122 = vmatprep.subr.bf16.mxu0 0
    %9123 = vmatpush2.bf16.msra.mxu0 0
    %9124 = vmatprep.subr.bf16.mxu0 0
    %9125 = vmatpush2.bf16.msra.mxu0 0
    %9126 = vmatprep.subr.bf16.mxu0 0
    %9127 = vmatpush2.bf16.msra.mxu0 0
    %9128 = vmatprep.subr.bf16.mxu0 0
    %9129 = vmatpush2.bf16.msra.mxu0 0
    %9130 = vmatprep.subr.bf16.mxu0 0
    %9131 = vmatpush2.bf16.msra.mxu0 0
    %9132 = vmatprep.subr.bf16.mxu0 0
    %9133 = vmatpush2.bf16.msra.mxu0 0
    %9134 = vmatprep.subr.bf16.mxu0 0
    %9135 = vmatpush2.bf16.msra.mxu0 0
    %9136 = vmatprep.mubr.bf16.mxu0 0
    %9137 = vmatmul.mubr.bf16.gmra.mxu0 %v9062
    %v9138 = vpop.f32.mrf.mxu0
    %v9139 = vadd.f32 0.0, %v9138
    %v9140 = vpop.f32.mrf.mxu0
    %v9141 = vadd.f32 0.0, %v9140
    %v9142 = vpop.f32.mrf.mxu0
    %v9143 = vpop.f32.mrf.mxu0
    %9144 = vdwg.mxu0
    %v9145 = vadd.f32 %v9058, %v9098
    %v9146 = vadd.f32 %v9059, %v9100
    %v9147 = vadd.f32 %v9060, %v9139
    %v9148 = vadd.f32 %v9061, %v9141
    %v9149 = vxor.u32 %v9145, 2147483648
    %v9150 = vmul.f32 %v9149, 1.442695
    %v9151 = vpow.pop %v9150
    %v9152 = vadd.f32 %v9151, 1.0
    %v9153 = vrcp.pop %v9152
    %v9154 = vmul.f32 1.0, %v9153
    %v9155 = vxor.u32 %v9146, 2147483648
    %v9156 = vmul.f32 %v9155, 1.442695
    %v9157 = vpow.pop %v9156
    %v9158 = vadd.f32 %v9157, 1.0
    %v9159 = vrcp.pop %v9158
    %v9160 = vmul.f32 1.0, %v9159
    %v9161 = vtanh.pop %v9147
    %v9162 = vxor.u32 %v9148, 2147483648
    %v9163 = vmul.f32 %v9162, 1.442695
    %v9164 = vpow.pop %v9163
    %v9165 = vadd.f32 %v9164, 1.0
    %v9166 = vrcp.pop %v9165
    %v9167 = vmul.f32 1.0, %v9166
    %v9168 = vmul.f32 %v9160, %v9054
    %v9169 = vmul.f32 %v9154, %v9161
    %v9170 = vadd.f32 %v9168, %v9169
    %v9171 = vtanh.pop %v9170
    %v9172 = vmul.f32 %v9167, %v9171
    %s9173 = scalar_lea.vmem [#allocation6], 192
    %v9174 = vld [vmem:[%s9173] sm:$0xff]
    %v9175 = vld [vmem:[%s9173 + $0x8] sm:$0xff]
    %v9176 = vld [vmem:[%s9173 + $0x10] sm:$0xff]
    %v9177 = vld [vmem:[%s9173 + $0x18] sm:$0xff]
    %v9178 = vpack.c.bf16 %v9172, %v9172
    %9179 = vmatprep.subr.bf16.mxu0 %v8448
    %9180 = vmatpush1.bf16.msra.mxu0 %v8447
    %9181 = vmatprep.subr.bf16.mxu0 %v8444
    %9182 = vmatpush1.bf16.msra.mxu0 %v8443
    %9183 = vmatprep.subr.bf16.mxu0 %v8440
    %9184 = vmatpush1.bf16.msra.mxu0 %v8439
    %9185 = vmatprep.subr.bf16.mxu0 %v8436
    %9186 = vmatpush1.bf16.msra.mxu0 %v8435
    %9187 = vmatprep.subr.bf16.mxu0 %v8432
    %9188 = vmatpush1.bf16.msra.mxu0 %v8431
    %9189 = vmatprep.subr.bf16.mxu0 %v8428
    %9190 = vmatpush1.bf16.msra.mxu0 %v8427
    %9191 = vmatprep.subr.bf16.mxu0 %v8424
    %9192 = vmatpush1.bf16.msra.mxu0 %v8423
    %9193 = vmatprep.subr.bf16.mxu0 %v8420
    %9194 = vmatpush1.bf16.msra.mxu0 %v8419
    %9195 = vmatprep.subr.bf16.mxu0 0
    %9196 = vmatpush2.bf16.msra.mxu0 0
    %9197 = vmatprep.subr.bf16.mxu0 0
    %9198 = vmatpush2.bf16.msra.mxu0 0
    %9199 = vmatprep.subr.bf16.mxu0 0
    %9200 = vmatpush2.bf16.msra.mxu0 0
    %9201 = vmatprep.subr.bf16.mxu0 0
    %9202 = vmatpush2.bf16.msra.mxu0 0
    %9203 = vmatprep.subr.bf16.mxu0 0
    %9204 = vmatpush2.bf16.msra.mxu0 0
    %9205 = vmatprep.subr.bf16.mxu0 0
    %9206 = vmatpush2.bf16.msra.mxu0 0
    %9207 = vmatprep.subr.bf16.mxu0 0
    %9208 = vmatpush2.bf16.msra.mxu0 0
    %9209 = vmatprep.subr.bf16.mxu0 0
    %9210 = vmatpush2.bf16.msra.mxu0 0
    %9211 = vmatprep.mubr.bf16.mxu0 0
    %9212 = vmatmul.mubr.bf16.gmra.mxu0 %v9178
    %v9213 = vpop.f32.mrf.mxu0
    %v9214 = vadd.f32 0.0, %v9213
    %v9215 = vpop.f32.mrf.mxu0
    %v9216 = vadd.f32 0.0, %v9215
    %v9217 = vpop.f32.mrf.mxu0
    %v9218 = vpop.f32.mrf.mxu0
    %9219 = vdwg.mxu0
    %9220 = vmatprep.subr.bf16.mxu0 %v8450
    %9221 = vmatpush1.bf16.msra.mxu0 %v8449
    %9222 = vmatprep.subr.bf16.mxu0 %v8446
    %9223 = vmatpush1.bf16.msra.mxu0 %v8445
    %9224 = vmatprep.subr.bf16.mxu0 %v8442
    %9225 = vmatpush1.bf16.msra.mxu0 %v8441
    %9226 = vmatprep.subr.bf16.mxu0 %v8438
    %9227 = vmatpush1.bf16.msra.mxu0 %v8437
    %9228 = vmatprep.subr.bf16.mxu0 %v8434
    %9229 = vmatpush1.bf16.msra.mxu0 %v8433
    %9230 = vmatprep.subr.bf16.mxu0 %v8430
    %9231 = vmatpush1.bf16.msra.mxu0 %v8429
    %9232 = vmatprep.subr.bf16.mxu0 %v8426
    %9233 = vmatpush1.bf16.msra.mxu0 %v8425
    %9234 = vmatprep.subr.bf16.mxu0 %v8422
    %9235 = vmatpush1.bf16.msra.mxu0 %v8421
    %9236 = vmatprep.subr.bf16.mxu0 0
    %9237 = vmatpush2.bf16.msra.mxu0 0
    %9238 = vmatprep.subr.bf16.mxu0 0
    %9239 = vmatpush2.bf16.msra.mxu0 0
    %9240 = vmatprep.subr.bf16.mxu0 0
    %9241 = vmatpush2.bf16.msra.mxu0 0
    %9242 = vmatprep.subr.bf16.mxu0 0
    %9243 = vmatpush2.bf16.msra.mxu0 0
    %9244 = vmatprep.subr.bf16.mxu0 0
    %9245 = vmatpush2.bf16.msra.mxu0 0
    %9246 = vmatprep.subr.bf16.mxu0 0
    %9247 = vmatpush2.bf16.msra.mxu0 0
    %9248 = vmatprep.subr.bf16.mxu0 0
    %9249 = vmatpush2.bf16.msra.mxu0 0
    %9250 = vmatprep.subr.bf16.mxu0 0
    %9251 = vmatpush2.bf16.msra.mxu0 0
    %9252 = vmatprep.mubr.bf16.mxu0 0
    %9253 = vmatmul.mubr.bf16.gmra.mxu0 %v9178
    %v9254 = vpop.f32.mrf.mxu0
    %v9255 = vadd.f32 0.0, %v9254
    %v9256 = vpop.f32.mrf.mxu0
    %v9257 = vadd.f32 0.0, %v9256
    %v9258 = vpop.f32.mrf.mxu0
    %v9259 = vpop.f32.mrf.mxu0
    %9260 = vdwg.mxu0
    %v9261 = vadd.f32 %v9174, %v9214
    %v9262 = vadd.f32 %v9175, %v9216
    %v9263 = vadd.f32 %v9176, %v9255
    %v9264 = vadd.f32 %v9177, %v9257
    %v9265 = vxor.u32 %v9261, 2147483648
    %v9266 = vmul.f32 %v9265, 1.442695
    %v9267 = vpow.pop %v9266
    %v9268 = vadd.f32 %v9267, 1.0
    %v9269 = vrcp.pop %v9268
    %v9270 = vmul.f32 1.0, %v9269
    %v9271 = vxor.u32 %v9262, 2147483648
    %v9272 = vmul.f32 %v9271, 1.442695
    %v9273 = vpow.pop %v9272
    %v9274 = vadd.f32 %v9273, 1.0
    %v9275 = vrcp.pop %v9274
    %v9276 = vmul.f32 1.0, %v9275
    %v9277 = vtanh.pop %v9263
    %v9278 = vxor.u32 %v9264, 2147483648
    %v9279 = vmul.f32 %v9278, 1.442695
    %v9280 = vpow.pop %v9279
    %v9281 = vadd.f32 %v9280, 1.0
    %v9282 = vrcp.pop %v9281
    %v9283 = vmul.f32 1.0, %v9282
    %v9284 = vmul.f32 %v9276, %v9170
    %v9285 = vmul.f32 %v9270, %v9277
    %v9286 = vadd.f32 %v9284, %v9285
    %v9287 = vtanh.pop %v9286
    %v9288 = vmul.f32 %v9283, %v9287
    %s9289 = scalar_lea.vmem [#allocation6], 224
    %v9290 = vld [vmem:[%s9289] sm:$0xff]
    %v9291 = vld [vmem:[%s9289 + $0x8] sm:$0xff]
    %v9292 = vld [vmem:[%s9289 + $0x10] sm:$0xff]
    %v9293 = vld [vmem:[%s9289 + $0x18] sm:$0xff]
    %v9294 = vpack.c.bf16 %v9288, %v9288
    %9295 = vmatprep.subr.bf16.mxu0 %v8448
    %9296 = vmatpush1.bf16.msra.mxu0 %v8447
    %9297 = vmatprep.subr.bf16.mxu0 %v8444
    %9298 = vmatpush1.bf16.msra.mxu0 %v8443
    %9299 = vmatprep.subr.bf16.mxu0 %v8440
    %9300 = vmatpush1.bf16.msra.mxu0 %v8439
    %9301 = vmatprep.subr.bf16.mxu0 %v8436
    %9302 = vmatpush1.bf16.msra.mxu0 %v8435
    %9303 = vmatprep.subr.bf16.mxu0 %v8432
    %9304 = vmatpush1.bf16.msra.mxu0 %v8431
    %9305 = vmatprep.subr.bf16.mxu0 %v8428
    %9306 = vmatpush1.bf16.msra.mxu0 %v8427
    %9307 = vmatprep.subr.bf16.mxu0 %v8424
    %9308 = vmatpush1.bf16.msra.mxu0 %v8423
    %9309 = vmatprep.subr.bf16.mxu0 %v8420
    %9310 = vmatpush1.bf16.msra.mxu0 %v8419
    %9311 = vmatprep.subr.bf16.mxu0 0
    %9312 = vmatpush2.bf16.msra.mxu0 0
    %9313 = vmatprep.subr.bf16.mxu0 0
    %9314 = vmatpush2.bf16.msra.mxu0 0
    %9315 = vmatprep.subr.bf16.mxu0 0
    %9316 = vmatpush2.bf16.msra.mxu0 0
    %9317 = vmatprep.subr.bf16.mxu0 0
    %9318 = vmatpush2.bf16.msra.mxu0 0
    %9319 = vmatprep.subr.bf16.mxu0 0
    %9320 = vmatpush2.bf16.msra.mxu0 0
    %9321 = vmatprep.subr.bf16.mxu0 0
    %9322 = vmatpush2.bf16.msra.mxu0 0
    %9323 = vmatprep.subr.bf16.mxu0 0
    %9324 = vmatpush2.bf16.msra.mxu0 0
    %9325 = vmatprep.subr.bf16.mxu0 0
    %9326 = vmatpush2.bf16.msra.mxu0 0
    %9327 = vmatprep.mubr.bf16.mxu0 0
    %9328 = vmatmul.mubr.bf16.gmra.mxu0 %v9294
    %v9329 = vpop.f32.mrf.mxu0
    %v9330 = vadd.f32 0.0, %v9329
    %v9331 = vpop.f32.mrf.mxu0
    %v9332 = vadd.f32 0.0, %v9331
    %v9333 = vpop.f32.mrf.mxu0
    %v9334 = vpop.f32.mrf.mxu0
    %9335 = vdwg.mxu0
    %9336 = vmatprep.subr.bf16.mxu0 %v8450
    %9337 = vmatpush1.bf16.msra.mxu0 %v8449
    %9338 = vmatprep.subr.bf16.mxu0 %v8446
    %9339 = vmatpush1.bf16.msra.mxu0 %v8445
    %9340 = vmatprep.subr.bf16.mxu0 %v8442
    %9341 = vmatpush1.bf16.msra.mxu0 %v8441
    %9342 = vmatprep.subr.bf16.mxu0 %v8438
    %9343 = vmatpush1.bf16.msra.mxu0 %v8437
    %9344 = vmatprep.subr.bf16.mxu0 %v8434
    %9345 = vmatpush1.bf16.msra.mxu0 %v8433
    %9346 = vmatprep.subr.bf16.mxu0 %v8430
    %9347 = vmatpush1.bf16.msra.mxu0 %v8429
    %9348 = vmatprep.subr.bf16.mxu0 %v8426
    %9349 = vmatpush1.bf16.msra.mxu0 %v8425
    %9350 = vmatprep.subr.bf16.mxu0 %v8422
    %9351 = vmatpush1.bf16.msra.mxu0 %v8421
    %9352 = vmatprep.subr.bf16.mxu0 0
    %9353 = vmatpush2.bf16.msra.mxu0 0
    %9354 = vmatprep.subr.bf16.mxu0 0
    %9355 = vmatpush2.bf16.msra.mxu0 0
    %9356 = vmatprep.subr.bf16.mxu0 0
    %9357 = vmatpush2.bf16.msra.mxu0 0
    %9358 = vmatprep.subr.bf16.mxu0 0
    %9359 = vmatpush2.bf16.msra.mxu0 0
    %9360 = vmatprep.subr.bf16.mxu0 0
    %9361 = vmatpush2.bf16.msra.mxu0 0
    %9362 = vmatprep.subr.bf16.mxu0 0
    %9363 = vmatpush2.bf16.msra.mxu0 0
    %9364 = vmatprep.subr.bf16.mxu0 0
    %9365 = vmatpush2.bf16.msra.mxu0 0
    %9366 = vmatprep.subr.bf16.mxu0 0
    %9367 = vmatpush2.bf16.msra.mxu0 0
    %9368 = vmatprep.mubr.bf16.mxu0 0
    %9369 = vmatmul.mubr.bf16.gmra.mxu0 %v9294
    %v9370 = vpop.f32.mrf.mxu0
    %v9371 = vadd.f32 0.0, %v9370
    %v9372 = vpop.f32.mrf.mxu0
    %v9373 = vadd.f32 0.0, %v9372
    %v9374 = vpop.f32.mrf.mxu0
    %v9375 = vpop.f32.mrf.mxu0
    %9376 = vdwg.mxu0
    %v9377 = vadd.f32 %v9290, %v9330
    %v9378 = vadd.f32 %v9291, %v9332
    %v9379 = vadd.f32 %v9292, %v9371
    %v9380 = vadd.f32 %v9293, %v9373
    %v9381 = vxor.u32 %v9377, 2147483648
    %v9382 = vmul.f32 %v9381, 1.442695
    %v9383 = vpow.pop %v9382
    %v9384 = vadd.f32 %v9383, 1.0
    %v9385 = vrcp.pop %v9384
    %v9386 = vmul.f32 1.0, %v9385
    %v9387 = vxor.u32 %v9378, 2147483648
    %v9388 = vmul.f32 %v9387, 1.442695
    %v9389 = vpow.pop %v9388
    %v9390 = vadd.f32 %v9389, 1.0
    %v9391 = vrcp.pop %v9390
    %v9392 = vmul.f32 1.0, %v9391
    %v9393 = vtanh.pop %v9379
    %v9394 = vxor.u32 %v9380, 2147483648
    %v9395 = vmul.f32 %v9394, 1.442695
    %v9396 = vpow.pop %v9395
    %v9397 = vadd.f32 %v9396, 1.0
    %v9398 = vrcp.pop %v9397
    %v9399 = vmul.f32 1.0, %v9398
    %v9400 = vmul.f32 %v9392, %v9286
    %v9401 = vmul.f32 %v9386, %v9393
    %v9402 = vadd.f32 %v9400, %v9401
    %v9403 = vtanh.pop %v9402
    %v9404 = vmul.f32 %v9399, %v9403
    %v9405 = vld [vmem:[#allocation17] sm:$0xff]
    %v9406 = vld [vmem:[#allocation17 + $0x8] sm:$0xff]
    %v9407 = vld [vmem:[#allocation17 + $0x10] sm:$0xff]
    %v9408 = vld [vmem:[#allocation17 + $0x18] sm:$0xff]
    %v9409 = vld [vmem:[#allocation17 + $0x20] sm:$0xff]
    %v9410 = vld [vmem:[#allocation17 + $0x28] sm:$0xff]
    %v9411 = vld [vmem:[#allocation17 + $0x30] sm:$0xff]
    %v9412 = vld [vmem:[#allocation17 + $0x38] sm:$0xff]
    %v9413 = vld [vmem:[#allocation17 + $0x40] sm:$0xff]
    %v9414 = vld [vmem:[#allocation17 + $0x48] sm:$0xff]
    %v9415 = vld [vmem:[#allocation17 + $0x50] sm:$0xff]
    %v9416 = vld [vmem:[#allocation17 + $0x58] sm:$0xff]
    %v9417 = vld [vmem:[#allocation17 + $0x60] sm:$0xff]
    %v9418 = vld [vmem:[#allocation17 + $0x68] sm:$0xff]
    %v9419 = vld [vmem:[#allocation17 + $0x70] sm:$0xff]
    %v9420 = vld [vmem:[#allocation17 + $0x78] sm:$0xff]
    %v9421 = vld [vmem:[#allocation17 + $0x80] sm:$0xff]
    %v9422 = vld [vmem:[#allocation17 + $0x88] sm:$0xff]
    %v9423 = vld [vmem:[#allocation17 + $0x90] sm:$0xff]
    %v9424 = vld [vmem:[#allocation17 + $0x98] sm:$0xff]
    %v9425 = vld [vmem:[#allocation17 + $0xa0] sm:$0xff]
    %v9426 = vld [vmem:[#allocation17 + $0xa8] sm:$0xff]
    %v9427 = vld [vmem:[#allocation17 + $0xb0] sm:$0xff]
    %v9428 = vld [vmem:[#allocation17 + $0xb8] sm:$0xff]
    %v9429 = vld [vmem:[#allocation17 + $0xc0] sm:$0xff]
    %v9430 = vld [vmem:[#allocation17 + $0xc8] sm:$0xff]
    %v9431 = vld [vmem:[#allocation17 + $0xd0] sm:$0xff]
    %v9432 = vld [vmem:[#allocation17 + $0xd8] sm:$0xff]
    %v9433 = vld [vmem:[#allocation17 + $0xe0] sm:$0xff]
    %v9434 = vld [vmem:[#allocation17 + $0xe8] sm:$0xff]
    %v9435 = vld [vmem:[#allocation17 + $0xf0] sm:$0xff]
    %v9436 = vld [vmem:[#allocation17 + $0xf8] sm:$0xff]
    %v9469 = vunpack.c.l.b16 %v9405
    %v9470 = vunpack.c.h.b16 %v9405
    %v9471 = vunpack.c.l.b16 %v9406
    %v9472 = vunpack.c.h.b16 %v9406
    %v9473 = vunpack.c.l.b16 %v9407
    %v9474 = vunpack.c.h.b16 %v9407
    %v9475 = vunpack.c.l.b16 %v9408
    %v9476 = vunpack.c.h.b16 %v9408
    %v9477 = vunpack.c.l.b16 %v9409
    %v9478 = vunpack.c.h.b16 %v9409
    %v9479 = vunpack.c.l.b16 %v9410
    %v9480 = vunpack.c.h.b16 %v9410
    %v9481 = vunpack.c.l.b16 %v9411
    %v9482 = vunpack.c.h.b16 %v9411
    %v9483 = vunpack.c.l.b16 %v9412
    %v9484 = vunpack.c.h.b16 %v9412
    %v9485 = vunpack.c.l.b16 %v9413
    %v9486 = vunpack.c.h.b16 %v9413
    %v9487 = vunpack.c.l.b16 %v9414
    %v9488 = vunpack.c.h.b16 %v9414
    %v9489 = vunpack.c.l.b16 %v9415
    %v9490 = vunpack.c.h.b16 %v9415
    %v9491 = vunpack.c.l.b16 %v9416
    %v9492 = vunpack.c.h.b16 %v9416
    %v9493 = vunpack.c.l.b16 %v9417
    %v9494 = vunpack.c.h.b16 %v9417
    %v9495 = vunpack.c.l.b16 %v9418
    %v9496 = vunpack.c.h.b16 %v9418
    %v9497 = vunpack.c.l.b16 %v9419
    %v9498 = vunpack.c.h.b16 %v9419
    %v9499 = vunpack.c.l.b16 %v9420
    %v9500 = vunpack.c.h.b16 %v9420
    %v9501 = vunpack.c.l.b16 %v9421
    %v9502 = vunpack.c.h.b16 %v9421
    %v9503 = vunpack.c.l.b16 %v9422
    %v9504 = vunpack.c.h.b16 %v9422
    %v9505 = vunpack.c.l.b16 %v9423
    %v9506 = vunpack.c.h.b16 %v9423
    %v9507 = vunpack.c.l.b16 %v9424
    %v9508 = vunpack.c.h.b16 %v9424
    %v9509 = vunpack.c.l.b16 %v9425
    %v9510 = vunpack.c.h.b16 %v9425
    %v9511 = vunpack.c.l.b16 %v9426
    %v9512 = vunpack.c.h.b16 %v9426
    %v9513 = vunpack.c.l.b16 %v9427
    %v9514 = vunpack.c.h.b16 %v9427
    %v9515 = vunpack.c.l.b16 %v9428
    %v9516 = vunpack.c.h.b16 %v9428
    %v9517 = vunpack.c.l.b16 %v9429
    %v9518 = vunpack.c.h.b16 %v9429
    %v9519 = vunpack.c.l.b16 %v9430
    %v9520 = vunpack.c.h.b16 %v9430
    %v9521 = vunpack.c.l.b16 %v9431
    %v9522 = vunpack.c.h.b16 %v9431
    %v9523 = vunpack.c.l.b16 %v9432
    %v9524 = vunpack.c.h.b16 %v9432
    %v9525 = vunpack.c.l.b16 %v9433
    %v9526 = vunpack.c.h.b16 %v9433
    %v9527 = vunpack.c.l.b16 %v9434
    %v9528 = vunpack.c.h.b16 %v9434
    %v9529 = vunpack.c.l.b16 %v9435
    %v9530 = vunpack.c.h.b16 %v9435
    %v9531 = vunpack.c.l.b16 %v9436
    %v9532 = vunpack.c.h.b16 %v9436
    %v9533 = vpack.c.b16 %v9473, %v9469
    %v9534 = vpack.c.b16 %v9474, %v9470
    %v9535 = vpack.c.b16 %v9475, %v9471
    %v9536 = vpack.c.b16 %v9476, %v9472
    %v9537 = vpack.c.b16 %v9481, %v9477
    %v9538 = vpack.c.b16 %v9482, %v9478
    %v9539 = vpack.c.b16 %v9483, %v9479
    %v9540 = vpack.c.b16 %v9484, %v9480
    %v9541 = vpack.c.b16 %v9489, %v9485
    %v9542 = vpack.c.b16 %v9490, %v9486
    %v9543 = vpack.c.b16 %v9491, %v9487
    %v9544 = vpack.c.b16 %v9492, %v9488
    %v9545 = vpack.c.b16 %v9497, %v9493
    %v9546 = vpack.c.b16 %v9498, %v9494
    %v9547 = vpack.c.b16 %v9499, %v9495
    %v9548 = vpack.c.b16 %v9500, %v9496
    %v9549 = vpack.c.b16 %v9505, %v9501
    %v9550 = vpack.c.b16 %v9506, %v9502
    %v9551 = vpack.c.b16 %v9507, %v9503
    %v9552 = vpack.c.b16 %v9508, %v9504
    %v9553 = vpack.c.b16 %v9513, %v9509
    %v9554 = vpack.c.b16 %v9514, %v9510
    %v9555 = vpack.c.b16 %v9515, %v9511
    %v9556 = vpack.c.b16 %v9516, %v9512
    %v9557 = vpack.c.b16 %v9521, %v9517
    %v9558 = vpack.c.b16 %v9522, %v9518
    %v9559 = vpack.c.b16 %v9523, %v9519
    %v9560 = vpack.c.b16 %v9524, %v9520
    %v9561 = vpack.c.b16 %v9529, %v9525
    %v9562 = vpack.c.b16 %v9530, %v9526
    %v9563 = vpack.c.b16 %v9531, %v9527
    %v9564 = vpack.c.b16 %v9532, %v9528
    %9597 = vmatprep.subr.bf16.mxu0 %v9562
    %9598 = vmatpush1.bf16.msra.mxu0 %v9561
    %9599 = vmatprep.subr.bf16.mxu0 %v9558
    %9600 = vmatpush1.bf16.msra.mxu0 %v9557
    %9601 = vmatprep.subr.bf16.mxu0 %v9554
    %9602 = vmatpush1.bf16.msra.mxu0 %v9553
    %9603 = vmatprep.subr.bf16.mxu0 %v9550
    %9604 = vmatpush1.bf16.msra.mxu0 %v9549
    %9605 = vmatprep.subr.bf16.mxu0 %v9546
    %9606 = vmatpush1.bf16.msra.mxu0 %v9545
    %9607 = vmatprep.subr.bf16.mxu0 %v9542
    %9608 = vmatpush1.bf16.msra.mxu0 %v9541
    %9609 = vmatprep.subr.bf16.mxu0 %v9538
    %9610 = vmatpush1.bf16.msra.mxu0 %v9537
    %9611 = vmatprep.subr.bf16.mxu0 %v9534
    %9612 = vmatpush1.bf16.msra.mxu0 %v9533
    %9613 = vmatprep.subr.bf16.mxu0 0
    %9614 = vmatpush2.bf16.msra.mxu0 0
    %9615 = vmatprep.subr.bf16.mxu0 0
    %9616 = vmatpush2.bf16.msra.mxu0 0
    %9617 = vmatprep.subr.bf16.mxu0 0
    %9618 = vmatpush2.bf16.msra.mxu0 0
    %9619 = vmatprep.subr.bf16.mxu0 0
    %9620 = vmatpush2.bf16.msra.mxu0 0
    %9621 = vmatprep.subr.bf16.mxu0 0
    %9622 = vmatpush2.bf16.msra.mxu0 0
    %9623 = vmatprep.subr.bf16.mxu0 0
    %9624 = vmatpush2.bf16.msra.mxu0 0
    %9625 = vmatprep.subr.bf16.mxu0 0
    %9626 = vmatpush2.bf16.msra.mxu0 0
    %9627 = vmatprep.subr.bf16.mxu0 0
    %9628 = vmatpush2.bf16.msra.mxu0 0
    %9629 = vmatprep.mubr.bf16.mxu0 0
    %9630 = vmatmul.mubr.bf16.gmra.mxu0 0
    %v9631 = vpop.f32.mrf.mxu0
    %v9632 = vadd.f32 0.0, %v9631
    %v9633 = vpop.f32.mrf.mxu0
    %v9634 = vadd.f32 0.0, %v9633
    %v9635 = vpop.f32.mrf.mxu0
    %v9636 = vpop.f32.mrf.mxu0
    %9637 = vdwg.mxu0
    %9638 = vmatprep.subr.bf16.mxu0 %v9564
    %9639 = vmatpush1.bf16.msra.mxu0 %v9563
    %9640 = vmatprep.subr.bf16.mxu0 %v9560
    %9641 = vmatpush1.bf16.msra.mxu0 %v9559
    %9642 = vmatprep.subr.bf16.mxu0 %v9556
    %9643 = vmatpush1.bf16.msra.mxu0 %v9555
    %9644 = vmatprep.subr.bf16.mxu0 %v9552
    %9645 = vmatpush1.bf16.msra.mxu0 %v9551
    %9646 = vmatprep.subr.bf16.mxu0 %v9548
    %9647 = vmatpush1.bf16.msra.mxu0 %v9547
    %9648 = vmatprep.subr.bf16.mxu0 %v9544
    %9649 = vmatpush1.bf16.msra.mxu0 %v9543
    %9650 = vmatprep.subr.bf16.mxu0 %v9540
    %9651 = vmatpush1.bf16.msra.mxu0 %v9539
    %9652 = vmatprep.subr.bf16.mxu0 %v9536
    %9653 = vmatpush1.bf16.msra.mxu0 %v9535
    %9654 = vmatprep.subr.bf16.mxu0 0
    %9655 = vmatpush2.bf16.msra.mxu0 0
    %9656 = vmatprep.subr.bf16.mxu0 0
    %9657 = vmatpush2.bf16.msra.mxu0 0
    %9658 = vmatprep.subr.bf16.mxu0 0
    %9659 = vmatpush2.bf16.msra.mxu0 0
    %9660 = vmatprep.subr.bf16.mxu0 0
    %9661 = vmatpush2.bf16.msra.mxu0 0
    %9662 = vmatprep.subr.bf16.mxu0 0
    %9663 = vmatpush2.bf16.msra.mxu0 0
    %9664 = vmatprep.subr.bf16.mxu0 0
    %9665 = vmatpush2.bf16.msra.mxu0 0
    %9666 = vmatprep.subr.bf16.mxu0 0
    %9667 = vmatpush2.bf16.msra.mxu0 0
    %9668 = vmatprep.subr.bf16.mxu0 0
    %9669 = vmatpush2.bf16.msra.mxu0 0
    %9670 = vmatprep.mubr.bf16.mxu0 0
    %9671 = vmatmul.mubr.bf16.gmra.mxu0 0
    %v9672 = vpop.f32.mrf.mxu0
    %v9673 = vadd.f32 0.0, %v9672
    %v9674 = vpop.f32.mrf.mxu0
    %v9675 = vadd.f32 0.0, %v9674
    %v9676 = vpop.f32.mrf.mxu0
    %v9677 = vpop.f32.mrf.mxu0
    %9678 = vdwg.mxu0
    %v9679 = vadd.f32 %v8251, %v9632
    %v9680 = vadd.f32 %v8252, %v9634
    %v9681 = vadd.f32 %v8253, %v9673
    %v9682 = vadd.f32 %v8254, %v9675
    %v9683 = vxor.u32 %v9679, 2147483648
    %v9684 = vmul.f32 %v9683, 1.442695
    %v9685 = vpow.pop %v9684
    %v9686 = vadd.f32 %v9685, 1.0
    %v9687 = vrcp.pop %v9686
    %v9688 = vmul.f32 1.0, %v9687
    %v9689 = vxor.u32 %v9680, 2147483648
    %v9690 = vmul.f32 %v9689, 1.442695
    %v9691 = vpow.pop %v9690
    %v9692 = vadd.f32 %v9691, 1.0
    %v9693 = vrcp.pop %v9692
    %v9694 = vmul.f32 1.0, %v9693
    %v9695 = vtanh.pop %v9681
    %v9696 = vxor.u32 %v9682, 2147483648
    %v9697 = vmul.f32 %v9696, 1.442695
    %v9698 = vpow.pop %v9697
    %v9699 = vadd.f32 %v9698, 1.0
    %v9700 = vrcp.pop %v9699
    %v9701 = vmul.f32 1.0, %v9700
    %v9702 = vmul.f32 %v9694, 0.0
    %v9703 = vmul.f32 %v9688, %v9695
    %v9704 = vadd.f32 %v9702, %v9703
    %v9705 = vtanh.pop %v9704
    %v9706 = vmul.f32 %v9701, %v9705
    %9708 = vrot.lane.b32.xlu0 %v9706, 64
    %v9709 = vpop.permute.xlu0 %9708
    %vm9711 = vcmask 523264
    %v9712 = vsel %vm9711, %v9404, %v9709
    %v9713 = vld [vmem:[%s10] sm:$0xff]
    %v9714 = vld [vmem:[%s10 + $0x8] sm:$0xff]
    %v9715 = vld [vmem:[%s10 + $0x10] sm:$0xff]
    %v9716 = vld [vmem:[%s10 + $0x18] sm:$0xff]
    %v9717 = vld [vmem:[%s10 + $0x20] sm:$0xff]
    %v9718 = vld [vmem:[%s10 + $0x28] sm:$0xff]
    %v9719 = vld [vmem:[%s10 + $0x30] sm:$0xff]
    %v9720 = vld [vmem:[%s10 + $0x38] sm:$0xff]
    %v9721 = vld [vmem:[%s10 + $0x40] sm:$0xff]
    %v9722 = vld [vmem:[%s10 + $0x48] sm:$0xff]
    %v9723 = vld [vmem:[%s10 + $0x50] sm:$0xff]
    %v9724 = vld [vmem:[%s10 + $0x58] sm:$0xff]
    %v9725 = vld [vmem:[%s10 + $0x60] sm:$0xff]
    %v9726 = vld [vmem:[%s10 + $0x68] sm:$0xff]
    %v9727 = vld [vmem:[%s10 + $0x70] sm:$0xff]
    %v9728 = vld [vmem:[%s10 + $0x78] sm:$0xff]
    %v9729 = vld [vmem:[%s11] sm:$0x1]
    %v9731 = vlaneseq
    %v9732 = vshrl.u32 %v9731, 7
    %v9733 = vsub.s32 0, %v9732
    %v9734 = vrot.slane %v9729, %v9733
    %9736 = vmatprep.subr.mxu0 0.0
    %9737 = vmatpush1.msra.mxu0 %v9728
    %9738 = vmatprep.subr.mxu0 0.0
    %9739 = vmatpush1.msra.mxu0 %v9727
    %9740 = vmatprep.subr.mxu0 0.0
    %9741 = vmatpush1.msra.mxu0 %v9726
    %9742 = vmatprep.subr.mxu0 0.0
    %9743 = vmatpush1.msra.mxu0 %v9725
    %9744 = vmatprep.subr.mxu0 0.0
    %9745 = vmatpush1.msra.mxu0 %v9724
    %9746 = vmatprep.subr.mxu0 0.0
    %9747 = vmatpush1.msra.mxu0 %v9723
    %9748 = vmatprep.subr.mxu0 0.0
    %9749 = vmatpush1.msra.mxu0 %v9722
    %9750 = vmatprep.subr.mxu0 0.0
    %9751 = vmatpush1.msra.mxu0 %v9721
    %9752 = vmatprep.subr.mxu0 0.0
    %9753 = vmatpush1.msra.mxu0 %v9720
    %9754 = vmatprep.subr.mxu0 0.0
    %9755 = vmatpush1.msra.mxu0 %v9719
    %9756 = vmatprep.subr.mxu0 0.0
    %9757 = vmatpush1.msra.mxu0 %v9718
    %9758 = vmatprep.subr.mxu0 0.0
    %9759 = vmatpush1.msra.mxu0 %v9717
    %9760 = vmatprep.subr.mxu0 0.0
    %9761 = vmatpush1.msra.mxu0 %v9716
    %9762 = vmatprep.subr.mxu0 0.0
    %9763 = vmatpush1.msra.mxu0 %v9715
    %9764 = vmatprep.subr.mxu0 0.0
    %9765 = vmatpush1.msra.mxu0 %v9714
    %9766 = vmatprep.subr.mxu0 0.0
    %9767 = vmatpush1.msra.mxu0 %v9713
    %9768 = vmatprep.subr.mxu0 0.0
    %9769 = vmatpush2.msra.mxu0 0.0
    %9770 = vmatprep.subr.mxu0 0.0
    %9771 = vmatpush2.msra.mxu0 0.0
    %9772 = vmatprep.subr.mxu0 0.0
    %9773 = vmatpush2.msra.mxu0 0.0
    %9774 = vmatprep.subr.mxu0 0.0
    %9775 = vmatpush2.msra.mxu0 0.0
    %9776 = vmatprep.subr.mxu0 0.0
    %9777 = vmatpush2.msra.mxu0 0.0
    %9778 = vmatprep.subr.mxu0 0.0
    %9779 = vmatpush2.msra.mxu0 0.0
    %9780 = vmatprep.subr.mxu0 0.0
    %9781 = vmatpush2.msra.mxu0 0.0
    %9782 = vmatprep.subr.mxu0 0.0
    %9783 = vmatpush2.msra.mxu0 0.0
    %9784 = vmatprep.subr.mxu0 0.0
    %9785 = vmatpush2.msra.mxu0 0.0
    %9786 = vmatprep.subr.mxu0 0.0
    %9787 = vmatpush2.msra.mxu0 0.0
    %9788 = vmatprep.subr.mxu0 0.0
    %9789 = vmatpush2.msra.mxu0 0.0
    %9790 = vmatprep.subr.mxu0 0.0
    %9791 = vmatpush2.msra.mxu0 0.0
    %9792 = vmatprep.subr.mxu0 0.0
    %9793 = vmatpush2.msra.mxu0 0.0
    %9794 = vmatprep.subr.mxu0 0.0
    %9795 = vmatpush2.msra.mxu0 0.0
    %9796 = vmatprep.subr.mxu0 0.0
    %9797 = vmatpush2.msra.mxu0 0.0
    %9798 = vmatprep.subr.mxu0 0.0
    %9799 = vmatpush2.msra.mxu0 0.0
    %9800 = vmatprep.mubr.f32.mxu0 0.0
    %9801 = vmatmul.mubr.f32.gmra.mxu0 %v9712
    %v9802 = vpop.f32.mrf.mxu0
    %v9803 = vadd.f32 %v9734, %v9802
    %v9804 = vpop.f32.mrf.mxu0
    %9805 = vdwg.mxu0
    %v9806 = vtanh.pop %v9803
    %v9807 = vld [vmem:[%s12] sm:$0xff]
    %v9808 = vld [vmem:[%s12 + $0x8] sm:$0xff]
    %v9809 = vld [vmem:[%s12 + $0x10] sm:$0xff]
    %v9810 = vld [vmem:[%s12 + $0x18] sm:$0xff]
    %v9811 = vld [vmem:[%s12 + $0x20] sm:$0xff]
    %v9812 = vld [vmem:[%s12 + $0x28] sm:$0xff]
    %v9813 = vld [vmem:[%s12 + $0x30] sm:$0xff]
    %v9814 = vld [vmem:[%s12 + $0x38] sm:$0xff]
    %v9815 = vld [vmem:[%s12 + $0x40] sm:$0xff]
    %v9816 = vld [vmem:[%s12 + $0x48] sm:$0xff]
    %v9817 = vld [vmem:[%s12 + $0x50] sm:$0xff]
    %v9818 = vld [vmem:[%s12 + $0x58] sm:$0xff]
    %v9819 = vld [vmem:[%s12 + $0x60] sm:$0xf]
    %v9820 = vld [vmem:[#allocation7] sm:$0x1]
    %v9822 = vlaneseq
    %v9823 = vshrl.u32 %v9822, 7
    %v9824 = vsub.s32 0, %v9823
    %v9825 = vrot.slane %v9820, %v9824
    %vm9827 = vcmask 818176
    %v9829 = vsel %vm9827, %v9806, 0
    %vm9831 = vcmask 1043456
    %v9833 = vsel %vm9831, %v9819, 0
    %9835 = vmatprep.subr.mxu0 0.0
    %9836 = vmatpush1.msra.mxu0 0.0
    %9837 = vmatprep.subr.mxu0 0.0
    %9838 = vmatpush1.msra.mxu0 0.0
    %9839 = vmatprep.subr.mxu0 0.0
    %9840 = vmatpush1.msra.mxu0 0.0
    %9841 = vmatprep.subr.mxu0 0.0
    %9842 = vmatpush1.msra.mxu0 %v9833
    %9843 = vmatprep.subr.mxu0 0.0
    %9844 = vmatpush1.msra.mxu0 %v9818
    %9845 = vmatprep.subr.mxu0 0.0
    %9846 = vmatpush1.msra.mxu0 %v9817
    %9847 = vmatprep.subr.mxu0 0.0
    %9848 = vmatpush1.msra.mxu0 %v9816
    %9849 = vmatprep.subr.mxu0 0.0
    %9850 = vmatpush1.msra.mxu0 %v9815
    %9851 = vmatprep.subr.mxu0 0.0
    %9852 = vmatpush1.msra.mxu0 %v9814
    %9853 = vmatprep.subr.mxu0 0.0
    %9854 = vmatpush1.msra.mxu0 %v9813
    %9855 = vmatprep.subr.mxu0 0.0
    %9856 = vmatpush1.msra.mxu0 %v9812
    %9857 = vmatprep.subr.mxu0 0.0
    %9858 = vmatpush1.msra.mxu0 %v9811
    %9859 = vmatprep.subr.mxu0 0.0
    %9860 = vmatpush1.msra.mxu0 %v9810
    %9861 = vmatprep.subr.mxu0 0.0
    %9862 = vmatpush1.msra.mxu0 %v9809
    %9863 = vmatprep.subr.mxu0 0.0
    %9864 = vmatpush1.msra.mxu0 %v9808
    %9865 = vmatprep.subr.mxu0 0.0
    %9866 = vmatpush1.msra.mxu0 %v9807
    %9867 = vmatprep.subr.mxu0 0.0
    %9868 = vmatpush2.msra.mxu0 0.0
    %9869 = vmatprep.subr.mxu0 0.0
    %9870 = vmatpush2.msra.mxu0 0.0
    %9871 = vmatprep.subr.mxu0 0.0
    %9872 = vmatpush2.msra.mxu0 0.0
    %9873 = vmatprep.subr.mxu0 0.0
    %9874 = vmatpush2.msra.mxu0 0.0
    %9875 = vmatprep.subr.mxu0 0.0
    %9876 = vmatpush2.msra.mxu0 0.0
    %9877 = vmatprep.subr.mxu0 0.0
    %9878 = vmatpush2.msra.mxu0 0.0
    %9879 = vmatprep.subr.mxu0 0.0
    %9880 = vmatpush2.msra.mxu0 0.0
    %9881 = vmatprep.subr.mxu0 0.0
    %9882 = vmatpush2.msra.mxu0 0.0
    %9883 = vmatprep.subr.mxu0 0.0
    %9884 = vmatpush2.msra.mxu0 0.0
    %9885 = vmatprep.subr.mxu0 0.0
    %9886 = vmatpush2.msra.mxu0 0.0
    %9887 = vmatprep.subr.mxu0 0.0
    %9888 = vmatpush2.msra.mxu0 0.0
    %9889 = vmatprep.subr.mxu0 0.0
    %9890 = vmatpush2.msra.mxu0 0.0
    %9891 = vmatprep.subr.mxu0 0.0
    %9892 = vmatpush2.msra.mxu0 0.0
    %9893 = vmatprep.subr.mxu0 0.0
    %9894 = vmatpush2.msra.mxu0 0.0
    %9895 = vmatprep.subr.mxu0 0.0
    %9896 = vmatpush2.msra.mxu0 0.0
    %9897 = vmatprep.subr.mxu0 0.0
    %9898 = vmatpush2.msra.mxu0 0.0
    %9899 = vmatprep.mubr.f32.mxu0 0.0
    %9900 = vmatmul.mubr.f32.gmra.mxu0 %v9829
    %v9901 = vpop.f32.mrf.mxu0
    %v9902 = vadd.f32 %v9825, %v9901
    %v9903 = vpop.f32.mrf.mxu0
    %9904 = vdwg.mxu0
    %v9905 = vlaneseq
    %v9906 = vshrl.u32 %v9905, 7
    %vm9907 = vcmp.lt.s32.totalorder %v9906, 4
    %v9908 = vsel %vm9907, %v9902, -inf
    %vm9909 = vcmask 7168
    %v9910 = vsel %vm9909, %v9908, -inf
    %v9911 = vrot.slane %v9910, 4
    %v9912 = vmax.f32 %v9910, %v9911
    %v9913 = vrot.slane %v9912, 2
    %v9914 = vmax.f32 %v9912, %v9913
    %v9915 = vrot.slane %v9914, 1
    %v9916 = vmax.f32 %v9914, %v9915
    %v9917 = vsub.f32 %v9908, %v9916
    %v9918 = vmul.f32 %v9917, 1.442695
    %v9919 = vpow.pop %v9918
    %v9920 = vsel %vm9909, %v9919, 0.0
    %v9921 = vrot.slane %v9920, 4
    %v9922 = vadd.f32 %v9920, %v9921
    %v9923 = vrot.slane %v9922, 2
    %v9924 = vadd.f32 %v9922, %v9923
    %v9925 = vrot.slane %v9924, 1
    %v9926 = vadd.f32 %v9924, %v9925
    %v9927 = vrcp.pop %v9926
    %v9928 = vmul.f32 %v9919, %v9927
    %9930 = vset.pattern.permute.xlu0 0
    %9931 = vperm.xlu0 %9930, %v9928
    %v9932 = vpop.permute.xlu0 %9931
    %v9934 = vmul.f32 %v9932, %v9712
    %v9935 = vrot.slane %v9934, 4
    %v9936 = vadd.f32 %v9934, %v9935
    %v9937 = vrot.slane %v9936, 2
    %v9938 = vadd.f32 %v9936, %v9937
    %v9939 = vrot.slane %v9938, 1
    %v9940 = vadd.f32 %v9938, %v9939
    %9941 = vst [vmem:[#allocation19] sm:$0x1] %v9940
    // Predicated region
    $region82: #{tpu_custom_call.1} parent=1 // pred_check
      _
    $region83: #{tpu_custom_call.1} parent=1 // pred_check_branch
      %9943 = sbr.rel (0) target = $region85
    $region84: #{tpu_custom_call.1} parent=1 // pred_region
      %s9945 = ssub.s32 16, 16
      %9946 = vsyncadd [#allocation10], %s9945
      %s9948 = sshll.u32 [#allocation19], 4
      %s9949 = int_to_ptr.vmem [resolvable:$true] %s9948
      %9951 = dma.vmem_to_hbm [thread:$0]  %s9949, 16, %s14, [#allocation10]
    $region85: #{tpu_custom_call.1} parent=1 // pred_fallthru
      _
    // Predicated region
    $region86: #{tpu_custom_call.1} parent=1 // pred_check
      _
    $region87: #{tpu_custom_call.1} parent=1 // pred_check_branch
      %9953 = sbr.rel (0) target = $region89
    $region88: #{tpu_custom_call.1} parent=1 // pred_region
      %9954 = dma.done [#allocation10], 16
    $region89: #{tpu_custom_call.1} parent=1 // pred_fallthru
      _
    %9955 = vsyncpa [#allocation9], 1
    %9956 = vsyncpa [#allocation12], 1
    %9957 = vsyncpa [#allocation15], 1
    %9958 = vsyncpa [#allocation18], 1
    %9959 = vsyncpa [#allocation10], 1

</llo_original>
